<compile_context>
chip_gen: v7x
topology: tpu7x:2x2x1
jax: 0.10.0
libtpu: 0.0.40
codegen_flags: <defaults>
</compile_context>

<pallas_src>
import numpy as np
import jax
import jax.numpy as jnp
from jax.experimental import pallas as pl
from jax.experimental.pallas import tpu as pltpu


# ----------------------------------------------------------------------------
# Fixed representative architecture dimensions.
# ----------------------------------------------------------------------------
C_IN, H1, W1 = 4, 16, 16          # network input (C, H, W)
CPAD = 8                          # conv1 input channels padded 4 -> 8 (alignment)
C1 = 8                            # conv1 out channels
C2 = 16                           # conv2 out channels
H3, W3 = 4, 4                     # spatial size after second maxpool2
HW1 = H1 * W1                     # 256 lanes per image
HW3 = H3 * W3                     # 16
FC1_OUT = 32
N_CLASSES = 10
OUT_PAD = 128                     # classes padded to a full lane tile
NEG_PAD = -1e9                    # padded-logit value (exp underflows to 0)

BATCH_BLOCK = 16                  # images processed per grid step
LANES = BATCH_BLOCK * HW1         # 4096 lanes per activation row


# ----------------------------------------------------------------------------
# Fused Pallas kernel: one grid step == BATCH_BLOCK images.
# ----------------------------------------------------------------------------
def _convnet_kernel(x_ref, w1_ref, b1_ref, mask1_ref, w2_ref, b2_ref, mask2_ref,
                    g_ref, maskf_ref, r_ref, fc1w_ref, fc1b_ref, fc2w_ref,
                    fc2b_ref, out_ref):
    f32 = jnp.float32

    def conv3x3_relu(x, w_ref, b_ref, mask_ref, stride):
        # x: (Cin, LANES).  One fused matmul: (Cout, 9*Cin) @ (9*Cin, LANES).
        taps = []
        for k in range(9):
            dh, dw = k // 3 - 1, k % 3 - 1
            s = stride * (dh * W1 + dw)
            if s == 0:
                taps.append(x)                                   # center tap
            else:
                # t[p] = x[p + s]; out-of-image / cross-image reads are masked.
                shifted = pltpu.roll(x, (-s) % LANES, axis=1)
                taps.append(shifted * mask_ref[k])
        xcol = jnp.concatenate(taps, axis=0)                     # (9*Cin, LANES)
        y = jnp.dot(w_ref[...], xcol, preferred_element_type=f32) + b_ref[...]
        return jnp.maximum(y, 0.0)

    def maxpool2x2(y, stride):
        # 2x2 max; valid at the top-left corner of every window and left
        # "sparse" on the 16x16 lane grid (consumers use doubled strides).
        h = jnp.maximum(y, pltpu.roll(y, (-stride) % LANES, axis=1))
        return jnp.maximum(h, pltpu.roll(h, (-stride * W1) % LANES, axis=1))

    x = x_ref[0]                                                 # (CPAD, LANES)
    y1 = conv3x3_relu(x, w1_ref, b1_ref, mask1_ref, stride=1)    # (C1, LANES)
    m1 = maxpool2x2(y1, stride=1)                                # valid on stride-2 grid
    y2 = conv3x3_relu(m1, w2_ref, b2_ref, mask2_ref, stride=2)   # (C2, LANES)
    m2 = maxpool2x2(y2, stride=2)                                # valid on stride-4 grid

    # Migrate batch from lanes to sublanes once: 256-aligned lane slices,
    # 16-row-aligned sublane concat.  Everything after this is batched (M=B).
    mc = jnp.concatenate(
        [m2[:, b * HW1:(b + 1) * HW1] for b in range(BATCH_BLOCK)],
        axis=0)                                                  # (B*C2, HW1)

    # NCHW flatten: spread matmul + channel mask + per-image row-sum matmul.
    spread = jnp.dot(mc, g_ref[...], preferred_element_type=f32)  # (B*C2, C2*HW3)
    flat = jnp.dot(r_ref[...], spread * maskf_ref[...],
                   preferred_element_type=f32)                    # (B, C2*HW3)

    h = jnp.dot(flat, fc1w_ref[...], preferred_element_type=f32) + fc1b_ref[...]
    h = jnp.maximum(h, 0.0)                                       # (B, FC1_OUT)
    logits = jnp.dot(h, fc2w_ref[...], preferred_element_type=f32) + fc2b_ref[...]

    # Softmax over the 128 padded lanes (padded logits are -1e9 -> exp == 0).
    logits = logits - jnp.max(logits, axis=-1, keepdims=True)
    e = jnp.exp(logits)
    out_ref[...] = e / jnp.sum(e, axis=-1, keepdims=True)         # (B, OUT_PAD)


# ----------------------------------------------------------------------------
# Host-side constant builders (run once).
# ----------------------------------------------------------------------------
def _conv_masks(stride):
    """(9, 1, LANES) 0/1 masks for the 9 taps of a 3x3 conv on the (16/stride)^2
    logical grid, evaluated on the sparse 16x16 lane grid and tiled over B."""
    idx = np.arange(HW1)
    qh, qw = (idx // W1) // stride, (idx % W1) // stride
    qn = H1 // stride
    m = np.zeros((9, 1, HW1), np.float32)
    for k in range(9):
        dh, dw = k // 3 - 1, k % 3 - 1
        m[k, 0] = ((qh + dh >= 0) & (qh + dh < qn) &
                   (qw + dw >= 0) & (qw + dw < qn)).astype(np.float32)
    return np.tile(m, (1, 1, BATCH_BLOCK))


def _flatten_spread():
    """(HW1, C2*HW3): column c*HW3+q picks the sparse pool2 lane 4*qh*W1+4*qw."""
    s = np.zeros((HW1, HW3), np.float32)
    for qh in range(H3):
        for qw in range(W3):
            s[4 * qh * W1 + 4 * qw, qh * W3 + qw] = 1.0
    return np.tile(s, (1, C2))


def _flatten_mask():
    """(B*C2, C2*HW3): keep channel c's own HW3-lane block inside every image."""
    m = np.repeat(np.eye(C2, dtype=np.float32), HW3, axis=1)      # (C2, C2*HW3)
    return np.tile(m, (BATCH_BLOCK, 1))


def _rowsum():
    """(B, B*C2): sums the C2 rows belonging to each image."""
    return np.kron(np.eye(BATCH_BLOCK, dtype=np.float32),
                   np.ones((1, C2), np.float32))


def prepare_params(params):
    """One-time repack of PyTorch-layout parameters into kernel-ready operands."""
    def conv_w(w, cin_pad):                       # (Co,Ci,3,3) -> (Co, 9*cin_pad)
        co, ci, kh, kw = w.shape
        w = jnp.pad(w, ((0, 0), (0, cin_pad - ci), (0, 0), (0, 0)))
        return jnp.transpose(w, (0, 2, 3, 1)).reshape(co, kh * kw * cin_pad)

    fc2_wT = jnp.zeros((FC1_OUT, OUT_PAD), jnp.float32)
    fc2_wT = fc2_wT.at[:, :N_CLASSES].set(params["fc2_w"].T)
    fc2_b = jnp.full((1, OUT_PAD), NEG_PAD, jnp.float32)
    fc2_b = fc2_b.at[0, :N_CLASSES].set(params["fc2_b"])

    return {
        "w1": conv_w(params["conv1_w"], CPAD),                 # (8, 72)
        "b1": params["conv1_b"].reshape(C1, 1),
        "mask1": jnp.asarray(_conv_masks(stride=1)),           # (9, 1, 4096)
        "w2": conv_w(params["conv2_w"], C1),                   # (16, 72)
        "b2": params["conv2_b"].reshape(C2, 1),
        "mask2": jnp.asarray(_conv_masks(stride=2)),           # (9, 1, 4096)
        "g": jnp.asarray(_flatten_spread()),                   # (256, 256)
        "maskf": jnp.asarray(_flatten_mask()),                 # (256, 256)
        "r": jnp.asarray(_rowsum()),                           # (16, 256)
        "fc1_wT": params["fc1_w"].T,                           # (256, 32)
        "fc1_b": params["fc1_b"].reshape(1, FC1_OUT),
        "fc2_wT": fc2_wT,                                      # (32, 128)
        "fc2_b": fc2_b,                                        # (1, 128)
    }


_OPERAND_ORDER = ("w1", "b1", "mask1", "w2", "b2", "mask2", "g", "maskf", "r",
                  "fc1_wT", "fc1_b", "fc2_wT", "fc2_b")


def _const_spec(arr):
    nd = arr.ndim
    return pl.BlockSpec(tuple(arr.shape), lambda i, _nd=nd: (0,) * _nd)


# ----------------------------------------------------------------------------
# Forward wrapper: one pallas_call for the whole network.
# ----------------------------------------------------------------------------
def convnet_forward(x_nchw, prep):
    n, c, h, w = x_nchw.shape
    assert (c, h, w) == (C_IN, H1, W1)
    B = BATCH_BLOCK
    g = (n + B - 1) // B
    n_pad = g * B

    # (n, C, H, W) -> (g, CPAD, B*HW1): pad batch & channels, batch onto lanes.
    x2 = x_nchw.reshape(n, C_IN, HW1)
    x2 = jnp.pad(x2, ((0, n_pad - n), (0, CPAD - C_IN), (0, 0)))
    xb = x2.reshape(g, B, CPAD, HW1).transpose(0, 2, 1, 3).reshape(g, CPAD, LANES)

    operands = [prep[k] for k in _OPERAND_ORDER]
    in_specs = [pl.BlockSpec((1, CPAD, LANES), lambda i: (i, 0, 0))]
    in_specs += [_const_spec(op) for op in operands]

    out = pl.pallas_call(
        _convnet_kernel,
        grid=(g,),
        in_specs=in_specs,
        out_specs=pl.BlockSpec((B, OUT_PAD), lambda i: (i, 0)),
        out_shape=jax.ShapeDtypeStruct((n_pad, OUT_PAD), jnp.float32),
        compiler_params=pltpu.CompilerParams(
            dimension_semantics=("parallel",),    # megacore-shards batch blocks
            vmem_limit_bytes=32 * 1024 * 1024,
        ),
    )(xb, *operands)
    return out[:n, :N_CLASSES]


# ----------------------------------------------------------------------------
# Deterministic parameters (PyTorch-style uniform(-1/sqrt(fan_in), +)) + reference
# ----------------------------------------------------------------------------
def init_params():
    key = jax.random.PRNGKey(0)
    ks = jax.random.split(key, 8)

    def u(k, shape, fan_in):
        bound = 1.0 / jnp.sqrt(float(fan_in))
        return jax.random.uniform(k, shape, jnp.float32, -bound, bound)

    return {
        "conv1_w": u(ks[0], (C1, C_IN, 3, 3), C_IN * 9),
        "conv1_b": u(ks[1], (C1,), C_IN * 9),
        "conv2_w": u(ks[2], (C2, C1, 3, 3), C1 * 9),
        "conv2_b": u(ks[3], (C2,), C1 * 9),
        "fc1_w": u(ks[4], (FC1_OUT, C2 * HW3), C2 * HW3),   # PyTorch Linear: (out, in)
        "fc1_b": u(ks[5], (FC1_OUT,), C2 * HW3),
        "fc2_w": u(ks[6], (N_CLASSES, FC1_OUT), FC1_OUT),
        "fc2_b": u(ks[7], (N_CLASSES,), FC1_OUT),
    }


def reference_forward(x, params):
    """Pure-JAX reference of the same PyTorch forward pass (for validation)."""
    def conv(y, w, b):
        y = jax.lax.conv_general_dilated(
            y, w, window_strides=(1, 1), padding=((1, 1), (1, 1)),
            dimension_numbers=("NCHW", "OIHW", "NCHW"))
        return jax.nn.relu(y + b[None, :, None, None])

    def pool(y):
        n, c, h, w = y.shape
        return y.reshape(n, c, h // 2, 2, w // 2, 2).max(axis=(3, 5))

    y = pool(conv(x, params["conv1_w"], params["conv1_b"]))
    y = pool(conv(y, params["conv2_w"], params["conv2_b"]))
    y = y.reshape(y.shape[0], -1)                               # nn.Flatten on NCHW
    y = jax.nn.relu(y @ params["fc1_w"].T + params["fc1_b"])
    y = y @ params["fc2_w"].T + params["fc2_b"]
    return jax.nn.softmax(y, axis=-1)


if __name__ == "__main__":
    params = init_params()
    prep = prepare_params(params)          # all constant building happens once, here
    x = jax.random.normal(jax.random.PRNGKey(0), (2, C_IN, H1, W1), jnp.float32)

    fwd = jax.jit(convnet_forward)
    out = jax.block_until_ready(fwd(x, prep))

    assert out.shape == (2, N_CLASSES)
    assert bool(jnp.all(jnp.isfinite(out)))
    # Softmax rows sum to 1 (exact divide now).
    assert jnp.allclose(jnp.sum(out, axis=-1), 1.0, atol=1e-4)
    # End-to-end check against the plain-JAX reference.
    ref = reference_forward(x, params)
    assert jnp.allclose(out, ref, atol=2e-4, rtol=1e-3), float(jnp.max(jnp.abs(out - ref)))
    print("KERNEL_OK")
</pallas_src>

<mosaic_0001>
module attributes {stable_mosaic.version = 11 : i64} {
  func.func @_convnet_kernel(%arg0: i32, %arg1: memref<1x8x4096xf32, #tpu.memory_space<vmem>>, %arg2: memref<8x72xf32, #tpu.memory_space<vmem>>, %arg3: memref<8x1xf32, #tpu.memory_space<vmem>>, %arg4: memref<9x1x4096xf32, #tpu.memory_space<vmem>>, %arg5: memref<16x72xf32, #tpu.memory_space<vmem>>, %arg6: memref<16x1xf32, #tpu.memory_space<vmem>>, %arg7: memref<9x1x4096xf32, #tpu.memory_space<vmem>>, %arg8: memref<256x256xf32, #tpu.memory_space<vmem>>, %arg9: memref<256x256xf32, #tpu.memory_space<vmem>>, %arg10: memref<16x256xf32, #tpu.memory_space<vmem>>, %arg11: memref<256x32xf32, #tpu.memory_space<vmem>>, %arg12: memref<1x32xf32, #tpu.memory_space<vmem>>, %arg13: memref<32x128xf32, #tpu.memory_space<vmem>>, %arg14: memref<1x128xf32, #tpu.memory_space<vmem>>, %arg15: memref<16x128xf32, #tpu.memory_space<vmem>>) attributes {dimension_semantics = [#tpu.dimension_semantics<parallel>], iteration_bounds = array<i64: 1>, scalar_prefetch = 0 : i64, scratch_operands = 0 : i64, tpu.core_type = #tpu.core_type<tc>, window_params = [{transform_indices = @transform_0, window_bounds = array<i64: 1, 8, 4096>}, {pipeline_mode = #tpu.pipeline_mode<synchronous>, transform_indices = @transform_1, window_bounds = array<i64: 8, 72>}, {pipeline_mode = #tpu.pipeline_mode<synchronous>, transform_indices = @transform_2, window_bounds = array<i64: 8, 1>}, {pipeline_mode = #tpu.pipeline_mode<synchronous>, transform_indices = @transform_3, window_bounds = array<i64: 9, 1, 4096>}, {pipeline_mode = #tpu.pipeline_mode<synchronous>, transform_indices = @transform_4, window_bounds = array<i64: 16, 72>}, {pipeline_mode = #tpu.pipeline_mode<synchronous>, transform_indices = @transform_5, window_bounds = array<i64: 16, 1>}, {pipeline_mode = #tpu.pipeline_mode<synchronous>, transform_indices = @transform_6, window_bounds = array<i64: 9, 1, 4096>}, {pipeline_mode = #tpu.pipeline_mode<synchronous>, transform_indices = @transform_7, window_bounds = array<i64: 256, 256>}, {pipeline_mode = #tpu.pipeline_mode<synchronous>, transform_indices = @transform_8, window_bounds = array<i64: 256, 256>}, {pipeline_mode = #tpu.pipeline_mode<synchronous>, transform_indices = @transform_9, window_bounds = array<i64: 16, 256>}, {pipeline_mode = #tpu.pipeline_mode<synchronous>, transform_indices = @transform_10, window_bounds = array<i64: 256, 32>}, {pipeline_mode = #tpu.pipeline_mode<synchronous>, transform_indices = @transform_11, window_bounds = array<i64: 1, 32>}, {pipeline_mode = #tpu.pipeline_mode<synchronous>, transform_indices = @transform_12, window_bounds = array<i64: 32, 128>}, {pipeline_mode = #tpu.pipeline_mode<synchronous>, transform_indices = @transform_13, window_bounds = array<i64: 1, 128>}, {transform_indices = @transform_14, window_bounds = array<i64: 16, 128>}]} {
    %c0 = arith.constant 0 : index
    %c0_0 = arith.constant 0 : index
    %c0_1 = arith.constant 0 : index
    %0 = vector.load %arg1[%c0, %c0_0, %c0_1] : memref<1x8x4096xf32, #tpu.memory_space<vmem>>, vector<1x8x4096xf32>
    %1 = vector.shape_cast %0 : vector<1x8x4096xf32> to vector<8x4096xf32>
    %c17_i32 = arith.constant 17 : i32
    %2 = tpu.dynamic_rotate %1 by %c17_i32 dim 1 : vector<8x4096xf32>, i32 -> vector<8x4096xf32>
    %c0_2 = arith.constant 0 : index
    %c0_3 = arith.constant 0 : index
    %c0_4 = arith.constant 0 : index
    %3 = vector.load %arg4[%c0_2, %c0_3, %c0_4] : memref<9x1x4096xf32, #tpu.memory_space<vmem>>, vector<1x1x4096xf32>
    %4 = vector.shape_cast %3 : vector<1x1x4096xf32> to vector<1x4096xf32>
    %5 = vector.broadcast %4 : vector<1x4096xf32> to vector<8x4096xf32>
    %6 = arith.mulf %2, %5 : vector<8x4096xf32>
    %c16_i32 = arith.constant 16 : i32
    %7 = tpu.dynamic_rotate %1 by %c16_i32 dim 1 : vector<8x4096xf32>, i32 -> vector<8x4096xf32>
    %c1 = arith.constant 1 : index
    %c0_5 = arith.constant 0 : index
    %c0_6 = arith.constant 0 : index
    %8 = vector.load %arg4[%c1, %c0_5, %c0_6] : memref<9x1x4096xf32, #tpu.memory_space<vmem>>, vector<1x1x4096xf32>
    %9 = vector.shape_cast %8 : vector<1x1x4096xf32> to vector<1x4096xf32>
    %10 = vector.broadcast %9 : vector<1x4096xf32> to vector<8x4096xf32>
    %11 = arith.mulf %7, %10 : vector<8x4096xf32>
    %c15_i32 = arith.constant 15 : i32
    %12 = tpu.dynamic_rotate %1 by %c15_i32 dim 1 : vector<8x4096xf32>, i32 -> vector<8x4096xf32>
    %c2 = arith.constant 2 : index
    %c0_7 = arith.constant 0 : index
    %c0_8 = arith.constant 0 : index
    %13 = vector.load %arg4[%c2, %c0_7, %c0_8] : memref<9x1x4096xf32, #tpu.memory_space<vmem>>, vector<1x1x4096xf32>
    %14 = vector.shape_cast %13 : vector<1x1x4096xf32> to vector<1x4096xf32>
    %15 = vector.broadcast %14 : vector<1x4096xf32> to vector<8x4096xf32>
    %16 = arith.mulf %12, %15 : vector<8x4096xf32>
    %c1_i32 = arith.constant 1 : i32
    %17 = tpu.dynamic_rotate %1 by %c1_i32 dim 1 : vector<8x4096xf32>, i32 -> vector<8x4096xf32>
    %c3 = arith.constant 3 : index
    %c0_9 = arith.constant 0 : index
    %c0_10 = arith.constant 0 : index
    %18 = vector.load %arg4[%c3, %c0_9, %c0_10] : memref<9x1x4096xf32, #tpu.memory_space<vmem>>, vector<1x1x4096xf32>
    %19 = vector.shape_cast %18 : vector<1x1x4096xf32> to vector<1x4096xf32>
    %20 = vector.broadcast %19 : vector<1x4096xf32> to vector<8x4096xf32>
    %21 = arith.mulf %17, %20 : vector<8x4096xf32>
    %c4095_i32 = arith.constant 4095 : i32
    %22 = tpu.dynamic_rotate %1 by %c4095_i32 dim 1 : vector<8x4096xf32>, i32 -> vector<8x4096xf32>
    %c5 = arith.constant 5 : index
    %c0_11 = arith.constant 0 : index
    %c0_12 = arith.constant 0 : index
    %23 = vector.load %arg4[%c5, %c0_11, %c0_12] : memref<9x1x4096xf32, #tpu.memory_space<vmem>>, vector<1x1x4096xf32>
    %24 = vector.shape_cast %23 : vector<1x1x4096xf32> to vector<1x4096xf32>
    %25 = vector.broadcast %24 : vector<1x4096xf32> to vector<8x4096xf32>
    %26 = arith.mulf %22, %25 : vector<8x4096xf32>
    %c4081_i32 = arith.constant 4081 : i32
    %27 = tpu.dynamic_rotate %1 by %c4081_i32 dim 1 : vector<8x4096xf32>, i32 -> vector<8x4096xf32>
    %c6 = arith.constant 6 : index
    %c0_13 = arith.constant 0 : index
    %c0_14 = arith.constant 0 : index
    %28 = vector.load %arg4[%c6, %c0_13, %c0_14] : memref<9x1x4096xf32, #tpu.memory_space<vmem>>, vector<1x1x4096xf32>
    %29 = vector.shape_cast %28 : vector<1x1x4096xf32> to vector<1x4096xf32>
    %30 = vector.broadcast %29 : vector<1x4096xf32> to vector<8x4096xf32>
    %31 = arith.mulf %27, %30 : vector<8x4096xf32>
    %c4080_i32 = arith.constant 4080 : i32
    %32 = tpu.dynamic_rotate %1 by %c4080_i32 dim 1 : vector<8x4096xf32>, i32 -> vector<8x4096xf32>
    %c7 = arith.constant 7 : index
    %c0_15 = arith.constant 0 : index
    %c0_16 = arith.constant 0 : index
    %33 = vector.load %arg4[%c7, %c0_15, %c0_16] : memref<9x1x4096xf32, #tpu.memory_space<vmem>>, vector<1x1x4096xf32>
    %34 = vector.shape_cast %33 : vector<1x1x4096xf32> to vector<1x4096xf32>
    %35 = vector.broadcast %34 : vector<1x4096xf32> to vector<8x4096xf32>
    %36 = arith.mulf %32, %35 : vector<8x4096xf32>
    %c4079_i32 = arith.constant 4079 : i32
    %37 = tpu.dynamic_rotate %1 by %c4079_i32 dim 1 : vector<8x4096xf32>, i32 -> vector<8x4096xf32>
    %c8 = arith.constant 8 : index
    %c0_17 = arith.constant 0 : index
    %c0_18 = arith.constant 0 : index
    %38 = vector.load %arg4[%c8, %c0_17, %c0_18] : memref<9x1x4096xf32, #tpu.memory_space<vmem>>, vector<1x1x4096xf32>
    %39 = vector.shape_cast %38 : vector<1x1x4096xf32> to vector<1x4096xf32>
    %40 = vector.broadcast %39 : vector<1x4096xf32> to vector<8x4096xf32>
    %41 = arith.mulf %37, %40 : vector<8x4096xf32>
    %42 = tpu.concatenate %6, %11, %16, %21, %1, %26, %31, %36, %41 in 0 : vector<8x4096xf32>, vector<8x4096xf32>, vector<8x4096xf32>, vector<8x4096xf32>, vector<8x4096xf32>, vector<8x4096xf32>, vector<8x4096xf32>, vector<8x4096xf32>, vector<8x4096xf32> -> vector<72x4096xf32>
    %c0_19 = arith.constant 0 : index
    %c0_20 = arith.constant 0 : index
    %43 = vector.load %arg2[%c0_19, %c0_20] : memref<8x72xf32, #tpu.memory_space<vmem>>, vector<8x72xf32>
    %cst = arith.constant dense<0.000000e+00> : vector<8x4096xf32>
    %44 = tpu.matmul %43, %42, %cst {dimension_numbers = #tpu.dot_dimension_numbers<[1], [0], [0], [1], [0, 0, 1, 1], [], []>} : vector<8x72xf32>, vector<72x4096xf32>, vector<8x4096xf32> -> vector<8x4096xf32>
    %c0_21 = arith.constant 0 : index
    %c0_22 = arith.constant 0 : index
    %45 = vector.load %arg3[%c0_21, %c0_22] : memref<8x1xf32, #tpu.memory_space<vmem>>, vector<8x1xf32>
    %46 = vector.broadcast %45 : vector<8x1xf32> to vector<8x4096xf32>
    %47 = arith.addf %44, %46 : vector<8x4096xf32>
    %cst_23 = arith.constant 0.000000e+00 : f32
    %48 = vector.broadcast %cst_23 : f32 to vector<8x4096xf32>
    %49 = arith.maximumf %47, %48 : vector<8x4096xf32>
    %c4095_i32_24 = arith.constant 4095 : i32
    %50 = tpu.dynamic_rotate %49 by %c4095_i32_24 dim 1 : vector<8x4096xf32>, i32 -> vector<8x4096xf32>
    %51 = arith.maximumf %49, %50 : vector<8x4096xf32>
    %c4080_i32_25 = arith.constant 4080 : i32
    %52 = tpu.dynamic_rotate %51 by %c4080_i32_25 dim 1 : vector<8x4096xf32>, i32 -> vector<8x4096xf32>
    %53 = arith.maximumf %51, %52 : vector<8x4096xf32>
    %c34_i32 = arith.constant 34 : i32
    %54 = tpu.dynamic_rotate %53 by %c34_i32 dim 1 : vector<8x4096xf32>, i32 -> vector<8x4096xf32>
    %c0_26 = arith.constant 0 : index
    %c0_27 = arith.constant 0 : index
    %c0_28 = arith.constant 0 : index
    %55 = vector.load %arg7[%c0_26, %c0_27, %c0_28] : memref<9x1x4096xf32, #tpu.memory_space<vmem>>, vector<1x1x4096xf32>
    %56 = vector.shape_cast %55 : vector<1x1x4096xf32> to vector<1x4096xf32>
    %57 = vector.broadcast %56 : vector<1x4096xf32> to vector<8x4096xf32>
    %58 = arith.mulf %54, %57 : vector<8x4096xf32>
    %c32_i32 = arith.constant 32 : i32
    %59 = tpu.dynamic_rotate %53 by %c32_i32 dim 1 : vector<8x4096xf32>, i32 -> vector<8x4096xf32>
    %c1_29 = arith.constant 1 : index
    %c0_30 = arith.constant 0 : index
    %c0_31 = arith.constant 0 : index
    %60 = vector.load %arg7[%c1_29, %c0_30, %c0_31] : memref<9x1x4096xf32, #tpu.memory_space<vmem>>, vector<1x1x4096xf32>
    %61 = vector.shape_cast %60 : vector<1x1x4096xf32> to vector<1x4096xf32>
    %62 = vector.broadcast %61 : vector<1x4096xf32> to vector<8x4096xf32>
    %63 = arith.mulf %59, %62 : vector<8x4096xf32>
    %c30_i32 = arith.constant 30 : i32
    %64 = tpu.dynamic_rotate %53 by %c30_i32 dim 1 : vector<8x4096xf32>, i32 -> vector<8x4096xf32>
    %c2_32 = arith.constant 2 : index
    %c0_33 = arith.constant 0 : index
    %c0_34 = arith.constant 0 : index
    %65 = vector.load %arg7[%c2_32, %c0_33, %c0_34] : memref<9x1x4096xf32, #tpu.memory_space<vmem>>, vector<1x1x4096xf32>
    %66 = vector.shape_cast %65 : vector<1x1x4096xf32> to vector<1x4096xf32>
    %67 = vector.broadcast %66 : vector<1x4096xf32> to vector<8x4096xf32>
    %68 = arith.mulf %64, %67 : vector<8x4096xf32>
    %c2_i32 = arith.constant 2 : i32
    %69 = tpu.dynamic_rotate %53 by %c2_i32 dim 1 : vector<8x4096xf32>, i32 -> vector<8x4096xf32>
    %c3_35 = arith.constant 3 : index
    %c0_36 = arith.constant 0 : index
    %c0_37 = arith.constant 0 : index
    %70 = vector.load %arg7[%c3_35, %c0_36, %c0_37] : memref<9x1x4096xf32, #tpu.memory_space<vmem>>, vector<1x1x4096xf32>
    %71 = vector.shape_cast %70 : vector<1x1x4096xf32> to vector<1x4096xf32>
    %72 = vector.broadcast %71 : vector<1x4096xf32> to vector<8x4096xf32>
    %73 = arith.mulf %69, %72 : vector<8x4096xf32>
    %c4094_i32 = arith.constant 4094 : i32
    %74 = tpu.dynamic_rotate %53 by %c4094_i32 dim 1 : vector<8x4096xf32>, i32 -> vector<8x4096xf32>
    %c5_38 = arith.constant 5 : index
    %c0_39 = arith.constant 0 : index
    %c0_40 = arith.constant 0 : index
    %75 = vector.load %arg7[%c5_38, %c0_39, %c0_40] : memref<9x1x4096xf32, #tpu.memory_space<vmem>>, vector<1x1x4096xf32>
    %76 = vector.shape_cast %75 : vector<1x1x4096xf32> to vector<1x4096xf32>
    %77 = vector.broadcast %76 : vector<1x4096xf32> to vector<8x4096xf32>
    %78 = arith.mulf %74, %77 : vector<8x4096xf32>
    %c4066_i32 = arith.constant 4066 : i32
    %79 = tpu.dynamic_rotate %53 by %c4066_i32 dim 1 : vector<8x4096xf32>, i32 -> vector<8x4096xf32>
    %c6_41 = arith.constant 6 : index
    %c0_42 = arith.constant 0 : index
    %c0_43 = arith.constant 0 : index
    %80 = vector.load %arg7[%c6_41, %c0_42, %c0_43] : memref<9x1x4096xf32, #tpu.memory_space<vmem>>, vector<1x1x4096xf32>
    %81 = vector.shape_cast %80 : vector<1x1x4096xf32> to vector<1x4096xf32>
    %82 = vector.broadcast %81 : vector<1x4096xf32> to vector<8x4096xf32>
    %83 = arith.mulf %79, %82 : vector<8x4096xf32>
    %c4064_i32 = arith.constant 4064 : i32
    %84 = tpu.dynamic_rotate %53 by %c4064_i32 dim 1 : vector<8x4096xf32>, i32 -> vector<8x4096xf32>
    %c7_44 = arith.constant 7 : index
    %c0_45 = arith.constant 0 : index
    %c0_46 = arith.constant 0 : index
    %85 = vector.load %arg7[%c7_44, %c0_45, %c0_46] : memref<9x1x4096xf32, #tpu.memory_space<vmem>>, vector<1x1x4096xf32>
    %86 = vector.shape_cast %85 : vector<1x1x4096xf32> to vector<1x4096xf32>
    %87 = vector.broadcast %86 : vector<1x4096xf32> to vector<8x4096xf32>
    %88 = arith.mulf %84, %87 : vector<8x4096xf32>
    %c4062_i32 = arith.constant 4062 : i32
    %89 = tpu.dynamic_rotate %53 by %c4062_i32 dim 1 : vector<8x4096xf32>, i32 -> vector<8x4096xf32>
    %c8_47 = arith.constant 8 : index
    %c0_48 = arith.constant 0 : index
    %c0_49 = arith.constant 0 : index
    %90 = vector.load %arg7[%c8_47, %c0_48, %c0_49] : memref<9x1x4096xf32, #tpu.memory_space<vmem>>, vector<1x1x4096xf32>
    %91 = vector.shape_cast %90 : vector<1x1x4096xf32> to vector<1x4096xf32>
    %92 = vector.broadcast %91 : vector<1x4096xf32> to vector<8x4096xf32>
    %93 = arith.mulf %89, %92 : vector<8x4096xf32>
    %94 = tpu.concatenate %58, %63, %68, %73, %53, %78, %83, %88, %93 in 0 : vector<8x4096xf32>, vector<8x4096xf32>, vector<8x4096xf32>, vector<8x4096xf32>, vector<8x4096xf32>, vector<8x4096xf32>, vector<8x4096xf32>, vector<8x4096xf32>, vector<8x4096xf32> -> vector<72x4096xf32>
    %c0_50 = arith.constant 0 : index
    %c0_51 = arith.constant 0 : index
    %95 = vector.load %arg5[%c0_50, %c0_51] : memref<16x72xf32, #tpu.memory_space<vmem>>, vector<16x72xf32>
    %cst_52 = arith.constant dense<0.000000e+00> : vector<16x4096xf32>
    %96 = tpu.matmul %95, %94, %cst_52 {dimension_numbers = #tpu.dot_dimension_numbers<[1], [0], [0], [1], [0, 0, 1, 1], [], []>} : vector<16x72xf32>, vector<72x4096xf32>, vector<16x4096xf32> -> vector<16x4096xf32>
    %c0_53 = arith.constant 0 : index
    %c0_54 = arith.constant 0 : index
    %97 = vector.load %arg6[%c0_53, %c0_54] : memref<16x1xf32, #tpu.memory_space<vmem>>, vector<16x1xf32>
    %98 = vector.broadcast %97 : vector<16x1xf32> to vector<16x4096xf32>
    %99 = arith.addf %96, %98 : vector<16x4096xf32>
    %cst_55 = arith.constant 0.000000e+00 : f32
    %100 = vector.broadcast %cst_55 : f32 to vector<16x4096xf32>
    %101 = arith.maximumf %99, %100 : vector<16x4096xf32>
    %c4094_i32_56 = arith.constant 4094 : i32
    %102 = tpu.dynamic_rotate %101 by %c4094_i32_56 dim 1 : vector<16x4096xf32>, i32 -> vector<16x4096xf32>
    %103 = arith.maximumf %101, %102 : vector<16x4096xf32>
    %c4064_i32_57 = arith.constant 4064 : i32
    %104 = tpu.dynamic_rotate %103 by %c4064_i32_57 dim 1 : vector<16x4096xf32>, i32 -> vector<16x4096xf32>
    %105 = arith.maximumf %103, %104 : vector<16x4096xf32>
    %106 = vector.extract_strided_slice %105 {offsets = [0, 0], sizes = [16, 256], strides = [1, 1]} : vector<16x4096xf32> to vector<16x256xf32>
    %107 = vector.extract_strided_slice %105 {offsets = [0, 256], sizes = [16, 256], strides = [1, 1]} : vector<16x4096xf32> to vector<16x256xf32>
    %108 = vector.extract_strided_slice %105 {offsets = [0, 512], sizes = [16, 256], strides = [1, 1]} : vector<16x4096xf32> to vector<16x256xf32>
    %109 = vector.extract_strided_slice %105 {offsets = [0, 768], sizes = [16, 256], strides = [1, 1]} : vector<16x4096xf32> to vector<16x256xf32>
    %110 = vector.extract_strided_slice %105 {offsets = [0, 1024], sizes = [16, 256], strides = [1, 1]} : vector<16x4096xf32> to vector<16x256xf32>
    %111 = vector.extract_strided_slice %105 {offsets = [0, 1280], sizes = [16, 256], strides = [1, 1]} : vector<16x4096xf32> to vector<16x256xf32>
    %112 = vector.extract_strided_slice %105 {offsets = [0, 1536], sizes = [16, 256], strides = [1, 1]} : vector<16x4096xf32> to vector<16x256xf32>
    %113 = vector.extract_strided_slice %105 {offsets = [0, 1792], sizes = [16, 256], strides = [1, 1]} : vector<16x4096xf32> to vector<16x256xf32>
    %114 = vector.extract_strided_slice %105 {offsets = [0, 2048], sizes = [16, 256], strides = [1, 1]} : vector<16x4096xf32> to vector<16x256xf32>
    %115 = vector.extract_strided_slice %105 {offsets = [0, 2304], sizes = [16, 256], strides = [1, 1]} : vector<16x4096xf32> to vector<16x256xf32>
    %116 = vector.extract_strided_slice %105 {offsets = [0, 2560], sizes = [16, 256], strides = [1, 1]} : vector<16x4096xf32> to vector<16x256xf32>
    %117 = vector.extract_strided_slice %105 {offsets = [0, 2816], sizes = [16, 256], strides = [1, 1]} : vector<16x4096xf32> to vector<16x256xf32>
    %118 = vector.extract_strided_slice %105 {offsets = [0, 3072], sizes = [16, 256], strides = [1, 1]} : vector<16x4096xf32> to vector<16x256xf32>
    %119 = vector.extract_strided_slice %105 {offsets = [0, 3328], sizes = [16, 256], strides = [1, 1]} : vector<16x4096xf32> to vector<16x256xf32>
    %120 = vector.extract_strided_slice %105 {offsets = [0, 3584], sizes = [16, 256], strides = [1, 1]} : vector<16x4096xf32> to vector<16x256xf32>
    %121 = vector.extract_strided_slice %105 {offsets = [0, 3840], sizes = [16, 256], strides = [1, 1]} : vector<16x4096xf32> to vector<16x256xf32>
    %122 = tpu.concatenate %106, %107, %108, %109, %110, %111, %112, %113, %114, %115, %116, %117, %118, %119, %120, %121 in 0 : vector<16x256xf32>, vector<16x256xf32>, vector<16x256xf32>, vector<16x256xf32>, vector<16x256xf32>, vector<16x256xf32>, vector<16x256xf32>, vector<16x256xf32>, vector<16x256xf32>, vector<16x256xf32>, vector<16x256xf32>, vector<16x256xf32>, vector<16x256xf32>, vector<16x256xf32>, vector<16x256xf32>, vector<16x256xf32> -> vector<256x256xf32>
    %c0_58 = arith.constant 0 : index
    %c0_59 = arith.constant 0 : index
    %123 = vector.load %arg8[%c0_58, %c0_59] : memref<256x256xf32, #tpu.memory_space<vmem>>, vector<256x256xf32>
    %cst_60 = arith.constant dense<0.000000e+00> : vector<256x256xf32>
    %124 = tpu.matmul %122, %123, %cst_60 {dimension_numbers = #tpu.dot_dimension_numbers<[1], [0], [0], [1], [0, 0, 1, 1], [], []>} : vector<256x256xf32>, vector<256x256xf32>, vector<256x256xf32> -> vector<256x256xf32>
    %c0_61 = arith.constant 0 : index
    %c0_62 = arith.constant 0 : index
    %125 = vector.load %arg10[%c0_61, %c0_62] : memref<16x256xf32, #tpu.memory_space<vmem>>, vector<16x256xf32>
    %c0_63 = arith.constant 0 : index
    %c0_64 = arith.constant 0 : index
    %126 = vector.load %arg9[%c0_63, %c0_64] : memref<256x256xf32, #tpu.memory_space<vmem>>, vector<256x256xf32>
    %127 = arith.mulf %124, %126 : vector<256x256xf32>
    %cst_65 = arith.constant dense<0.000000e+00> : vector<16x256xf32>
    %128 = tpu.matmul %125, %127, %cst_65 {dimension_numbers = #tpu.dot_dimension_numbers<[1], [0], [0], [1], [0, 0, 1, 1], [], []>} : vector<16x256xf32>, vector<256x256xf32>, vector<16x256xf32> -> vector<16x256xf32>
    %c0_66 = arith.constant 0 : index
    %c0_67 = arith.constant 0 : index
    %129 = vector.load %arg11[%c0_66, %c0_67] : memref<256x32xf32, #tpu.memory_space<vmem>>, vector<256x32xf32>
    %cst_68 = arith.constant dense<0.000000e+00> : vector<16x32xf32>
    %130 = tpu.matmul %128, %129, %cst_68 {dimension_numbers = #tpu.dot_dimension_numbers<[1], [0], [0], [1], [0, 0, 1, 1], [], []>} : vector<16x256xf32>, vector<256x32xf32>, vector<16x32xf32> -> vector<16x32xf32>
    %c0_69 = arith.constant 0 : index
    %c0_70 = arith.constant 0 : index
    %131 = vector.load %arg12[%c0_69, %c0_70] : memref<1x32xf32, #tpu.memory_space<vmem>>, vector<1x32xf32>
    %132 = vector.broadcast %131 : vector<1x32xf32> to vector<16x32xf32>
    %133 = arith.addf %130, %132 : vector<16x32xf32>
    %cst_71 = arith.constant 0.000000e+00 : f32
    %134 = vector.broadcast %cst_71 : f32 to vector<16x32xf32>
    %135 = arith.maximumf %133, %134 : vector<16x32xf32>
    %c0_72 = arith.constant 0 : index
    %c0_73 = arith.constant 0 : index
    %136 = vector.load %arg13[%c0_72, %c0_73] : memref<32x128xf32, #tpu.memory_space<vmem>>, vector<32x128xf32>
    %cst_74 = arith.constant dense<0.000000e+00> : vector<16x128xf32>
    %137 = tpu.matmul %135, %136, %cst_74 {dimension_numbers = #tpu.dot_dimension_numbers<[1], [0], [0], [1], [0, 0, 1, 1], [], []>} : vector<16x32xf32>, vector<32x128xf32>, vector<16x128xf32> -> vector<16x128xf32>
    %c0_75 = arith.constant 0 : index
    %c0_76 = arith.constant 0 : index
    %138 = vector.load %arg14[%c0_75, %c0_76] : memref<1x128xf32, #tpu.memory_space<vmem>>, vector<1x128xf32>
    %139 = vector.broadcast %138 : vector<1x128xf32> to vector<16x128xf32>
    %140 = arith.addf %137, %139 : vector<16x128xf32>
    %cst_77 = arith.constant dense<0xFF800000> : vector<16xf32>
    %141 = vector.multi_reduction <maximumf>, %140, %cst_77 [1] : vector<16x128xf32> to vector<16xf32>
    %142 = vector.shape_cast %141 : vector<16xf32> to vector<16x1xf32>
    %143 = vector.broadcast %142 : vector<16x1xf32> to vector<16x128xf32>
    %144 = arith.subf %140, %143 : vector<16x128xf32>
    %145 = math.exp %144 : vector<16x128xf32>
    %cst_78 = arith.constant dense<0.000000e+00> : vector<16xf32>
    %146 = vector.multi_reduction <add>, %145, %cst_78 [1] : vector<16x128xf32> to vector<16xf32>
    %147 = vector.shape_cast %146 : vector<16xf32> to vector<16x1xf32>
    %148 = vector.broadcast %147 : vector<16x1xf32> to vector<16x128xf32>
    %149 = arith.divf %145, %148 : vector<16x128xf32>
    %c0_79 = arith.constant 0 : index
    %c0_80 = arith.constant 0 : index
    %150 = vector.load %arg15[%c0_79, %c0_80] : memref<16x128xf32, #tpu.memory_space<vmem>>, vector<16x128xf32>
    tpu.vector_store %arg15[%c0_79, %c0_80], %149 {strides = array<i32>} : memref<16x128xf32, #tpu.memory_space<vmem>>, vector<16x128xf32>,
    return
  }
  func.func @transform_0(%arg0: i32) -> (i32, i32, i32) {
    %c0_i32 = arith.constant 0 : i32
    %c0_i32_0 = arith.constant 0 : i32
    %c0_i32_1 = arith.constant 0 : i32
    return %arg0, %c0_i32, %c0_i32_0 : i32, i32, i32
  }
  func.func @transform_1(%arg0: i32) -> (i32, i32) {
    %c0_i32 = arith.constant 0 : i32
    %c0_i32_0 = arith.constant 0 : i32
    %c0_i32_1 = arith.constant 0 : i32
    return %c0_i32, %c0_i32_0 : i32, i32
  }
  func.func @transform_2(%arg0: i32) -> (i32, i32) {
    %c0_i32 = arith.constant 0 : i32
    %c0_i32_0 = arith.constant 0 : i32
    %c0_i32_1 = arith.constant 0 : i32
    return %c0_i32, %c0_i32_0 : i32, i32
  }
  func.func @transform_3(%arg0: i32) -> (i32, i32, i32) {
    %c0_i32 = arith.constant 0 : i32
    %c0_i32_0 = arith.constant 0 : i32
    %c0_i32_1 = arith.constant 0 : i32
    %c0_i32_2 = arith.constant 0 : i32
    return %c0_i32, %c0_i32_0, %c0_i32_1 : i32, i32, i32
  }
  func.func @transform_4(%arg0: i32) -> (i32, i32) {
    %c0_i32 = arith.constant 0 : i32
    %c0_i32_0 = arith.constant 0 : i32
    %c0_i32_1 = arith.constant 0 : i32
    return %c0_i32, %c0_i32_0 : i32, i32
  }
  func.func @transform_5(%arg0: i32) -> (i32, i32) {
    %c0_i32 = arith.constant 0 : i32
    %c0_i32_0 = arith.constant 0 : i32
    %c0_i32_1 = arith.constant 0 : i32
    return %c0_i32, %c0_i32_0 : i32, i32
  }
  func.func @transform_6(%arg0: i32) -> (i32, i32, i32) {
    %c0_i32 = arith.constant 0 : i32
    %c0_i32_0 = arith.constant 0 : i32
    %c0_i32_1 = arith.constant 0 : i32
    %c0_i32_2 = arith.constant 0 : i32
    return %c0_i32, %c0_i32_0, %c0_i32_1 : i32, i32, i32
  }
  func.func @transform_7(%arg0: i32) -> (i32, i32) {
    %c0_i32 = arith.constant 0 : i32
    %c0_i32_0 = arith.constant 0 : i32
    %c0_i32_1 = arith.constant 0 : i32
    return %c0_i32, %c0_i32_0 : i32, i32
  }
  func.func @transform_8(%arg0: i32) -> (i32, i32) {
    %c0_i32 = arith.constant 0 : i32
    %c0_i32_0 = arith.constant 0 : i32
    %c0_i32_1 = arith.constant 0 : i32
    return %c0_i32, %c0_i32_0 : i32, i32
  }
  func.func @transform_9(%arg0: i32) -> (i32, i32) {
    %c0_i32 = arith.constant 0 : i32
    %c0_i32_0 = arith.constant 0 : i32
    %c0_i32_1 = arith.constant 0 : i32
    return %c0_i32, %c0_i32_0 : i32, i32
  }
  func.func @transform_10(%arg0: i32) -> (i32, i32) {
    %c0_i32 = arith.constant 0 : i32
    %c0_i32_0 = arith.constant 0 : i32
    %c0_i32_1 = arith.constant 0 : i32
    return %c0_i32, %c0_i32_0 : i32, i32
  }
  func.func @transform_11(%arg0: i32) -> (i32, i32) {
    %c0_i32 = arith.constant 0 : i32
    %c0_i32_0 = arith.constant 0 : i32
    %c0_i32_1 = arith.constant 0 : i32
    return %c0_i32, %c0_i32_0 : i32, i32
  }
  func.func @transform_12(%arg0: i32) -> (i32, i32) {
    %c0_i32 = arith.constant 0 : i32
    %c0_i32_0 = arith.constant 0 : i32
    %c0_i32_1 = arith.constant 0 : i32
    return %c0_i32, %c0_i32_0 : i32, i32
  }
  func.func @transform_13(%arg0: i32) -> (i32, i32) {
    %c0_i32 = arith.constant 0 : i32
    %c0_i32_0 = arith.constant 0 : i32
    %c0_i32_1 = arith.constant 0 : i32
    return %c0_i32, %c0_i32_0 : i32, i32
  }
  func.func @transform_14(%arg0: i32) -> (i32, i32) {
    %c0_i32 = arith.constant 0 : i32
    %c0_i32_0 = arith.constant 0 : i32
    return %arg0, %c0_i32 : i32, i32
  }
}

</mosaic_0001>

<llo_original>
// kernel: convnet_forward.1
$region0: #{convnet_forward.1}
  #allocation0 [shape = 'u32[]', space=smem, size = 0x4, offset = 0x4, fixed_abs, tag = 'smem constant byte address 0x4 - core index']
  #allocation1 [shape = 'u32[144,128]{1,0:T(1,128)}', space=vmem, size = 0x12000, scoped, tag = 'internal scratch']
  %s0 = inlined_call_operand.vmem [shape: f32[1,8,4096], index: 0, kind: input, shape index: {}]
  %s1 = inlined_call_operand.vmem [shape: f32[8,72], index: 1, kind: input, shape index: {}]
  %s2 = inlined_call_operand.vmem [shape: f32[8,1], index: 2, kind: input, shape index: {}]
  %s3 = inlined_call_operand.hbm [shape: f32[9,1,4096], index: 3, kind: input, shape index: {}]
  %s4 = inlined_call_operand.hbm [shape: f32[16,72], index: 4, kind: input, shape index: {}]
  %s5 = inlined_call_operand.vmem [shape: f32[16,1], index: 5, kind: input, shape index: {}]
  %s6 = inlined_call_operand.vmem [shape: f32[9,1,4096], index: 6, kind: input, shape index: {}]
  %s7 = inlined_call_operand.vmem [shape: f32[256,256], index: 7, kind: input, shape index: {}]
  %s8 = inlined_call_operand.hbm [shape: f32[256,256], index: 8, kind: input, shape index: {}]
  %s9 = inlined_call_operand.hbm [shape: f32[16,256], index: 9, kind: input, shape index: {}]
  %s10 = inlined_call_operand.vmem [shape: f32[256,32], index: 10, kind: input, shape index: {}]
  %s11 = inlined_call_operand.hbm [shape: f32[1,32], index: 11, kind: input, shape index: {}]
  %s12 = inlined_call_operand.hbm [shape: f32[32,128], index: 12, kind: input, shape index: {}]
  %s13 = inlined_call_operand.hbm [shape: f32[1,128], index: 13, kind: input, shape index: {}]
  %s14 = inlined_call_operand.vmem [shape: f32[16,128], index: 14, kind: output, shape index: {}]
  %s15 = sld [smem:[#allocation0]]
  $region94: #{convnet_forward.1} parent=0
    _
  %s17 = ssub.s32 1, %s15
  %s18 = scalar_select 0, %s17, %s15
  $region1: #{convnet_forward.1} parent=0
    #allocation2 [shape = 'u8[147456]{0}', space=vmem, size = 0x24000, scoped, tag = 'input window, operand 3, single buffered']
    #allocation3 [shape = 's32[1]{0}', space=sflag, size = 0x4, scoped, tag = 'scoped memory for convnet_forward.1']
    #allocation4 [shape = 'u8[8192]{0}', space=vmem, size = 0x2000, scoped, tag = 'input window, operand 4, single buffered']
    #allocation5 [shape = 's32[1]{0}', space=sflag, size = 0x4, scoped, tag = 'scoped memory for convnet_forward.1']
    #allocation6 [shape = 'u8[262144]{0}', space=vmem, size = 0x40000, scoped, tag = 'input window, operand 8, single buffered']
    #allocation7 [shape = 'u8[16384]{0}', space=vmem, size = 0x4000, scoped, tag = 'input window, operand 9, single buffered']
    #allocation8 [shape = 's32[1]{0}', space=sflag, size = 0x4, scoped, tag = 'scoped memory for convnet_forward.1']
    #allocation9 [shape = 'u8[512]{0}', space=vmem, size = 0x400, scoped, tag = 'input window, operand 11, single buffered']
    #allocation10 [shape = 'u8[16384]{0}', space=vmem, size = 0x4000, scoped, tag = 'input window, operand 12, single buffered']
    #allocation11 [shape = 's32[1]{0}', space=sflag, size = 0x4, scoped, tag = 'scoped memory for convnet_forward.1']
    #allocation12 [shape = 'u8[512]{0}', space=vmem, size = 0x400, scoped, tag = 'input window, operand 13, single buffered']
    %19 = vsyncpa [#allocation3], 0
    %20 = vsyncpa [#allocation5], 0
    %21 = vsyncpa [#allocation8], 0
    %22 = vsyncpa [#allocation11], 0
    // Predicated region
    $region2: #{convnet_forward.1} parent=1 // pred_check
      _
    $region3: #{convnet_forward.1} parent=1 // pred_check_branch
      %24 = sbr.rel (0) target = $region5
    $region4: #{convnet_forward.1} parent=1 // pred_region
      _
    $region5: #{convnet_forward.1} parent=1 // pred_fallthru
      _
    // Predicated region
    $region6: #{convnet_forward.1} parent=1 // pred_check
      _
    $region7: #{convnet_forward.1} parent=1 // pred_check_branch
      %26 = sbr.rel (0) target = $region9
    $region8: #{convnet_forward.1} parent=1 // pred_region
      _
    $region9: #{convnet_forward.1} parent=1 // pred_fallthru
      _
    // Predicated region
    $region10: #{convnet_forward.1} parent=1 // pred_check
      _
    $region11: #{convnet_forward.1} parent=1 // pred_check_branch
      %28 = sbr.rel (0) target = $region13
    $region12: #{convnet_forward.1} parent=1 // pred_region
      _
    $region13: #{convnet_forward.1} parent=1 // pred_fallthru
      _
    // Predicated region
    $region14: #{convnet_forward.1} parent=1 // pred_check
      _
    $region15: #{convnet_forward.1} parent=1 // pred_check_branch
      %30 = sbr.rel (0) target = $region17
    $region16: #{convnet_forward.1} parent=1 // pred_region
      %s32 = ssub.s32 4608, 4608
      %33 = vsyncadd [#allocation3], %s32
      %s34 = sshll.u32 [#allocation2], 4
      %s35 = int_to_ptr.vmem [resolvable:$true] %s34
      %40 = dma.hbm_to_vmem [thread:$0]  %s3, 4608, %s35, [#allocation3], 512, 512, 32
    $region17: #{convnet_forward.1} parent=1 // pred_fallthru
      _
    // Predicated region
    $region18: #{convnet_forward.1} parent=1 // pred_check
      _
    $region19: #{convnet_forward.1} parent=1 // pred_check_branch
      %42 = sbr.rel (0) target = $region21
    $region20: #{convnet_forward.1} parent=1 // pred_region
      %s44 = ssub.s32 256, 256
      %45 = vsyncadd [#allocation5], %s44
      %s46 = sshll.u32 [#allocation4], 4
      %s47 = int_to_ptr.vmem [resolvable:$true] %s46
      %52 = dma.hbm_to_vmem [thread:$0]  %s4, 256, %s47, [#allocation5], 128, 128, 8
    $region21: #{convnet_forward.1} parent=1 // pred_fallthru
      _
    // Predicated region
    $region22: #{convnet_forward.1} parent=1 // pred_check
      _
    $region23: #{convnet_forward.1} parent=1 // pred_check_branch
      %54 = sbr.rel (0) target = $region25
    $region24: #{convnet_forward.1} parent=1 // pred_region
      _
    $region25: #{convnet_forward.1} parent=1 // pred_fallthru
      _
    // Predicated region
    $region26: #{convnet_forward.1} parent=1 // pred_check
      _
    $region27: #{convnet_forward.1} parent=1 // pred_check_branch
      %56 = sbr.rel (0) target = $region29
    $region28: #{convnet_forward.1} parent=1 // pred_region
      _
    $region29: #{convnet_forward.1} parent=1 // pred_fallthru
      _
    // Predicated region
    $region30: #{convnet_forward.1} parent=1 // pred_check
      _
    $region31: #{convnet_forward.1} parent=1 // pred_check_branch
      %58 = sbr.rel (0) target = $region33
    $region32: #{convnet_forward.1} parent=1 // pred_region
      _
    $region33: #{convnet_forward.1} parent=1 // pred_fallthru
      _
    // Predicated region
    $region34: #{convnet_forward.1} parent=1 // pred_check
      _
    $region35: #{convnet_forward.1} parent=1 // pred_check_branch
      %60 = sbr.rel (0) target = $region37
    $region36: #{convnet_forward.1} parent=1 // pred_region
      %s62 = ssub.s32 8192, 8192
      %63 = vsyncadd [#allocation5], %s62
      %s64 = sshll.u32 [#allocation6], 4
      %s65 = int_to_ptr.vmem [resolvable:$true] %s64
      %70 = dma.hbm_to_vmem [thread:$0]  %s8, 8192, %s65, [#allocation5], 256, 256, 16
    $region37: #{convnet_forward.1} parent=1 // pred_fallthru
      _
    // Predicated region
    $region38: #{convnet_forward.1} parent=1 // pred_check
      _
    $region39: #{convnet_forward.1} parent=1 // pred_check_branch
      %72 = sbr.rel (0) target = $region41
    $region40: #{convnet_forward.1} parent=1 // pred_region
      %s74 = ssub.s32 512, 512
      %75 = vsyncadd [#allocation8], %s74
      %s76 = sshll.u32 [#allocation7], 4
      %s77 = int_to_ptr.vmem [resolvable:$true] %s76
      %82 = dma.hbm_to_vmem [thread:$0]  %s9, 512, %s77, [#allocation8], 256, 256, 16
    $region41: #{convnet_forward.1} parent=1 // pred_fallthru
      _
    // Predicated region
    $region42: #{convnet_forward.1} parent=1 // pred_check
      _
    $region43: #{convnet_forward.1} parent=1 // pred_check_branch
      %84 = sbr.rel (0) target = $region45
    $region44: #{convnet_forward.1} parent=1 // pred_region
      _
    $region45: #{convnet_forward.1} parent=1 // pred_fallthru
      _
    // Predicated region
    $region46: #{convnet_forward.1} parent=1 // pred_check
      _
    $region47: #{convnet_forward.1} parent=1 // pred_check_branch
      %86 = sbr.rel (0) target = $region49
    $region48: #{convnet_forward.1} parent=1 // pred_region
      %s88 = ssub.s32 16, 16
      %89 = vsyncadd [#allocation8], %s88
      %s91 = sshll.u32 [#allocation9], 4
      %s92 = int_to_ptr.vmem [resolvable:$true] %s91
      %94 = dma.hbm_to_vmem [thread:$0]  %s11, 16, %s92, [#allocation8]
    $region49: #{convnet_forward.1} parent=1 // pred_fallthru
      _
    // Predicated region
    $region50: #{convnet_forward.1} parent=1 // pred_check
      _
    $region51: #{convnet_forward.1} parent=1 // pred_check_branch
      %96 = sbr.rel (0) target = $region53
    $region52: #{convnet_forward.1} parent=1 // pred_region
      %s98 = ssub.s32 512, 512
      %99 = vsyncadd [#allocation11], %s98
      %s100 = sshll.u32 [#allocation10], 4
      %s101 = int_to_ptr.vmem [resolvable:$true] %s100
      %106 = dma.hbm_to_vmem [thread:$0]  %s12, 512, %s101, [#allocation11], 128, 128, 8
    $region53: #{convnet_forward.1} parent=1 // pred_fallthru
      _
    // Predicated region
    $region54: #{convnet_forward.1} parent=1 // pred_check
      _
    $region55: #{convnet_forward.1} parent=1 // pred_check_branch
      %108 = sbr.rel (0) target = $region57
    $region56: #{convnet_forward.1} parent=1 // pred_region
      %s110 = ssub.s32 16, 16
      %111 = vsyncadd [#allocation11], %s110
      %s113 = sshll.u32 [#allocation12], 4
      %s114 = int_to_ptr.vmem [resolvable:$true] %s113
      %116 = dma.hbm_to_vmem [thread:$0]  %s13, 16, %s114, [#allocation11]
    $region57: #{convnet_forward.1} parent=1 // pred_fallthru
      _
    // Predicated region
    $region58: #{convnet_forward.1} parent=1 // pred_check
      _
    $region59: #{convnet_forward.1} parent=1 // pred_check_branch
      %118 = sbr.rel (0) target = $region61
    $region60: #{convnet_forward.1} parent=1 // pred_region
      %119 = dma.done [#allocation3], 4608
    $region61: #{convnet_forward.1} parent=1 // pred_fallthru
      _
    // Predicated region
    $region62: #{convnet_forward.1} parent=1 // pred_check
      _
    $region63: #{convnet_forward.1} parent=1 // pred_check_branch
      %121 = sbr.rel (0) target = $region65
    $region64: #{convnet_forward.1} parent=1 // pred_region
      %122 = dma.done [#allocation5], 256
    $region65: #{convnet_forward.1} parent=1 // pred_fallthru
      _
    // Predicated region
    $region66: #{convnet_forward.1} parent=1 // pred_check
      _
    $region67: #{convnet_forward.1} parent=1 // pred_check_branch
      %124 = sbr.rel (0) target = $region69
    $region68: #{convnet_forward.1} parent=1 // pred_region
      %125 = dma.done [#allocation5], 8192
    $region69: #{convnet_forward.1} parent=1 // pred_fallthru
      _
    // Predicated region
    $region70: #{convnet_forward.1} parent=1 // pred_check
      _
    $region71: #{convnet_forward.1} parent=1 // pred_check_branch
      %127 = sbr.rel (0) target = $region73
    $region72: #{convnet_forward.1} parent=1 // pred_region
      %128 = dma.done [#allocation8], 512
    $region73: #{convnet_forward.1} parent=1 // pred_fallthru
      _
    // Predicated region
    $region74: #{convnet_forward.1} parent=1 // pred_check
      _
    $region75: #{convnet_forward.1} parent=1 // pred_check_branch
      %130 = sbr.rel (0) target = $region77
    $region76: #{convnet_forward.1} parent=1 // pred_region
      %131 = dma.done [#allocation8], 16
    $region77: #{convnet_forward.1} parent=1 // pred_fallthru
      _
    // Predicated region
    $region78: #{convnet_forward.1} parent=1 // pred_check
      _
    $region79: #{convnet_forward.1} parent=1 // pred_check_branch
      %133 = sbr.rel (0) target = $region81
    $region80: #{convnet_forward.1} parent=1 // pred_region
      %134 = dma.done [#allocation11], 512
    $region81: #{convnet_forward.1} parent=1 // pred_fallthru
      _
    // Predicated region
    $region82: #{convnet_forward.1} parent=1 // pred_check
      _
    $region83: #{convnet_forward.1} parent=1 // pred_check_branch
      %136 = sbr.rel (0) target = $region85
    $region84: #{convnet_forward.1} parent=1 // pred_region
      %137 = dma.done [#allocation11], 16
    $region85: #{convnet_forward.1} parent=1 // pred_fallthru
      _
    %v138 = vld [vmem:[%s0] sm:$0xff]
    %v139 = vld [vmem:[%s0 + $0x8] sm:$0xff]
    %v140 = vld [vmem:[%s0 + $0x10] sm:$0xff]
    %v141 = vld [vmem:[%s0 + $0x18] sm:$0xff]
    %v142 = vld [vmem:[%s0 + $0x20] sm:$0xff]
    %v143 = vld [vmem:[%s0 + $0x28] sm:$0xff]
    %v144 = vld [vmem:[%s0 + $0x30] sm:$0xff]
    %v145 = vld [vmem:[%s0 + $0x38] sm:$0xff]
    %v146 = vld [vmem:[%s0 + $0x40] sm:$0xff]
    %v147 = vld [vmem:[%s0 + $0x48] sm:$0xff]
    %v148 = vld [vmem:[%s0 + $0x50] sm:$0xff]
    %v149 = vld [vmem:[%s0 + $0x58] sm:$0xff]
    %v150 = vld [vmem:[%s0 + $0x60] sm:$0xff]
    %v151 = vld [vmem:[%s0 + $0x68] sm:$0xff]
    %v152 = vld [vmem:[%s0 + $0x70] sm:$0xff]
    %v153 = vld [vmem:[%s0 + $0x78] sm:$0xff]
    %v154 = vld [vmem:[%s0 + $0x80] sm:$0xff]
    %v155 = vld [vmem:[%s0 + $0x88] sm:$0xff]
    %v156 = vld [vmem:[%s0 + $0x90] sm:$0xff]
    %v157 = vld [vmem:[%s0 + $0x98] sm:$0xff]
    %v158 = vld [vmem:[%s0 + $0xa0] sm:$0xff]
    %v159 = vld [vmem:[%s0 + $0xa8] sm:$0xff]
    %v160 = vld [vmem:[%s0 + $0xb0] sm:$0xff]
    %v161 = vld [vmem:[%s0 + $0xb8] sm:$0xff]
    %v162 = vld [vmem:[%s0 + $0xc0] sm:$0xff]
    %v163 = vld [vmem:[%s0 + $0xc8] sm:$0xff]
    %v164 = vld [vmem:[%s0 + $0xd0] sm:$0xff]
    %v165 = vld [vmem:[%s0 + $0xd8] sm:$0xff]
    %v166 = vld [vmem:[%s0 + $0xe0] sm:$0xff]
    %v167 = vld [vmem:[%s0 + $0xe8] sm:$0xff]
    %v168 = vld [vmem:[%s0 + $0xf0] sm:$0xff]
    %v169 = vld [vmem:[%s0 + $0xf8] sm:$0xff]
    %170 = vrot.lane.b32.xlu0 %v138, 17
    %v171 = vpop.permute.xlu0 %170
    %172 = vrot.lane.b32.xlu0 %v139, 17
    %v173 = vpop.permute.xlu0 %172
    %174 = vrot.lane.b32.xlu0 %v140, 17
    %v175 = vpop.permute.xlu0 %174
    %176 = vrot.lane.b32.xlu0 %v141, 17
    %v177 = vpop.permute.xlu0 %176
    %178 = vrot.lane.b32.xlu0 %v142, 17
    %v179 = vpop.permute.xlu0 %178
    %180 = vrot.lane.b32.xlu0 %v143, 17
    %v181 = vpop.permute.xlu0 %180
    %182 = vrot.lane.b32.xlu0 %v144, 17
    %v183 = vpop.permute.xlu0 %182
    %184 = vrot.lane.b32.xlu0 %v145, 17
    %v185 = vpop.permute.xlu0 %184
    %186 = vrot.lane.b32.xlu0 %v146, 17
    %v187 = vpop.permute.xlu0 %186
    %188 = vrot.lane.b32.xlu0 %v147, 17
    %v189 = vpop.permute.xlu0 %188
    %190 = vrot.lane.b32.xlu0 %v148, 17
    %v191 = vpop.permute.xlu0 %190
    %192 = vrot.lane.b32.xlu0 %v149, 17
    %v193 = vpop.permute.xlu0 %192
    %194 = vrot.lane.b32.xlu0 %v150, 17
    %v195 = vpop.permute.xlu0 %194
    %196 = vrot.lane.b32.xlu0 %v151, 17
    %v197 = vpop.permute.xlu0 %196
    %198 = vrot.lane.b32.xlu0 %v152, 17
    %v199 = vpop.permute.xlu0 %198
    %200 = vrot.lane.b32.xlu0 %v153, 17
    %v201 = vpop.permute.xlu0 %200
    %202 = vrot.lane.b32.xlu0 %v154, 17
    %v203 = vpop.permute.xlu0 %202
    %204 = vrot.lane.b32.xlu0 %v155, 17
    %v205 = vpop.permute.xlu0 %204
    %206 = vrot.lane.b32.xlu0 %v156, 17
    %v207 = vpop.permute.xlu0 %206
    %208 = vrot.lane.b32.xlu0 %v157, 17
    %v209 = vpop.permute.xlu0 %208
    %210 = vrot.lane.b32.xlu0 %v158, 17
    %v211 = vpop.permute.xlu0 %210
    %212 = vrot.lane.b32.xlu0 %v159, 17
    %v213 = vpop.permute.xlu0 %212
    %214 = vrot.lane.b32.xlu0 %v160, 17
    %v215 = vpop.permute.xlu0 %214
    %216 = vrot.lane.b32.xlu0 %v161, 17
    %v217 = vpop.permute.xlu0 %216
    %218 = vrot.lane.b32.xlu0 %v162, 17
    %v219 = vpop.permute.xlu0 %218
    %220 = vrot.lane.b32.xlu0 %v163, 17
    %v221 = vpop.permute.xlu0 %220
    %222 = vrot.lane.b32.xlu0 %v164, 17
    %v223 = vpop.permute.xlu0 %222
    %224 = vrot.lane.b32.xlu0 %v165, 17
    %v225 = vpop.permute.xlu0 %224
    %226 = vrot.lane.b32.xlu0 %v166, 17
    %v227 = vpop.permute.xlu0 %226
    %228 = vrot.lane.b32.xlu0 %v167, 17
    %v229 = vpop.permute.xlu0 %228
    %230 = vrot.lane.b32.xlu0 %v168, 17
    %v231 = vpop.permute.xlu0 %230
    %232 = vrot.lane.b32.xlu0 %v169, 17
    %v233 = vpop.permute.xlu0 %232
    %v234 = vlaneseq
    %v235 = vand.u32 %v234, 127
    %vm236 = vcmp.lt.s32.totalorder %v235, 17
    %v237 = vsel %vm236, %v231, %v233
    %v238 = vsel %vm236, %v229, %v231
    %v239 = vsel %vm236, %v227, %v229
    %v240 = vsel %vm236, %v225, %v227
    %v241 = vsel %vm236, %v223, %v225
    %v242 = vsel %vm236, %v221, %v223
    %v243 = vsel %vm236, %v219, %v221
    %v244 = vsel %vm236, %v217, %v219
    %v245 = vsel %vm236, %v215, %v217
    %v246 = vsel %vm236, %v213, %v215
    %v247 = vsel %vm236, %v211, %v213
    %v248 = vsel %vm236, %v209, %v211
    %v249 = vsel %vm236, %v207, %v209
    %v250 = vsel %vm236, %v205, %v207
    %v251 = vsel %vm236, %v203, %v205
    %v252 = vsel %vm236, %v201, %v203
    %v253 = vsel %vm236, %v199, %v201
    %v254 = vsel %vm236, %v197, %v199
    %v255 = vsel %vm236, %v195, %v197
    %v256 = vsel %vm236, %v193, %v195
    %v257 = vsel %vm236, %v191, %v193
    %v258 = vsel %vm236, %v189, %v191
    %v259 = vsel %vm236, %v187, %v189
    %v260 = vsel %vm236, %v185, %v187
    %v261 = vsel %vm236, %v183, %v185
    %v262 = vsel %vm236, %v181, %v183
    %v263 = vsel %vm236, %v179, %v181
    %v264 = vsel %vm236, %v177, %v179
    %v265 = vsel %vm236, %v175, %v177
    %v266 = vsel %vm236, %v173, %v175
    %v267 = vsel %vm236, %v171, %v173
    %v268 = vsel %vm236, %v233, %v171
    %v269 = vld [vmem:[#allocation2] sm:$0xff]
    %v270 = vld [vmem:[#allocation2 + $0x8] sm:$0xff]
    %v271 = vld [vmem:[#allocation2 + $0x10] sm:$0xff]
    %v272 = vld [vmem:[#allocation2 + $0x18] sm:$0xff]
    %v277 = vlaneseq
    %v278 = vshrl.u32 %v277, 7
    %v279 = vsub.s32 0, %v278
    %v280 = vrot.slane %v269, %v279
    %v281 = vlaneseq
    %v282 = vshrl.u32 %v281, 7
    %v283 = vsub.s32 1, %v282
    %v284 = vrot.slane %v269, %v283
    %v285 = vlaneseq
    %v286 = vshrl.u32 %v285, 7
    %v287 = vsub.s32 2, %v286
    %v288 = vrot.slane %v269, %v287
    %v289 = vlaneseq
    %v290 = vshrl.u32 %v289, 7
    %v291 = vsub.s32 3, %v290
    %v292 = vrot.slane %v269, %v291
    %v293 = vlaneseq
    %v294 = vshrl.u32 %v293, 7
    %v295 = vsub.s32 4, %v294
    %v296 = vrot.slane %v269, %v295
    %v297 = vlaneseq
    %v298 = vshrl.u32 %v297, 7
    %v299 = vsub.s32 5, %v298
    %v300 = vrot.slane %v269, %v299
    %v301 = vlaneseq
    %v302 = vshrl.u32 %v301, 7
    %v303 = vsub.s32 6, %v302
    %v304 = vrot.slane %v269, %v303
    %v305 = vlaneseq
    %v306 = vshrl.u32 %v305, 7
    %v307 = vsub.s32 7, %v306
    %v308 = vrot.slane %v269, %v307
    %v309 = vlaneseq
    %v310 = vshrl.u32 %v309, 7
    %v311 = vsub.s32 0, %v310
    %v312 = vrot.slane %v270, %v311
    %v313 = vlaneseq
    %v314 = vshrl.u32 %v313, 7
    %v315 = vsub.s32 1, %v314
    %v316 = vrot.slane %v270, %v315
    %v317 = vlaneseq
    %v318 = vshrl.u32 %v317, 7
    %v319 = vsub.s32 2, %v318
    %v320 = vrot.slane %v270, %v319
    %v321 = vlaneseq
    %v322 = vshrl.u32 %v321, 7
    %v323 = vsub.s32 3, %v322
    %v324 = vrot.slane %v270, %v323
    %v325 = vlaneseq
    %v326 = vshrl.u32 %v325, 7
    %v327 = vsub.s32 4, %v326
    %v328 = vrot.slane %v270, %v327
    %v329 = vlaneseq
    %v330 = vshrl.u32 %v329, 7
    %v331 = vsub.s32 5, %v330
    %v332 = vrot.slane %v270, %v331
    %v333 = vlaneseq
    %v334 = vshrl.u32 %v333, 7
    %v335 = vsub.s32 6, %v334
    %v336 = vrot.slane %v270, %v335
    %v337 = vlaneseq
    %v338 = vshrl.u32 %v337, 7
    %v339 = vsub.s32 7, %v338
    %v340 = vrot.slane %v270, %v339
    %v341 = vlaneseq
    %v342 = vshrl.u32 %v341, 7
    %v343 = vsub.s32 0, %v342
    %v344 = vrot.slane %v271, %v343
    %v345 = vlaneseq
    %v346 = vshrl.u32 %v345, 7
    %v347 = vsub.s32 1, %v346
    %v348 = vrot.slane %v271, %v347
    %v349 = vlaneseq
    %v350 = vshrl.u32 %v349, 7
    %v351 = vsub.s32 2, %v350
    %v352 = vrot.slane %v271, %v351
    %v353 = vlaneseq
    %v354 = vshrl.u32 %v353, 7
    %v355 = vsub.s32 3, %v354
    %v356 = vrot.slane %v271, %v355
    %v357 = vlaneseq
    %v358 = vshrl.u32 %v357, 7
    %v359 = vsub.s32 4, %v358
    %v360 = vrot.slane %v271, %v359
    %v361 = vlaneseq
    %v362 = vshrl.u32 %v361, 7
    %v363 = vsub.s32 5, %v362
    %v364 = vrot.slane %v271, %v363
    %v365 = vlaneseq
    %v366 = vshrl.u32 %v365, 7
    %v367 = vsub.s32 6, %v366
    %v368 = vrot.slane %v271, %v367
    %v369 = vlaneseq
    %v370 = vshrl.u32 %v369, 7
    %v371 = vsub.s32 7, %v370
    %v372 = vrot.slane %v271, %v371
    %v373 = vlaneseq
    %v374 = vshrl.u32 %v373, 7
    %v375 = vsub.s32 0, %v374
    %v376 = vrot.slane %v272, %v375
    %v377 = vlaneseq
    %v378 = vshrl.u32 %v377, 7
    %v379 = vsub.s32 1, %v378
    %v380 = vrot.slane %v272, %v379
    %v381 = vlaneseq
    %v382 = vshrl.u32 %v381, 7
    %v383 = vsub.s32 2, %v382
    %v384 = vrot.slane %v272, %v383
    %v385 = vlaneseq
    %v386 = vshrl.u32 %v385, 7
    %v387 = vsub.s32 3, %v386
    %v388 = vrot.slane %v272, %v387
    %v389 = vlaneseq
    %v390 = vshrl.u32 %v389, 7
    %v391 = vsub.s32 4, %v390
    %v392 = vrot.slane %v272, %v391
    %v393 = vlaneseq
    %v394 = vshrl.u32 %v393, 7
    %v395 = vsub.s32 5, %v394
    %v396 = vrot.slane %v272, %v395
    %v397 = vlaneseq
    %v398 = vshrl.u32 %v397, 7
    %v399 = vsub.s32 6, %v398
    %v400 = vrot.slane %v272, %v399
    %v401 = vlaneseq
    %v402 = vshrl.u32 %v401, 7
    %v403 = vsub.s32 7, %v402
    %v404 = vrot.slane %v272, %v403
    %v437 = vmul.f32 %v268, %v280
    %v438 = vmul.f32 %v267, %v284
    %v439 = vmul.f32 %v266, %v288
    %v440 = vmul.f32 %v265, %v292
    %v441 = vmul.f32 %v264, %v296
    %v442 = vmul.f32 %v263, %v300
    %v443 = vmul.f32 %v262, %v304
    %v444 = vmul.f32 %v261, %v308
    %v445 = vmul.f32 %v260, %v312
    %v446 = vmul.f32 %v259, %v316
    %v447 = vmul.f32 %v258, %v320
    %v448 = vmul.f32 %v257, %v324
    %v449 = vmul.f32 %v256, %v328
    %v450 = vmul.f32 %v255, %v332
    %v451 = vmul.f32 %v254, %v336
    %v452 = vmul.f32 %v253, %v340
    %v453 = vmul.f32 %v252, %v344
    %v454 = vmul.f32 %v251, %v348
    %v455 = vmul.f32 %v250, %v352
    %v456 = vmul.f32 %v249, %v356
    %v457 = vmul.f32 %v248, %v360
    %v458 = vmul.f32 %v247, %v364
    %v459 = vmul.f32 %v246, %v368
    %v460 = vmul.f32 %v245, %v372
    %v461 = vmul.f32 %v244, %v376
    %v462 = vmul.f32 %v243, %v380
    %v463 = vmul.f32 %v242, %v384
    %v464 = vmul.f32 %v241, %v388
    %v465 = vmul.f32 %v240, %v392
    %v466 = vmul.f32 %v239, %v396
    %v467 = vmul.f32 %v238, %v400
    %v468 = vmul.f32 %v237, %v404
    %469 = vrot.lane.b32.xlu0 %v138, 16
    %v470 = vpop.permute.xlu0 %469
    %471 = vrot.lane.b32.xlu0 %v139, 16
    %v472 = vpop.permute.xlu0 %471
    %473 = vrot.lane.b32.xlu0 %v140, 16
    %v474 = vpop.permute.xlu0 %473
    %475 = vrot.lane.b32.xlu0 %v141, 16
    %v476 = vpop.permute.xlu0 %475
    %477 = vrot.lane.b32.xlu0 %v142, 16
    %v478 = vpop.permute.xlu0 %477
    %479 = vrot.lane.b32.xlu0 %v143, 16
    %v480 = vpop.permute.xlu0 %479
    %481 = vrot.lane.b32.xlu0 %v144, 16
    %v482 = vpop.permute.xlu0 %481
    %483 = vrot.lane.b32.xlu0 %v145, 16
    %v484 = vpop.permute.xlu0 %483
    %485 = vrot.lane.b32.xlu0 %v146, 16
    %v486 = vpop.permute.xlu0 %485
    %487 = vrot.lane.b32.xlu0 %v147, 16
    %v488 = vpop.permute.xlu0 %487
    %489 = vrot.lane.b32.xlu0 %v148, 16
    %v490 = vpop.permute.xlu0 %489
    %491 = vrot.lane.b32.xlu0 %v149, 16
    %v492 = vpop.permute.xlu0 %491
    %493 = vrot.lane.b32.xlu0 %v150, 16
    %v494 = vpop.permute.xlu0 %493
    %495 = vrot.lane.b32.xlu0 %v151, 16
    %v496 = vpop.permute.xlu0 %495
    %497 = vrot.lane.b32.xlu0 %v152, 16
    %v498 = vpop.permute.xlu0 %497
    %499 = vrot.lane.b32.xlu0 %v153, 16
    %v500 = vpop.permute.xlu0 %499
    %501 = vrot.lane.b32.xlu0 %v154, 16
    %v502 = vpop.permute.xlu0 %501
    %503 = vrot.lane.b32.xlu0 %v155, 16
    %v504 = vpop.permute.xlu0 %503
    %505 = vrot.lane.b32.xlu0 %v156, 16
    %v506 = vpop.permute.xlu0 %505
    %507 = vrot.lane.b32.xlu0 %v157, 16
    %v508 = vpop.permute.xlu0 %507
    %509 = vrot.lane.b32.xlu0 %v158, 16
    %v510 = vpop.permute.xlu0 %509
    %511 = vrot.lane.b32.xlu0 %v159, 16
    %v512 = vpop.permute.xlu0 %511
    %513 = vrot.lane.b32.xlu0 %v160, 16
    %v514 = vpop.permute.xlu0 %513
    %515 = vrot.lane.b32.xlu0 %v161, 16
    %v516 = vpop.permute.xlu0 %515
    %517 = vrot.lane.b32.xlu0 %v162, 16
    %v518 = vpop.permute.xlu0 %517
    %519 = vrot.lane.b32.xlu0 %v163, 16
    %v520 = vpop.permute.xlu0 %519
    %521 = vrot.lane.b32.xlu0 %v164, 16
    %v522 = vpop.permute.xlu0 %521
    %523 = vrot.lane.b32.xlu0 %v165, 16
    %v524 = vpop.permute.xlu0 %523
    %525 = vrot.lane.b32.xlu0 %v166, 16
    %v526 = vpop.permute.xlu0 %525
    %527 = vrot.lane.b32.xlu0 %v167, 16
    %v528 = vpop.permute.xlu0 %527
    %529 = vrot.lane.b32.xlu0 %v168, 16
    %v530 = vpop.permute.xlu0 %529
    %531 = vrot.lane.b32.xlu0 %v169, 16
    %v532 = vpop.permute.xlu0 %531
    %vm533 = vcmp.lt.s32.totalorder %v235, 16
    %v534 = vsel %vm533, %v530, %v532
    %v535 = vsel %vm533, %v528, %v530
    %v536 = vsel %vm533, %v526, %v528
    %v537 = vsel %vm533, %v524, %v526
    %v538 = vsel %vm533, %v522, %v524
    %v539 = vsel %vm533, %v520, %v522
    %v540 = vsel %vm533, %v518, %v520
    %v541 = vsel %vm533, %v516, %v518
    %v542 = vsel %vm533, %v514, %v516
    %v543 = vsel %vm533, %v512, %v514
    %v544 = vsel %vm533, %v510, %v512
    %v545 = vsel %vm533, %v508, %v510
    %v546 = vsel %vm533, %v506, %v508
    %v547 = vsel %vm533, %v504, %v506
    %v548 = vsel %vm533, %v502, %v504
    %v549 = vsel %vm533, %v500, %v502
    %v550 = vsel %vm533, %v498, %v500
    %v551 = vsel %vm533, %v496, %v498
    %v552 = vsel %vm533, %v494, %v496
    %v553 = vsel %vm533, %v492, %v494
    %v554 = vsel %vm533, %v490, %v492
    %v555 = vsel %vm533, %v488, %v490
    %v556 = vsel %vm533, %v486, %v488
    %v557 = vsel %vm533, %v484, %v486
    %v558 = vsel %vm533, %v482, %v484
    %v559 = vsel %vm533, %v480, %v482
    %v560 = vsel %vm533, %v478, %v480
    %v561 = vsel %vm533, %v476, %v478
    %v562 = vsel %vm533, %v474, %v476
    %v563 = vsel %vm533, %v472, %v474
    %v564 = vsel %vm533, %v470, %v472
    %v565 = vsel %vm533, %v532, %v470
    %s566 = scalar_lea.vmem [#allocation2], 32
    %v567 = vld [vmem:[%s566] sm:$0xff]
    %v568 = vld [vmem:[%s566 + $0x8] sm:$0xff]
    %v569 = vld [vmem:[%s566 + $0x10] sm:$0xff]
    %v570 = vld [vmem:[%s566 + $0x18] sm:$0xff]
    %v575 = vlaneseq
    %v576 = vshrl.u32 %v575, 7
    %v577 = vsub.s32 0, %v576
    %v578 = vrot.slane %v567, %v577
    %v579 = vlaneseq
    %v580 = vshrl.u32 %v579, 7
    %v581 = vsub.s32 1, %v580
    %v582 = vrot.slane %v567, %v581
    %v583 = vlaneseq
    %v584 = vshrl.u32 %v583, 7
    %v585 = vsub.s32 2, %v584
    %v586 = vrot.slane %v567, %v585
    %v587 = vlaneseq
    %v588 = vshrl.u32 %v587, 7
    %v589 = vsub.s32 3, %v588
    %v590 = vrot.slane %v567, %v589
    %v591 = vlaneseq
    %v592 = vshrl.u32 %v591, 7
    %v593 = vsub.s32 4, %v592
    %v594 = vrot.slane %v567, %v593
    %v595 = vlaneseq
    %v596 = vshrl.u32 %v595, 7
    %v597 = vsub.s32 5, %v596
    %v598 = vrot.slane %v567, %v597
    %v599 = vlaneseq
    %v600 = vshrl.u32 %v599, 7
    %v601 = vsub.s32 6, %v600
    %v602 = vrot.slane %v567, %v601
    %v603 = vlaneseq
    %v604 = vshrl.u32 %v603, 7
    %v605 = vsub.s32 7, %v604
    %v606 = vrot.slane %v567, %v605
    %v607 = vlaneseq
    %v608 = vshrl.u32 %v607, 7
    %v609 = vsub.s32 0, %v608
    %v610 = vrot.slane %v568, %v609
    %v611 = vlaneseq
    %v612 = vshrl.u32 %v611, 7
    %v613 = vsub.s32 1, %v612
    %v614 = vrot.slane %v568, %v613
    %v615 = vlaneseq
    %v616 = vshrl.u32 %v615, 7
    %v617 = vsub.s32 2, %v616
    %v618 = vrot.slane %v568, %v617
    %v619 = vlaneseq
    %v620 = vshrl.u32 %v619, 7
    %v621 = vsub.s32 3, %v620
    %v622 = vrot.slane %v568, %v621
    %v623 = vlaneseq
    %v624 = vshrl.u32 %v623, 7
    %v625 = vsub.s32 4, %v624
    %v626 = vrot.slane %v568, %v625
    %v627 = vlaneseq
    %v628 = vshrl.u32 %v627, 7
    %v629 = vsub.s32 5, %v628
    %v630 = vrot.slane %v568, %v629
    %v631 = vlaneseq
    %v632 = vshrl.u32 %v631, 7
    %v633 = vsub.s32 6, %v632
    %v634 = vrot.slane %v568, %v633
    %v635 = vlaneseq
    %v636 = vshrl.u32 %v635, 7
    %v637 = vsub.s32 7, %v636
    %v638 = vrot.slane %v568, %v637
    %v639 = vlaneseq
    %v640 = vshrl.u32 %v639, 7
    %v641 = vsub.s32 0, %v640
    %v642 = vrot.slane %v569, %v641
    %v643 = vlaneseq
    %v644 = vshrl.u32 %v643, 7
    %v645 = vsub.s32 1, %v644
    %v646 = vrot.slane %v569, %v645
    %v647 = vlaneseq
    %v648 = vshrl.u32 %v647, 7
    %v649 = vsub.s32 2, %v648
    %v650 = vrot.slane %v569, %v649
    %v651 = vlaneseq
    %v652 = vshrl.u32 %v651, 7
    %v653 = vsub.s32 3, %v652
    %v654 = vrot.slane %v569, %v653
    %v655 = vlaneseq
    %v656 = vshrl.u32 %v655, 7
    %v657 = vsub.s32 4, %v656
    %v658 = vrot.slane %v569, %v657
    %v659 = vlaneseq
    %v660 = vshrl.u32 %v659, 7
    %v661 = vsub.s32 5, %v660
    %v662 = vrot.slane %v569, %v661
    %v663 = vlaneseq
    %v664 = vshrl.u32 %v663, 7
    %v665 = vsub.s32 6, %v664
    %v666 = vrot.slane %v569, %v665
    %v667 = vlaneseq
    %v668 = vshrl.u32 %v667, 7
    %v669 = vsub.s32 7, %v668
    %v670 = vrot.slane %v569, %v669
    %v671 = vlaneseq
    %v672 = vshrl.u32 %v671, 7
    %v673 = vsub.s32 0, %v672
    %v674 = vrot.slane %v570, %v673
    %v675 = vlaneseq
    %v676 = vshrl.u32 %v675, 7
    %v677 = vsub.s32 1, %v676
    %v678 = vrot.slane %v570, %v677
    %v679 = vlaneseq
    %v680 = vshrl.u32 %v679, 7
    %v681 = vsub.s32 2, %v680
    %v682 = vrot.slane %v570, %v681
    %v683 = vlaneseq
    %v684 = vshrl.u32 %v683, 7
    %v685 = vsub.s32 3, %v684
    %v686 = vrot.slane %v570, %v685
    %v687 = vlaneseq
    %v688 = vshrl.u32 %v687, 7
    %v689 = vsub.s32 4, %v688
    %v690 = vrot.slane %v570, %v689
    %v691 = vlaneseq
    %v692 = vshrl.u32 %v691, 7
    %v693 = vsub.s32 5, %v692
    %v694 = vrot.slane %v570, %v693
    %v695 = vlaneseq
    %v696 = vshrl.u32 %v695, 7
    %v697 = vsub.s32 6, %v696
    %v698 = vrot.slane %v570, %v697
    %v699 = vlaneseq
    %v700 = vshrl.u32 %v699, 7
    %v701 = vsub.s32 7, %v700
    %v702 = vrot.slane %v570, %v701
    %v735 = vmul.f32 %v565, %v578
    %v736 = vmul.f32 %v564, %v582
    %v737 = vmul.f32 %v563, %v586
    %v738 = vmul.f32 %v562, %v590
    %v739 = vmul.f32 %v561, %v594
    %v740 = vmul.f32 %v560, %v598
    %v741 = vmul.f32 %v559, %v602
    %v742 = vmul.f32 %v558, %v606
    %v743 = vmul.f32 %v557, %v610
    %v744 = vmul.f32 %v556, %v614
    %v745 = vmul.f32 %v555, %v618
    %v746 = vmul.f32 %v554, %v622
    %v747 = vmul.f32 %v553, %v626
    %v748 = vmul.f32 %v552, %v630
    %v749 = vmul.f32 %v551, %v634
    %v750 = vmul.f32 %v550, %v638
    %v751 = vmul.f32 %v549, %v642
    %v752 = vmul.f32 %v548, %v646
    %v753 = vmul.f32 %v547, %v650
    %v754 = vmul.f32 %v546, %v654
    %v755 = vmul.f32 %v545, %v658
    %v756 = vmul.f32 %v544, %v662
    %v757 = vmul.f32 %v543, %v666
    %v758 = vmul.f32 %v542, %v670
    %v759 = vmul.f32 %v541, %v674
    %v760 = vmul.f32 %v540, %v678
    %v761 = vmul.f32 %v539, %v682
    %v762 = vmul.f32 %v538, %v686
    %v763 = vmul.f32 %v537, %v690
    %v764 = vmul.f32 %v536, %v694
    %v765 = vmul.f32 %v535, %v698
    %v766 = vmul.f32 %v534, %v702
    %767 = vrot.lane.b32.xlu0 %v138, 15
    %v768 = vpop.permute.xlu0 %767
    %769 = vrot.lane.b32.xlu0 %v139, 15
    %v770 = vpop.permute.xlu0 %769
    %771 = vrot.lane.b32.xlu0 %v140, 15
    %v772 = vpop.permute.xlu0 %771
    %773 = vrot.lane.b32.xlu0 %v141, 15
    %v774 = vpop.permute.xlu0 %773
    %775 = vrot.lane.b32.xlu0 %v142, 15
    %v776 = vpop.permute.xlu0 %775
    %777 = vrot.lane.b32.xlu0 %v143, 15
    %v778 = vpop.permute.xlu0 %777
    %779 = vrot.lane.b32.xlu0 %v144, 15
    %v780 = vpop.permute.xlu0 %779
    %781 = vrot.lane.b32.xlu0 %v145, 15
    %v782 = vpop.permute.xlu0 %781
    %783 = vrot.lane.b32.xlu0 %v146, 15
    %v784 = vpop.permute.xlu0 %783
    %785 = vrot.lane.b32.xlu0 %v147, 15
    %v786 = vpop.permute.xlu0 %785
    %787 = vrot.lane.b32.xlu0 %v148, 15
    %v788 = vpop.permute.xlu0 %787
    %789 = vrot.lane.b32.xlu0 %v149, 15
    %v790 = vpop.permute.xlu0 %789
    %791 = vrot.lane.b32.xlu0 %v150, 15
    %v792 = vpop.permute.xlu0 %791
    %793 = vrot.lane.b32.xlu0 %v151, 15
    %v794 = vpop.permute.xlu0 %793
    %795 = vrot.lane.b32.xlu0 %v152, 15
    %v796 = vpop.permute.xlu0 %795
    %797 = vrot.lane.b32.xlu0 %v153, 15
    %v798 = vpop.permute.xlu0 %797
    %799 = vrot.lane.b32.xlu0 %v154, 15
    %v800 = vpop.permute.xlu0 %799
    %801 = vrot.lane.b32.xlu0 %v155, 15
    %v802 = vpop.permute.xlu0 %801
    %803 = vrot.lane.b32.xlu0 %v156, 15
    %v804 = vpop.permute.xlu0 %803
    %805 = vrot.lane.b32.xlu0 %v157, 15
    %v806 = vpop.permute.xlu0 %805
    %807 = vrot.lane.b32.xlu0 %v158, 15
    %v808 = vpop.permute.xlu0 %807
    %809 = vrot.lane.b32.xlu0 %v159, 15
    %v810 = vpop.permute.xlu0 %809
    %811 = vrot.lane.b32.xlu0 %v160, 15
    %v812 = vpop.permute.xlu0 %811
    %813 = vrot.lane.b32.xlu0 %v161, 15
    %v814 = vpop.permute.xlu0 %813
    %815 = vrot.lane.b32.xlu0 %v162, 15
    %v816 = vpop.permute.xlu0 %815
    %817 = vrot.lane.b32.xlu0 %v163, 15
    %v818 = vpop.permute.xlu0 %817
    %819 = vrot.lane.b32.xlu0 %v164, 15
    %v820 = vpop.permute.xlu0 %819
    %821 = vrot.lane.b32.xlu0 %v165, 15
    %v822 = vpop.permute.xlu0 %821
    %823 = vrot.lane.b32.xlu0 %v166, 15
    %v824 = vpop.permute.xlu0 %823
    %825 = vrot.lane.b32.xlu0 %v167, 15
    %v826 = vpop.permute.xlu0 %825
    %827 = vrot.lane.b32.xlu0 %v168, 15
    %v828 = vpop.permute.xlu0 %827
    %829 = vrot.lane.b32.xlu0 %v169, 15
    %v830 = vpop.permute.xlu0 %829
    %vm831 = vcmp.lt.s32.totalorder %v235, 15
    %v832 = vsel %vm831, %v828, %v830
    %v833 = vsel %vm831, %v826, %v828
    %v834 = vsel %vm831, %v824, %v826
    %v835 = vsel %vm831, %v822, %v824
    %v836 = vsel %vm831, %v820, %v822
    %v837 = vsel %vm831, %v818, %v820
    %v838 = vsel %vm831, %v816, %v818
    %v839 = vsel %vm831, %v814, %v816
    %v840 = vsel %vm831, %v812, %v814
    %v841 = vsel %vm831, %v810, %v812
    %v842 = vsel %vm831, %v808, %v810
    %v843 = vsel %vm831, %v806, %v808
    %v844 = vsel %vm831, %v804, %v806
    %v845 = vsel %vm831, %v802, %v804
    %v846 = vsel %vm831, %v800, %v802
    %v847 = vsel %vm831, %v798, %v800
    %v848 = vsel %vm831, %v796, %v798
    %v849 = vsel %vm831, %v794, %v796
    %v850 = vsel %vm831, %v792, %v794
    %v851 = vsel %vm831, %v790, %v792
    %v852 = vsel %vm831, %v788, %v790
    %v853 = vsel %vm831, %v786, %v788
    %v854 = vsel %vm831, %v784, %v786
    %v855 = vsel %vm831, %v782, %v784
    %v856 = vsel %vm831, %v780, %v782
    %v857 = vsel %vm831, %v778, %v780
    %v858 = vsel %vm831, %v776, %v778
    %v859 = vsel %vm831, %v774, %v776
    %v860 = vsel %vm831, %v772, %v774
    %v861 = vsel %vm831, %v770, %v772
    %v862 = vsel %vm831, %v768, %v770
    %v863 = vsel %vm831, %v830, %v768
    %s864 = scalar_lea.vmem [#allocation2], 64
    %v865 = vld [vmem:[%s864] sm:$0xff]
    %v866 = vld [vmem:[%s864 + $0x8] sm:$0xff]
    %v867 = vld [vmem:[%s864 + $0x10] sm:$0xff]
    %v868 = vld [vmem:[%s864 + $0x18] sm:$0xff]
    %v873 = vlaneseq
    %v874 = vshrl.u32 %v873, 7
    %v875 = vsub.s32 0, %v874
    %v876 = vrot.slane %v865, %v875
    %v877 = vlaneseq
    %v878 = vshrl.u32 %v877, 7
    %v879 = vsub.s32 1, %v878
    %v880 = vrot.slane %v865, %v879
    %v881 = vlaneseq
    %v882 = vshrl.u32 %v881, 7
    %v883 = vsub.s32 2, %v882
    %v884 = vrot.slane %v865, %v883
    %v885 = vlaneseq
    %v886 = vshrl.u32 %v885, 7
    %v887 = vsub.s32 3, %v886
    %v888 = vrot.slane %v865, %v887
    %v889 = vlaneseq
    %v890 = vshrl.u32 %v889, 7
    %v891 = vsub.s32 4, %v890
    %v892 = vrot.slane %v865, %v891
    %v893 = vlaneseq
    %v894 = vshrl.u32 %v893, 7
    %v895 = vsub.s32 5, %v894
    %v896 = vrot.slane %v865, %v895
    %v897 = vlaneseq
    %v898 = vshrl.u32 %v897, 7
    %v899 = vsub.s32 6, %v898
    %v900 = vrot.slane %v865, %v899
    %v901 = vlaneseq
    %v902 = vshrl.u32 %v901, 7
    %v903 = vsub.s32 7, %v902
    %v904 = vrot.slane %v865, %v903
    %v905 = vlaneseq
    %v906 = vshrl.u32 %v905, 7
    %v907 = vsub.s32 0, %v906
    %v908 = vrot.slane %v866, %v907
    %v909 = vlaneseq
    %v910 = vshrl.u32 %v909, 7
    %v911 = vsub.s32 1, %v910
    %v912 = vrot.slane %v866, %v911
    %v913 = vlaneseq
    %v914 = vshrl.u32 %v913, 7
    %v915 = vsub.s32 2, %v914
    %v916 = vrot.slane %v866, %v915
    %v917 = vlaneseq
    %v918 = vshrl.u32 %v917, 7
    %v919 = vsub.s32 3, %v918
    %v920 = vrot.slane %v866, %v919
    %v921 = vlaneseq
    %v922 = vshrl.u32 %v921, 7
    %v923 = vsub.s32 4, %v922
    %v924 = vrot.slane %v866, %v923
    %v925 = vlaneseq
    %v926 = vshrl.u32 %v925, 7
    %v927 = vsub.s32 5, %v926
    %v928 = vrot.slane %v866, %v927
    %v929 = vlaneseq
    %v930 = vshrl.u32 %v929, 7
    %v931 = vsub.s32 6, %v930
    %v932 = vrot.slane %v866, %v931
    %v933 = vlaneseq
    %v934 = vshrl.u32 %v933, 7
    %v935 = vsub.s32 7, %v934
    %v936 = vrot.slane %v866, %v935
    %v937 = vlaneseq
    %v938 = vshrl.u32 %v937, 7
    %v939 = vsub.s32 0, %v938
    %v940 = vrot.slane %v867, %v939
    %v941 = vlaneseq
    %v942 = vshrl.u32 %v941, 7
    %v943 = vsub.s32 1, %v942
    %v944 = vrot.slane %v867, %v943
    %v945 = vlaneseq
    %v946 = vshrl.u32 %v945, 7
    %v947 = vsub.s32 2, %v946
    %v948 = vrot.slane %v867, %v947
    %v949 = vlaneseq
    %v950 = vshrl.u32 %v949, 7
    %v951 = vsub.s32 3, %v950
    %v952 = vrot.slane %v867, %v951
    %v953 = vlaneseq
    %v954 = vshrl.u32 %v953, 7
    %v955 = vsub.s32 4, %v954
    %v956 = vrot.slane %v867, %v955
    %v957 = vlaneseq
    %v958 = vshrl.u32 %v957, 7
    %v959 = vsub.s32 5, %v958
    %v960 = vrot.slane %v867, %v959
    %v961 = vlaneseq
    %v962 = vshrl.u32 %v961, 7
    %v963 = vsub.s32 6, %v962
    %v964 = vrot.slane %v867, %v963
    %v965 = vlaneseq
    %v966 = vshrl.u32 %v965, 7
    %v967 = vsub.s32 7, %v966
    %v968 = vrot.slane %v867, %v967
    %v969 = vlaneseq
    %v970 = vshrl.u32 %v969, 7
    %v971 = vsub.s32 0, %v970
    %v972 = vrot.slane %v868, %v971
    %v973 = vlaneseq
    %v974 = vshrl.u32 %v973, 7
    %v975 = vsub.s32 1, %v974
    %v976 = vrot.slane %v868, %v975
    %v977 = vlaneseq
    %v978 = vshrl.u32 %v977, 7
    %v979 = vsub.s32 2, %v978
    %v980 = vrot.slane %v868, %v979
    %v981 = vlaneseq
    %v982 = vshrl.u32 %v981, 7
    %v983 = vsub.s32 3, %v982
    %v984 = vrot.slane %v868, %v983
    %v985 = vlaneseq
    %v986 = vshrl.u32 %v985, 7
    %v987 = vsub.s32 4, %v986
    %v988 = vrot.slane %v868, %v987
    %v989 = vlaneseq
    %v990 = vshrl.u32 %v989, 7
    %v991 = vsub.s32 5, %v990
    %v992 = vrot.slane %v868, %v991
    %v993 = vlaneseq
    %v994 = vshrl.u32 %v993, 7
    %v995 = vsub.s32 6, %v994
    %v996 = vrot.slane %v868, %v995
    %v997 = vlaneseq
    %v998 = vshrl.u32 %v997, 7
    %v999 = vsub.s32 7, %v998
    %v1000 = vrot.slane %v868, %v999
    %v1033 = vmul.f32 %v863, %v876
    %v1034 = vmul.f32 %v862, %v880
    %v1035 = vmul.f32 %v861, %v884
    %v1036 = vmul.f32 %v860, %v888
    %v1037 = vmul.f32 %v859, %v892
    %v1038 = vmul.f32 %v858, %v896
    %v1039 = vmul.f32 %v857, %v900
    %v1040 = vmul.f32 %v856, %v904
    %v1041 = vmul.f32 %v855, %v908
    %v1042 = vmul.f32 %v854, %v912
    %v1043 = vmul.f32 %v853, %v916
    %v1044 = vmul.f32 %v852, %v920
    %v1045 = vmul.f32 %v851, %v924
    %v1046 = vmul.f32 %v850, %v928
    %v1047 = vmul.f32 %v849, %v932
    %v1048 = vmul.f32 %v848, %v936
    %v1049 = vmul.f32 %v847, %v940
    %v1050 = vmul.f32 %v846, %v944
    %v1051 = vmul.f32 %v845, %v948
    %v1052 = vmul.f32 %v844, %v952
    %v1053 = vmul.f32 %v843, %v956
    %v1054 = vmul.f32 %v842, %v960
    %v1055 = vmul.f32 %v841, %v964
    %v1056 = vmul.f32 %v840, %v968
    %v1057 = vmul.f32 %v839, %v972
    %v1058 = vmul.f32 %v838, %v976
    %v1059 = vmul.f32 %v837, %v980
    %v1060 = vmul.f32 %v836, %v984
    %v1061 = vmul.f32 %v835, %v988
    %v1062 = vmul.f32 %v834, %v992
    %v1063 = vmul.f32 %v833, %v996
    %v1064 = vmul.f32 %v832, %v1000
    %1065 = vrot.lane.b32.xlu0 %v138, 1
    %v1066 = vpop.permute.xlu0 %1065
    %1067 = vrot.lane.b32.xlu0 %v139, 1
    %v1068 = vpop.permute.xlu0 %1067
    %1069 = vrot.lane.b32.xlu0 %v140, 1
    %v1070 = vpop.permute.xlu0 %1069
    %1071 = vrot.lane.b32.xlu0 %v141, 1
    %v1072 = vpop.permute.xlu0 %1071
    %1073 = vrot.lane.b32.xlu0 %v142, 1
    %v1074 = vpop.permute.xlu0 %1073
    %1075 = vrot.lane.b32.xlu0 %v143, 1
    %v1076 = vpop.permute.xlu0 %1075
    %1077 = vrot.lane.b32.xlu0 %v144, 1
    %v1078 = vpop.permute.xlu0 %1077
    %1079 = vrot.lane.b32.xlu0 %v145, 1
    %v1080 = vpop.permute.xlu0 %1079
    %1081 = vrot.lane.b32.xlu0 %v146, 1
    %v1082 = vpop.permute.xlu0 %1081
    %1083 = vrot.lane.b32.xlu0 %v147, 1
    %v1084 = vpop.permute.xlu0 %1083
    %1085 = vrot.lane.b32.xlu0 %v148, 1
    %v1086 = vpop.permute.xlu0 %1085
    %1087 = vrot.lane.b32.xlu0 %v149, 1
    %v1088 = vpop.permute.xlu0 %1087
    %1089 = vrot.lane.b32.xlu0 %v150, 1
    %v1090 = vpop.permute.xlu0 %1089
    %1091 = vrot.lane.b32.xlu0 %v151, 1
    %v1092 = vpop.permute.xlu0 %1091
    %1093 = vrot.lane.b32.xlu0 %v152, 1
    %v1094 = vpop.permute.xlu0 %1093
    %1095 = vrot.lane.b32.xlu0 %v153, 1
    %v1096 = vpop.permute.xlu0 %1095
    %1097 = vrot.lane.b32.xlu0 %v154, 1
    %v1098 = vpop.permute.xlu0 %1097
    %1099 = vrot.lane.b32.xlu0 %v155, 1
    %v1100 = vpop.permute.xlu0 %1099
    %1101 = vrot.lane.b32.xlu0 %v156, 1
    %v1102 = vpop.permute.xlu0 %1101
    %1103 = vrot.lane.b32.xlu0 %v157, 1
    %v1104 = vpop.permute.xlu0 %1103
    %1105 = vrot.lane.b32.xlu0 %v158, 1
    %v1106 = vpop.permute.xlu0 %1105
    %1107 = vrot.lane.b32.xlu0 %v159, 1
    %v1108 = vpop.permute.xlu0 %1107
    %1109 = vrot.lane.b32.xlu0 %v160, 1
    %v1110 = vpop.permute.xlu0 %1109
    %1111 = vrot.lane.b32.xlu0 %v161, 1
    %v1112 = vpop.permute.xlu0 %1111
    %1113 = vrot.lane.b32.xlu0 %v162, 1
    %v1114 = vpop.permute.xlu0 %1113
    %1115 = vrot.lane.b32.xlu0 %v163, 1
    %v1116 = vpop.permute.xlu0 %1115
    %1117 = vrot.lane.b32.xlu0 %v164, 1
    %v1118 = vpop.permute.xlu0 %1117
    %1119 = vrot.lane.b32.xlu0 %v165, 1
    %v1120 = vpop.permute.xlu0 %1119
    %1121 = vrot.lane.b32.xlu0 %v166, 1
    %v1122 = vpop.permute.xlu0 %1121
    %1123 = vrot.lane.b32.xlu0 %v167, 1
    %v1124 = vpop.permute.xlu0 %1123
    %1125 = vrot.lane.b32.xlu0 %v168, 1
    %v1126 = vpop.permute.xlu0 %1125
    %1127 = vrot.lane.b32.xlu0 %v169, 1
    %v1128 = vpop.permute.xlu0 %1127
    %vm1129 = vcmp.lt.s32.totalorder %v235, 1
    %v1130 = vsel %vm1129, %v1126, %v1128
    %v1131 = vsel %vm1129, %v1124, %v1126
    %v1132 = vsel %vm1129, %v1122, %v1124
    %v1133 = vsel %vm1129, %v1120, %v1122
    %v1134 = vsel %vm1129, %v1118, %v1120
    %v1135 = vsel %vm1129, %v1116, %v1118
    %v1136 = vsel %vm1129, %v1114, %v1116
    %v1137 = vsel %vm1129, %v1112, %v1114
    %v1138 = vsel %vm1129, %v1110, %v1112
    %v1139 = vsel %vm1129, %v1108, %v1110
    %v1140 = vsel %vm1129, %v1106, %v1108
    %v1141 = vsel %vm1129, %v1104, %v1106
    %v1142 = vsel %vm1129, %v1102, %v1104
    %v1143 = vsel %vm1129, %v1100, %v1102
    %v1144 = vsel %vm1129, %v1098, %v1100
    %v1145 = vsel %vm1129, %v1096, %v1098
    %v1146 = vsel %vm1129, %v1094, %v1096
    %v1147 = vsel %vm1129, %v1092, %v1094
    %v1148 = vsel %vm1129, %v1090, %v1092
    %v1149 = vsel %vm1129, %v1088, %v1090
    %v1150 = vsel %vm1129, %v1086, %v1088
    %v1151 = vsel %vm1129, %v1084, %v1086
    %v1152 = vsel %vm1129, %v1082, %v1084
    %v1153 = vsel %vm1129, %v1080, %v1082
    %v1154 = vsel %vm1129, %v1078, %v1080
    %v1155 = vsel %vm1129, %v1076, %v1078
    %v1156 = vsel %vm1129, %v1074, %v1076
    %v1157 = vsel %vm1129, %v1072, %v1074
    %v1158 = vsel %vm1129, %v1070, %v1072
    %v1159 = vsel %vm1129, %v1068, %v1070
    %v1160 = vsel %vm1129, %v1066, %v1068
    %v1161 = vsel %vm1129, %v1128, %v1066
    %s1162 = scalar_lea.vmem [#allocation2], 96
    %v1163 = vld [vmem:[%s1162] sm:$0xff]
    %v1164 = vld [vmem:[%s1162 + $0x8] sm:$0xff]
    %v1165 = vld [vmem:[%s1162 + $0x10] sm:$0xff]
    %v1166 = vld [vmem:[%s1162 + $0x18] sm:$0xff]
    %v1171 = vlaneseq
    %v1172 = vshrl.u32 %v1171, 7
    %v1173 = vsub.s32 0, %v1172
    %v1174 = vrot.slane %v1163, %v1173
    %v1175 = vlaneseq
    %v1176 = vshrl.u32 %v1175, 7
    %v1177 = vsub.s32 1, %v1176
    %v1178 = vrot.slane %v1163, %v1177
    %v1179 = vlaneseq
    %v1180 = vshrl.u32 %v1179, 7
    %v1181 = vsub.s32 2, %v1180
    %v1182 = vrot.slane %v1163, %v1181
    %v1183 = vlaneseq
    %v1184 = vshrl.u32 %v1183, 7
    %v1185 = vsub.s32 3, %v1184
    %v1186 = vrot.slane %v1163, %v1185
    %v1187 = vlaneseq
    %v1188 = vshrl.u32 %v1187, 7
    %v1189 = vsub.s32 4, %v1188
    %v1190 = vrot.slane %v1163, %v1189
    %v1191 = vlaneseq
    %v1192 = vshrl.u32 %v1191, 7
    %v1193 = vsub.s32 5, %v1192
    %v1194 = vrot.slane %v1163, %v1193
    %v1195 = vlaneseq
    %v1196 = vshrl.u32 %v1195, 7
    %v1197 = vsub.s32 6, %v1196
    %v1198 = vrot.slane %v1163, %v1197
    %v1199 = vlaneseq
    %v1200 = vshrl.u32 %v1199, 7
    %v1201 = vsub.s32 7, %v1200
    %v1202 = vrot.slane %v1163, %v1201
    %v1203 = vlaneseq
    %v1204 = vshrl.u32 %v1203, 7
    %v1205 = vsub.s32 0, %v1204
    %v1206 = vrot.slane %v1164, %v1205
    %v1207 = vlaneseq
    %v1208 = vshrl.u32 %v1207, 7
    %v1209 = vsub.s32 1, %v1208
    %v1210 = vrot.slane %v1164, %v1209
    %v1211 = vlaneseq
    %v1212 = vshrl.u32 %v1211, 7
    %v1213 = vsub.s32 2, %v1212
    %v1214 = vrot.slane %v1164, %v1213
    %v1215 = vlaneseq
    %v1216 = vshrl.u32 %v1215, 7
    %v1217 = vsub.s32 3, %v1216
    %v1218 = vrot.slane %v1164, %v1217
    %v1219 = vlaneseq
    %v1220 = vshrl.u32 %v1219, 7
    %v1221 = vsub.s32 4, %v1220
    %v1222 = vrot.slane %v1164, %v1221
    %v1223 = vlaneseq
    %v1224 = vshrl.u32 %v1223, 7
    %v1225 = vsub.s32 5, %v1224
    %v1226 = vrot.slane %v1164, %v1225
    %v1227 = vlaneseq
    %v1228 = vshrl.u32 %v1227, 7
    %v1229 = vsub.s32 6, %v1228
    %v1230 = vrot.slane %v1164, %v1229
    %v1231 = vlaneseq
    %v1232 = vshrl.u32 %v1231, 7
    %v1233 = vsub.s32 7, %v1232
    %v1234 = vrot.slane %v1164, %v1233
    %v1235 = vlaneseq
    %v1236 = vshrl.u32 %v1235, 7
    %v1237 = vsub.s32 0, %v1236
    %v1238 = vrot.slane %v1165, %v1237
    %v1239 = vlaneseq
    %v1240 = vshrl.u32 %v1239, 7
    %v1241 = vsub.s32 1, %v1240
    %v1242 = vrot.slane %v1165, %v1241
    %v1243 = vlaneseq
    %v1244 = vshrl.u32 %v1243, 7
    %v1245 = vsub.s32 2, %v1244
    %v1246 = vrot.slane %v1165, %v1245
    %v1247 = vlaneseq
    %v1248 = vshrl.u32 %v1247, 7
    %v1249 = vsub.s32 3, %v1248
    %v1250 = vrot.slane %v1165, %v1249
    %v1251 = vlaneseq
    %v1252 = vshrl.u32 %v1251, 7
    %v1253 = vsub.s32 4, %v1252
    %v1254 = vrot.slane %v1165, %v1253
    %v1255 = vlaneseq
    %v1256 = vshrl.u32 %v1255, 7
    %v1257 = vsub.s32 5, %v1256
    %v1258 = vrot.slane %v1165, %v1257
    %v1259 = vlaneseq
    %v1260 = vshrl.u32 %v1259, 7
    %v1261 = vsub.s32 6, %v1260
    %v1262 = vrot.slane %v1165, %v1261
    %v1263 = vlaneseq
    %v1264 = vshrl.u32 %v1263, 7
    %v1265 = vsub.s32 7, %v1264
    %v1266 = vrot.slane %v1165, %v1265
    %v1267 = vlaneseq
    %v1268 = vshrl.u32 %v1267, 7
    %v1269 = vsub.s32 0, %v1268
    %v1270 = vrot.slane %v1166, %v1269
    %v1271 = vlaneseq
    %v1272 = vshrl.u32 %v1271, 7
    %v1273 = vsub.s32 1, %v1272
    %v1274 = vrot.slane %v1166, %v1273
    %v1275 = vlaneseq
    %v1276 = vshrl.u32 %v1275, 7
    %v1277 = vsub.s32 2, %v1276
    %v1278 = vrot.slane %v1166, %v1277
    %v1279 = vlaneseq
    %v1280 = vshrl.u32 %v1279, 7
    %v1281 = vsub.s32 3, %v1280
    %v1282 = vrot.slane %v1166, %v1281
    %v1283 = vlaneseq
    %v1284 = vshrl.u32 %v1283, 7
    %v1285 = vsub.s32 4, %v1284
    %v1286 = vrot.slane %v1166, %v1285
    %v1287 = vlaneseq
    %v1288 = vshrl.u32 %v1287, 7
    %v1289 = vsub.s32 5, %v1288
    %v1290 = vrot.slane %v1166, %v1289
    %v1291 = vlaneseq
    %v1292 = vshrl.u32 %v1291, 7
    %v1293 = vsub.s32 6, %v1292
    %v1294 = vrot.slane %v1166, %v1293
    %v1295 = vlaneseq
    %v1296 = vshrl.u32 %v1295, 7
    %v1297 = vsub.s32 7, %v1296
    %v1298 = vrot.slane %v1166, %v1297
    %v1331 = vmul.f32 %v1161, %v1174
    %v1332 = vmul.f32 %v1160, %v1178
    %v1333 = vmul.f32 %v1159, %v1182
    %v1334 = vmul.f32 %v1158, %v1186
    %v1335 = vmul.f32 %v1157, %v1190
    %v1336 = vmul.f32 %v1156, %v1194
    %v1337 = vmul.f32 %v1155, %v1198
    %v1338 = vmul.f32 %v1154, %v1202
    %v1339 = vmul.f32 %v1153, %v1206
    %v1340 = vmul.f32 %v1152, %v1210
    %v1341 = vmul.f32 %v1151, %v1214
    %v1342 = vmul.f32 %v1150, %v1218
    %v1343 = vmul.f32 %v1149, %v1222
    %v1344 = vmul.f32 %v1148, %v1226
    %v1345 = vmul.f32 %v1147, %v1230
    %v1346 = vmul.f32 %v1146, %v1234
    %v1347 = vmul.f32 %v1145, %v1238
    %v1348 = vmul.f32 %v1144, %v1242
    %v1349 = vmul.f32 %v1143, %v1246
    %v1350 = vmul.f32 %v1142, %v1250
    %v1351 = vmul.f32 %v1141, %v1254
    %v1352 = vmul.f32 %v1140, %v1258
    %v1353 = vmul.f32 %v1139, %v1262
    %v1354 = vmul.f32 %v1138, %v1266
    %v1355 = vmul.f32 %v1137, %v1270
    %v1356 = vmul.f32 %v1136, %v1274
    %v1357 = vmul.f32 %v1135, %v1278
    %v1358 = vmul.f32 %v1134, %v1282
    %v1359 = vmul.f32 %v1133, %v1286
    %v1360 = vmul.f32 %v1132, %v1290
    %v1361 = vmul.f32 %v1131, %v1294
    %v1362 = vmul.f32 %v1130, %v1298
    %1363 = vrot.lane.b32.xlu0 %v138, 127
    %v1364 = vpop.permute.xlu0 %1363
    %1365 = vrot.lane.b32.xlu0 %v139, 127
    %v1366 = vpop.permute.xlu0 %1365
    %1367 = vrot.lane.b32.xlu0 %v140, 127
    %v1368 = vpop.permute.xlu0 %1367
    %1369 = vrot.lane.b32.xlu0 %v141, 127
    %v1370 = vpop.permute.xlu0 %1369
    %1371 = vrot.lane.b32.xlu0 %v142, 127
    %v1372 = vpop.permute.xlu0 %1371
    %1373 = vrot.lane.b32.xlu0 %v143, 127
    %v1374 = vpop.permute.xlu0 %1373
    %1375 = vrot.lane.b32.xlu0 %v144, 127
    %v1376 = vpop.permute.xlu0 %1375
    %1377 = vrot.lane.b32.xlu0 %v145, 127
    %v1378 = vpop.permute.xlu0 %1377
    %1379 = vrot.lane.b32.xlu0 %v146, 127
    %v1380 = vpop.permute.xlu0 %1379
    %1381 = vrot.lane.b32.xlu0 %v147, 127
    %v1382 = vpop.permute.xlu0 %1381
    %1383 = vrot.lane.b32.xlu0 %v148, 127
    %v1384 = vpop.permute.xlu0 %1383
    %1385 = vrot.lane.b32.xlu0 %v149, 127
    %v1386 = vpop.permute.xlu0 %1385
    %1387 = vrot.lane.b32.xlu0 %v150, 127
    %v1388 = vpop.permute.xlu0 %1387
    %1389 = vrot.lane.b32.xlu0 %v151, 127
    %v1390 = vpop.permute.xlu0 %1389
    %1391 = vrot.lane.b32.xlu0 %v152, 127
    %v1392 = vpop.permute.xlu0 %1391
    %1393 = vrot.lane.b32.xlu0 %v153, 127
    %v1394 = vpop.permute.xlu0 %1393
    %1395 = vrot.lane.b32.xlu0 %v154, 127
    %v1396 = vpop.permute.xlu0 %1395
    %1397 = vrot.lane.b32.xlu0 %v155, 127
    %v1398 = vpop.permute.xlu0 %1397
    %1399 = vrot.lane.b32.xlu0 %v156, 127
    %v1400 = vpop.permute.xlu0 %1399
    %1401 = vrot.lane.b32.xlu0 %v157, 127
    %v1402 = vpop.permute.xlu0 %1401
    %1403 = vrot.lane.b32.xlu0 %v158, 127
    %v1404 = vpop.permute.xlu0 %1403
    %1405 = vrot.lane.b32.xlu0 %v159, 127
    %v1406 = vpop.permute.xlu0 %1405
    %1407 = vrot.lane.b32.xlu0 %v160, 127
    %v1408 = vpop.permute.xlu0 %1407
    %1409 = vrot.lane.b32.xlu0 %v161, 127
    %v1410 = vpop.permute.xlu0 %1409
    %1411 = vrot.lane.b32.xlu0 %v162, 127
    %v1412 = vpop.permute.xlu0 %1411
    %1413 = vrot.lane.b32.xlu0 %v163, 127
    %v1414 = vpop.permute.xlu0 %1413
    %1415 = vrot.lane.b32.xlu0 %v164, 127
    %v1416 = vpop.permute.xlu0 %1415
    %1417 = vrot.lane.b32.xlu0 %v165, 127
    %v1418 = vpop.permute.xlu0 %1417
    %1419 = vrot.lane.b32.xlu0 %v166, 127
    %v1420 = vpop.permute.xlu0 %1419
    %1421 = vrot.lane.b32.xlu0 %v167, 127
    %v1422 = vpop.permute.xlu0 %1421
    %1423 = vrot.lane.b32.xlu0 %v168, 127
    %v1424 = vpop.permute.xlu0 %1423
    %1425 = vrot.lane.b32.xlu0 %v169, 127
    %v1426 = vpop.permute.xlu0 %1425
    %vm1427 = vcmp.lt.s32.totalorder %v235, 127
    %v1428 = vsel %vm1427, %v1424, %v1426
    %v1429 = vsel %vm1427, %v1422, %v1424
    %v1430 = vsel %vm1427, %v1420, %v1422
    %v1431 = vsel %vm1427, %v1418, %v1420
    %v1432 = vsel %vm1427, %v1416, %v1418
    %v1433 = vsel %vm1427, %v1414, %v1416
    %v1434 = vsel %vm1427, %v1412, %v1414
    %v1435 = vsel %vm1427, %v1410, %v1412
    %v1436 = vsel %vm1427, %v1408, %v1410
    %v1437 = vsel %vm1427, %v1406, %v1408
    %v1438 = vsel %vm1427, %v1404, %v1406
    %v1439 = vsel %vm1427, %v1402, %v1404
    %v1440 = vsel %vm1427, %v1400, %v1402
    %v1441 = vsel %vm1427, %v1398, %v1400
    %v1442 = vsel %vm1427, %v1396, %v1398
    %v1443 = vsel %vm1427, %v1394, %v1396
    %v1444 = vsel %vm1427, %v1392, %v1394
    %v1445 = vsel %vm1427, %v1390, %v1392
    %v1446 = vsel %vm1427, %v1388, %v1390
    %v1447 = vsel %vm1427, %v1386, %v1388
    %v1448 = vsel %vm1427, %v1384, %v1386
    %v1449 = vsel %vm1427, %v1382, %v1384
    %v1450 = vsel %vm1427, %v1380, %v1382
    %v1451 = vsel %vm1427, %v1378, %v1380
    %v1452 = vsel %vm1427, %v1376, %v1378
    %v1453 = vsel %vm1427, %v1374, %v1376
    %v1454 = vsel %vm1427, %v1372, %v1374
    %v1455 = vsel %vm1427, %v1370, %v1372
    %v1456 = vsel %vm1427, %v1368, %v1370
    %v1457 = vsel %vm1427, %v1366, %v1368
    %v1458 = vsel %vm1427, %v1364, %v1366
    %v1459 = vsel %vm1427, %v1426, %v1364
    %s1460 = scalar_lea.vmem [#allocation2], 160
    %v1461 = vld [vmem:[%s1460] sm:$0xff]
    %v1462 = vld [vmem:[%s1460 + $0x8] sm:$0xff]
    %v1463 = vld [vmem:[%s1460 + $0x10] sm:$0xff]
    %v1464 = vld [vmem:[%s1460 + $0x18] sm:$0xff]
    %v1469 = vlaneseq
    %v1470 = vshrl.u32 %v1469, 7
    %v1471 = vsub.s32 0, %v1470
    %v1472 = vrot.slane %v1461, %v1471
    %v1473 = vlaneseq
    %v1474 = vshrl.u32 %v1473, 7
    %v1475 = vsub.s32 1, %v1474
    %v1476 = vrot.slane %v1461, %v1475
    %v1477 = vlaneseq
    %v1478 = vshrl.u32 %v1477, 7
    %v1479 = vsub.s32 2, %v1478
    %v1480 = vrot.slane %v1461, %v1479
    %v1481 = vlaneseq
    %v1482 = vshrl.u32 %v1481, 7
    %v1483 = vsub.s32 3, %v1482
    %v1484 = vrot.slane %v1461, %v1483
    %v1485 = vlaneseq
    %v1486 = vshrl.u32 %v1485, 7
    %v1487 = vsub.s32 4, %v1486
    %v1488 = vrot.slane %v1461, %v1487
    %v1489 = vlaneseq
    %v1490 = vshrl.u32 %v1489, 7
    %v1491 = vsub.s32 5, %v1490
    %v1492 = vrot.slane %v1461, %v1491
    %v1493 = vlaneseq
    %v1494 = vshrl.u32 %v1493, 7
    %v1495 = vsub.s32 6, %v1494
    %v1496 = vrot.slane %v1461, %v1495
    %v1497 = vlaneseq
    %v1498 = vshrl.u32 %v1497, 7
    %v1499 = vsub.s32 7, %v1498
    %v1500 = vrot.slane %v1461, %v1499
    %v1501 = vlaneseq
    %v1502 = vshrl.u32 %v1501, 7
    %v1503 = vsub.s32 0, %v1502
    %v1504 = vrot.slane %v1462, %v1503
    %v1505 = vlaneseq
    %v1506 = vshrl.u32 %v1505, 7
    %v1507 = vsub.s32 1, %v1506
    %v1508 = vrot.slane %v1462, %v1507
    %v1509 = vlaneseq
    %v1510 = vshrl.u32 %v1509, 7
    %v1511 = vsub.s32 2, %v1510
    %v1512 = vrot.slane %v1462, %v1511
    %v1513 = vlaneseq
    %v1514 = vshrl.u32 %v1513, 7
    %v1515 = vsub.s32 3, %v1514
    %v1516 = vrot.slane %v1462, %v1515
    %v1517 = vlaneseq
    %v1518 = vshrl.u32 %v1517, 7
    %v1519 = vsub.s32 4, %v1518
    %v1520 = vrot.slane %v1462, %v1519
    %v1521 = vlaneseq
    %v1522 = vshrl.u32 %v1521, 7
    %v1523 = vsub.s32 5, %v1522
    %v1524 = vrot.slane %v1462, %v1523
    %v1525 = vlaneseq
    %v1526 = vshrl.u32 %v1525, 7
    %v1527 = vsub.s32 6, %v1526
    %v1528 = vrot.slane %v1462, %v1527
    %v1529 = vlaneseq
    %v1530 = vshrl.u32 %v1529, 7
    %v1531 = vsub.s32 7, %v1530
    %v1532 = vrot.slane %v1462, %v1531
    %v1533 = vlaneseq
    %v1534 = vshrl.u32 %v1533, 7
    %v1535 = vsub.s32 0, %v1534
    %v1536 = vrot.slane %v1463, %v1535
    %v1537 = vlaneseq
    %v1538 = vshrl.u32 %v1537, 7
    %v1539 = vsub.s32 1, %v1538
    %v1540 = vrot.slane %v1463, %v1539
    %v1541 = vlaneseq
    %v1542 = vshrl.u32 %v1541, 7
    %v1543 = vsub.s32 2, %v1542
    %v1544 = vrot.slane %v1463, %v1543
    %v1545 = vlaneseq
    %v1546 = vshrl.u32 %v1545, 7
    %v1547 = vsub.s32 3, %v1546
    %v1548 = vrot.slane %v1463, %v1547
    %v1549 = vlaneseq
    %v1550 = vshrl.u32 %v1549, 7
    %v1551 = vsub.s32 4, %v1550
    %v1552 = vrot.slane %v1463, %v1551
    %v1553 = vlaneseq
    %v1554 = vshrl.u32 %v1553, 7
    %v1555 = vsub.s32 5, %v1554
    %v1556 = vrot.slane %v1463, %v1555
    %v1557 = vlaneseq
    %v1558 = vshrl.u32 %v1557, 7
    %v1559 = vsub.s32 6, %v1558
    %v1560 = vrot.slane %v1463, %v1559
    %v1561 = vlaneseq
    %v1562 = vshrl.u32 %v1561, 7
    %v1563 = vsub.s32 7, %v1562
    %v1564 = vrot.slane %v1463, %v1563
    %v1565 = vlaneseq
    %v1566 = vshrl.u32 %v1565, 7
    %v1567 = vsub.s32 0, %v1566
    %v1568 = vrot.slane %v1464, %v1567
    %v1569 = vlaneseq
    %v1570 = vshrl.u32 %v1569, 7
    %v1571 = vsub.s32 1, %v1570
    %v1572 = vrot.slane %v1464, %v1571
    %v1573 = vlaneseq
    %v1574 = vshrl.u32 %v1573, 7
    %v1575 = vsub.s32 2, %v1574
    %v1576 = vrot.slane %v1464, %v1575
    %v1577 = vlaneseq
    %v1578 = vshrl.u32 %v1577, 7
    %v1579 = vsub.s32 3, %v1578
    %v1580 = vrot.slane %v1464, %v1579
    %v1581 = vlaneseq
    %v1582 = vshrl.u32 %v1581, 7
    %v1583 = vsub.s32 4, %v1582
    %v1584 = vrot.slane %v1464, %v1583
    %v1585 = vlaneseq
    %v1586 = vshrl.u32 %v1585, 7
    %v1587 = vsub.s32 5, %v1586
    %v1588 = vrot.slane %v1464, %v1587
    %v1589 = vlaneseq
    %v1590 = vshrl.u32 %v1589, 7
    %v1591 = vsub.s32 6, %v1590
    %v1592 = vrot.slane %v1464, %v1591
    %v1593 = vlaneseq
    %v1594 = vshrl.u32 %v1593, 7
    %v1595 = vsub.s32 7, %v1594
    %v1596 = vrot.slane %v1464, %v1595
    %v1629 = vmul.f32 %v1458, %v1472
    %v1630 = vmul.f32 %v1457, %v1476
    %v1631 = vmul.f32 %v1456, %v1480
    %v1632 = vmul.f32 %v1455, %v1484
    %v1633 = vmul.f32 %v1454, %v1488
    %v1634 = vmul.f32 %v1453, %v1492
    %v1635 = vmul.f32 %v1452, %v1496
    %v1636 = vmul.f32 %v1451, %v1500
    %v1637 = vmul.f32 %v1450, %v1504
    %v1638 = vmul.f32 %v1449, %v1508
    %v1639 = vmul.f32 %v1448, %v1512
    %v1640 = vmul.f32 %v1447, %v1516
    %v1641 = vmul.f32 %v1446, %v1520
    %v1642 = vmul.f32 %v1445, %v1524
    %v1643 = vmul.f32 %v1444, %v1528
    %v1644 = vmul.f32 %v1443, %v1532
    %v1645 = vmul.f32 %v1442, %v1536
    %v1646 = vmul.f32 %v1441, %v1540
    %v1647 = vmul.f32 %v1440, %v1544
    %v1648 = vmul.f32 %v1439, %v1548
    %v1649 = vmul.f32 %v1438, %v1552
    %v1650 = vmul.f32 %v1437, %v1556
    %v1651 = vmul.f32 %v1436, %v1560
    %v1652 = vmul.f32 %v1435, %v1564
    %v1653 = vmul.f32 %v1434, %v1568
    %v1654 = vmul.f32 %v1433, %v1572
    %v1655 = vmul.f32 %v1432, %v1576
    %v1656 = vmul.f32 %v1431, %v1580
    %v1657 = vmul.f32 %v1430, %v1584
    %v1658 = vmul.f32 %v1429, %v1588
    %v1659 = vmul.f32 %v1428, %v1592
    %v1660 = vmul.f32 %v1459, %v1596
    %1661 = vrot.lane.b32.xlu0 %v138, 113
    %v1662 = vpop.permute.xlu0 %1661
    %1663 = vrot.lane.b32.xlu0 %v139, 113
    %v1664 = vpop.permute.xlu0 %1663
    %1665 = vrot.lane.b32.xlu0 %v140, 113
    %v1666 = vpop.permute.xlu0 %1665
    %1667 = vrot.lane.b32.xlu0 %v141, 113
    %v1668 = vpop.permute.xlu0 %1667
    %1669 = vrot.lane.b32.xlu0 %v142, 113
    %v1670 = vpop.permute.xlu0 %1669
    %1671 = vrot.lane.b32.xlu0 %v143, 113
    %v1672 = vpop.permute.xlu0 %1671
    %1673 = vrot.lane.b32.xlu0 %v144, 113
    %v1674 = vpop.permute.xlu0 %1673
    %1675 = vrot.lane.b32.xlu0 %v145, 113
    %v1676 = vpop.permute.xlu0 %1675
    %1677 = vrot.lane.b32.xlu0 %v146, 113
    %v1678 = vpop.permute.xlu0 %1677
    %1679 = vrot.lane.b32.xlu0 %v147, 113
    %v1680 = vpop.permute.xlu0 %1679
    %1681 = vrot.lane.b32.xlu0 %v148, 113
    %v1682 = vpop.permute.xlu0 %1681
    %1683 = vrot.lane.b32.xlu0 %v149, 113
    %v1684 = vpop.permute.xlu0 %1683
    %1685 = vrot.lane.b32.xlu0 %v150, 113
    %v1686 = vpop.permute.xlu0 %1685
    %1687 = vrot.lane.b32.xlu0 %v151, 113
    %v1688 = vpop.permute.xlu0 %1687
    %1689 = vrot.lane.b32.xlu0 %v152, 113
    %v1690 = vpop.permute.xlu0 %1689
    %1691 = vrot.lane.b32.xlu0 %v153, 113
    %v1692 = vpop.permute.xlu0 %1691
    %1693 = vrot.lane.b32.xlu0 %v154, 113
    %v1694 = vpop.permute.xlu0 %1693
    %1695 = vrot.lane.b32.xlu0 %v155, 113
    %v1696 = vpop.permute.xlu0 %1695
    %1697 = vrot.lane.b32.xlu0 %v156, 113
    %v1698 = vpop.permute.xlu0 %1697
    %1699 = vrot.lane.b32.xlu0 %v157, 113
    %v1700 = vpop.permute.xlu0 %1699
    %1701 = vrot.lane.b32.xlu0 %v158, 113
    %v1702 = vpop.permute.xlu0 %1701
    %1703 = vrot.lane.b32.xlu0 %v159, 113
    %v1704 = vpop.permute.xlu0 %1703
    %1705 = vrot.lane.b32.xlu0 %v160, 113
    %v1706 = vpop.permute.xlu0 %1705
    %1707 = vrot.lane.b32.xlu0 %v161, 113
    %v1708 = vpop.permute.xlu0 %1707
    %1709 = vrot.lane.b32.xlu0 %v162, 113
    %v1710 = vpop.permute.xlu0 %1709
    %1711 = vrot.lane.b32.xlu0 %v163, 113
    %v1712 = vpop.permute.xlu0 %1711
    %1713 = vrot.lane.b32.xlu0 %v164, 113
    %v1714 = vpop.permute.xlu0 %1713
    %1715 = vrot.lane.b32.xlu0 %v165, 113
    %v1716 = vpop.permute.xlu0 %1715
    %1717 = vrot.lane.b32.xlu0 %v166, 113
    %v1718 = vpop.permute.xlu0 %1717
    %1719 = vrot.lane.b32.xlu0 %v167, 113
    %v1720 = vpop.permute.xlu0 %1719
    %1721 = vrot.lane.b32.xlu0 %v168, 113
    %v1722 = vpop.permute.xlu0 %1721
    %1723 = vrot.lane.b32.xlu0 %v169, 113
    %v1724 = vpop.permute.xlu0 %1723
    %vm1725 = vcmp.lt.s32.totalorder %v235, 113
    %v1726 = vsel %vm1725, %v1722, %v1724
    %v1727 = vsel %vm1725, %v1720, %v1722
    %v1728 = vsel %vm1725, %v1718, %v1720
    %v1729 = vsel %vm1725, %v1716, %v1718
    %v1730 = vsel %vm1725, %v1714, %v1716
    %v1731 = vsel %vm1725, %v1712, %v1714
    %v1732 = vsel %vm1725, %v1710, %v1712
    %v1733 = vsel %vm1725, %v1708, %v1710
    %v1734 = vsel %vm1725, %v1706, %v1708
    %v1735 = vsel %vm1725, %v1704, %v1706
    %v1736 = vsel %vm1725, %v1702, %v1704
    %v1737 = vsel %vm1725, %v1700, %v1702
    %v1738 = vsel %vm1725, %v1698, %v1700
    %v1739 = vsel %vm1725, %v1696, %v1698
    %v1740 = vsel %vm1725, %v1694, %v1696
    %v1741 = vsel %vm1725, %v1692, %v1694
    %v1742 = vsel %vm1725, %v1690, %v1692
    %v1743 = vsel %vm1725, %v1688, %v1690
    %v1744 = vsel %vm1725, %v1686, %v1688
    %v1745 = vsel %vm1725, %v1684, %v1686
    %v1746 = vsel %vm1725, %v1682, %v1684
    %v1747 = vsel %vm1725, %v1680, %v1682
    %v1748 = vsel %vm1725, %v1678, %v1680
    %v1749 = vsel %vm1725, %v1676, %v1678
    %v1750 = vsel %vm1725, %v1674, %v1676
    %v1751 = vsel %vm1725, %v1672, %v1674
    %v1752 = vsel %vm1725, %v1670, %v1672
    %v1753 = vsel %vm1725, %v1668, %v1670
    %v1754 = vsel %vm1725, %v1666, %v1668
    %v1755 = vsel %vm1725, %v1664, %v1666
    %v1756 = vsel %vm1725, %v1662, %v1664
    %v1757 = vsel %vm1725, %v1724, %v1662
    %s1758 = scalar_lea.vmem [#allocation2], 192
    %v1759 = vld [vmem:[%s1758] sm:$0xff]
    %v1760 = vld [vmem:[%s1758 + $0x8] sm:$0xff]
    %v1761 = vld [vmem:[%s1758 + $0x10] sm:$0xff]
    %v1762 = vld [vmem:[%s1758 + $0x18] sm:$0xff]
    %v1767 = vlaneseq
    %v1768 = vshrl.u32 %v1767, 7
    %v1769 = vsub.s32 0, %v1768
    %v1770 = vrot.slane %v1759, %v1769
    %v1771 = vlaneseq
    %v1772 = vshrl.u32 %v1771, 7
    %v1773 = vsub.s32 1, %v1772
    %v1774 = vrot.slane %v1759, %v1773
    %v1775 = vlaneseq
    %v1776 = vshrl.u32 %v1775, 7
    %v1777 = vsub.s32 2, %v1776
    %v1778 = vrot.slane %v1759, %v1777
    %v1779 = vlaneseq
    %v1780 = vshrl.u32 %v1779, 7
    %v1781 = vsub.s32 3, %v1780
    %v1782 = vrot.slane %v1759, %v1781
    %v1783 = vlaneseq
    %v1784 = vshrl.u32 %v1783, 7
    %v1785 = vsub.s32 4, %v1784
    %v1786 = vrot.slane %v1759, %v1785
    %v1787 = vlaneseq
    %v1788 = vshrl.u32 %v1787, 7
    %v1789 = vsub.s32 5, %v1788
    %v1790 = vrot.slane %v1759, %v1789
    %v1791 = vlaneseq
    %v1792 = vshrl.u32 %v1791, 7
    %v1793 = vsub.s32 6, %v1792
    %v1794 = vrot.slane %v1759, %v1793
    %v1795 = vlaneseq
    %v1796 = vshrl.u32 %v1795, 7
    %v1797 = vsub.s32 7, %v1796
    %v1798 = vrot.slane %v1759, %v1797
    %v1799 = vlaneseq
    %v1800 = vshrl.u32 %v1799, 7
    %v1801 = vsub.s32 0, %v1800
    %v1802 = vrot.slane %v1760, %v1801
    %v1803 = vlaneseq
    %v1804 = vshrl.u32 %v1803, 7
    %v1805 = vsub.s32 1, %v1804
    %v1806 = vrot.slane %v1760, %v1805
    %v1807 = vlaneseq
    %v1808 = vshrl.u32 %v1807, 7
    %v1809 = vsub.s32 2, %v1808
    %v1810 = vrot.slane %v1760, %v1809
    %v1811 = vlaneseq
    %v1812 = vshrl.u32 %v1811, 7
    %v1813 = vsub.s32 3, %v1812
    %v1814 = vrot.slane %v1760, %v1813
    %v1815 = vlaneseq
    %v1816 = vshrl.u32 %v1815, 7
    %v1817 = vsub.s32 4, %v1816
    %v1818 = vrot.slane %v1760, %v1817
    %v1819 = vlaneseq
    %v1820 = vshrl.u32 %v1819, 7
    %v1821 = vsub.s32 5, %v1820
    %v1822 = vrot.slane %v1760, %v1821
    %v1823 = vlaneseq
    %v1824 = vshrl.u32 %v1823, 7
    %v1825 = vsub.s32 6, %v1824
    %v1826 = vrot.slane %v1760, %v1825
    %v1827 = vlaneseq
    %v1828 = vshrl.u32 %v1827, 7
    %v1829 = vsub.s32 7, %v1828
    %v1830 = vrot.slane %v1760, %v1829
    %v1831 = vlaneseq
    %v1832 = vshrl.u32 %v1831, 7
    %v1833 = vsub.s32 0, %v1832
    %v1834 = vrot.slane %v1761, %v1833
    %v1835 = vlaneseq
    %v1836 = vshrl.u32 %v1835, 7
    %v1837 = vsub.s32 1, %v1836
    %v1838 = vrot.slane %v1761, %v1837
    %v1839 = vlaneseq
    %v1840 = vshrl.u32 %v1839, 7
    %v1841 = vsub.s32 2, %v1840
    %v1842 = vrot.slane %v1761, %v1841
    %v1843 = vlaneseq
    %v1844 = vshrl.u32 %v1843, 7
    %v1845 = vsub.s32 3, %v1844
    %v1846 = vrot.slane %v1761, %v1845
    %v1847 = vlaneseq
    %v1848 = vshrl.u32 %v1847, 7
    %v1849 = vsub.s32 4, %v1848
    %v1850 = vrot.slane %v1761, %v1849
    %v1851 = vlaneseq
    %v1852 = vshrl.u32 %v1851, 7
    %v1853 = vsub.s32 5, %v1852
    %v1854 = vrot.slane %v1761, %v1853
    %v1855 = vlaneseq
    %v1856 = vshrl.u32 %v1855, 7
    %v1857 = vsub.s32 6, %v1856
    %v1858 = vrot.slane %v1761, %v1857
    %v1859 = vlaneseq
    %v1860 = vshrl.u32 %v1859, 7
    %v1861 = vsub.s32 7, %v1860
    %v1862 = vrot.slane %v1761, %v1861
    %v1863 = vlaneseq
    %v1864 = vshrl.u32 %v1863, 7
    %v1865 = vsub.s32 0, %v1864
    %v1866 = vrot.slane %v1762, %v1865
    %v1867 = vlaneseq
    %v1868 = vshrl.u32 %v1867, 7
    %v1869 = vsub.s32 1, %v1868
    %v1870 = vrot.slane %v1762, %v1869
    %v1871 = vlaneseq
    %v1872 = vshrl.u32 %v1871, 7
    %v1873 = vsub.s32 2, %v1872
    %v1874 = vrot.slane %v1762, %v1873
    %v1875 = vlaneseq
    %v1876 = vshrl.u32 %v1875, 7
    %v1877 = vsub.s32 3, %v1876
    %v1878 = vrot.slane %v1762, %v1877
    %v1879 = vlaneseq
    %v1880 = vshrl.u32 %v1879, 7
    %v1881 = vsub.s32 4, %v1880
    %v1882 = vrot.slane %v1762, %v1881
    %v1883 = vlaneseq
    %v1884 = vshrl.u32 %v1883, 7
    %v1885 = vsub.s32 5, %v1884
    %v1886 = vrot.slane %v1762, %v1885
    %v1887 = vlaneseq
    %v1888 = vshrl.u32 %v1887, 7
    %v1889 = vsub.s32 6, %v1888
    %v1890 = vrot.slane %v1762, %v1889
    %v1891 = vlaneseq
    %v1892 = vshrl.u32 %v1891, 7
    %v1893 = vsub.s32 7, %v1892
    %v1894 = vrot.slane %v1762, %v1893
    %v1927 = vmul.f32 %v1756, %v1770
    %v1928 = vmul.f32 %v1755, %v1774
    %v1929 = vmul.f32 %v1754, %v1778
    %v1930 = vmul.f32 %v1753, %v1782
    %v1931 = vmul.f32 %v1752, %v1786
    %v1932 = vmul.f32 %v1751, %v1790
    %v1933 = vmul.f32 %v1750, %v1794
    %v1934 = vmul.f32 %v1749, %v1798
    %v1935 = vmul.f32 %v1748, %v1802
    %v1936 = vmul.f32 %v1747, %v1806
    %v1937 = vmul.f32 %v1746, %v1810
    %v1938 = vmul.f32 %v1745, %v1814
    %v1939 = vmul.f32 %v1744, %v1818
    %v1940 = vmul.f32 %v1743, %v1822
    %v1941 = vmul.f32 %v1742, %v1826
    %v1942 = vmul.f32 %v1741, %v1830
    %v1943 = vmul.f32 %v1740, %v1834
    %v1944 = vmul.f32 %v1739, %v1838
    %v1945 = vmul.f32 %v1738, %v1842
    %v1946 = vmul.f32 %v1737, %v1846
    %v1947 = vmul.f32 %v1736, %v1850
    %v1948 = vmul.f32 %v1735, %v1854
    %v1949 = vmul.f32 %v1734, %v1858
    %v1950 = vmul.f32 %v1733, %v1862
    %v1951 = vmul.f32 %v1732, %v1866
    %v1952 = vmul.f32 %v1731, %v1870
    %v1953 = vmul.f32 %v1730, %v1874
    %v1954 = vmul.f32 %v1729, %v1878
    %v1955 = vmul.f32 %v1728, %v1882
    %v1956 = vmul.f32 %v1727, %v1886
    %v1957 = vmul.f32 %v1726, %v1890
    %v1958 = vmul.f32 %v1757, %v1894
    %1959 = vrot.lane.b32.xlu0 %v138, 112
    %v1960 = vpop.permute.xlu0 %1959
    %1961 = vrot.lane.b32.xlu0 %v139, 112
    %v1962 = vpop.permute.xlu0 %1961
    %1963 = vrot.lane.b32.xlu0 %v140, 112
    %v1964 = vpop.permute.xlu0 %1963
    %1965 = vrot.lane.b32.xlu0 %v141, 112
    %v1966 = vpop.permute.xlu0 %1965
    %1967 = vrot.lane.b32.xlu0 %v142, 112
    %v1968 = vpop.permute.xlu0 %1967
    %1969 = vrot.lane.b32.xlu0 %v143, 112
    %v1970 = vpop.permute.xlu0 %1969
    %1971 = vrot.lane.b32.xlu0 %v144, 112
    %v1972 = vpop.permute.xlu0 %1971
    %1973 = vrot.lane.b32.xlu0 %v145, 112
    %v1974 = vpop.permute.xlu0 %1973
    %1975 = vrot.lane.b32.xlu0 %v146, 112
    %v1976 = vpop.permute.xlu0 %1975
    %1977 = vrot.lane.b32.xlu0 %v147, 112
    %v1978 = vpop.permute.xlu0 %1977
    %1979 = vrot.lane.b32.xlu0 %v148, 112
    %v1980 = vpop.permute.xlu0 %1979
    %1981 = vrot.lane.b32.xlu0 %v149, 112
    %v1982 = vpop.permute.xlu0 %1981
    %1983 = vrot.lane.b32.xlu0 %v150, 112
    %v1984 = vpop.permute.xlu0 %1983
    %1985 = vrot.lane.b32.xlu0 %v151, 112
    %v1986 = vpop.permute.xlu0 %1985
    %1987 = vrot.lane.b32.xlu0 %v152, 112
    %v1988 = vpop.permute.xlu0 %1987
    %1989 = vrot.lane.b32.xlu0 %v153, 112
    %v1990 = vpop.permute.xlu0 %1989
    %1991 = vrot.lane.b32.xlu0 %v154, 112
    %v1992 = vpop.permute.xlu0 %1991
    %1993 = vrot.lane.b32.xlu0 %v155, 112
    %v1994 = vpop.permute.xlu0 %1993
    %1995 = vrot.lane.b32.xlu0 %v156, 112
    %v1996 = vpop.permute.xlu0 %1995
    %1997 = vrot.lane.b32.xlu0 %v157, 112
    %v1998 = vpop.permute.xlu0 %1997
    %1999 = vrot.lane.b32.xlu0 %v158, 112
    %v2000 = vpop.permute.xlu0 %1999
    %2001 = vrot.lane.b32.xlu0 %v159, 112
    %v2002 = vpop.permute.xlu0 %2001
    %2003 = vrot.lane.b32.xlu0 %v160, 112
    %v2004 = vpop.permute.xlu0 %2003
    %2005 = vrot.lane.b32.xlu0 %v161, 112
    %v2006 = vpop.permute.xlu0 %2005
    %2007 = vrot.lane.b32.xlu0 %v162, 112
    %v2008 = vpop.permute.xlu0 %2007
    %2009 = vrot.lane.b32.xlu0 %v163, 112
    %v2010 = vpop.permute.xlu0 %2009
    %2011 = vrot.lane.b32.xlu0 %v164, 112
    %v2012 = vpop.permute.xlu0 %2011
    %2013 = vrot.lane.b32.xlu0 %v165, 112
    %v2014 = vpop.permute.xlu0 %2013
    %2015 = vrot.lane.b32.xlu0 %v166, 112
    %v2016 = vpop.permute.xlu0 %2015
    %2017 = vrot.lane.b32.xlu0 %v167, 112
    %v2018 = vpop.permute.xlu0 %2017
    %2019 = vrot.lane.b32.xlu0 %v168, 112
    %v2020 = vpop.permute.xlu0 %2019
    %2021 = vrot.lane.b32.xlu0 %v169, 112
    %v2022 = vpop.permute.xlu0 %2021
    %vm2023 = vcmp.lt.s32.totalorder %v235, 112
    %v2024 = vsel %vm2023, %v2020, %v2022
    %v2025 = vsel %vm2023, %v2018, %v2020
    %v2026 = vsel %vm2023, %v2016, %v2018
    %v2027 = vsel %vm2023, %v2014, %v2016
    %v2028 = vsel %vm2023, %v2012, %v2014
    %v2029 = vsel %vm2023, %v2010, %v2012
    %v2030 = vsel %vm2023, %v2008, %v2010
    %v2031 = vsel %vm2023, %v2006, %v2008
    %v2032 = vsel %vm2023, %v2004, %v2006
    %v2033 = vsel %vm2023, %v2002, %v2004
    %v2034 = vsel %vm2023, %v2000, %v2002
    %v2035 = vsel %vm2023, %v1998, %v2000
    %v2036 = vsel %vm2023, %v1996, %v1998
    %v2037 = vsel %vm2023, %v1994, %v1996
    %v2038 = vsel %vm2023, %v1992, %v1994
    %v2039 = vsel %vm2023, %v1990, %v1992
    %v2040 = vsel %vm2023, %v1988, %v1990
    %v2041 = vsel %vm2023, %v1986, %v1988
    %v2042 = vsel %vm2023, %v1984, %v1986
    %v2043 = vsel %vm2023, %v1982, %v1984
    %v2044 = vsel %vm2023, %v1980, %v1982
    %v2045 = vsel %vm2023, %v1978, %v1980
    %v2046 = vsel %vm2023, %v1976, %v1978
    %v2047 = vsel %vm2023, %v1974, %v1976
    %v2048 = vsel %vm2023, %v1972, %v1974
    %v2049 = vsel %vm2023, %v1970, %v1972
    %v2050 = vsel %vm2023, %v1968, %v1970
    %v2051 = vsel %vm2023, %v1966, %v1968
    %v2052 = vsel %vm2023, %v1964, %v1966
    %v2053 = vsel %vm2023, %v1962, %v1964
    %v2054 = vsel %vm2023, %v1960, %v1962
    %v2055 = vsel %vm2023, %v2022, %v1960
    %s2056 = scalar_lea.vmem [#allocation2], 224
    %v2057 = vld [vmem:[%s2056] sm:$0xff]
    %v2058 = vld [vmem:[%s2056 + $0x8] sm:$0xff]
    %v2059 = vld [vmem:[%s2056 + $0x10] sm:$0xff]
    %v2060 = vld [vmem:[%s2056 + $0x18] sm:$0xff]
    %v2065 = vlaneseq
    %v2066 = vshrl.u32 %v2065, 7
    %v2067 = vsub.s32 0, %v2066
    %v2068 = vrot.slane %v2057, %v2067
    %v2069 = vlaneseq
    %v2070 = vshrl.u32 %v2069, 7
    %v2071 = vsub.s32 1, %v2070
    %v2072 = vrot.slane %v2057, %v2071
    %v2073 = vlaneseq
    %v2074 = vshrl.u32 %v2073, 7
    %v2075 = vsub.s32 2, %v2074
    %v2076 = vrot.slane %v2057, %v2075
    %v2077 = vlaneseq
    %v2078 = vshrl.u32 %v2077, 7
    %v2079 = vsub.s32 3, %v2078
    %v2080 = vrot.slane %v2057, %v2079
    %v2081 = vlaneseq
    %v2082 = vshrl.u32 %v2081, 7
    %v2083 = vsub.s32 4, %v2082
    %v2084 = vrot.slane %v2057, %v2083
    %v2085 = vlaneseq
    %v2086 = vshrl.u32 %v2085, 7
    %v2087 = vsub.s32 5, %v2086
    %v2088 = vrot.slane %v2057, %v2087
    %v2089 = vlaneseq
    %v2090 = vshrl.u32 %v2089, 7
    %v2091 = vsub.s32 6, %v2090
    %v2092 = vrot.slane %v2057, %v2091
    %v2093 = vlaneseq
    %v2094 = vshrl.u32 %v2093, 7
    %v2095 = vsub.s32 7, %v2094
    %v2096 = vrot.slane %v2057, %v2095
    %v2097 = vlaneseq
    %v2098 = vshrl.u32 %v2097, 7
    %v2099 = vsub.s32 0, %v2098
    %v2100 = vrot.slane %v2058, %v2099
    %v2101 = vlaneseq
    %v2102 = vshrl.u32 %v2101, 7
    %v2103 = vsub.s32 1, %v2102
    %v2104 = vrot.slane %v2058, %v2103
    %v2105 = vlaneseq
    %v2106 = vshrl.u32 %v2105, 7
    %v2107 = vsub.s32 2, %v2106
    %v2108 = vrot.slane %v2058, %v2107
    %v2109 = vlaneseq
    %v2110 = vshrl.u32 %v2109, 7
    %v2111 = vsub.s32 3, %v2110
    %v2112 = vrot.slane %v2058, %v2111
    %v2113 = vlaneseq
    %v2114 = vshrl.u32 %v2113, 7
    %v2115 = vsub.s32 4, %v2114
    %v2116 = vrot.slane %v2058, %v2115
    %v2117 = vlaneseq
    %v2118 = vshrl.u32 %v2117, 7
    %v2119 = vsub.s32 5, %v2118
    %v2120 = vrot.slane %v2058, %v2119
    %v2121 = vlaneseq
    %v2122 = vshrl.u32 %v2121, 7
    %v2123 = vsub.s32 6, %v2122
    %v2124 = vrot.slane %v2058, %v2123
    %v2125 = vlaneseq
    %v2126 = vshrl.u32 %v2125, 7
    %v2127 = vsub.s32 7, %v2126
    %v2128 = vrot.slane %v2058, %v2127
    %v2129 = vlaneseq
    %v2130 = vshrl.u32 %v2129, 7
    %v2131 = vsub.s32 0, %v2130
    %v2132 = vrot.slane %v2059, %v2131
    %v2133 = vlaneseq
    %v2134 = vshrl.u32 %v2133, 7
    %v2135 = vsub.s32 1, %v2134
    %v2136 = vrot.slane %v2059, %v2135
    %v2137 = vlaneseq
    %v2138 = vshrl.u32 %v2137, 7
    %v2139 = vsub.s32 2, %v2138
    %v2140 = vrot.slane %v2059, %v2139
    %v2141 = vlaneseq
    %v2142 = vshrl.u32 %v2141, 7
    %v2143 = vsub.s32 3, %v2142
    %v2144 = vrot.slane %v2059, %v2143
    %v2145 = vlaneseq
    %v2146 = vshrl.u32 %v2145, 7
    %v2147 = vsub.s32 4, %v2146
    %v2148 = vrot.slane %v2059, %v2147
    %v2149 = vlaneseq
    %v2150 = vshrl.u32 %v2149, 7
    %v2151 = vsub.s32 5, %v2150
    %v2152 = vrot.slane %v2059, %v2151
    %v2153 = vlaneseq
    %v2154 = vshrl.u32 %v2153, 7
    %v2155 = vsub.s32 6, %v2154
    %v2156 = vrot.slane %v2059, %v2155
    %v2157 = vlaneseq
    %v2158 = vshrl.u32 %v2157, 7
    %v2159 = vsub.s32 7, %v2158
    %v2160 = vrot.slane %v2059, %v2159
    %v2161 = vlaneseq
    %v2162 = vshrl.u32 %v2161, 7
    %v2163 = vsub.s32 0, %v2162
    %v2164 = vrot.slane %v2060, %v2163
    %v2165 = vlaneseq
    %v2166 = vshrl.u32 %v2165, 7
    %v2167 = vsub.s32 1, %v2166
    %v2168 = vrot.slane %v2060, %v2167
    %v2169 = vlaneseq
    %v2170 = vshrl.u32 %v2169, 7
    %v2171 = vsub.s32 2, %v2170
    %v2172 = vrot.slane %v2060, %v2171
    %v2173 = vlaneseq
    %v2174 = vshrl.u32 %v2173, 7
    %v2175 = vsub.s32 3, %v2174
    %v2176 = vrot.slane %v2060, %v2175
    %v2177 = vlaneseq
    %v2178 = vshrl.u32 %v2177, 7
    %v2179 = vsub.s32 4, %v2178
    %v2180 = vrot.slane %v2060, %v2179
    %v2181 = vlaneseq
    %v2182 = vshrl.u32 %v2181, 7
    %v2183 = vsub.s32 5, %v2182
    %v2184 = vrot.slane %v2060, %v2183
    %v2185 = vlaneseq
    %v2186 = vshrl.u32 %v2185, 7
    %v2187 = vsub.s32 6, %v2186
    %v2188 = vrot.slane %v2060, %v2187
    %v2189 = vlaneseq
    %v2190 = vshrl.u32 %v2189, 7
    %v2191 = vsub.s32 7, %v2190
    %v2192 = vrot.slane %v2060, %v2191
    %v2225 = vmul.f32 %v2054, %v2068
    %v2226 = vmul.f32 %v2053, %v2072
    %v2227 = vmul.f32 %v2052, %v2076
    %v2228 = vmul.f32 %v2051, %v2080
    %v2229 = vmul.f32 %v2050, %v2084
    %v2230 = vmul.f32 %v2049, %v2088
    %v2231 = vmul.f32 %v2048, %v2092
    %v2232 = vmul.f32 %v2047, %v2096
    %v2233 = vmul.f32 %v2046, %v2100
    %v2234 = vmul.f32 %v2045, %v2104
    %v2235 = vmul.f32 %v2044, %v2108
    %v2236 = vmul.f32 %v2043, %v2112
    %v2237 = vmul.f32 %v2042, %v2116
    %v2238 = vmul.f32 %v2041, %v2120
    %v2239 = vmul.f32 %v2040, %v2124
    %v2240 = vmul.f32 %v2039, %v2128
    %v2241 = vmul.f32 %v2038, %v2132
    %v2242 = vmul.f32 %v2037, %v2136
    %v2243 = vmul.f32 %v2036, %v2140
    %v2244 = vmul.f32 %v2035, %v2144
    %v2245 = vmul.f32 %v2034, %v2148
    %v2246 = vmul.f32 %v2033, %v2152
    %v2247 = vmul.f32 %v2032, %v2156
    %v2248 = vmul.f32 %v2031, %v2160
    %v2249 = vmul.f32 %v2030, %v2164
    %v2250 = vmul.f32 %v2029, %v2168
    %v2251 = vmul.f32 %v2028, %v2172
    %v2252 = vmul.f32 %v2027, %v2176
    %v2253 = vmul.f32 %v2026, %v2180
    %v2254 = vmul.f32 %v2025, %v2184
    %v2255 = vmul.f32 %v2024, %v2188
    %v2256 = vmul.f32 %v2055, %v2192
    %2257 = vrot.lane.b32.xlu0 %v138, 111
    %v2258 = vpop.permute.xlu0 %2257
    %2259 = vrot.lane.b32.xlu0 %v139, 111
    %v2260 = vpop.permute.xlu0 %2259
    %2261 = vrot.lane.b32.xlu0 %v140, 111
    %v2262 = vpop.permute.xlu0 %2261
    %2263 = vrot.lane.b32.xlu0 %v141, 111
    %v2264 = vpop.permute.xlu0 %2263
    %2265 = vrot.lane.b32.xlu0 %v142, 111
    %v2266 = vpop.permute.xlu0 %2265
    %2267 = vrot.lane.b32.xlu0 %v143, 111
    %v2268 = vpop.permute.xlu0 %2267
    %2269 = vrot.lane.b32.xlu0 %v144, 111
    %v2270 = vpop.permute.xlu0 %2269
    %2271 = vrot.lane.b32.xlu0 %v145, 111
    %v2272 = vpop.permute.xlu0 %2271
    %2273 = vrot.lane.b32.xlu0 %v146, 111
    %v2274 = vpop.permute.xlu0 %2273
    %2275 = vrot.lane.b32.xlu0 %v147, 111
    %v2276 = vpop.permute.xlu0 %2275
    %2277 = vrot.lane.b32.xlu0 %v148, 111
    %v2278 = vpop.permute.xlu0 %2277
    %2279 = vrot.lane.b32.xlu0 %v149, 111
    %v2280 = vpop.permute.xlu0 %2279
    %2281 = vrot.lane.b32.xlu0 %v150, 111
    %v2282 = vpop.permute.xlu0 %2281
    %2283 = vrot.lane.b32.xlu0 %v151, 111
    %v2284 = vpop.permute.xlu0 %2283
    %2285 = vrot.lane.b32.xlu0 %v152, 111
    %v2286 = vpop.permute.xlu0 %2285
    %2287 = vrot.lane.b32.xlu0 %v153, 111
    %v2288 = vpop.permute.xlu0 %2287
    %2289 = vrot.lane.b32.xlu0 %v154, 111
    %v2290 = vpop.permute.xlu0 %2289
    %2291 = vrot.lane.b32.xlu0 %v155, 111
    %v2292 = vpop.permute.xlu0 %2291
    %2293 = vrot.lane.b32.xlu0 %v156, 111
    %v2294 = vpop.permute.xlu0 %2293
    %2295 = vrot.lane.b32.xlu0 %v157, 111
    %v2296 = vpop.permute.xlu0 %2295
    %2297 = vrot.lane.b32.xlu0 %v158, 111
    %v2298 = vpop.permute.xlu0 %2297
    %2299 = vrot.lane.b32.xlu0 %v159, 111
    %v2300 = vpop.permute.xlu0 %2299
    %2301 = vrot.lane.b32.xlu0 %v160, 111
    %v2302 = vpop.permute.xlu0 %2301
    %2303 = vrot.lane.b32.xlu0 %v161, 111
    %v2304 = vpop.permute.xlu0 %2303
    %2305 = vrot.lane.b32.xlu0 %v162, 111
    %v2306 = vpop.permute.xlu0 %2305
    %2307 = vrot.lane.b32.xlu0 %v163, 111
    %v2308 = vpop.permute.xlu0 %2307
    %2309 = vrot.lane.b32.xlu0 %v164, 111
    %v2310 = vpop.permute.xlu0 %2309
    %2311 = vrot.lane.b32.xlu0 %v165, 111
    %v2312 = vpop.permute.xlu0 %2311
    %2313 = vrot.lane.b32.xlu0 %v166, 111
    %v2314 = vpop.permute.xlu0 %2313
    %2315 = vrot.lane.b32.xlu0 %v167, 111
    %v2316 = vpop.permute.xlu0 %2315
    %2317 = vrot.lane.b32.xlu0 %v168, 111
    %v2318 = vpop.permute.xlu0 %2317
    %2319 = vrot.lane.b32.xlu0 %v169, 111
    %v2320 = vpop.permute.xlu0 %2319
    %vm2321 = vcmp.lt.s32.totalorder %v235, 111
    %v2322 = vsel %vm2321, %v2318, %v2320
    %v2323 = vsel %vm2321, %v2316, %v2318
    %v2324 = vsel %vm2321, %v2314, %v2316
    %v2325 = vsel %vm2321, %v2312, %v2314
    %v2326 = vsel %vm2321, %v2310, %v2312
    %v2327 = vsel %vm2321, %v2308, %v2310
    %v2328 = vsel %vm2321, %v2306, %v2308
    %v2329 = vsel %vm2321, %v2304, %v2306
    %v2330 = vsel %vm2321, %v2302, %v2304
    %v2331 = vsel %vm2321, %v2300, %v2302
    %v2332 = vsel %vm2321, %v2298, %v2300
    %v2333 = vsel %vm2321, %v2296, %v2298
    %v2334 = vsel %vm2321, %v2294, %v2296
    %v2335 = vsel %vm2321, %v2292, %v2294
    %v2336 = vsel %vm2321, %v2290, %v2292
    %v2337 = vsel %vm2321, %v2288, %v2290
    %v2338 = vsel %vm2321, %v2286, %v2288
    %v2339 = vsel %vm2321, %v2284, %v2286
    %v2340 = vsel %vm2321, %v2282, %v2284
    %v2341 = vsel %vm2321, %v2280, %v2282
    %v2342 = vsel %vm2321, %v2278, %v2280
    %v2343 = vsel %vm2321, %v2276, %v2278
    %v2344 = vsel %vm2321, %v2274, %v2276
    %v2345 = vsel %vm2321, %v2272, %v2274
    %v2346 = vsel %vm2321, %v2270, %v2272
    %v2347 = vsel %vm2321, %v2268, %v2270
    %v2348 = vsel %vm2321, %v2266, %v2268
    %v2349 = vsel %vm2321, %v2264, %v2266
    %v2350 = vsel %vm2321, %v2262, %v2264
    %v2351 = vsel %vm2321, %v2260, %v2262
    %v2352 = vsel %vm2321, %v2258, %v2260
    %v2353 = vsel %vm2321, %v2320, %v2258
    %s2354 = scalar_lea.vmem [#allocation2], 256
    %v2355 = vld [vmem:[%s2354] sm:$0xff]
    %v2356 = vld [vmem:[%s2354 + $0x8] sm:$0xff]
    %v2357 = vld [vmem:[%s2354 + $0x10] sm:$0xff]
    %v2358 = vld [vmem:[%s2354 + $0x18] sm:$0xff]
    %v2363 = vlaneseq
    %v2364 = vshrl.u32 %v2363, 7
    %v2365 = vsub.s32 0, %v2364
    %v2366 = vrot.slane %v2355, %v2365
    %v2367 = vlaneseq
    %v2368 = vshrl.u32 %v2367, 7
    %v2369 = vsub.s32 1, %v2368
    %v2370 = vrot.slane %v2355, %v2369
    %v2371 = vlaneseq
    %v2372 = vshrl.u32 %v2371, 7
    %v2373 = vsub.s32 2, %v2372
    %v2374 = vrot.slane %v2355, %v2373
    %v2375 = vlaneseq
    %v2376 = vshrl.u32 %v2375, 7
    %v2377 = vsub.s32 3, %v2376
    %v2378 = vrot.slane %v2355, %v2377
    %v2379 = vlaneseq
    %v2380 = vshrl.u32 %v2379, 7
    %v2381 = vsub.s32 4, %v2380
    %v2382 = vrot.slane %v2355, %v2381
    %v2383 = vlaneseq
    %v2384 = vshrl.u32 %v2383, 7
    %v2385 = vsub.s32 5, %v2384
    %v2386 = vrot.slane %v2355, %v2385
    %v2387 = vlaneseq
    %v2388 = vshrl.u32 %v2387, 7
    %v2389 = vsub.s32 6, %v2388
    %v2390 = vrot.slane %v2355, %v2389
    %v2391 = vlaneseq
    %v2392 = vshrl.u32 %v2391, 7
    %v2393 = vsub.s32 7, %v2392
    %v2394 = vrot.slane %v2355, %v2393
    %v2395 = vlaneseq
    %v2396 = vshrl.u32 %v2395, 7
    %v2397 = vsub.s32 0, %v2396
    %v2398 = vrot.slane %v2356, %v2397
    %v2399 = vlaneseq
    %v2400 = vshrl.u32 %v2399, 7
    %v2401 = vsub.s32 1, %v2400
    %v2402 = vrot.slane %v2356, %v2401
    %v2403 = vlaneseq
    %v2404 = vshrl.u32 %v2403, 7
    %v2405 = vsub.s32 2, %v2404
    %v2406 = vrot.slane %v2356, %v2405
    %v2407 = vlaneseq
    %v2408 = vshrl.u32 %v2407, 7
    %v2409 = vsub.s32 3, %v2408
    %v2410 = vrot.slane %v2356, %v2409
    %v2411 = vlaneseq
    %v2412 = vshrl.u32 %v2411, 7
    %v2413 = vsub.s32 4, %v2412
    %v2414 = vrot.slane %v2356, %v2413
    %v2415 = vlaneseq
    %v2416 = vshrl.u32 %v2415, 7
    %v2417 = vsub.s32 5, %v2416
    %v2418 = vrot.slane %v2356, %v2417
    %v2419 = vlaneseq
    %v2420 = vshrl.u32 %v2419, 7
    %v2421 = vsub.s32 6, %v2420
    %v2422 = vrot.slane %v2356, %v2421
    %v2423 = vlaneseq
    %v2424 = vshrl.u32 %v2423, 7
    %v2425 = vsub.s32 7, %v2424
    %v2426 = vrot.slane %v2356, %v2425
    %v2427 = vlaneseq
    %v2428 = vshrl.u32 %v2427, 7
    %v2429 = vsub.s32 0, %v2428
    %v2430 = vrot.slane %v2357, %v2429
    %v2431 = vlaneseq
    %v2432 = vshrl.u32 %v2431, 7
    %v2433 = vsub.s32 1, %v2432
    %v2434 = vrot.slane %v2357, %v2433
    %v2435 = vlaneseq
    %v2436 = vshrl.u32 %v2435, 7
    %v2437 = vsub.s32 2, %v2436
    %v2438 = vrot.slane %v2357, %v2437
    %v2439 = vlaneseq
    %v2440 = vshrl.u32 %v2439, 7
    %v2441 = vsub.s32 3, %v2440
    %v2442 = vrot.slane %v2357, %v2441
    %v2443 = vlaneseq
    %v2444 = vshrl.u32 %v2443, 7
    %v2445 = vsub.s32 4, %v2444
    %v2446 = vrot.slane %v2357, %v2445
    %v2447 = vlaneseq
    %v2448 = vshrl.u32 %v2447, 7
    %v2449 = vsub.s32 5, %v2448
    %v2450 = vrot.slane %v2357, %v2449
    %v2451 = vlaneseq
    %v2452 = vshrl.u32 %v2451, 7
    %v2453 = vsub.s32 6, %v2452
    %v2454 = vrot.slane %v2357, %v2453
    %v2455 = vlaneseq
    %v2456 = vshrl.u32 %v2455, 7
    %v2457 = vsub.s32 7, %v2456
    %v2458 = vrot.slane %v2357, %v2457
    %v2459 = vlaneseq
    %v2460 = vshrl.u32 %v2459, 7
    %v2461 = vsub.s32 0, %v2460
    %v2462 = vrot.slane %v2358, %v2461
    %v2463 = vlaneseq
    %v2464 = vshrl.u32 %v2463, 7
    %v2465 = vsub.s32 1, %v2464
    %v2466 = vrot.slane %v2358, %v2465
    %v2467 = vlaneseq
    %v2468 = vshrl.u32 %v2467, 7
    %v2469 = vsub.s32 2, %v2468
    %v2470 = vrot.slane %v2358, %v2469
    %v2471 = vlaneseq
    %v2472 = vshrl.u32 %v2471, 7
    %v2473 = vsub.s32 3, %v2472
    %v2474 = vrot.slane %v2358, %v2473
    %v2475 = vlaneseq
    %v2476 = vshrl.u32 %v2475, 7
    %v2477 = vsub.s32 4, %v2476
    %v2478 = vrot.slane %v2358, %v2477
    %v2479 = vlaneseq
    %v2480 = vshrl.u32 %v2479, 7
    %v2481 = vsub.s32 5, %v2480
    %v2482 = vrot.slane %v2358, %v2481
    %v2483 = vlaneseq
    %v2484 = vshrl.u32 %v2483, 7
    %v2485 = vsub.s32 6, %v2484
    %v2486 = vrot.slane %v2358, %v2485
    %v2487 = vlaneseq
    %v2488 = vshrl.u32 %v2487, 7
    %v2489 = vsub.s32 7, %v2488
    %v2490 = vrot.slane %v2358, %v2489
    %v2523 = vmul.f32 %v2352, %v2366
    %v2524 = vmul.f32 %v2351, %v2370
    %v2525 = vmul.f32 %v2350, %v2374
    %v2526 = vmul.f32 %v2349, %v2378
    %v2527 = vmul.f32 %v2348, %v2382
    %v2528 = vmul.f32 %v2347, %v2386
    %v2529 = vmul.f32 %v2346, %v2390
    %v2530 = vmul.f32 %v2345, %v2394
    %v2531 = vmul.f32 %v2344, %v2398
    %v2532 = vmul.f32 %v2343, %v2402
    %v2533 = vmul.f32 %v2342, %v2406
    %v2534 = vmul.f32 %v2341, %v2410
    %v2535 = vmul.f32 %v2340, %v2414
    %v2536 = vmul.f32 %v2339, %v2418
    %v2537 = vmul.f32 %v2338, %v2422
    %v2538 = vmul.f32 %v2337, %v2426
    %v2539 = vmul.f32 %v2336, %v2430
    %v2540 = vmul.f32 %v2335, %v2434
    %v2541 = vmul.f32 %v2334, %v2438
    %v2542 = vmul.f32 %v2333, %v2442
    %v2543 = vmul.f32 %v2332, %v2446
    %v2544 = vmul.f32 %v2331, %v2450
    %v2545 = vmul.f32 %v2330, %v2454
    %v2546 = vmul.f32 %v2329, %v2458
    %v2547 = vmul.f32 %v2328, %v2462
    %v2548 = vmul.f32 %v2327, %v2466
    %v2549 = vmul.f32 %v2326, %v2470
    %v2550 = vmul.f32 %v2325, %v2474
    %v2551 = vmul.f32 %v2324, %v2478
    %v2552 = vmul.f32 %v2323, %v2482
    %v2553 = vmul.f32 %v2322, %v2486
    %v2554 = vmul.f32 %v2353, %v2490
    %v2555 = vld [vmem:[%s1] sm:$0xff]
    %v2556 = vld [vmem:[%s2] sm:$0xff]
    %2558 = vset.pattern.permute.xlu0 0
    %2559 = vperm.xlu0 %2558, %v2556
    %v2560 = vpop.permute.xlu0 %2559
    %vm2562 = vcmask 588800
    %v2564 = vsel %vm2562, %v2555, 0
    %2566 = vmatprep.subr.mxu0 %v438
    %2567 = vmatpush1.msra.mxu0 %v437
    %2568 = vmatprep.subr.mxu0 %v736
    %2569 = vmatpush1.msra.mxu0 %v735
    %2570 = vmatprep.subr.mxu0 %v1034
    %2571 = vmatpush1.msra.mxu0 %v1033
    %2572 = vmatprep.subr.mxu0 %v1332
    %2573 = vmatpush1.msra.mxu0 %v1331
    %2574 = vmatprep.subr.mxu0 %v139
    %2575 = vmatpush1.msra.mxu0 %v138
    %2576 = vmatprep.subr.mxu0 %v1630
    %2577 = vmatpush1.msra.mxu0 %v1629
    %2578 = vmatprep.subr.mxu0 %v1928
    %2579 = vmatpush1.msra.mxu0 %v1927
    %2580 = vmatprep.subr.mxu0 %v2226
    %2581 = vmatpush1.msra.mxu0 %v2225
    %2582 = vmatprep.subr.mxu0 %v2524
    %2583 = vmatpush1.msra.mxu0 %v2523
    %2584 = vmatprep.subr.mxu0 0.0
    %2585 = vmatpush1.msra.mxu0 0.0
    %2586 = vmatprep.subr.mxu0 0.0
    %2587 = vmatpush1.msra.mxu0 0.0
    %2588 = vmatprep.subr.mxu0 0.0
    %2589 = vmatpush1.msra.mxu0 0.0
    %2590 = vmatprep.subr.mxu0 0.0
    %2591 = vmatpush1.msra.mxu0 0.0
    %2592 = vmatprep.subr.mxu0 0.0
    %2593 = vmatpush1.msra.mxu0 0.0
    %2594 = vmatprep.subr.mxu0 0.0
    %2595 = vmatpush1.msra.mxu0 0.0
    %2596 = vmatprep.subr.mxu0 0.0
    %2597 = vmatpush1.msra.mxu0 0.0
    %2598 = vmatprep.subr.mxu0 0.0
    %2599 = vmatpush1.msra.mxu0 0.0
    %2600 = vmatprep.subr.mxu0 0.0
    %2601 = vmatpush1.msra.mxu0 0.0
    %2602 = vmatprep.subr.mxu0 0.0
    %2603 = vmatpush1.msra.mxu0 0.0
    %2604 = vmatprep.subr.mxu0 0.0
    %2605 = vmatpush1.msra.mxu0 0.0
    %2606 = vmatprep.subr.mxu0 0.0
    %2607 = vmatpush1.msra.mxu0 0.0
    %2608 = vmatprep.subr.mxu0 0.0
    %2609 = vmatpush1.msra.mxu0 0.0
    %2610 = vmatprep.subr.mxu0 0.0
    %2611 = vmatpush1.msra.mxu0 0.0
    %2612 = vmatprep.subr.mxu0 0.0
    %2613 = vmatpush1.msra.mxu0 0.0
    %2614 = vmatprep.subr.mxu0 0.0
    %2615 = vmatpush1.msra.mxu0 0.0
    %2616 = vmatprep.subr.mxu0 0.0
    %2617 = vmatpush1.msra.mxu0 0.0
    %2618 = vmatprep.subr.mxu0 0.0
    %2619 = vmatpush1.msra.mxu0 0.0
    %2620 = vmatprep.subr.mxu0 0.0
    %2621 = vmatpush1.msra.mxu0 0.0
    %2622 = vmatprep.subr.mxu0 0.0
    %2623 = vmatpush1.msra.mxu0 0.0
    %2624 = vmatprep.subr.mxu0 0.0
    %2625 = vmatpush1.msra.mxu0 0.0
    %2626 = vmatprep.subr.mxu0 0.0
    %2627 = vmatpush1.msra.mxu0 0.0
    %2628 = vmatprep.subr.mxu0 0.0
    %2629 = vmatpush1.msra.mxu0 0.0
    %2630 = vmatprep.mubr.f32.mxu0 0.0
    %2631 = vmatmul.mubr.f32.gmra.mrb[0].mxu0 %v2564
    %v2632 = vpop.f32.mrb[0].mxu0
    %v2633 = vadd.f32 %v2560, %v2632
    %v2634 = vpop.f32.mrb[0].mxu0
    %v2635 = vadd.f32 %v2560, %v2634
    %2636 = vdwg.mxu0
    %2637 = vmatprep.subr.mxu0 %v440
    %2638 = vmatpush1.msra.mxu0 %v439
    %2639 = vmatprep.subr.mxu0 %v738
    %2640 = vmatpush1.msra.mxu0 %v737
    %2641 = vmatprep.subr.mxu0 %v1036
    %2642 = vmatpush1.msra.mxu0 %v1035
    %2643 = vmatprep.subr.mxu0 %v1334
    %2644 = vmatpush1.msra.mxu0 %v1333
    %2645 = vmatprep.subr.mxu0 %v141
    %2646 = vmatpush1.msra.mxu0 %v140
    %2647 = vmatprep.subr.mxu0 %v1632
    %2648 = vmatpush1.msra.mxu0 %v1631
    %2649 = vmatprep.subr.mxu0 %v1930
    %2650 = vmatpush1.msra.mxu0 %v1929
    %2651 = vmatprep.subr.mxu0 %v2228
    %2652 = vmatpush1.msra.mxu0 %v2227
    %2653 = vmatprep.subr.mxu0 %v2526
    %2654 = vmatpush1.msra.mxu0 %v2525
    %2655 = vmatprep.subr.mxu0 0.0
    %2656 = vmatpush1.msra.mxu0 0.0
    %2657 = vmatprep.subr.mxu0 0.0
    %2658 = vmatpush1.msra.mxu0 0.0
    %2659 = vmatprep.subr.mxu0 0.0
    %2660 = vmatpush1.msra.mxu0 0.0
    %2661 = vmatprep.subr.mxu0 0.0
    %2662 = vmatpush1.msra.mxu0 0.0
    %2663 = vmatprep.subr.mxu0 0.0
    %2664 = vmatpush1.msra.mxu0 0.0
    %2665 = vmatprep.subr.mxu0 0.0
    %2666 = vmatpush1.msra.mxu0 0.0
    %2667 = vmatprep.subr.mxu0 0.0
    %2668 = vmatpush1.msra.mxu0 0.0
    %2669 = vmatprep.subr.mxu0 0.0
    %2670 = vmatpush1.msra.mxu0 0.0
    %2671 = vmatprep.subr.mxu0 0.0
    %2672 = vmatpush1.msra.mxu0 0.0
    %2673 = vmatprep.subr.mxu0 0.0
    %2674 = vmatpush1.msra.mxu0 0.0
    %2675 = vmatprep.subr.mxu0 0.0
    %2676 = vmatpush1.msra.mxu0 0.0
    %2677 = vmatprep.subr.mxu0 0.0
    %2678 = vmatpush1.msra.mxu0 0.0
    %2679 = vmatprep.subr.mxu0 0.0
    %2680 = vmatpush1.msra.mxu0 0.0
    %2681 = vmatprep.subr.mxu0 0.0
    %2682 = vmatpush1.msra.mxu0 0.0
    %2683 = vmatprep.subr.mxu0 0.0
    %2684 = vmatpush1.msra.mxu0 0.0
    %2685 = vmatprep.subr.mxu0 0.0
    %2686 = vmatpush1.msra.mxu0 0.0
    %2687 = vmatprep.subr.mxu0 0.0
    %2688 = vmatpush1.msra.mxu0 0.0
    %2689 = vmatprep.subr.mxu0 0.0
    %2690 = vmatpush1.msra.mxu0 0.0
    %2691 = vmatprep.subr.mxu0 0.0
    %2692 = vmatpush1.msra.mxu0 0.0
    %2693 = vmatprep.subr.mxu0 0.0
    %2694 = vmatpush1.msra.mxu0 0.0
    %2695 = vmatprep.subr.mxu0 0.0
    %2696 = vmatpush1.msra.mxu0 0.0
    %2697 = vmatprep.subr.mxu0 0.0
    %2698 = vmatpush1.msra.mxu0 0.0
    %2699 = vmatprep.subr.mxu0 0.0
    %2700 = vmatpush1.msra.mxu0 0.0
    %2701 = vmatprep.mubr.f32.mxu0 0.0
    %2702 = vmatmul.mubr.f32.gmra.mrb[0].mxu0 %v2564
    %v2703 = vpop.f32.mrb[0].mxu0
    %v2704 = vadd.f32 %v2560, %v2703
    %v2705 = vpop.f32.mrb[0].mxu0
    %v2706 = vadd.f32 %v2560, %v2705
    %2707 = vdwg.mxu0
    %2708 = vmatprep.subr.mxu0 %v442
    %2709 = vmatpush1.msra.mxu0 %v441
    %2710 = vmatprep.subr.mxu0 %v740
    %2711 = vmatpush1.msra.mxu0 %v739
    %2712 = vmatprep.subr.mxu0 %v1038
    %2713 = vmatpush1.msra.mxu0 %v1037
    %2714 = vmatprep.subr.mxu0 %v1336
    %2715 = vmatpush1.msra.mxu0 %v1335
    %2716 = vmatprep.subr.mxu0 %v143
    %2717 = vmatpush1.msra.mxu0 %v142
    %2718 = vmatprep.subr.mxu0 %v1634
    %2719 = vmatpush1.msra.mxu0 %v1633
    %2720 = vmatprep.subr.mxu0 %v1932
    %2721 = vmatpush1.msra.mxu0 %v1931
    %2722 = vmatprep.subr.mxu0 %v2230
    %2723 = vmatpush1.msra.mxu0 %v2229
    %2724 = vmatprep.subr.mxu0 %v2528
    %2725 = vmatpush1.msra.mxu0 %v2527
    %2726 = vmatprep.subr.mxu0 0.0
    %2727 = vmatpush1.msra.mxu0 0.0
    %2728 = vmatprep.subr.mxu0 0.0
    %2729 = vmatpush1.msra.mxu0 0.0
    %2730 = vmatprep.subr.mxu0 0.0
    %2731 = vmatpush1.msra.mxu0 0.0
    %2732 = vmatprep.subr.mxu0 0.0
    %2733 = vmatpush1.msra.mxu0 0.0
    %2734 = vmatprep.subr.mxu0 0.0
    %2735 = vmatpush1.msra.mxu0 0.0
    %2736 = vmatprep.subr.mxu0 0.0
    %2737 = vmatpush1.msra.mxu0 0.0
    %2738 = vmatprep.subr.mxu0 0.0
    %2739 = vmatpush1.msra.mxu0 0.0
    %2740 = vmatprep.subr.mxu0 0.0
    %2741 = vmatpush1.msra.mxu0 0.0
    %2742 = vmatprep.subr.mxu0 0.0
    %2743 = vmatpush1.msra.mxu0 0.0
    %2744 = vmatprep.subr.mxu0 0.0
    %2745 = vmatpush1.msra.mxu0 0.0
    %2746 = vmatprep.subr.mxu0 0.0
    %2747 = vmatpush1.msra.mxu0 0.0
    %2748 = vmatprep.subr.mxu0 0.0
    %2749 = vmatpush1.msra.mxu0 0.0
    %2750 = vmatprep.subr.mxu0 0.0
    %2751 = vmatpush1.msra.mxu0 0.0
    %2752 = vmatprep.subr.mxu0 0.0
    %2753 = vmatpush1.msra.mxu0 0.0
    %2754 = vmatprep.subr.mxu0 0.0
    %2755 = vmatpush1.msra.mxu0 0.0
    %2756 = vmatprep.subr.mxu0 0.0
    %2757 = vmatpush1.msra.mxu0 0.0
    %2758 = vmatprep.subr.mxu0 0.0
    %2759 = vmatpush1.msra.mxu0 0.0
    %2760 = vmatprep.subr.mxu0 0.0
    %2761 = vmatpush1.msra.mxu0 0.0
    %2762 = vmatprep.subr.mxu0 0.0
    %2763 = vmatpush1.msra.mxu0 0.0
    %2764 = vmatprep.subr.mxu0 0.0
    %2765 = vmatpush1.msra.mxu0 0.0
    %2766 = vmatprep.subr.mxu0 0.0
    %2767 = vmatpush1.msra.mxu0 0.0
    %2768 = vmatprep.subr.mxu0 0.0
    %2769 = vmatpush1.msra.mxu0 0.0
    %2770 = vmatprep.subr.mxu0 0.0
    %2771 = vmatpush1.msra.mxu0 0.0
    %2772 = vmatprep.mubr.f32.mxu0 0.0
    %2773 = vmatmul.mubr.f32.gmra.mrb[0].mxu0 %v2564
    %v2774 = vpop.f32.mrb[0].mxu0
    %v2775 = vadd.f32 %v2560, %v2774
    %v2776 = vpop.f32.mrb[0].mxu0
    %v2777 = vadd.f32 %v2560, %v2776
    %2778 = vdwg.mxu0
    %2779 = vmatprep.subr.mxu0 %v444
    %2780 = vmatpush1.msra.mxu0 %v443
    %2781 = vmatprep.subr.mxu0 %v742
    %2782 = vmatpush1.msra.mxu0 %v741
    %2783 = vmatprep.subr.mxu0 %v1040
    %2784 = vmatpush1.msra.mxu0 %v1039
    %2785 = vmatprep.subr.mxu0 %v1338
    %2786 = vmatpush1.msra.mxu0 %v1337
    %2787 = vmatprep.subr.mxu0 %v145
    %2788 = vmatpush1.msra.mxu0 %v144
    %2789 = vmatprep.subr.mxu0 %v1636
    %2790 = vmatpush1.msra.mxu0 %v1635
    %2791 = vmatprep.subr.mxu0 %v1934
    %2792 = vmatpush1.msra.mxu0 %v1933
    %2793 = vmatprep.subr.mxu0 %v2232
    %2794 = vmatpush1.msra.mxu0 %v2231
    %2795 = vmatprep.subr.mxu0 %v2530
    %2796 = vmatpush1.msra.mxu0 %v2529
    %2797 = vmatprep.subr.mxu0 0.0
    %2798 = vmatpush1.msra.mxu0 0.0
    %2799 = vmatprep.subr.mxu0 0.0
    %2800 = vmatpush1.msra.mxu0 0.0
    %2801 = vmatprep.subr.mxu0 0.0
    %2802 = vmatpush1.msra.mxu0 0.0
    %2803 = vmatprep.subr.mxu0 0.0
    %2804 = vmatpush1.msra.mxu0 0.0
    %2805 = vmatprep.subr.mxu0 0.0
    %2806 = vmatpush1.msra.mxu0 0.0
    %2807 = vmatprep.subr.mxu0 0.0
    %2808 = vmatpush1.msra.mxu0 0.0
    %2809 = vmatprep.subr.mxu0 0.0
    %2810 = vmatpush1.msra.mxu0 0.0
    %2811 = vmatprep.subr.mxu0 0.0
    %2812 = vmatpush1.msra.mxu0 0.0
    %2813 = vmatprep.subr.mxu0 0.0
    %2814 = vmatpush1.msra.mxu0 0.0
    %2815 = vmatprep.subr.mxu0 0.0
    %2816 = vmatpush1.msra.mxu0 0.0
    %2817 = vmatprep.subr.mxu0 0.0
    %2818 = vmatpush1.msra.mxu0 0.0
    %2819 = vmatprep.subr.mxu0 0.0
    %2820 = vmatpush1.msra.mxu0 0.0
    %2821 = vmatprep.subr.mxu0 0.0
    %2822 = vmatpush1.msra.mxu0 0.0
    %2823 = vmatprep.subr.mxu0 0.0
    %2824 = vmatpush1.msra.mxu0 0.0
    %2825 = vmatprep.subr.mxu0 0.0
    %2826 = vmatpush1.msra.mxu0 0.0
    %2827 = vmatprep.subr.mxu0 0.0
    %2828 = vmatpush1.msra.mxu0 0.0
    %2829 = vmatprep.subr.mxu0 0.0
    %2830 = vmatpush1.msra.mxu0 0.0
    %2831 = vmatprep.subr.mxu0 0.0
    %2832 = vmatpush1.msra.mxu0 0.0
    %2833 = vmatprep.subr.mxu0 0.0
    %2834 = vmatpush1.msra.mxu0 0.0
    %2835 = vmatprep.subr.mxu0 0.0
    %2836 = vmatpush1.msra.mxu0 0.0
    %2837 = vmatprep.subr.mxu0 0.0
    %2838 = vmatpush1.msra.mxu0 0.0
    %2839 = vmatprep.subr.mxu0 0.0
    %2840 = vmatpush1.msra.mxu0 0.0
    %2841 = vmatprep.subr.mxu0 0.0
    %2842 = vmatpush1.msra.mxu0 0.0
    %2843 = vmatprep.mubr.f32.mxu0 0.0
    %2844 = vmatmul.mubr.f32.gmra.mrb[0].mxu0 %v2564
    %v2845 = vpop.f32.mrb[0].mxu0
    %v2846 = vadd.f32 %v2560, %v2845
    %v2847 = vpop.f32.mrb[0].mxu0
    %v2848 = vadd.f32 %v2560, %v2847
    %2849 = vdwg.mxu0
    %2850 = vmatprep.subr.mxu0 %v446
    %2851 = vmatpush1.msra.mxu0 %v445
    %2852 = vmatprep.subr.mxu0 %v744
    %2853 = vmatpush1.msra.mxu0 %v743
    %2854 = vmatprep.subr.mxu0 %v1042
    %2855 = vmatpush1.msra.mxu0 %v1041
    %2856 = vmatprep.subr.mxu0 %v1340
    %2857 = vmatpush1.msra.mxu0 %v1339
    %2858 = vmatprep.subr.mxu0 %v147
    %2859 = vmatpush1.msra.mxu0 %v146
    %2860 = vmatprep.subr.mxu0 %v1638
    %2861 = vmatpush1.msra.mxu0 %v1637
    %2862 = vmatprep.subr.mxu0 %v1936
    %2863 = vmatpush1.msra.mxu0 %v1935
    %2864 = vmatprep.subr.mxu0 %v2234
    %2865 = vmatpush1.msra.mxu0 %v2233
    %2866 = vmatprep.subr.mxu0 %v2532
    %2867 = vmatpush1.msra.mxu0 %v2531
    %2868 = vmatprep.subr.mxu0 0.0
    %2869 = vmatpush1.msra.mxu0 0.0
    %2870 = vmatprep.subr.mxu0 0.0
    %2871 = vmatpush1.msra.mxu0 0.0
    %2872 = vmatprep.subr.mxu0 0.0
    %2873 = vmatpush1.msra.mxu0 0.0
    %2874 = vmatprep.subr.mxu0 0.0
    %2875 = vmatpush1.msra.mxu0 0.0
    %2876 = vmatprep.subr.mxu0 0.0
    %2877 = vmatpush1.msra.mxu0 0.0
    %2878 = vmatprep.subr.mxu0 0.0
    %2879 = vmatpush1.msra.mxu0 0.0
    %2880 = vmatprep.subr.mxu0 0.0
    %2881 = vmatpush1.msra.mxu0 0.0
    %2882 = vmatprep.subr.mxu0 0.0
    %2883 = vmatpush1.msra.mxu0 0.0
    %2884 = vmatprep.subr.mxu0 0.0
    %2885 = vmatpush1.msra.mxu0 0.0
    %2886 = vmatprep.subr.mxu0 0.0
    %2887 = vmatpush1.msra.mxu0 0.0
    %2888 = vmatprep.subr.mxu0 0.0
    %2889 = vmatpush1.msra.mxu0 0.0
    %2890 = vmatprep.subr.mxu0 0.0
    %2891 = vmatpush1.msra.mxu0 0.0
    %2892 = vmatprep.subr.mxu0 0.0
    %2893 = vmatpush1.msra.mxu0 0.0
    %2894 = vmatprep.subr.mxu0 0.0
    %2895 = vmatpush1.msra.mxu0 0.0
    %2896 = vmatprep.subr.mxu0 0.0
    %2897 = vmatpush1.msra.mxu0 0.0
    %2898 = vmatprep.subr.mxu0 0.0
    %2899 = vmatpush1.msra.mxu0 0.0
    %2900 = vmatprep.subr.mxu0 0.0
    %2901 = vmatpush1.msra.mxu0 0.0
    %2902 = vmatprep.subr.mxu0 0.0
    %2903 = vmatpush1.msra.mxu0 0.0
    %2904 = vmatprep.subr.mxu0 0.0
    %2905 = vmatpush1.msra.mxu0 0.0
    %2906 = vmatprep.subr.mxu0 0.0
    %2907 = vmatpush1.msra.mxu0 0.0
    %2908 = vmatprep.subr.mxu0 0.0
    %2909 = vmatpush1.msra.mxu0 0.0
    %2910 = vmatprep.subr.mxu0 0.0
    %2911 = vmatpush1.msra.mxu0 0.0
    %2912 = vmatprep.subr.mxu0 0.0
    %2913 = vmatpush1.msra.mxu0 0.0
    %2914 = vmatprep.mubr.f32.mxu0 0.0
    %2915 = vmatmul.mubr.f32.gmra.mrb[0].mxu0 %v2564
    %v2916 = vpop.f32.mrb[0].mxu0
    %v2917 = vadd.f32 %v2560, %v2916
    %v2918 = vpop.f32.mrb[0].mxu0
    %v2919 = vadd.f32 %v2560, %v2918
    %2920 = vdwg.mxu0
    %2921 = vmatprep.subr.mxu0 %v448
    %2922 = vmatpush1.msra.mxu0 %v447
    %2923 = vmatprep.subr.mxu0 %v746
    %2924 = vmatpush1.msra.mxu0 %v745
    %2925 = vmatprep.subr.mxu0 %v1044
    %2926 = vmatpush1.msra.mxu0 %v1043
    %2927 = vmatprep.subr.mxu0 %v1342
    %2928 = vmatpush1.msra.mxu0 %v1341
    %2929 = vmatprep.subr.mxu0 %v149
    %2930 = vmatpush1.msra.mxu0 %v148
    %2931 = vmatprep.subr.mxu0 %v1640
    %2932 = vmatpush1.msra.mxu0 %v1639
    %2933 = vmatprep.subr.mxu0 %v1938
    %2934 = vmatpush1.msra.mxu0 %v1937
    %2935 = vmatprep.subr.mxu0 %v2236
    %2936 = vmatpush1.msra.mxu0 %v2235
    %2937 = vmatprep.subr.mxu0 %v2534
    %2938 = vmatpush1.msra.mxu0 %v2533
    %2939 = vmatprep.subr.mxu0 0.0
    %2940 = vmatpush1.msra.mxu0 0.0
    %2941 = vmatprep.subr.mxu0 0.0
    %2942 = vmatpush1.msra.mxu0 0.0
    %2943 = vmatprep.subr.mxu0 0.0
    %2944 = vmatpush1.msra.mxu0 0.0
    %2945 = vmatprep.subr.mxu0 0.0
    %2946 = vmatpush1.msra.mxu0 0.0
    %2947 = vmatprep.subr.mxu0 0.0
    %2948 = vmatpush1.msra.mxu0 0.0
    %2949 = vmatprep.subr.mxu0 0.0
    %2950 = vmatpush1.msra.mxu0 0.0
    %2951 = vmatprep.subr.mxu0 0.0
    %2952 = vmatpush1.msra.mxu0 0.0
    %2953 = vmatprep.subr.mxu0 0.0
    %2954 = vmatpush1.msra.mxu0 0.0
    %2955 = vmatprep.subr.mxu0 0.0
    %2956 = vmatpush1.msra.mxu0 0.0
    %2957 = vmatprep.subr.mxu0 0.0
    %2958 = vmatpush1.msra.mxu0 0.0
    %2959 = vmatprep.subr.mxu0 0.0
    %2960 = vmatpush1.msra.mxu0 0.0
    %2961 = vmatprep.subr.mxu0 0.0
    %2962 = vmatpush1.msra.mxu0 0.0
    %2963 = vmatprep.subr.mxu0 0.0
    %2964 = vmatpush1.msra.mxu0 0.0
    %2965 = vmatprep.subr.mxu0 0.0
    %2966 = vmatpush1.msra.mxu0 0.0
    %2967 = vmatprep.subr.mxu0 0.0
    %2968 = vmatpush1.msra.mxu0 0.0
    %2969 = vmatprep.subr.mxu0 0.0
    %2970 = vmatpush1.msra.mxu0 0.0
    %2971 = vmatprep.subr.mxu0 0.0
    %2972 = vmatpush1.msra.mxu0 0.0
    %2973 = vmatprep.subr.mxu0 0.0
    %2974 = vmatpush1.msra.mxu0 0.0
    %2975 = vmatprep.subr.mxu0 0.0
    %2976 = vmatpush1.msra.mxu0 0.0
    %2977 = vmatprep.subr.mxu0 0.0
    %2978 = vmatpush1.msra.mxu0 0.0
    %2979 = vmatprep.subr.mxu0 0.0
    %2980 = vmatpush1.msra.mxu0 0.0
    %2981 = vmatprep.subr.mxu0 0.0
    %2982 = vmatpush1.msra.mxu0 0.0
    %2983 = vmatprep.subr.mxu0 0.0
    %2984 = vmatpush1.msra.mxu0 0.0
    %2985 = vmatprep.mubr.f32.mxu0 0.0
    %2986 = vmatmul.mubr.f32.gmra.mrb[0].mxu0 %v2564
    %v2987 = vpop.f32.mrb[0].mxu0
    %v2988 = vadd.f32 %v2560, %v2987
    %v2989 = vpop.f32.mrb[0].mxu0
    %v2990 = vadd.f32 %v2560, %v2989
    %2991 = vdwg.mxu0
    %2992 = vmatprep.subr.mxu0 %v450
    %2993 = vmatpush1.msra.mxu0 %v449
    %2994 = vmatprep.subr.mxu0 %v748
    %2995 = vmatpush1.msra.mxu0 %v747
    %2996 = vmatprep.subr.mxu0 %v1046
    %2997 = vmatpush1.msra.mxu0 %v1045
    %2998 = vmatprep.subr.mxu0 %v1344
    %2999 = vmatpush1.msra.mxu0 %v1343
    %3000 = vmatprep.subr.mxu0 %v151
    %3001 = vmatpush1.msra.mxu0 %v150
    %3002 = vmatprep.subr.mxu0 %v1642
    %3003 = vmatpush1.msra.mxu0 %v1641
    %3004 = vmatprep.subr.mxu0 %v1940
    %3005 = vmatpush1.msra.mxu0 %v1939
    %3006 = vmatprep.subr.mxu0 %v2238
    %3007 = vmatpush1.msra.mxu0 %v2237
    %3008 = vmatprep.subr.mxu0 %v2536
    %3009 = vmatpush1.msra.mxu0 %v2535
    %3010 = vmatprep.subr.mxu0 0.0
    %3011 = vmatpush1.msra.mxu0 0.0
    %3012 = vmatprep.subr.mxu0 0.0
    %3013 = vmatpush1.msra.mxu0 0.0
    %3014 = vmatprep.subr.mxu0 0.0
    %3015 = vmatpush1.msra.mxu0 0.0
    %3016 = vmatprep.subr.mxu0 0.0
    %3017 = vmatpush1.msra.mxu0 0.0
    %3018 = vmatprep.subr.mxu0 0.0
    %3019 = vmatpush1.msra.mxu0 0.0
    %3020 = vmatprep.subr.mxu0 0.0
    %3021 = vmatpush1.msra.mxu0 0.0
    %3022 = vmatprep.subr.mxu0 0.0
    %3023 = vmatpush1.msra.mxu0 0.0
    %3024 = vmatprep.subr.mxu0 0.0
    %3025 = vmatpush1.msra.mxu0 0.0
    %3026 = vmatprep.subr.mxu0 0.0
    %3027 = vmatpush1.msra.mxu0 0.0
    %3028 = vmatprep.subr.mxu0 0.0
    %3029 = vmatpush1.msra.mxu0 0.0
    %3030 = vmatprep.subr.mxu0 0.0
    %3031 = vmatpush1.msra.mxu0 0.0
    %3032 = vmatprep.subr.mxu0 0.0
    %3033 = vmatpush1.msra.mxu0 0.0
    %3034 = vmatprep.subr.mxu0 0.0
    %3035 = vmatpush1.msra.mxu0 0.0
    %3036 = vmatprep.subr.mxu0 0.0
    %3037 = vmatpush1.msra.mxu0 0.0
    %3038 = vmatprep.subr.mxu0 0.0
    %3039 = vmatpush1.msra.mxu0 0.0
    %3040 = vmatprep.subr.mxu0 0.0
    %3041 = vmatpush1.msra.mxu0 0.0
    %3042 = vmatprep.subr.mxu0 0.0
    %3043 = vmatpush1.msra.mxu0 0.0
    %3044 = vmatprep.subr.mxu0 0.0
    %3045 = vmatpush1.msra.mxu0 0.0
    %3046 = vmatprep.subr.mxu0 0.0
    %3047 = vmatpush1.msra.mxu0 0.0
    %3048 = vmatprep.subr.mxu0 0.0
    %3049 = vmatpush1.msra.mxu0 0.0
    %3050 = vmatprep.subr.mxu0 0.0
    %3051 = vmatpush1.msra.mxu0 0.0
    %3052 = vmatprep.subr.mxu0 0.0
    %3053 = vmatpush1.msra.mxu0 0.0
    %3054 = vmatprep.subr.mxu0 0.0
    %3055 = vmatpush1.msra.mxu0 0.0
    %3056 = vmatprep.mubr.f32.mxu0 0.0
    %3057 = vmatmul.mubr.f32.gmra.mrb[0].mxu0 %v2564
    %v3058 = vpop.f32.mrb[0].mxu0
    %v3059 = vadd.f32 %v2560, %v3058
    %v3060 = vpop.f32.mrb[0].mxu0
    %v3061 = vadd.f32 %v2560, %v3060
    %3062 = vdwg.mxu0
    %3063 = vmatprep.subr.mxu0 %v452
    %3064 = vmatpush1.msra.mxu0 %v451
    %3065 = vmatprep.subr.mxu0 %v750
    %3066 = vmatpush1.msra.mxu0 %v749
    %3067 = vmatprep.subr.mxu0 %v1048
    %3068 = vmatpush1.msra.mxu0 %v1047
    %3069 = vmatprep.subr.mxu0 %v1346
    %3070 = vmatpush1.msra.mxu0 %v1345
    %3071 = vmatprep.subr.mxu0 %v153
    %3072 = vmatpush1.msra.mxu0 %v152
    %3073 = vmatprep.subr.mxu0 %v1644
    %3074 = vmatpush1.msra.mxu0 %v1643
    %3075 = vmatprep.subr.mxu0 %v1942
    %3076 = vmatpush1.msra.mxu0 %v1941
    %3077 = vmatprep.subr.mxu0 %v2240
    %3078 = vmatpush1.msra.mxu0 %v2239
    %3079 = vmatprep.subr.mxu0 %v2538
    %3080 = vmatpush1.msra.mxu0 %v2537
    %3081 = vmatprep.subr.mxu0 0.0
    %3082 = vmatpush1.msra.mxu0 0.0
    %3083 = vmatprep.subr.mxu0 0.0
    %3084 = vmatpush1.msra.mxu0 0.0
    %3085 = vmatprep.subr.mxu0 0.0
    %3086 = vmatpush1.msra.mxu0 0.0
    %3087 = vmatprep.subr.mxu0 0.0
    %3088 = vmatpush1.msra.mxu0 0.0
    %3089 = vmatprep.subr.mxu0 0.0
    %3090 = vmatpush1.msra.mxu0 0.0
    %3091 = vmatprep.subr.mxu0 0.0
    %3092 = vmatpush1.msra.mxu0 0.0
    %3093 = vmatprep.subr.mxu0 0.0
    %3094 = vmatpush1.msra.mxu0 0.0
    %3095 = vmatprep.subr.mxu0 0.0
    %3096 = vmatpush1.msra.mxu0 0.0
    %3097 = vmatprep.subr.mxu0 0.0
    %3098 = vmatpush1.msra.mxu0 0.0
    %3099 = vmatprep.subr.mxu0 0.0
    %3100 = vmatpush1.msra.mxu0 0.0
    %3101 = vmatprep.subr.mxu0 0.0
    %3102 = vmatpush1.msra.mxu0 0.0
    %3103 = vmatprep.subr.mxu0 0.0
    %3104 = vmatpush1.msra.mxu0 0.0
    %3105 = vmatprep.subr.mxu0 0.0
    %3106 = vmatpush1.msra.mxu0 0.0
    %3107 = vmatprep.subr.mxu0 0.0
    %3108 = vmatpush1.msra.mxu0 0.0
    %3109 = vmatprep.subr.mxu0 0.0
    %3110 = vmatpush1.msra.mxu0 0.0
    %3111 = vmatprep.subr.mxu0 0.0
    %3112 = vmatpush1.msra.mxu0 0.0
    %3113 = vmatprep.subr.mxu0 0.0
    %3114 = vmatpush1.msra.mxu0 0.0
    %3115 = vmatprep.subr.mxu0 0.0
    %3116 = vmatpush1.msra.mxu0 0.0
    %3117 = vmatprep.subr.mxu0 0.0
    %3118 = vmatpush1.msra.mxu0 0.0
    %3119 = vmatprep.subr.mxu0 0.0
    %3120 = vmatpush1.msra.mxu0 0.0
    %3121 = vmatprep.subr.mxu0 0.0
    %3122 = vmatpush1.msra.mxu0 0.0
    %3123 = vmatprep.subr.mxu0 0.0
    %3124 = vmatpush1.msra.mxu0 0.0
    %3125 = vmatprep.subr.mxu0 0.0
    %3126 = vmatpush1.msra.mxu0 0.0
    %3127 = vmatprep.mubr.f32.mxu0 0.0
    %3128 = vmatmul.mubr.f32.gmra.mrb[0].mxu0 %v2564
    %v3129 = vpop.f32.mrb[0].mxu0
    %v3130 = vadd.f32 %v2560, %v3129
    %v3131 = vpop.f32.mrb[0].mxu0
    %v3132 = vadd.f32 %v2560, %v3131
    %3133 = vdwg.mxu0
    %3134 = vmatprep.subr.mxu0 %v454
    %3135 = vmatpush1.msra.mxu0 %v453
    %3136 = vmatprep.subr.mxu0 %v752
    %3137 = vmatpush1.msra.mxu0 %v751
    %3138 = vmatprep.subr.mxu0 %v1050
    %3139 = vmatpush1.msra.mxu0 %v1049
    %3140 = vmatprep.subr.mxu0 %v1348
    %3141 = vmatpush1.msra.mxu0 %v1347
    %3142 = vmatprep.subr.mxu0 %v155
    %3143 = vmatpush1.msra.mxu0 %v154
    %3144 = vmatprep.subr.mxu0 %v1646
    %3145 = vmatpush1.msra.mxu0 %v1645
    %3146 = vmatprep.subr.mxu0 %v1944
    %3147 = vmatpush1.msra.mxu0 %v1943
    %3148 = vmatprep.subr.mxu0 %v2242
    %3149 = vmatpush1.msra.mxu0 %v2241
    %3150 = vmatprep.subr.mxu0 %v2540
    %3151 = vmatpush1.msra.mxu0 %v2539
    %3152 = vmatprep.subr.mxu0 0.0
    %3153 = vmatpush1.msra.mxu0 0.0
    %3154 = vmatprep.subr.mxu0 0.0
    %3155 = vmatpush1.msra.mxu0 0.0
    %3156 = vmatprep.subr.mxu0 0.0
    %3157 = vmatpush1.msra.mxu0 0.0
    %3158 = vmatprep.subr.mxu0 0.0
    %3159 = vmatpush1.msra.mxu0 0.0
    %3160 = vmatprep.subr.mxu0 0.0
    %3161 = vmatpush1.msra.mxu0 0.0
    %3162 = vmatprep.subr.mxu0 0.0
    %3163 = vmatpush1.msra.mxu0 0.0
    %3164 = vmatprep.subr.mxu0 0.0
    %3165 = vmatpush1.msra.mxu0 0.0
    %3166 = vmatprep.subr.mxu0 0.0
    %3167 = vmatpush1.msra.mxu0 0.0
    %3168 = vmatprep.subr.mxu0 0.0
    %3169 = vmatpush1.msra.mxu0 0.0
    %3170 = vmatprep.subr.mxu0 0.0
    %3171 = vmatpush1.msra.mxu0 0.0
    %3172 = vmatprep.subr.mxu0 0.0
    %3173 = vmatpush1.msra.mxu0 0.0
    %3174 = vmatprep.subr.mxu0 0.0
    %3175 = vmatpush1.msra.mxu0 0.0
    %3176 = vmatprep.subr.mxu0 0.0
    %3177 = vmatpush1.msra.mxu0 0.0
    %3178 = vmatprep.subr.mxu0 0.0
    %3179 = vmatpush1.msra.mxu0 0.0
    %3180 = vmatprep.subr.mxu0 0.0
    %3181 = vmatpush1.msra.mxu0 0.0
    %3182 = vmatprep.subr.mxu0 0.0
    %3183 = vmatpush1.msra.mxu0 0.0
    %3184 = vmatprep.subr.mxu0 0.0
    %3185 = vmatpush1.msra.mxu0 0.0
    %3186 = vmatprep.subr.mxu0 0.0
    %3187 = vmatpush1.msra.mxu0 0.0
    %3188 = vmatprep.subr.mxu0 0.0
    %3189 = vmatpush1.msra.mxu0 0.0
    %3190 = vmatprep.subr.mxu0 0.0
    %3191 = vmatpush1.msra.mxu0 0.0
    %3192 = vmatprep.subr.mxu0 0.0
    %3193 = vmatpush1.msra.mxu0 0.0
    %3194 = vmatprep.subr.mxu0 0.0
    %3195 = vmatpush1.msra.mxu0 0.0
    %3196 = vmatprep.subr.mxu0 0.0
    %3197 = vmatpush1.msra.mxu0 0.0
    %3198 = vmatprep.mubr.f32.mxu0 0.0
    %3199 = vmatmul.mubr.f32.gmra.mrb[0].mxu0 %v2564
    %v3200 = vpop.f32.mrb[0].mxu0
    %v3201 = vadd.f32 %v2560, %v3200
    %v3202 = vpop.f32.mrb[0].mxu0
    %v3203 = vadd.f32 %v2560, %v3202
    %3204 = vdwg.mxu0
    %3205 = vmatprep.subr.mxu0 %v456
    %3206 = vmatpush1.msra.mxu0 %v455
    %3207 = vmatprep.subr.mxu0 %v754
    %3208 = vmatpush1.msra.mxu0 %v753
    %3209 = vmatprep.subr.mxu0 %v1052
    %3210 = vmatpush1.msra.mxu0 %v1051
    %3211 = vmatprep.subr.mxu0 %v1350
    %3212 = vmatpush1.msra.mxu0 %v1349
    %3213 = vmatprep.subr.mxu0 %v157
    %3214 = vmatpush1.msra.mxu0 %v156
    %3215 = vmatprep.subr.mxu0 %v1648
    %3216 = vmatpush1.msra.mxu0 %v1647
    %3217 = vmatprep.subr.mxu0 %v1946
    %3218 = vmatpush1.msra.mxu0 %v1945
    %3219 = vmatprep.subr.mxu0 %v2244
    %3220 = vmatpush1.msra.mxu0 %v2243
    %3221 = vmatprep.subr.mxu0 %v2542
    %3222 = vmatpush1.msra.mxu0 %v2541
    %3223 = vmatprep.subr.mxu0 0.0
    %3224 = vmatpush1.msra.mxu0 0.0
    %3225 = vmatprep.subr.mxu0 0.0
    %3226 = vmatpush1.msra.mxu0 0.0
    %3227 = vmatprep.subr.mxu0 0.0
    %3228 = vmatpush1.msra.mxu0 0.0
    %3229 = vmatprep.subr.mxu0 0.0
    %3230 = vmatpush1.msra.mxu0 0.0
    %3231 = vmatprep.subr.mxu0 0.0
    %3232 = vmatpush1.msra.mxu0 0.0
    %3233 = vmatprep.subr.mxu0 0.0
    %3234 = vmatpush1.msra.mxu0 0.0
    %3235 = vmatprep.subr.mxu0 0.0
    %3236 = vmatpush1.msra.mxu0 0.0
    %3237 = vmatprep.subr.mxu0 0.0
    %3238 = vmatpush1.msra.mxu0 0.0
    %3239 = vmatprep.subr.mxu0 0.0
    %3240 = vmatpush1.msra.mxu0 0.0
    %3241 = vmatprep.subr.mxu0 0.0
    %3242 = vmatpush1.msra.mxu0 0.0
    %3243 = vmatprep.subr.mxu0 0.0
    %3244 = vmatpush1.msra.mxu0 0.0
    %3245 = vmatprep.subr.mxu0 0.0
    %3246 = vmatpush1.msra.mxu0 0.0
    %3247 = vmatprep.subr.mxu0 0.0
    %3248 = vmatpush1.msra.mxu0 0.0
    %3249 = vmatprep.subr.mxu0 0.0
    %3250 = vmatpush1.msra.mxu0 0.0
    %3251 = vmatprep.subr.mxu0 0.0
    %3252 = vmatpush1.msra.mxu0 0.0
    %3253 = vmatprep.subr.mxu0 0.0
    %3254 = vmatpush1.msra.mxu0 0.0
    %3255 = vmatprep.subr.mxu0 0.0
    %3256 = vmatpush1.msra.mxu0 0.0
    %3257 = vmatprep.subr.mxu0 0.0
    %3258 = vmatpush1.msra.mxu0 0.0
    %3259 = vmatprep.subr.mxu0 0.0
    %3260 = vmatpush1.msra.mxu0 0.0
    %3261 = vmatprep.subr.mxu0 0.0
    %3262 = vmatpush1.msra.mxu0 0.0
    %3263 = vmatprep.subr.mxu0 0.0
    %3264 = vmatpush1.msra.mxu0 0.0
    %3265 = vmatprep.subr.mxu0 0.0
    %3266 = vmatpush1.msra.mxu0 0.0
    %3267 = vmatprep.subr.mxu0 0.0
    %3268 = vmatpush1.msra.mxu0 0.0
    %3269 = vmatprep.mubr.f32.mxu0 0.0
    %3270 = vmatmul.mubr.f32.gmra.mrb[0].mxu0 %v2564
    %v3271 = vpop.f32.mrb[0].mxu0
    %v3272 = vadd.f32 %v2560, %v3271
    %v3273 = vpop.f32.mrb[0].mxu0
    %v3274 = vadd.f32 %v2560, %v3273
    %3275 = vdwg.mxu0
    %3276 = vmatprep.subr.mxu0 %v458
    %3277 = vmatpush1.msra.mxu0 %v457
    %3278 = vmatprep.subr.mxu0 %v756
    %3279 = vmatpush1.msra.mxu0 %v755
    %3280 = vmatprep.subr.mxu0 %v1054
    %3281 = vmatpush1.msra.mxu0 %v1053
    %3282 = vmatprep.subr.mxu0 %v1352
    %3283 = vmatpush1.msra.mxu0 %v1351
    %3284 = vmatprep.subr.mxu0 %v159
    %3285 = vmatpush1.msra.mxu0 %v158
    %3286 = vmatprep.subr.mxu0 %v1650
    %3287 = vmatpush1.msra.mxu0 %v1649
    %3288 = vmatprep.subr.mxu0 %v1948
    %3289 = vmatpush1.msra.mxu0 %v1947
    %3290 = vmatprep.subr.mxu0 %v2246
    %3291 = vmatpush1.msra.mxu0 %v2245
    %3292 = vmatprep.subr.mxu0 %v2544
    %3293 = vmatpush1.msra.mxu0 %v2543
    %3294 = vmatprep.subr.mxu0 0.0
    %3295 = vmatpush1.msra.mxu0 0.0
    %3296 = vmatprep.subr.mxu0 0.0
    %3297 = vmatpush1.msra.mxu0 0.0
    %3298 = vmatprep.subr.mxu0 0.0
    %3299 = vmatpush1.msra.mxu0 0.0
    %3300 = vmatprep.subr.mxu0 0.0
    %3301 = vmatpush1.msra.mxu0 0.0
    %3302 = vmatprep.subr.mxu0 0.0
    %3303 = vmatpush1.msra.mxu0 0.0
    %3304 = vmatprep.subr.mxu0 0.0
    %3305 = vmatpush1.msra.mxu0 0.0
    %3306 = vmatprep.subr.mxu0 0.0
    %3307 = vmatpush1.msra.mxu0 0.0
    %3308 = vmatprep.subr.mxu0 0.0
    %3309 = vmatpush1.msra.mxu0 0.0
    %3310 = vmatprep.subr.mxu0 0.0
    %3311 = vmatpush1.msra.mxu0 0.0
    %3312 = vmatprep.subr.mxu0 0.0
    %3313 = vmatpush1.msra.mxu0 0.0
    %3314 = vmatprep.subr.mxu0 0.0
    %3315 = vmatpush1.msra.mxu0 0.0
    %3316 = vmatprep.subr.mxu0 0.0
    %3317 = vmatpush1.msra.mxu0 0.0
    %3318 = vmatprep.subr.mxu0 0.0
    %3319 = vmatpush1.msra.mxu0 0.0
    %3320 = vmatprep.subr.mxu0 0.0
    %3321 = vmatpush1.msra.mxu0 0.0
    %3322 = vmatprep.subr.mxu0 0.0
    %3323 = vmatpush1.msra.mxu0 0.0
    %3324 = vmatprep.subr.mxu0 0.0
    %3325 = vmatpush1.msra.mxu0 0.0
    %3326 = vmatprep.subr.mxu0 0.0
    %3327 = vmatpush1.msra.mxu0 0.0
    %3328 = vmatprep.subr.mxu0 0.0
    %3329 = vmatpush1.msra.mxu0 0.0
    %3330 = vmatprep.subr.mxu0 0.0
    %3331 = vmatpush1.msra.mxu0 0.0
    %3332 = vmatprep.subr.mxu0 0.0
    %3333 = vmatpush1.msra.mxu0 0.0
    %3334 = vmatprep.subr.mxu0 0.0
    %3335 = vmatpush1.msra.mxu0 0.0
    %3336 = vmatprep.subr.mxu0 0.0
    %3337 = vmatpush1.msra.mxu0 0.0
    %3338 = vmatprep.subr.mxu0 0.0
    %3339 = vmatpush1.msra.mxu0 0.0
    %3340 = vmatprep.mubr.f32.mxu0 0.0
    %3341 = vmatmul.mubr.f32.gmra.mrb[0].mxu0 %v2564
    %v3342 = vpop.f32.mrb[0].mxu0
    %v3343 = vadd.f32 %v2560, %v3342
    %v3344 = vpop.f32.mrb[0].mxu0
    %v3345 = vadd.f32 %v2560, %v3344
    %3346 = vdwg.mxu0
    %3347 = vmatprep.subr.mxu0 %v460
    %3348 = vmatpush1.msra.mxu0 %v459
    %3349 = vmatprep.subr.mxu0 %v758
    %3350 = vmatpush1.msra.mxu0 %v757
    %3351 = vmatprep.subr.mxu0 %v1056
    %3352 = vmatpush1.msra.mxu0 %v1055
    %3353 = vmatprep.subr.mxu0 %v1354
    %3354 = vmatpush1.msra.mxu0 %v1353
    %3355 = vmatprep.subr.mxu0 %v161
    %3356 = vmatpush1.msra.mxu0 %v160
    %3357 = vmatprep.subr.mxu0 %v1652
    %3358 = vmatpush1.msra.mxu0 %v1651
    %3359 = vmatprep.subr.mxu0 %v1950
    %3360 = vmatpush1.msra.mxu0 %v1949
    %3361 = vmatprep.subr.mxu0 %v2248
    %3362 = vmatpush1.msra.mxu0 %v2247
    %3363 = vmatprep.subr.mxu0 %v2546
    %3364 = vmatpush1.msra.mxu0 %v2545
    %3365 = vmatprep.subr.mxu0 0.0
    %3366 = vmatpush1.msra.mxu0 0.0
    %3367 = vmatprep.subr.mxu0 0.0
    %3368 = vmatpush1.msra.mxu0 0.0
    %3369 = vmatprep.subr.mxu0 0.0
    %3370 = vmatpush1.msra.mxu0 0.0
    %3371 = vmatprep.subr.mxu0 0.0
    %3372 = vmatpush1.msra.mxu0 0.0
    %3373 = vmatprep.subr.mxu0 0.0
    %3374 = vmatpush1.msra.mxu0 0.0
    %3375 = vmatprep.subr.mxu0 0.0
    %3376 = vmatpush1.msra.mxu0 0.0
    %3377 = vmatprep.subr.mxu0 0.0
    %3378 = vmatpush1.msra.mxu0 0.0
    %3379 = vmatprep.subr.mxu0 0.0
    %3380 = vmatpush1.msra.mxu0 0.0
    %3381 = vmatprep.subr.mxu0 0.0
    %3382 = vmatpush1.msra.mxu0 0.0
    %3383 = vmatprep.subr.mxu0 0.0
    %3384 = vmatpush1.msra.mxu0 0.0
    %3385 = vmatprep.subr.mxu0 0.0
    %3386 = vmatpush1.msra.mxu0 0.0
    %3387 = vmatprep.subr.mxu0 0.0
    %3388 = vmatpush1.msra.mxu0 0.0
    %3389 = vmatprep.subr.mxu0 0.0
    %3390 = vmatpush1.msra.mxu0 0.0
    %3391 = vmatprep.subr.mxu0 0.0
    %3392 = vmatpush1.msra.mxu0 0.0
    %3393 = vmatprep.subr.mxu0 0.0
    %3394 = vmatpush1.msra.mxu0 0.0
    %3395 = vmatprep.subr.mxu0 0.0
    %3396 = vmatpush1.msra.mxu0 0.0
    %3397 = vmatprep.subr.mxu0 0.0
    %3398 = vmatpush1.msra.mxu0 0.0
    %3399 = vmatprep.subr.mxu0 0.0
    %3400 = vmatpush1.msra.mxu0 0.0
    %3401 = vmatprep.subr.mxu0 0.0
    %3402 = vmatpush1.msra.mxu0 0.0
    %3403 = vmatprep.subr.mxu0 0.0
    %3404 = vmatpush1.msra.mxu0 0.0
    %3405 = vmatprep.subr.mxu0 0.0
    %3406 = vmatpush1.msra.mxu0 0.0
    %3407 = vmatprep.subr.mxu0 0.0
    %3408 = vmatpush1.msra.mxu0 0.0
    %3409 = vmatprep.subr.mxu0 0.0
    %3410 = vmatpush1.msra.mxu0 0.0
    %3411 = vmatprep.mubr.f32.mxu0 0.0
    %3412 = vmatmul.mubr.f32.gmra.mrb[0].mxu0 %v2564
    %v3413 = vpop.f32.mrb[0].mxu0
    %v3414 = vadd.f32 %v2560, %v3413
    %v3415 = vpop.f32.mrb[0].mxu0
    %v3416 = vadd.f32 %v2560, %v3415
    %3417 = vdwg.mxu0
    %3418 = vmatprep.subr.mxu0 %v462
    %3419 = vmatpush1.msra.mxu0 %v461
    %3420 = vmatprep.subr.mxu0 %v760
    %3421 = vmatpush1.msra.mxu0 %v759
    %3422 = vmatprep.subr.mxu0 %v1058
    %3423 = vmatpush1.msra.mxu0 %v1057
    %3424 = vmatprep.subr.mxu0 %v1356
    %3425 = vmatpush1.msra.mxu0 %v1355
    %3426 = vmatprep.subr.mxu0 %v163
    %3427 = vmatpush1.msra.mxu0 %v162
    %3428 = vmatprep.subr.mxu0 %v1654
    %3429 = vmatpush1.msra.mxu0 %v1653
    %3430 = vmatprep.subr.mxu0 %v1952
    %3431 = vmatpush1.msra.mxu0 %v1951
    %3432 = vmatprep.subr.mxu0 %v2250
    %3433 = vmatpush1.msra.mxu0 %v2249
    %3434 = vmatprep.subr.mxu0 %v2548
    %3435 = vmatpush1.msra.mxu0 %v2547
    %3436 = vmatprep.subr.mxu0 0.0
    %3437 = vmatpush1.msra.mxu0 0.0
    %3438 = vmatprep.subr.mxu0 0.0
    %3439 = vmatpush1.msra.mxu0 0.0
    %3440 = vmatprep.subr.mxu0 0.0
    %3441 = vmatpush1.msra.mxu0 0.0
    %3442 = vmatprep.subr.mxu0 0.0
    %3443 = vmatpush1.msra.mxu0 0.0
    %3444 = vmatprep.subr.mxu0 0.0
    %3445 = vmatpush1.msra.mxu0 0.0
    %3446 = vmatprep.subr.mxu0 0.0
    %3447 = vmatpush1.msra.mxu0 0.0
    %3448 = vmatprep.subr.mxu0 0.0
    %3449 = vmatpush1.msra.mxu0 0.0
    %3450 = vmatprep.subr.mxu0 0.0
    %3451 = vmatpush1.msra.mxu0 0.0
    %3452 = vmatprep.subr.mxu0 0.0
    %3453 = vmatpush1.msra.mxu0 0.0
    %3454 = vmatprep.subr.mxu0 0.0
    %3455 = vmatpush1.msra.mxu0 0.0
    %3456 = vmatprep.subr.mxu0 0.0
    %3457 = vmatpush1.msra.mxu0 0.0
    %3458 = vmatprep.subr.mxu0 0.0
    %3459 = vmatpush1.msra.mxu0 0.0
    %3460 = vmatprep.subr.mxu0 0.0
    %3461 = vmatpush1.msra.mxu0 0.0
    %3462 = vmatprep.subr.mxu0 0.0
    %3463 = vmatpush1.msra.mxu0 0.0
    %3464 = vmatprep.subr.mxu0 0.0
    %3465 = vmatpush1.msra.mxu0 0.0
    %3466 = vmatprep.subr.mxu0 0.0
    %3467 = vmatpush1.msra.mxu0 0.0
    %3468 = vmatprep.subr.mxu0 0.0
    %3469 = vmatpush1.msra.mxu0 0.0
    %3470 = vmatprep.subr.mxu0 0.0
    %3471 = vmatpush1.msra.mxu0 0.0
    %3472 = vmatprep.subr.mxu0 0.0
    %3473 = vmatpush1.msra.mxu0 0.0
    %3474 = vmatprep.subr.mxu0 0.0
    %3475 = vmatpush1.msra.mxu0 0.0
    %3476 = vmatprep.subr.mxu0 0.0
    %3477 = vmatpush1.msra.mxu0 0.0
    %3478 = vmatprep.subr.mxu0 0.0
    %3479 = vmatpush1.msra.mxu0 0.0
    %3480 = vmatprep.subr.mxu0 0.0
    %3481 = vmatpush1.msra.mxu0 0.0
    %3482 = vmatprep.mubr.f32.mxu0 0.0
    %3483 = vmatmul.mubr.f32.gmra.mrb[0].mxu0 %v2564
    %v3484 = vpop.f32.mrb[0].mxu0
    %v3485 = vadd.f32 %v2560, %v3484
    %v3486 = vpop.f32.mrb[0].mxu0
    %v3487 = vadd.f32 %v2560, %v3486
    %3488 = vdwg.mxu0
    %3489 = vmatprep.subr.mxu0 %v464
    %3490 = vmatpush1.msra.mxu0 %v463
    %3491 = vmatprep.subr.mxu0 %v762
    %3492 = vmatpush1.msra.mxu0 %v761
    %3493 = vmatprep.subr.mxu0 %v1060
    %3494 = vmatpush1.msra.mxu0 %v1059
    %3495 = vmatprep.subr.mxu0 %v1358
    %3496 = vmatpush1.msra.mxu0 %v1357
    %3497 = vmatprep.subr.mxu0 %v165
    %3498 = vmatpush1.msra.mxu0 %v164
    %3499 = vmatprep.subr.mxu0 %v1656
    %3500 = vmatpush1.msra.mxu0 %v1655
    %3501 = vmatprep.subr.mxu0 %v1954
    %3502 = vmatpush1.msra.mxu0 %v1953
    %3503 = vmatprep.subr.mxu0 %v2252
    %3504 = vmatpush1.msra.mxu0 %v2251
    %3505 = vmatprep.subr.mxu0 %v2550
    %3506 = vmatpush1.msra.mxu0 %v2549
    %3507 = vmatprep.subr.mxu0 0.0
    %3508 = vmatpush1.msra.mxu0 0.0
    %3509 = vmatprep.subr.mxu0 0.0
    %3510 = vmatpush1.msra.mxu0 0.0
    %3511 = vmatprep.subr.mxu0 0.0
    %3512 = vmatpush1.msra.mxu0 0.0
    %3513 = vmatprep.subr.mxu0 0.0
    %3514 = vmatpush1.msra.mxu0 0.0
    %3515 = vmatprep.subr.mxu0 0.0
    %3516 = vmatpush1.msra.mxu0 0.0
    %3517 = vmatprep.subr.mxu0 0.0
    %3518 = vmatpush1.msra.mxu0 0.0
    %3519 = vmatprep.subr.mxu0 0.0
    %3520 = vmatpush1.msra.mxu0 0.0
    %3521 = vmatprep.subr.mxu0 0.0
    %3522 = vmatpush1.msra.mxu0 0.0
    %3523 = vmatprep.subr.mxu0 0.0
    %3524 = vmatpush1.msra.mxu0 0.0
    %3525 = vmatprep.subr.mxu0 0.0
    %3526 = vmatpush1.msra.mxu0 0.0
    %3527 = vmatprep.subr.mxu0 0.0
    %3528 = vmatpush1.msra.mxu0 0.0
    %3529 = vmatprep.subr.mxu0 0.0
    %3530 = vmatpush1.msra.mxu0 0.0
    %3531 = vmatprep.subr.mxu0 0.0
    %3532 = vmatpush1.msra.mxu0 0.0
    %3533 = vmatprep.subr.mxu0 0.0
    %3534 = vmatpush1.msra.mxu0 0.0
    %3535 = vmatprep.subr.mxu0 0.0
    %3536 = vmatpush1.msra.mxu0 0.0
    %3537 = vmatprep.subr.mxu0 0.0
    %3538 = vmatpush1.msra.mxu0 0.0
    %3539 = vmatprep.subr.mxu0 0.0
    %3540 = vmatpush1.msra.mxu0 0.0
    %3541 = vmatprep.subr.mxu0 0.0
    %3542 = vmatpush1.msra.mxu0 0.0
    %3543 = vmatprep.subr.mxu0 0.0
    %3544 = vmatpush1.msra.mxu0 0.0
    %3545 = vmatprep.subr.mxu0 0.0
    %3546 = vmatpush1.msra.mxu0 0.0
    %3547 = vmatprep.subr.mxu0 0.0
    %3548 = vmatpush1.msra.mxu0 0.0
    %3549 = vmatprep.subr.mxu0 0.0
    %3550 = vmatpush1.msra.mxu0 0.0
    %3551 = vmatprep.subr.mxu0 0.0
    %3552 = vmatpush1.msra.mxu0 0.0
    %3553 = vmatprep.mubr.f32.mxu0 0.0
    %3554 = vmatmul.mubr.f32.gmra.mrb[0].mxu0 %v2564
    %v3555 = vpop.f32.mrb[0].mxu0
    %v3556 = vadd.f32 %v2560, %v3555
    %v3557 = vpop.f32.mrb[0].mxu0
    %v3558 = vadd.f32 %v2560, %v3557
    %3559 = vdwg.mxu0
    %3560 = vmatprep.subr.mxu0 %v466
    %3561 = vmatpush1.msra.mxu0 %v465
    %3562 = vmatprep.subr.mxu0 %v764
    %3563 = vmatpush1.msra.mxu0 %v763
    %3564 = vmatprep.subr.mxu0 %v1062
    %3565 = vmatpush1.msra.mxu0 %v1061
    %3566 = vmatprep.subr.mxu0 %v1360
    %3567 = vmatpush1.msra.mxu0 %v1359
    %3568 = vmatprep.subr.mxu0 %v167
    %3569 = vmatpush1.msra.mxu0 %v166
    %3570 = vmatprep.subr.mxu0 %v1658
    %3571 = vmatpush1.msra.mxu0 %v1657
    %3572 = vmatprep.subr.mxu0 %v1956
    %3573 = vmatpush1.msra.mxu0 %v1955
    %3574 = vmatprep.subr.mxu0 %v2254
    %3575 = vmatpush1.msra.mxu0 %v2253
    %3576 = vmatprep.subr.mxu0 %v2552
    %3577 = vmatpush1.msra.mxu0 %v2551
    %3578 = vmatprep.subr.mxu0 0.0
    %3579 = vmatpush1.msra.mxu0 0.0
    %3580 = vmatprep.subr.mxu0 0.0
    %3581 = vmatpush1.msra.mxu0 0.0
    %3582 = vmatprep.subr.mxu0 0.0
    %3583 = vmatpush1.msra.mxu0 0.0
    %3584 = vmatprep.subr.mxu0 0.0
    %3585 = vmatpush1.msra.mxu0 0.0
    %3586 = vmatprep.subr.mxu0 0.0
    %3587 = vmatpush1.msra.mxu0 0.0
    %3588 = vmatprep.subr.mxu0 0.0
    %3589 = vmatpush1.msra.mxu0 0.0
    %3590 = vmatprep.subr.mxu0 0.0
    %3591 = vmatpush1.msra.mxu0 0.0
    %3592 = vmatprep.subr.mxu0 0.0
    %3593 = vmatpush1.msra.mxu0 0.0
    %3594 = vmatprep.subr.mxu0 0.0
    %3595 = vmatpush1.msra.mxu0 0.0
    %3596 = vmatprep.subr.mxu0 0.0
    %3597 = vmatpush1.msra.mxu0 0.0
    %3598 = vmatprep.subr.mxu0 0.0
    %3599 = vmatpush1.msra.mxu0 0.0
    %3600 = vmatprep.subr.mxu0 0.0
    %3601 = vmatpush1.msra.mxu0 0.0
    %3602 = vmatprep.subr.mxu0 0.0
    %3603 = vmatpush1.msra.mxu0 0.0
    %3604 = vmatprep.subr.mxu0 0.0
    %3605 = vmatpush1.msra.mxu0 0.0
    %3606 = vmatprep.subr.mxu0 0.0
    %3607 = vmatpush1.msra.mxu0 0.0
    %3608 = vmatprep.subr.mxu0 0.0
    %3609 = vmatpush1.msra.mxu0 0.0
    %3610 = vmatprep.subr.mxu0 0.0
    %3611 = vmatpush1.msra.mxu0 0.0
    %3612 = vmatprep.subr.mxu0 0.0
    %3613 = vmatpush1.msra.mxu0 0.0
    %3614 = vmatprep.subr.mxu0 0.0
    %3615 = vmatpush1.msra.mxu0 0.0
    %3616 = vmatprep.subr.mxu0 0.0
    %3617 = vmatpush1.msra.mxu0 0.0
    %3618 = vmatprep.subr.mxu0 0.0
    %3619 = vmatpush1.msra.mxu0 0.0
    %3620 = vmatprep.subr.mxu0 0.0
    %3621 = vmatpush1.msra.mxu0 0.0
    %3622 = vmatprep.subr.mxu0 0.0
    %3623 = vmatpush1.msra.mxu0 0.0
    %3624 = vmatprep.mubr.f32.mxu0 0.0
    %3625 = vmatmul.mubr.f32.gmra.mrb[0].mxu0 %v2564
    %v3626 = vpop.f32.mrb[0].mxu0
    %v3627 = vadd.f32 %v2560, %v3626
    %v3628 = vpop.f32.mrb[0].mxu0
    %v3629 = vadd.f32 %v2560, %v3628
    %3630 = vdwg.mxu0
    %3631 = vmatprep.subr.mxu0 %v468
    %3632 = vmatpush1.msra.mxu0 %v467
    %3633 = vmatprep.subr.mxu0 %v766
    %3634 = vmatpush1.msra.mxu0 %v765
    %3635 = vmatprep.subr.mxu0 %v1064
    %3636 = vmatpush1.msra.mxu0 %v1063
    %3637 = vmatprep.subr.mxu0 %v1362
    %3638 = vmatpush1.msra.mxu0 %v1361
    %3639 = vmatprep.subr.mxu0 %v169
    %3640 = vmatpush1.msra.mxu0 %v168
    %3641 = vmatprep.subr.mxu0 %v1660
    %3642 = vmatpush1.msra.mxu0 %v1659
    %3643 = vmatprep.subr.mxu0 %v1958
    %3644 = vmatpush1.msra.mxu0 %v1957
    %3645 = vmatprep.subr.mxu0 %v2256
    %3646 = vmatpush1.msra.mxu0 %v2255
    %3647 = vmatprep.subr.mxu0 %v2554
    %3648 = vmatpush1.msra.mxu0 %v2553
    %3649 = vmatprep.subr.mxu0 0.0
    %3650 = vmatpush1.msra.mxu0 0.0
    %3651 = vmatprep.subr.mxu0 0.0
    %3652 = vmatpush1.msra.mxu0 0.0
    %3653 = vmatprep.subr.mxu0 0.0
    %3654 = vmatpush1.msra.mxu0 0.0
    %3655 = vmatprep.subr.mxu0 0.0
    %3656 = vmatpush1.msra.mxu0 0.0
    %3657 = vmatprep.subr.mxu0 0.0
    %3658 = vmatpush1.msra.mxu0 0.0
    %3659 = vmatprep.subr.mxu0 0.0
    %3660 = vmatpush1.msra.mxu0 0.0
    %3661 = vmatprep.subr.mxu0 0.0
    %3662 = vmatpush1.msra.mxu0 0.0
    %3663 = vmatprep.subr.mxu0 0.0
    %3664 = vmatpush1.msra.mxu0 0.0
    %3665 = vmatprep.subr.mxu0 0.0
    %3666 = vmatpush1.msra.mxu0 0.0
    %3667 = vmatprep.subr.mxu0 0.0
    %3668 = vmatpush1.msra.mxu0 0.0
    %3669 = vmatprep.subr.mxu0 0.0
    %3670 = vmatpush1.msra.mxu0 0.0
    %3671 = vmatprep.subr.mxu0 0.0
    %3672 = vmatpush1.msra.mxu0 0.0
    %3673 = vmatprep.subr.mxu0 0.0
    %3674 = vmatpush1.msra.mxu0 0.0
    %3675 = vmatprep.subr.mxu0 0.0
    %3676 = vmatpush1.msra.mxu0 0.0
    %3677 = vmatprep.subr.mxu0 0.0
    %3678 = vmatpush1.msra.mxu0 0.0
    %3679 = vmatprep.subr.mxu0 0.0
    %3680 = vmatpush1.msra.mxu0 0.0
    %3681 = vmatprep.subr.mxu0 0.0
    %3682 = vmatpush1.msra.mxu0 0.0
    %3683 = vmatprep.subr.mxu0 0.0
    %3684 = vmatpush1.msra.mxu0 0.0
    %3685 = vmatprep.subr.mxu0 0.0
    %3686 = vmatpush1.msra.mxu0 0.0
    %3687 = vmatprep.subr.mxu0 0.0
    %3688 = vmatpush1.msra.mxu0 0.0
    %3689 = vmatprep.subr.mxu0 0.0
    %3690 = vmatpush1.msra.mxu0 0.0
    %3691 = vmatprep.subr.mxu0 0.0
    %3692 = vmatpush1.msra.mxu0 0.0
    %3693 = vmatprep.subr.mxu0 0.0
    %3694 = vmatpush1.msra.mxu0 0.0
    %3695 = vmatprep.mubr.f32.mxu0 0.0
    %3696 = vmatmul.mubr.f32.gmra.mrb[0].mxu0 %v2564
    %v3697 = vpop.f32.mrb[0].mxu0
    %v3698 = vadd.f32 %v2560, %v3697
    %v3699 = vpop.f32.mrb[0].mxu0
    %v3700 = vadd.f32 %v2560, %v3699
    %3701 = vdwg.mxu0
    %v3702 = vmax.f32 %v2633, 0.0
    %v3703 = vmax.f32 %v2635, 0.0
    %v3704 = vmax.f32 %v2704, 0.0
    %v3705 = vmax.f32 %v2706, 0.0
    %v3706 = vmax.f32 %v2775, 0.0
    %v3707 = vmax.f32 %v2777, 0.0
    %v3708 = vmax.f32 %v2846, 0.0
    %v3709 = vmax.f32 %v2848, 0.0
    %v3710 = vmax.f32 %v2917, 0.0
    %v3711 = vmax.f32 %v2919, 0.0
    %v3712 = vmax.f32 %v2988, 0.0
    %v3713 = vmax.f32 %v2990, 0.0
    %v3714 = vmax.f32 %v3059, 0.0
    %v3715 = vmax.f32 %v3061, 0.0
    %v3716 = vmax.f32 %v3130, 0.0
    %v3717 = vmax.f32 %v3132, 0.0
    %v3718 = vmax.f32 %v3201, 0.0
    %v3719 = vmax.f32 %v3203, 0.0
    %v3720 = vmax.f32 %v3272, 0.0
    %v3721 = vmax.f32 %v3274, 0.0
    %v3722 = vmax.f32 %v3343, 0.0
    %v3723 = vmax.f32 %v3345, 0.0
    %v3724 = vmax.f32 %v3414, 0.0
    %v3725 = vmax.f32 %v3416, 0.0
    %v3726 = vmax.f32 %v3485, 0.0
    %v3727 = vmax.f32 %v3487, 0.0
    %v3728 = vmax.f32 %v3556, 0.0
    %v3729 = vmax.f32 %v3558, 0.0
    %v3730 = vmax.f32 %v3627, 0.0
    %v3731 = vmax.f32 %v3629, 0.0
    %v3732 = vmax.f32 %v3698, 0.0
    %v3733 = vmax.f32 %v3700, 0.0
    %3734 = vrot.lane.b32.xlu0 %v3702, 127
    %v3735 = vpop.permute.xlu0 %3734
    %3736 = vrot.lane.b32.xlu0 %v3703, 127
    %v3737 = vpop.permute.xlu0 %3736
    %3738 = vrot.lane.b32.xlu0 %v3704, 127
    %v3739 = vpop.permute.xlu0 %3738
    %3740 = vrot.lane.b32.xlu0 %v3705, 127
    %v3741 = vpop.permute.xlu0 %3740
    %3742 = vrot.lane.b32.xlu0 %v3706, 127
    %v3743 = vpop.permute.xlu0 %3742
    %3744 = vrot.lane.b32.xlu0 %v3707, 127
    %v3745 = vpop.permute.xlu0 %3744
    %3746 = vrot.lane.b32.xlu0 %v3708, 127
    %v3747 = vpop.permute.xlu0 %3746
    %3748 = vrot.lane.b32.xlu0 %v3709, 127
    %v3749 = vpop.permute.xlu0 %3748
    %3750 = vrot.lane.b32.xlu0 %v3710, 127
    %v3751 = vpop.permute.xlu0 %3750
    %3752 = vrot.lane.b32.xlu0 %v3711, 127
    %v3753 = vpop.permute.xlu0 %3752
    %3754 = vrot.lane.b32.xlu0 %v3712, 127
    %v3755 = vpop.permute.xlu0 %3754
    %3756 = vrot.lane.b32.xlu0 %v3713, 127
    %v3757 = vpop.permute.xlu0 %3756
    %3758 = vrot.lane.b32.xlu0 %v3714, 127
    %v3759 = vpop.permute.xlu0 %3758
    %3760 = vrot.lane.b32.xlu0 %v3715, 127
    %v3761 = vpop.permute.xlu0 %3760
    %3762 = vrot.lane.b32.xlu0 %v3716, 127
    %v3763 = vpop.permute.xlu0 %3762
    %3764 = vrot.lane.b32.xlu0 %v3717, 127
    %v3765 = vpop.permute.xlu0 %3764
    %3766 = vrot.lane.b32.xlu0 %v3718, 127
    %v3767 = vpop.permute.xlu0 %3766
    %3768 = vrot.lane.b32.xlu0 %v3719, 127
    %v3769 = vpop.permute.xlu0 %3768
    %3770 = vrot.lane.b32.xlu0 %v3720, 127
    %v3771 = vpop.permute.xlu0 %3770
    %3772 = vrot.lane.b32.xlu0 %v3721, 127
    %v3773 = vpop.permute.xlu0 %3772
    %3774 = vrot.lane.b32.xlu0 %v3722, 127
    %v3775 = vpop.permute.xlu0 %3774
    %3776 = vrot.lane.b32.xlu0 %v3723, 127
    %v3777 = vpop.permute.xlu0 %3776
    %3778 = vrot.lane.b32.xlu0 %v3724, 127
    %v3779 = vpop.permute.xlu0 %3778
    %3780 = vrot.lane.b32.xlu0 %v3725, 127
    %v3781 = vpop.permute.xlu0 %3780
    %3782 = vrot.lane.b32.xlu0 %v3726, 127
    %v3783 = vpop.permute.xlu0 %3782
    %3784 = vrot.lane.b32.xlu0 %v3727, 127
    %v3785 = vpop.permute.xlu0 %3784
    %3786 = vrot.lane.b32.xlu0 %v3728, 127
    %v3787 = vpop.permute.xlu0 %3786
    %3788 = vrot.lane.b32.xlu0 %v3729, 127
    %v3789 = vpop.permute.xlu0 %3788
    %3790 = vrot.lane.b32.xlu0 %v3730, 127
    %v3791 = vpop.permute.xlu0 %3790
    %3792 = vrot.lane.b32.xlu0 %v3731, 127
    %v3793 = vpop.permute.xlu0 %3792
    %3794 = vrot.lane.b32.xlu0 %v3732, 127
    %v3795 = vpop.permute.xlu0 %3794
    %3796 = vrot.lane.b32.xlu0 %v3733, 127
    %v3797 = vpop.permute.xlu0 %3796
    %v3798 = vsel %vm1427, %v3795, %v3797
    %v3799 = vsel %vm1427, %v3793, %v3795
    %v3800 = vsel %vm1427, %v3791, %v3793
    %v3801 = vsel %vm1427, %v3789, %v3791
    %v3802 = vsel %vm1427, %v3787, %v3789
    %v3803 = vsel %vm1427, %v3785, %v3787
    %v3804 = vsel %vm1427, %v3783, %v3785
    %v3805 = vsel %vm1427, %v3781, %v3783
    %v3806 = vsel %vm1427, %v3779, %v3781
    %v3807 = vsel %vm1427, %v3777, %v3779
    %v3808 = vsel %vm1427, %v3775, %v3777
    %v3809 = vsel %vm1427, %v3773, %v3775
    %v3810 = vsel %vm1427, %v3771, %v3773
    %v3811 = vsel %vm1427, %v3769, %v3771
    %v3812 = vsel %vm1427, %v3767, %v3769
    %v3813 = vsel %vm1427, %v3765, %v3767
    %v3814 = vsel %vm1427, %v3763, %v3765
    %v3815 = vsel %vm1427, %v3761, %v3763
    %v3816 = vsel %vm1427, %v3759, %v3761
    %v3817 = vsel %vm1427, %v3757, %v3759
    %v3818 = vsel %vm1427, %v3755, %v3757
    %v3819 = vsel %vm1427, %v3753, %v3755
    %v3820 = vsel %vm1427, %v3751, %v3753
    %v3821 = vsel %vm1427, %v3749, %v3751
    %v3822 = vsel %vm1427, %v3747, %v3749
    %v3823 = vsel %vm1427, %v3745, %v3747
    %v3824 = vsel %vm1427, %v3743, %v3745
    %v3825 = vsel %vm1427, %v3741, %v3743
    %v3826 = vsel %vm1427, %v3739, %v3741
    %v3827 = vsel %vm1427, %v3737, %v3739
    %v3828 = vsel %vm1427, %v3735, %v3737
    %v3829 = vsel %vm1427, %v3797, %v3735
    %v3830 = vmax.f32 %v3702, %v3828
    %v3831 = vmax.f32 %v3703, %v3827
    %v3832 = vmax.f32 %v3704, %v3826
    %v3833 = vmax.f32 %v3705, %v3825
    %v3834 = vmax.f32 %v3706, %v3824
    %v3835 = vmax.f32 %v3707, %v3823
    %v3836 = vmax.f32 %v3708, %v3822
    %v3837 = vmax.f32 %v3709, %v3821
    %v3838 = vmax.f32 %v3710, %v3820
    %v3839 = vmax.f32 %v3711, %v3819
    %v3840 = vmax.f32 %v3712, %v3818
    %v3841 = vmax.f32 %v3713, %v3817
    %v3842 = vmax.f32 %v3714, %v3816
    %v3843 = vmax.f32 %v3715, %v3815
    %v3844 = vmax.f32 %v3716, %v3814
    %v3845 = vmax.f32 %v3717, %v3813
    %v3846 = vmax.f32 %v3718, %v3812
    %v3847 = vmax.f32 %v3719, %v3811
    %v3848 = vmax.f32 %v3720, %v3810
    %v3849 = vmax.f32 %v3721, %v3809
    %v3850 = vmax.f32 %v3722, %v3808
    %v3851 = vmax.f32 %v3723, %v3807
    %v3852 = vmax.f32 %v3724, %v3806
    %v3853 = vmax.f32 %v3725, %v3805
    %v3854 = vmax.f32 %v3726, %v3804
    %v3855 = vmax.f32 %v3727, %v3803
    %v3856 = vmax.f32 %v3728, %v3802
    %v3857 = vmax.f32 %v3729, %v3801
    %v3858 = vmax.f32 %v3730, %v3800
    %v3859 = vmax.f32 %v3731, %v3799
    %v3860 = vmax.f32 %v3732, %v3798
    %v3861 = vmax.f32 %v3733, %v3829
    %3862 = vrot.lane.b32.xlu0 %v3830, 112
    %v3863 = vpop.permute.xlu0 %3862
    %3864 = vrot.lane.b32.xlu0 %v3831, 112
    %v3865 = vpop.permute.xlu0 %3864
    %3866 = vrot.lane.b32.xlu0 %v3832, 112
    %v3867 = vpop.permute.xlu0 %3866
    %3868 = vrot.lane.b32.xlu0 %v3833, 112
    %v3869 = vpop.permute.xlu0 %3868
    %3870 = vrot.lane.b32.xlu0 %v3834, 112
    %v3871 = vpop.permute.xlu0 %3870
    %3872 = vrot.lane.b32.xlu0 %v3835, 112
    %v3873 = vpop.permute.xlu0 %3872
    %3874 = vrot.lane.b32.xlu0 %v3836, 112
    %v3875 = vpop.permute.xlu0 %3874
    %3876 = vrot.lane.b32.xlu0 %v3837, 112
    %v3877 = vpop.permute.xlu0 %3876
    %3878 = vrot.lane.b32.xlu0 %v3838, 112
    %v3879 = vpop.permute.xlu0 %3878
    %3880 = vrot.lane.b32.xlu0 %v3839, 112
    %v3881 = vpop.permute.xlu0 %3880
    %3882 = vrot.lane.b32.xlu0 %v3840, 112
    %v3883 = vpop.permute.xlu0 %3882
    %3884 = vrot.lane.b32.xlu0 %v3841, 112
    %v3885 = vpop.permute.xlu0 %3884
    %3886 = vrot.lane.b32.xlu0 %v3842, 112
    %v3887 = vpop.permute.xlu0 %3886
    %3888 = vrot.lane.b32.xlu0 %v3843, 112
    %v3889 = vpop.permute.xlu0 %3888
    %3890 = vrot.lane.b32.xlu0 %v3844, 112
    %v3891 = vpop.permute.xlu0 %3890
    %3892 = vrot.lane.b32.xlu0 %v3845, 112
    %v3893 = vpop.permute.xlu0 %3892
    %3894 = vrot.lane.b32.xlu0 %v3846, 112
    %v3895 = vpop.permute.xlu0 %3894
    %3896 = vrot.lane.b32.xlu0 %v3847, 112
    %v3897 = vpop.permute.xlu0 %3896
    %3898 = vrot.lane.b32.xlu0 %v3848, 112
    %v3899 = vpop.permute.xlu0 %3898
    %3900 = vrot.lane.b32.xlu0 %v3849, 112
    %v3901 = vpop.permute.xlu0 %3900
    %3902 = vrot.lane.b32.xlu0 %v3850, 112
    %v3903 = vpop.permute.xlu0 %3902
    %3904 = vrot.lane.b32.xlu0 %v3851, 112
    %v3905 = vpop.permute.xlu0 %3904
    %3906 = vrot.lane.b32.xlu0 %v3852, 112
    %v3907 = vpop.permute.xlu0 %3906
    %3908 = vrot.lane.b32.xlu0 %v3853, 112
    %v3909 = vpop.permute.xlu0 %3908
    %3910 = vrot.lane.b32.xlu0 %v3854, 112
    %v3911 = vpop.permute.xlu0 %3910
    %3912 = vrot.lane.b32.xlu0 %v3855, 112
    %v3913 = vpop.permute.xlu0 %3912
    %3914 = vrot.lane.b32.xlu0 %v3856, 112
    %v3915 = vpop.permute.xlu0 %3914
    %3916 = vrot.lane.b32.xlu0 %v3857, 112
    %v3917 = vpop.permute.xlu0 %3916
    %3918 = vrot.lane.b32.xlu0 %v3858, 112
    %v3919 = vpop.permute.xlu0 %3918
    %3920 = vrot.lane.b32.xlu0 %v3859, 112
    %v3921 = vpop.permute.xlu0 %3920
    %3922 = vrot.lane.b32.xlu0 %v3860, 112
    %v3923 = vpop.permute.xlu0 %3922
    %3924 = vrot.lane.b32.xlu0 %v3861, 112
    %v3925 = vpop.permute.xlu0 %3924
    %v3926 = vsel %vm2023, %v3923, %v3925
    %v3927 = vsel %vm2023, %v3921, %v3923
    %v3928 = vsel %vm2023, %v3919, %v3921
    %v3929 = vsel %vm2023, %v3917, %v3919
    %v3930 = vsel %vm2023, %v3915, %v3917
    %v3931 = vsel %vm2023, %v3913, %v3915
    %v3932 = vsel %vm2023, %v3911, %v3913
    %v3933 = vsel %vm2023, %v3909, %v3911
    %v3934 = vsel %vm2023, %v3907, %v3909
    %v3935 = vsel %vm2023, %v3905, %v3907
    %v3936 = vsel %vm2023, %v3903, %v3905
    %v3937 = vsel %vm2023, %v3901, %v3903
    %v3938 = vsel %vm2023, %v3899, %v3901
    %v3939 = vsel %vm2023, %v3897, %v3899
    %v3940 = vsel %vm2023, %v3895, %v3897
    %v3941 = vsel %vm2023, %v3893, %v3895
    %v3942 = vsel %vm2023, %v3891, %v3893
    %v3943 = vsel %vm2023, %v3889, %v3891
    %v3944 = vsel %vm2023, %v3887, %v3889
    %v3945 = vsel %vm2023, %v3885, %v3887
    %v3946 = vsel %vm2023, %v3883, %v3885
    %v3947 = vsel %vm2023, %v3881, %v3883
    %v3948 = vsel %vm2023, %v3879, %v3881
    %v3949 = vsel %vm2023, %v3877, %v3879
    %v3950 = vsel %vm2023, %v3875, %v3877
    %v3951 = vsel %vm2023, %v3873, %v3875
    %v3952 = vsel %vm2023, %v3871, %v3873
    %v3953 = vsel %vm2023, %v3869, %v3871
    %v3954 = vsel %vm2023, %v3867, %v3869
    %v3955 = vsel %vm2023, %v3865, %v3867
    %v3956 = vsel %vm2023, %v3863, %v3865
    %v3957 = vsel %vm2023, %v3925, %v3863
    %v3958 = vmax.f32 %v3830, %v3956
    %v3959 = vmax.f32 %v3831, %v3955
    %v3960 = vmax.f32 %v3832, %v3954
    %v3961 = vmax.f32 %v3833, %v3953
    %v3962 = vmax.f32 %v3834, %v3952
    %v3963 = vmax.f32 %v3835, %v3951
    %v3964 = vmax.f32 %v3836, %v3950
    %v3965 = vmax.f32 %v3837, %v3949
    %v3966 = vmax.f32 %v3838, %v3948
    %v3967 = vmax.f32 %v3839, %v3947
    %v3968 = vmax.f32 %v3840, %v3946
    %v3969 = vmax.f32 %v3841, %v3945
    %v3970 = vmax.f32 %v3842, %v3944
    %v3971 = vmax.f32 %v3843, %v3943
    %v3972 = vmax.f32 %v3844, %v3942
    %v3973 = vmax.f32 %v3845, %v3941
    %v3974 = vmax.f32 %v3846, %v3940
    %v3975 = vmax.f32 %v3847, %v3939
    %v3976 = vmax.f32 %v3848, %v3938
    %v3977 = vmax.f32 %v3849, %v3937
    %v3978 = vmax.f32 %v3850, %v3936
    %v3979 = vmax.f32 %v3851, %v3935
    %v3980 = vmax.f32 %v3852, %v3934
    %v3981 = vmax.f32 %v3853, %v3933
    %v3982 = vmax.f32 %v3854, %v3932
    %v3983 = vmax.f32 %v3855, %v3931
    %v3984 = vmax.f32 %v3856, %v3930
    %v3985 = vmax.f32 %v3857, %v3929
    %v3986 = vmax.f32 %v3858, %v3928
    %v3987 = vmax.f32 %v3859, %v3927
    %v3988 = vmax.f32 %v3860, %v3926
    %v3989 = vmax.f32 %v3861, %v3957
    %3990 = vrot.lane.b32.xlu0 %v3958, 34
    %v3991 = vpop.permute.xlu0 %3990
    %3992 = vrot.lane.b32.xlu0 %v3959, 34
    %v3993 = vpop.permute.xlu0 %3992
    %3994 = vrot.lane.b32.xlu0 %v3960, 34
    %v3995 = vpop.permute.xlu0 %3994
    %3996 = vrot.lane.b32.xlu0 %v3961, 34
    %v3997 = vpop.permute.xlu0 %3996
    %3998 = vrot.lane.b32.xlu0 %v3962, 34
    %v3999 = vpop.permute.xlu0 %3998
    %4000 = vrot.lane.b32.xlu0 %v3963, 34
    %v4001 = vpop.permute.xlu0 %4000
    %4002 = vrot.lane.b32.xlu0 %v3964, 34
    %v4003 = vpop.permute.xlu0 %4002
    %4004 = vrot.lane.b32.xlu0 %v3965, 34
    %v4005 = vpop.permute.xlu0 %4004
    %4006 = vrot.lane.b32.xlu0 %v3966, 34
    %v4007 = vpop.permute.xlu0 %4006
    %4008 = vrot.lane.b32.xlu0 %v3967, 34
    %v4009 = vpop.permute.xlu0 %4008
    %4010 = vrot.lane.b32.xlu0 %v3968, 34
    %v4011 = vpop.permute.xlu0 %4010
    %4012 = vrot.lane.b32.xlu0 %v3969, 34
    %v4013 = vpop.permute.xlu0 %4012
    %4014 = vrot.lane.b32.xlu0 %v3970, 34
    %v4015 = vpop.permute.xlu0 %4014
    %4016 = vrot.lane.b32.xlu0 %v3971, 34
    %v4017 = vpop.permute.xlu0 %4016
    %4018 = vrot.lane.b32.xlu0 %v3972, 34
    %v4019 = vpop.permute.xlu0 %4018
    %4020 = vrot.lane.b32.xlu0 %v3973, 34
    %v4021 = vpop.permute.xlu0 %4020
    %4022 = vrot.lane.b32.xlu0 %v3974, 34
    %v4023 = vpop.permute.xlu0 %4022
    %4024 = vrot.lane.b32.xlu0 %v3975, 34
    %v4025 = vpop.permute.xlu0 %4024
    %4026 = vrot.lane.b32.xlu0 %v3976, 34
    %v4027 = vpop.permute.xlu0 %4026
    %4028 = vrot.lane.b32.xlu0 %v3977, 34
    %v4029 = vpop.permute.xlu0 %4028
    %4030 = vrot.lane.b32.xlu0 %v3978, 34
    %v4031 = vpop.permute.xlu0 %4030
    %4032 = vrot.lane.b32.xlu0 %v3979, 34
    %v4033 = vpop.permute.xlu0 %4032
    %4034 = vrot.lane.b32.xlu0 %v3980, 34
    %v4035 = vpop.permute.xlu0 %4034
    %4036 = vrot.lane.b32.xlu0 %v3981, 34
    %v4037 = vpop.permute.xlu0 %4036
    %4038 = vrot.lane.b32.xlu0 %v3982, 34
    %v4039 = vpop.permute.xlu0 %4038
    %4040 = vrot.lane.b32.xlu0 %v3983, 34
    %v4041 = vpop.permute.xlu0 %4040
    %4042 = vrot.lane.b32.xlu0 %v3984, 34
    %v4043 = vpop.permute.xlu0 %4042
    %4044 = vrot.lane.b32.xlu0 %v3985, 34
    %v4045 = vpop.permute.xlu0 %4044
    %4046 = vrot.lane.b32.xlu0 %v3986, 34
    %v4047 = vpop.permute.xlu0 %4046
    %4048 = vrot.lane.b32.xlu0 %v3987, 34
    %v4049 = vpop.permute.xlu0 %4048
    %4050 = vrot.lane.b32.xlu0 %v3988, 34
    %v4051 = vpop.permute.xlu0 %4050
    %4052 = vrot.lane.b32.xlu0 %v3989, 34
    %v4053 = vpop.permute.xlu0 %4052
    %vm4054 = vcmp.lt.s32.totalorder %v235, 34
    %v4055 = vsel %vm4054, %v4051, %v4053
    %v4056 = vsel %vm4054, %v4049, %v4051
    %v4057 = vsel %vm4054, %v4047, %v4049
    %v4058 = vsel %vm4054, %v4045, %v4047
    %v4059 = vsel %vm4054, %v4043, %v4045
    %v4060 = vsel %vm4054, %v4041, %v4043
    %v4061 = vsel %vm4054, %v4039, %v4041
    %v4062 = vsel %vm4054, %v4037, %v4039
    %v4063 = vsel %vm4054, %v4035, %v4037
    %v4064 = vsel %vm4054, %v4033, %v4035
    %v4065 = vsel %vm4054, %v4031, %v4033
    %v4066 = vsel %vm4054, %v4029, %v4031
    %v4067 = vsel %vm4054, %v4027, %v4029
    %v4068 = vsel %vm4054, %v4025, %v4027
    %v4069 = vsel %vm4054, %v4023, %v4025
    %v4070 = vsel %vm4054, %v4021, %v4023
    %v4071 = vsel %vm4054, %v4019, %v4021
    %v4072 = vsel %vm4054, %v4017, %v4019
    %v4073 = vsel %vm4054, %v4015, %v4017
    %v4074 = vsel %vm4054, %v4013, %v4015
    %v4075 = vsel %vm4054, %v4011, %v4013
    %v4076 = vsel %vm4054, %v4009, %v4011
    %v4077 = vsel %vm4054, %v4007, %v4009
    %v4078 = vsel %vm4054, %v4005, %v4007
    %v4079 = vsel %vm4054, %v4003, %v4005
    %v4080 = vsel %vm4054, %v4001, %v4003
    %v4081 = vsel %vm4054, %v3999, %v4001
    %v4082 = vsel %vm4054, %v3997, %v3999
    %v4083 = vsel %vm4054, %v3995, %v3997
    %v4084 = vsel %vm4054, %v3993, %v3995
    %v4085 = vsel %vm4054, %v3991, %v3993
    %v4086 = vsel %vm4054, %v4053, %v3991
    %v4087 = vld [vmem:[%s6] sm:$0xff]
    %v4088 = vld [vmem:[%s6 + $0x8] sm:$0xff]
    %v4089 = vld [vmem:[%s6 + $0x10] sm:$0xff]
    %v4090 = vld [vmem:[%s6 + $0x18] sm:$0xff]
    %v4095 = vlaneseq
    %v4096 = vshrl.u32 %v4095, 7
    %v4097 = vsub.s32 0, %v4096
    %v4098 = vrot.slane %v4087, %v4097
    %v4099 = vlaneseq
    %v4100 = vshrl.u32 %v4099, 7
    %v4101 = vsub.s32 1, %v4100
    %v4102 = vrot.slane %v4087, %v4101
    %v4103 = vlaneseq
    %v4104 = vshrl.u32 %v4103, 7
    %v4105 = vsub.s32 2, %v4104
    %v4106 = vrot.slane %v4087, %v4105
    %v4107 = vlaneseq
    %v4108 = vshrl.u32 %v4107, 7
    %v4109 = vsub.s32 3, %v4108
    %v4110 = vrot.slane %v4087, %v4109
    %v4111 = vlaneseq
    %v4112 = vshrl.u32 %v4111, 7
    %v4113 = vsub.s32 4, %v4112
    %v4114 = vrot.slane %v4087, %v4113
    %v4115 = vlaneseq
    %v4116 = vshrl.u32 %v4115, 7
    %v4117 = vsub.s32 5, %v4116
    %v4118 = vrot.slane %v4087, %v4117
    %v4119 = vlaneseq
    %v4120 = vshrl.u32 %v4119, 7
    %v4121 = vsub.s32 6, %v4120
    %v4122 = vrot.slane %v4087, %v4121
    %v4123 = vlaneseq
    %v4124 = vshrl.u32 %v4123, 7
    %v4125 = vsub.s32 7, %v4124
    %v4126 = vrot.slane %v4087, %v4125
    %v4127 = vlaneseq
    %v4128 = vshrl.u32 %v4127, 7
    %v4129 = vsub.s32 0, %v4128
    %v4130 = vrot.slane %v4088, %v4129
    %v4131 = vlaneseq
    %v4132 = vshrl.u32 %v4131, 7
    %v4133 = vsub.s32 1, %v4132
    %v4134 = vrot.slane %v4088, %v4133
    %v4135 = vlaneseq
    %v4136 = vshrl.u32 %v4135, 7
    %v4137 = vsub.s32 2, %v4136
    %v4138 = vrot.slane %v4088, %v4137
    %v4139 = vlaneseq
    %v4140 = vshrl.u32 %v4139, 7
    %v4141 = vsub.s32 3, %v4140
    %v4142 = vrot.slane %v4088, %v4141
    %v4143 = vlaneseq
    %v4144 = vshrl.u32 %v4143, 7
    %v4145 = vsub.s32 4, %v4144
    %v4146 = vrot.slane %v4088, %v4145
    %v4147 = vlaneseq
    %v4148 = vshrl.u32 %v4147, 7
    %v4149 = vsub.s32 5, %v4148
    %v4150 = vrot.slane %v4088, %v4149
    %v4151 = vlaneseq
    %v4152 = vshrl.u32 %v4151, 7
    %v4153 = vsub.s32 6, %v4152
    %v4154 = vrot.slane %v4088, %v4153
    %v4155 = vlaneseq
    %v4156 = vshrl.u32 %v4155, 7
    %v4157 = vsub.s32 7, %v4156
    %v4158 = vrot.slane %v4088, %v4157
    %v4159 = vlaneseq
    %v4160 = vshrl.u32 %v4159, 7
    %v4161 = vsub.s32 0, %v4160
    %v4162 = vrot.slane %v4089, %v4161
    %v4163 = vlaneseq
    %v4164 = vshrl.u32 %v4163, 7
    %v4165 = vsub.s32 1, %v4164
    %v4166 = vrot.slane %v4089, %v4165
    %v4167 = vlaneseq
    %v4168 = vshrl.u32 %v4167, 7
    %v4169 = vsub.s32 2, %v4168
    %v4170 = vrot.slane %v4089, %v4169
    %v4171 = vlaneseq
    %v4172 = vshrl.u32 %v4171, 7
    %v4173 = vsub.s32 3, %v4172
    %v4174 = vrot.slane %v4089, %v4173
    %v4175 = vlaneseq
    %v4176 = vshrl.u32 %v4175, 7
    %v4177 = vsub.s32 4, %v4176
    %v4178 = vrot.slane %v4089, %v4177
    %v4179 = vlaneseq
    %v4180 = vshrl.u32 %v4179, 7
    %v4181 = vsub.s32 5, %v4180
    %v4182 = vrot.slane %v4089, %v4181
    %v4183 = vlaneseq
    %v4184 = vshrl.u32 %v4183, 7
    %v4185 = vsub.s32 6, %v4184
    %v4186 = vrot.slane %v4089, %v4185
    %v4187 = vlaneseq
    %v4188 = vshrl.u32 %v4187, 7
    %v4189 = vsub.s32 7, %v4188
    %v4190 = vrot.slane %v4089, %v4189
    %v4191 = vlaneseq
    %v4192 = vshrl.u32 %v4191, 7
    %v4193 = vsub.s32 0, %v4192
    %v4194 = vrot.slane %v4090, %v4193
    %v4195 = vlaneseq
    %v4196 = vshrl.u32 %v4195, 7
    %v4197 = vsub.s32 1, %v4196
    %v4198 = vrot.slane %v4090, %v4197
    %v4199 = vlaneseq
    %v4200 = vshrl.u32 %v4199, 7
    %v4201 = vsub.s32 2, %v4200
    %v4202 = vrot.slane %v4090, %v4201
    %v4203 = vlaneseq
    %v4204 = vshrl.u32 %v4203, 7
    %v4205 = vsub.s32 3, %v4204
    %v4206 = vrot.slane %v4090, %v4205
    %v4207 = vlaneseq
    %v4208 = vshrl.u32 %v4207, 7
    %v4209 = vsub.s32 4, %v4208
    %v4210 = vrot.slane %v4090, %v4209
    %v4211 = vlaneseq
    %v4212 = vshrl.u32 %v4211, 7
    %v4213 = vsub.s32 5, %v4212
    %v4214 = vrot.slane %v4090, %v4213
    %v4215 = vlaneseq
    %v4216 = vshrl.u32 %v4215, 7
    %v4217 = vsub.s32 6, %v4216
    %v4218 = vrot.slane %v4090, %v4217
    %v4219 = vlaneseq
    %v4220 = vshrl.u32 %v4219, 7
    %v4221 = vsub.s32 7, %v4220
    %v4222 = vrot.slane %v4090, %v4221
    %v4255 = vmul.f32 %v4086, %v4098
    %v4256 = vmul.f32 %v4085, %v4102
    %v4257 = vmul.f32 %v4084, %v4106
    %v4258 = vmul.f32 %v4083, %v4110
    %v4259 = vmul.f32 %v4082, %v4114
    %v4260 = vmul.f32 %v4081, %v4118
    %v4261 = vmul.f32 %v4080, %v4122
    %v4262 = vmul.f32 %v4079, %v4126
    %v4263 = vmul.f32 %v4078, %v4130
    %v4264 = vmul.f32 %v4077, %v4134
    %v4265 = vmul.f32 %v4076, %v4138
    %v4266 = vmul.f32 %v4075, %v4142
    %v4267 = vmul.f32 %v4074, %v4146
    %v4268 = vmul.f32 %v4073, %v4150
    %v4269 = vmul.f32 %v4072, %v4154
    %v4270 = vmul.f32 %v4071, %v4158
    %v4271 = vmul.f32 %v4070, %v4162
    %v4272 = vmul.f32 %v4069, %v4166
    %v4273 = vmul.f32 %v4068, %v4170
    %v4274 = vmul.f32 %v4067, %v4174
    %v4275 = vmul.f32 %v4066, %v4178
    %v4276 = vmul.f32 %v4065, %v4182
    %v4277 = vmul.f32 %v4064, %v4186
    %v4278 = vmul.f32 %v4063, %v4190
    %v4279 = vmul.f32 %v4062, %v4194
    %v4280 = vmul.f32 %v4061, %v4198
    %v4281 = vmul.f32 %v4060, %v4202
    %v4282 = vmul.f32 %v4059, %v4206
    %v4283 = vmul.f32 %v4058, %v4210
    %v4284 = vmul.f32 %v4057, %v4214
    %v4285 = vmul.f32 %v4056, %v4218
    %v4286 = vmul.f32 %v4055, %v4222
    %4287 = vrot.lane.b32.xlu0 %v3958, 32
    %v4288 = vpop.permute.xlu0 %4287
    %4289 = vrot.lane.b32.xlu0 %v3959, 32
    %v4290 = vpop.permute.xlu0 %4289
    %4291 = vrot.lane.b32.xlu0 %v3960, 32
    %v4292 = vpop.permute.xlu0 %4291
    %4293 = vrot.lane.b32.xlu0 %v3961, 32
    %v4294 = vpop.permute.xlu0 %4293
    %4295 = vrot.lane.b32.xlu0 %v3962, 32
    %v4296 = vpop.permute.xlu0 %4295
    %4297 = vrot.lane.b32.xlu0 %v3963, 32
    %v4298 = vpop.permute.xlu0 %4297
    %4299 = vrot.lane.b32.xlu0 %v3964, 32
    %v4300 = vpop.permute.xlu0 %4299
    %4301 = vrot.lane.b32.xlu0 %v3965, 32
    %v4302 = vpop.permute.xlu0 %4301
    %4303 = vrot.lane.b32.xlu0 %v3966, 32
    %v4304 = vpop.permute.xlu0 %4303
    %4305 = vrot.lane.b32.xlu0 %v3967, 32
    %v4306 = vpop.permute.xlu0 %4305
    %4307 = vrot.lane.b32.xlu0 %v3968, 32
    %v4308 = vpop.permute.xlu0 %4307
    %4309 = vrot.lane.b32.xlu0 %v3969, 32
    %v4310 = vpop.permute.xlu0 %4309
    %4311 = vrot.lane.b32.xlu0 %v3970, 32
    %v4312 = vpop.permute.xlu0 %4311
    %4313 = vrot.lane.b32.xlu0 %v3971, 32
    %v4314 = vpop.permute.xlu0 %4313
    %4315 = vrot.lane.b32.xlu0 %v3972, 32
    %v4316 = vpop.permute.xlu0 %4315
    %4317 = vrot.lane.b32.xlu0 %v3973, 32
    %v4318 = vpop.permute.xlu0 %4317
    %4319 = vrot.lane.b32.xlu0 %v3974, 32
    %v4320 = vpop.permute.xlu0 %4319
    %4321 = vrot.lane.b32.xlu0 %v3975, 32
    %v4322 = vpop.permute.xlu0 %4321
    %4323 = vrot.lane.b32.xlu0 %v3976, 32
    %v4324 = vpop.permute.xlu0 %4323
    %4325 = vrot.lane.b32.xlu0 %v3977, 32
    %v4326 = vpop.permute.xlu0 %4325
    %4327 = vrot.lane.b32.xlu0 %v3978, 32
    %v4328 = vpop.permute.xlu0 %4327
    %4329 = vrot.lane.b32.xlu0 %v3979, 32
    %v4330 = vpop.permute.xlu0 %4329
    %4331 = vrot.lane.b32.xlu0 %v3980, 32
    %v4332 = vpop.permute.xlu0 %4331
    %4333 = vrot.lane.b32.xlu0 %v3981, 32
    %v4334 = vpop.permute.xlu0 %4333
    %4335 = vrot.lane.b32.xlu0 %v3982, 32
    %v4336 = vpop.permute.xlu0 %4335
    %4337 = vrot.lane.b32.xlu0 %v3983, 32
    %v4338 = vpop.permute.xlu0 %4337
    %4339 = vrot.lane.b32.xlu0 %v3984, 32
    %v4340 = vpop.permute.xlu0 %4339
    %4341 = vrot.lane.b32.xlu0 %v3985, 32
    %v4342 = vpop.permute.xlu0 %4341
    %4343 = vrot.lane.b32.xlu0 %v3986, 32
    %v4344 = vpop.permute.xlu0 %4343
    %4345 = vrot.lane.b32.xlu0 %v3987, 32
    %v4346 = vpop.permute.xlu0 %4345
    %4347 = vrot.lane.b32.xlu0 %v3988, 32
    %v4348 = vpop.permute.xlu0 %4347
    %4349 = vrot.lane.b32.xlu0 %v3989, 32
    %v4350 = vpop.permute.xlu0 %4349
    %vm4351 = vcmp.lt.s32.totalorder %v235, 32
    %v4352 = vsel %vm4351, %v4348, %v4350
    %v4353 = vsel %vm4351, %v4346, %v4348
    %v4354 = vsel %vm4351, %v4344, %v4346
    %v4355 = vsel %vm4351, %v4342, %v4344
    %v4356 = vsel %vm4351, %v4340, %v4342
    %v4357 = vsel %vm4351, %v4338, %v4340
    %v4358 = vsel %vm4351, %v4336, %v4338
    %v4359 = vsel %vm4351, %v4334, %v4336
    %v4360 = vsel %vm4351, %v4332, %v4334
    %v4361 = vsel %vm4351, %v4330, %v4332
    %v4362 = vsel %vm4351, %v4328, %v4330
    %v4363 = vsel %vm4351, %v4326, %v4328
    %v4364 = vsel %vm4351, %v4324, %v4326
    %v4365 = vsel %vm4351, %v4322, %v4324
    %v4366 = vsel %vm4351, %v4320, %v4322
    %v4367 = vsel %vm4351, %v4318, %v4320
    %v4368 = vsel %vm4351, %v4316, %v4318
    %v4369 = vsel %vm4351, %v4314, %v4316
    %v4370 = vsel %vm4351, %v4312, %v4314
    %v4371 = vsel %vm4351, %v4310, %v4312
    %v4372 = vsel %vm4351, %v4308, %v4310
    %v4373 = vsel %vm4351, %v4306, %v4308
    %v4374 = vsel %vm4351, %v4304, %v4306
    %v4375 = vsel %vm4351, %v4302, %v4304
    %v4376 = vsel %vm4351, %v4300, %v4302
    %v4377 = vsel %vm4351, %v4298, %v4300
    %v4378 = vsel %vm4351, %v4296, %v4298
    %v4379 = vsel %vm4351, %v4294, %v4296
    %v4380 = vsel %vm4351, %v4292, %v4294
    %v4381 = vsel %vm4351, %v4290, %v4292
    %v4382 = vsel %vm4351, %v4288, %v4290
    %v4383 = vsel %vm4351, %v4350, %v4288
    %s4384 = scalar_lea.vmem %s6, 32
    %v4385 = vld [vmem:[%s4384] sm:$0xff]
    %v4386 = vld [vmem:[%s4384 + $0x8] sm:$0xff]
    %v4387 = vld [vmem:[%s4384 + $0x10] sm:$0xff]
    %v4388 = vld [vmem:[%s4384 + $0x18] sm:$0xff]
    %v4393 = vlaneseq
    %v4394 = vshrl.u32 %v4393, 7
    %v4395 = vsub.s32 0, %v4394
    %v4396 = vrot.slane %v4385, %v4395
    %v4397 = vlaneseq
    %v4398 = vshrl.u32 %v4397, 7
    %v4399 = vsub.s32 1, %v4398
    %v4400 = vrot.slane %v4385, %v4399
    %v4401 = vlaneseq
    %v4402 = vshrl.u32 %v4401, 7
    %v4403 = vsub.s32 2, %v4402
    %v4404 = vrot.slane %v4385, %v4403
    %v4405 = vlaneseq
    %v4406 = vshrl.u32 %v4405, 7
    %v4407 = vsub.s32 3, %v4406
    %v4408 = vrot.slane %v4385, %v4407
    %v4409 = vlaneseq
    %v4410 = vshrl.u32 %v4409, 7
    %v4411 = vsub.s32 4, %v4410
    %v4412 = vrot.slane %v4385, %v4411
    %v4413 = vlaneseq
    %v4414 = vshrl.u32 %v4413, 7
    %v4415 = vsub.s32 5, %v4414
    %v4416 = vrot.slane %v4385, %v4415
    %v4417 = vlaneseq
    %v4418 = vshrl.u32 %v4417, 7
    %v4419 = vsub.s32 6, %v4418
    %v4420 = vrot.slane %v4385, %v4419
    %v4421 = vlaneseq
    %v4422 = vshrl.u32 %v4421, 7
    %v4423 = vsub.s32 7, %v4422
    %v4424 = vrot.slane %v4385, %v4423
    %v4425 = vlaneseq
    %v4426 = vshrl.u32 %v4425, 7
    %v4427 = vsub.s32 0, %v4426
    %v4428 = vrot.slane %v4386, %v4427
    %v4429 = vlaneseq
    %v4430 = vshrl.u32 %v4429, 7
    %v4431 = vsub.s32 1, %v4430
    %v4432 = vrot.slane %v4386, %v4431
    %v4433 = vlaneseq
    %v4434 = vshrl.u32 %v4433, 7
    %v4435 = vsub.s32 2, %v4434
    %v4436 = vrot.slane %v4386, %v4435
    %v4437 = vlaneseq
    %v4438 = vshrl.u32 %v4437, 7
    %v4439 = vsub.s32 3, %v4438
    %v4440 = vrot.slane %v4386, %v4439
    %v4441 = vlaneseq
    %v4442 = vshrl.u32 %v4441, 7
    %v4443 = vsub.s32 4, %v4442
    %v4444 = vrot.slane %v4386, %v4443
    %v4445 = vlaneseq
    %v4446 = vshrl.u32 %v4445, 7
    %v4447 = vsub.s32 5, %v4446
    %v4448 = vrot.slane %v4386, %v4447
    %v4449 = vlaneseq
    %v4450 = vshrl.u32 %v4449, 7
    %v4451 = vsub.s32 6, %v4450
    %v4452 = vrot.slane %v4386, %v4451
    %v4453 = vlaneseq
    %v4454 = vshrl.u32 %v4453, 7
    %v4455 = vsub.s32 7, %v4454
    %v4456 = vrot.slane %v4386, %v4455
    %v4457 = vlaneseq
    %v4458 = vshrl.u32 %v4457, 7
    %v4459 = vsub.s32 0, %v4458
    %v4460 = vrot.slane %v4387, %v4459
    %v4461 = vlaneseq
    %v4462 = vshrl.u32 %v4461, 7
    %v4463 = vsub.s32 1, %v4462
    %v4464 = vrot.slane %v4387, %v4463
    %v4465 = vlaneseq
    %v4466 = vshrl.u32 %v4465, 7
    %v4467 = vsub.s32 2, %v4466
    %v4468 = vrot.slane %v4387, %v4467
    %v4469 = vlaneseq
    %v4470 = vshrl.u32 %v4469, 7
    %v4471 = vsub.s32 3, %v4470
    %v4472 = vrot.slane %v4387, %v4471
    %v4473 = vlaneseq
    %v4474 = vshrl.u32 %v4473, 7
    %v4475 = vsub.s32 4, %v4474
    %v4476 = vrot.slane %v4387, %v4475
    %v4477 = vlaneseq
    %v4478 = vshrl.u32 %v4477, 7
    %v4479 = vsub.s32 5, %v4478
    %v4480 = vrot.slane %v4387, %v4479
    %v4481 = vlaneseq
    %v4482 = vshrl.u32 %v4481, 7
    %v4483 = vsub.s32 6, %v4482
    %v4484 = vrot.slane %v4387, %v4483
    %v4485 = vlaneseq
    %v4486 = vshrl.u32 %v4485, 7
    %v4487 = vsub.s32 7, %v4486
    %v4488 = vrot.slane %v4387, %v4487
    %v4489 = vlaneseq
    %v4490 = vshrl.u32 %v4489, 7
    %v4491 = vsub.s32 0, %v4490
    %v4492 = vrot.slane %v4388, %v4491
    %v4493 = vlaneseq
    %v4494 = vshrl.u32 %v4493, 7
    %v4495 = vsub.s32 1, %v4494
    %v4496 = vrot.slane %v4388, %v4495
    %v4497 = vlaneseq
    %v4498 = vshrl.u32 %v4497, 7
    %v4499 = vsub.s32 2, %v4498
    %v4500 = vrot.slane %v4388, %v4499
    %v4501 = vlaneseq
    %v4502 = vshrl.u32 %v4501, 7
    %v4503 = vsub.s32 3, %v4502
    %v4504 = vrot.slane %v4388, %v4503
    %v4505 = vlaneseq
    %v4506 = vshrl.u32 %v4505, 7
    %v4507 = vsub.s32 4, %v4506
    %v4508 = vrot.slane %v4388, %v4507
    %v4509 = vlaneseq
    %v4510 = vshrl.u32 %v4509, 7
    %v4511 = vsub.s32 5, %v4510
    %v4512 = vrot.slane %v4388, %v4511
    %v4513 = vlaneseq
    %v4514 = vshrl.u32 %v4513, 7
    %v4515 = vsub.s32 6, %v4514
    %v4516 = vrot.slane %v4388, %v4515
    %v4517 = vlaneseq
    %v4518 = vshrl.u32 %v4517, 7
    %v4519 = vsub.s32 7, %v4518
    %v4520 = vrot.slane %v4388, %v4519
    %v4553 = vmul.f32 %v4383, %v4396
    %v4554 = vmul.f32 %v4382, %v4400
    %v4555 = vmul.f32 %v4381, %v4404
    %v4556 = vmul.f32 %v4380, %v4408
    %v4557 = vmul.f32 %v4379, %v4412
    %v4558 = vmul.f32 %v4378, %v4416
    %v4559 = vmul.f32 %v4377, %v4420
    %v4560 = vmul.f32 %v4376, %v4424
    %v4561 = vmul.f32 %v4375, %v4428
    %v4562 = vmul.f32 %v4374, %v4432
    %v4563 = vmul.f32 %v4373, %v4436
    %v4564 = vmul.f32 %v4372, %v4440
    %v4565 = vmul.f32 %v4371, %v4444
    %v4566 = vmul.f32 %v4370, %v4448
    %v4567 = vmul.f32 %v4369, %v4452
    %v4568 = vmul.f32 %v4368, %v4456
    %v4569 = vmul.f32 %v4367, %v4460
    %v4570 = vmul.f32 %v4366, %v4464
    %v4571 = vmul.f32 %v4365, %v4468
    %v4572 = vmul.f32 %v4364, %v4472
    %v4573 = vmul.f32 %v4363, %v4476
    %v4574 = vmul.f32 %v4362, %v4480
    %v4575 = vmul.f32 %v4361, %v4484
    %v4576 = vmul.f32 %v4360, %v4488
    %v4577 = vmul.f32 %v4359, %v4492
    %v4578 = vmul.f32 %v4358, %v4496
    %v4579 = vmul.f32 %v4357, %v4500
    %v4580 = vmul.f32 %v4356, %v4504
    %v4581 = vmul.f32 %v4355, %v4508
    %v4582 = vmul.f32 %v4354, %v4512
    %v4583 = vmul.f32 %v4353, %v4516
    %v4584 = vmul.f32 %v4352, %v4520
    %4585 = vrot.lane.b32.xlu0 %v3958, 30
    %v4586 = vpop.permute.xlu0 %4585
    %4587 = vrot.lane.b32.xlu0 %v3959, 30
    %v4588 = vpop.permute.xlu0 %4587
    %4589 = vrot.lane.b32.xlu0 %v3960, 30
    %v4590 = vpop.permute.xlu0 %4589
    %4591 = vrot.lane.b32.xlu0 %v3961, 30
    %v4592 = vpop.permute.xlu0 %4591
    %4593 = vrot.lane.b32.xlu0 %v3962, 30
    %v4594 = vpop.permute.xlu0 %4593
    %4595 = vrot.lane.b32.xlu0 %v3963, 30
    %v4596 = vpop.permute.xlu0 %4595
    %4597 = vrot.lane.b32.xlu0 %v3964, 30
    %v4598 = vpop.permute.xlu0 %4597
    %4599 = vrot.lane.b32.xlu0 %v3965, 30
    %v4600 = vpop.permute.xlu0 %4599
    %4601 = vrot.lane.b32.xlu0 %v3966, 30
    %v4602 = vpop.permute.xlu0 %4601
    %4603 = vrot.lane.b32.xlu0 %v3967, 30
    %v4604 = vpop.permute.xlu0 %4603
    %4605 = vrot.lane.b32.xlu0 %v3968, 30
    %v4606 = vpop.permute.xlu0 %4605
    %4607 = vrot.lane.b32.xlu0 %v3969, 30
    %v4608 = vpop.permute.xlu0 %4607
    %4609 = vrot.lane.b32.xlu0 %v3970, 30
    %v4610 = vpop.permute.xlu0 %4609
    %4611 = vrot.lane.b32.xlu0 %v3971, 30
    %v4612 = vpop.permute.xlu0 %4611
    %4613 = vrot.lane.b32.xlu0 %v3972, 30
    %v4614 = vpop.permute.xlu0 %4613
    %4615 = vrot.lane.b32.xlu0 %v3973, 30
    %v4616 = vpop.permute.xlu0 %4615
    %4617 = vrot.lane.b32.xlu0 %v3974, 30
    %v4618 = vpop.permute.xlu0 %4617
    %4619 = vrot.lane.b32.xlu0 %v3975, 30
    %v4620 = vpop.permute.xlu0 %4619
    %4621 = vrot.lane.b32.xlu0 %v3976, 30
    %v4622 = vpop.permute.xlu0 %4621
    %4623 = vrot.lane.b32.xlu0 %v3977, 30
    %v4624 = vpop.permute.xlu0 %4623
    %4625 = vrot.lane.b32.xlu0 %v3978, 30
    %v4626 = vpop.permute.xlu0 %4625
    %4627 = vrot.lane.b32.xlu0 %v3979, 30
    %v4628 = vpop.permute.xlu0 %4627
    %4629 = vrot.lane.b32.xlu0 %v3980, 30
    %v4630 = vpop.permute.xlu0 %4629
    %4631 = vrot.lane.b32.xlu0 %v3981, 30
    %v4632 = vpop.permute.xlu0 %4631
    %4633 = vrot.lane.b32.xlu0 %v3982, 30
    %v4634 = vpop.permute.xlu0 %4633
    %4635 = vrot.lane.b32.xlu0 %v3983, 30
    %v4636 = vpop.permute.xlu0 %4635
    %4637 = vrot.lane.b32.xlu0 %v3984, 30
    %v4638 = vpop.permute.xlu0 %4637
    %4639 = vrot.lane.b32.xlu0 %v3985, 30
    %v4640 = vpop.permute.xlu0 %4639
    %4641 = vrot.lane.b32.xlu0 %v3986, 30
    %v4642 = vpop.permute.xlu0 %4641
    %4643 = vrot.lane.b32.xlu0 %v3987, 30
    %v4644 = vpop.permute.xlu0 %4643
    %4645 = vrot.lane.b32.xlu0 %v3988, 30
    %v4646 = vpop.permute.xlu0 %4645
    %4647 = vrot.lane.b32.xlu0 %v3989, 30
    %v4648 = vpop.permute.xlu0 %4647
    %vm4649 = vcmp.lt.s32.totalorder %v235, 30
    %v4650 = vsel %vm4649, %v4646, %v4648
    %v4651 = vsel %vm4649, %v4644, %v4646
    %v4652 = vsel %vm4649, %v4642, %v4644
    %v4653 = vsel %vm4649, %v4640, %v4642
    %v4654 = vsel %vm4649, %v4638, %v4640
    %v4655 = vsel %vm4649, %v4636, %v4638
    %v4656 = vsel %vm4649, %v4634, %v4636
    %v4657 = vsel %vm4649, %v4632, %v4634
    %v4658 = vsel %vm4649, %v4630, %v4632
    %v4659 = vsel %vm4649, %v4628, %v4630
    %v4660 = vsel %vm4649, %v4626, %v4628
    %v4661 = vsel %vm4649, %v4624, %v4626
    %v4662 = vsel %vm4649, %v4622, %v4624
    %v4663 = vsel %vm4649, %v4620, %v4622
    %v4664 = vsel %vm4649, %v4618, %v4620
    %v4665 = vsel %vm4649, %v4616, %v4618
    %v4666 = vsel %vm4649, %v4614, %v4616
    %v4667 = vsel %vm4649, %v4612, %v4614
    %v4668 = vsel %vm4649, %v4610, %v4612
    %v4669 = vsel %vm4649, %v4608, %v4610
    %v4670 = vsel %vm4649, %v4606, %v4608
    %v4671 = vsel %vm4649, %v4604, %v4606
    %v4672 = vsel %vm4649, %v4602, %v4604
    %v4673 = vsel %vm4649, %v4600, %v4602
    %v4674 = vsel %vm4649, %v4598, %v4600
    %v4675 = vsel %vm4649, %v4596, %v4598
    %v4676 = vsel %vm4649, %v4594, %v4596
    %v4677 = vsel %vm4649, %v4592, %v4594
    %v4678 = vsel %vm4649, %v4590, %v4592
    %v4679 = vsel %vm4649, %v4588, %v4590
    %v4680 = vsel %vm4649, %v4586, %v4588
    %v4681 = vsel %vm4649, %v4648, %v4586
    %s4682 = scalar_lea.vmem %s6, 64
    %v4683 = vld [vmem:[%s4682] sm:$0xff]
    %v4684 = vld [vmem:[%s4682 + $0x8] sm:$0xff]
    %v4685 = vld [vmem:[%s4682 + $0x10] sm:$0xff]
    %v4686 = vld [vmem:[%s4682 + $0x18] sm:$0xff]
    %v4691 = vlaneseq
    %v4692 = vshrl.u32 %v4691, 7
    %v4693 = vsub.s32 0, %v4692
    %v4694 = vrot.slane %v4683, %v4693
    %v4695 = vlaneseq
    %v4696 = vshrl.u32 %v4695, 7
    %v4697 = vsub.s32 1, %v4696
    %v4698 = vrot.slane %v4683, %v4697
    %v4699 = vlaneseq
    %v4700 = vshrl.u32 %v4699, 7
    %v4701 = vsub.s32 2, %v4700
    %v4702 = vrot.slane %v4683, %v4701
    %v4703 = vlaneseq
    %v4704 = vshrl.u32 %v4703, 7
    %v4705 = vsub.s32 3, %v4704
    %v4706 = vrot.slane %v4683, %v4705
    %v4707 = vlaneseq
    %v4708 = vshrl.u32 %v4707, 7
    %v4709 = vsub.s32 4, %v4708
    %v4710 = vrot.slane %v4683, %v4709
    %v4711 = vlaneseq
    %v4712 = vshrl.u32 %v4711, 7
    %v4713 = vsub.s32 5, %v4712
    %v4714 = vrot.slane %v4683, %v4713
    %v4715 = vlaneseq
    %v4716 = vshrl.u32 %v4715, 7
    %v4717 = vsub.s32 6, %v4716
    %v4718 = vrot.slane %v4683, %v4717
    %v4719 = vlaneseq
    %v4720 = vshrl.u32 %v4719, 7
    %v4721 = vsub.s32 7, %v4720
    %v4722 = vrot.slane %v4683, %v4721
    %v4723 = vlaneseq
    %v4724 = vshrl.u32 %v4723, 7
    %v4725 = vsub.s32 0, %v4724
    %v4726 = vrot.slane %v4684, %v4725
    %v4727 = vlaneseq
    %v4728 = vshrl.u32 %v4727, 7
    %v4729 = vsub.s32 1, %v4728
    %v4730 = vrot.slane %v4684, %v4729
    %v4731 = vlaneseq
    %v4732 = vshrl.u32 %v4731, 7
    %v4733 = vsub.s32 2, %v4732
    %v4734 = vrot.slane %v4684, %v4733
    %v4735 = vlaneseq
    %v4736 = vshrl.u32 %v4735, 7
    %v4737 = vsub.s32 3, %v4736
    %v4738 = vrot.slane %v4684, %v4737
    %v4739 = vlaneseq
    %v4740 = vshrl.u32 %v4739, 7
    %v4741 = vsub.s32 4, %v4740
    %v4742 = vrot.slane %v4684, %v4741
    %v4743 = vlaneseq
    %v4744 = vshrl.u32 %v4743, 7
    %v4745 = vsub.s32 5, %v4744
    %v4746 = vrot.slane %v4684, %v4745
    %v4747 = vlaneseq
    %v4748 = vshrl.u32 %v4747, 7
    %v4749 = vsub.s32 6, %v4748
    %v4750 = vrot.slane %v4684, %v4749
    %v4751 = vlaneseq
    %v4752 = vshrl.u32 %v4751, 7
    %v4753 = vsub.s32 7, %v4752
    %v4754 = vrot.slane %v4684, %v4753
    %v4755 = vlaneseq
    %v4756 = vshrl.u32 %v4755, 7
    %v4757 = vsub.s32 0, %v4756
    %v4758 = vrot.slane %v4685, %v4757
    %v4759 = vlaneseq
    %v4760 = vshrl.u32 %v4759, 7
    %v4761 = vsub.s32 1, %v4760
    %v4762 = vrot.slane %v4685, %v4761
    %v4763 = vlaneseq
    %v4764 = vshrl.u32 %v4763, 7
    %v4765 = vsub.s32 2, %v4764
    %v4766 = vrot.slane %v4685, %v4765
    %v4767 = vlaneseq
    %v4768 = vshrl.u32 %v4767, 7
    %v4769 = vsub.s32 3, %v4768
    %v4770 = vrot.slane %v4685, %v4769
    %v4771 = vlaneseq
    %v4772 = vshrl.u32 %v4771, 7
    %v4773 = vsub.s32 4, %v4772
    %v4774 = vrot.slane %v4685, %v4773
    %v4775 = vlaneseq
    %v4776 = vshrl.u32 %v4775, 7
    %v4777 = vsub.s32 5, %v4776
    %v4778 = vrot.slane %v4685, %v4777
    %v4779 = vlaneseq
    %v4780 = vshrl.u32 %v4779, 7
    %v4781 = vsub.s32 6, %v4780
    %v4782 = vrot.slane %v4685, %v4781
    %v4783 = vlaneseq
    %v4784 = vshrl.u32 %v4783, 7
    %v4785 = vsub.s32 7, %v4784
    %v4786 = vrot.slane %v4685, %v4785
    %v4787 = vlaneseq
    %v4788 = vshrl.u32 %v4787, 7
    %v4789 = vsub.s32 0, %v4788
    %v4790 = vrot.slane %v4686, %v4789
    %v4791 = vlaneseq
    %v4792 = vshrl.u32 %v4791, 7
    %v4793 = vsub.s32 1, %v4792
    %v4794 = vrot.slane %v4686, %v4793
    %v4795 = vlaneseq
    %v4796 = vshrl.u32 %v4795, 7
    %v4797 = vsub.s32 2, %v4796
    %v4798 = vrot.slane %v4686, %v4797
    %v4799 = vlaneseq
    %v4800 = vshrl.u32 %v4799, 7
    %v4801 = vsub.s32 3, %v4800
    %v4802 = vrot.slane %v4686, %v4801
    %v4803 = vlaneseq
    %v4804 = vshrl.u32 %v4803, 7
    %v4805 = vsub.s32 4, %v4804
    %v4806 = vrot.slane %v4686, %v4805
    %v4807 = vlaneseq
    %v4808 = vshrl.u32 %v4807, 7
    %v4809 = vsub.s32 5, %v4808
    %v4810 = vrot.slane %v4686, %v4809
    %v4811 = vlaneseq
    %v4812 = vshrl.u32 %v4811, 7
    %v4813 = vsub.s32 6, %v4812
    %v4814 = vrot.slane %v4686, %v4813
    %v4815 = vlaneseq
    %v4816 = vshrl.u32 %v4815, 7
    %v4817 = vsub.s32 7, %v4816
    %v4818 = vrot.slane %v4686, %v4817
    %v4851 = vmul.f32 %v4681, %v4694
    %v4852 = vmul.f32 %v4680, %v4698
    %v4853 = vmul.f32 %v4679, %v4702
    %v4854 = vmul.f32 %v4678, %v4706
    %v4855 = vmul.f32 %v4677, %v4710
    %v4856 = vmul.f32 %v4676, %v4714
    %v4857 = vmul.f32 %v4675, %v4718
    %v4858 = vmul.f32 %v4674, %v4722
    %v4859 = vmul.f32 %v4673, %v4726
    %v4860 = vmul.f32 %v4672, %v4730
    %v4861 = vmul.f32 %v4671, %v4734
    %v4862 = vmul.f32 %v4670, %v4738
    %v4863 = vmul.f32 %v4669, %v4742
    %v4864 = vmul.f32 %v4668, %v4746
    %v4865 = vmul.f32 %v4667, %v4750
    %v4866 = vmul.f32 %v4666, %v4754
    %v4867 = vmul.f32 %v4665, %v4758
    %v4868 = vmul.f32 %v4664, %v4762
    %v4869 = vmul.f32 %v4663, %v4766
    %v4870 = vmul.f32 %v4662, %v4770
    %v4871 = vmul.f32 %v4661, %v4774
    %v4872 = vmul.f32 %v4660, %v4778
    %v4873 = vmul.f32 %v4659, %v4782
    %v4874 = vmul.f32 %v4658, %v4786
    %v4875 = vmul.f32 %v4657, %v4790
    %v4876 = vmul.f32 %v4656, %v4794
    %v4877 = vmul.f32 %v4655, %v4798
    %v4878 = vmul.f32 %v4654, %v4802
    %v4879 = vmul.f32 %v4653, %v4806
    %v4880 = vmul.f32 %v4652, %v4810
    %v4881 = vmul.f32 %v4651, %v4814
    %v4882 = vmul.f32 %v4650, %v4818
    %4883 = vrot.lane.b32.xlu0 %v3958, 2
    %v4884 = vpop.permute.xlu0 %4883
    %4885 = vrot.lane.b32.xlu0 %v3959, 2
    %v4886 = vpop.permute.xlu0 %4885
    %4887 = vrot.lane.b32.xlu0 %v3960, 2
    %v4888 = vpop.permute.xlu0 %4887
    %4889 = vrot.lane.b32.xlu0 %v3961, 2
    %v4890 = vpop.permute.xlu0 %4889
    %4891 = vrot.lane.b32.xlu0 %v3962, 2
    %v4892 = vpop.permute.xlu0 %4891
    %4893 = vrot.lane.b32.xlu0 %v3963, 2
    %v4894 = vpop.permute.xlu0 %4893
    %4895 = vrot.lane.b32.xlu0 %v3964, 2
    %v4896 = vpop.permute.xlu0 %4895
    %4897 = vrot.lane.b32.xlu0 %v3965, 2
    %v4898 = vpop.permute.xlu0 %4897
    %4899 = vrot.lane.b32.xlu0 %v3966, 2
    %v4900 = vpop.permute.xlu0 %4899
    %4901 = vrot.lane.b32.xlu0 %v3967, 2
    %v4902 = vpop.permute.xlu0 %4901
    %4903 = vrot.lane.b32.xlu0 %v3968, 2
    %v4904 = vpop.permute.xlu0 %4903
    %4905 = vrot.lane.b32.xlu0 %v3969, 2
    %v4906 = vpop.permute.xlu0 %4905
    %4907 = vrot.lane.b32.xlu0 %v3970, 2
    %v4908 = vpop.permute.xlu0 %4907
    %4909 = vrot.lane.b32.xlu0 %v3971, 2
    %v4910 = vpop.permute.xlu0 %4909
    %4911 = vrot.lane.b32.xlu0 %v3972, 2
    %v4912 = vpop.permute.xlu0 %4911
    %4913 = vrot.lane.b32.xlu0 %v3973, 2
    %v4914 = vpop.permute.xlu0 %4913
    %4915 = vrot.lane.b32.xlu0 %v3974, 2
    %v4916 = vpop.permute.xlu0 %4915
    %4917 = vrot.lane.b32.xlu0 %v3975, 2
    %v4918 = vpop.permute.xlu0 %4917
    %4919 = vrot.lane.b32.xlu0 %v3976, 2
    %v4920 = vpop.permute.xlu0 %4919
    %4921 = vrot.lane.b32.xlu0 %v3977, 2
    %v4922 = vpop.permute.xlu0 %4921
    %4923 = vrot.lane.b32.xlu0 %v3978, 2
    %v4924 = vpop.permute.xlu0 %4923
    %4925 = vrot.lane.b32.xlu0 %v3979, 2
    %v4926 = vpop.permute.xlu0 %4925
    %4927 = vrot.lane.b32.xlu0 %v3980, 2
    %v4928 = vpop.permute.xlu0 %4927
    %4929 = vrot.lane.b32.xlu0 %v3981, 2
    %v4930 = vpop.permute.xlu0 %4929
    %4931 = vrot.lane.b32.xlu0 %v3982, 2
    %v4932 = vpop.permute.xlu0 %4931
    %4933 = vrot.lane.b32.xlu0 %v3983, 2
    %v4934 = vpop.permute.xlu0 %4933
    %4935 = vrot.lane.b32.xlu0 %v3984, 2
    %v4936 = vpop.permute.xlu0 %4935
    %4937 = vrot.lane.b32.xlu0 %v3985, 2
    %v4938 = vpop.permute.xlu0 %4937
    %4939 = vrot.lane.b32.xlu0 %v3986, 2
    %v4940 = vpop.permute.xlu0 %4939
    %4941 = vrot.lane.b32.xlu0 %v3987, 2
    %v4942 = vpop.permute.xlu0 %4941
    %4943 = vrot.lane.b32.xlu0 %v3988, 2
    %v4944 = vpop.permute.xlu0 %4943
    %4945 = vrot.lane.b32.xlu0 %v3989, 2
    %v4946 = vpop.permute.xlu0 %4945
    %vm4947 = vcmp.lt.s32.totalorder %v235, 2
    %v4948 = vsel %vm4947, %v4944, %v4946
    %v4949 = vsel %vm4947, %v4942, %v4944
    %v4950 = vsel %vm4947, %v4940, %v4942
    %v4951 = vsel %vm4947, %v4938, %v4940
    %v4952 = vsel %vm4947, %v4936, %v4938
    %v4953 = vsel %vm4947, %v4934, %v4936
    %v4954 = vsel %vm4947, %v4932, %v4934
    %v4955 = vsel %vm4947, %v4930, %v4932
    %v4956 = vsel %vm4947, %v4928, %v4930
    %v4957 = vsel %vm4947, %v4926, %v4928
    %v4958 = vsel %vm4947, %v4924, %v4926
    %v4959 = vsel %vm4947, %v4922, %v4924
    %v4960 = vsel %vm4947, %v4920, %v4922
    %v4961 = vsel %vm4947, %v4918, %v4920
    %v4962 = vsel %vm4947, %v4916, %v4918
    %v4963 = vsel %vm4947, %v4914, %v4916
    %v4964 = vsel %vm4947, %v4912, %v4914
    %v4965 = vsel %vm4947, %v4910, %v4912
    %v4966 = vsel %vm4947, %v4908, %v4910
    %v4967 = vsel %vm4947, %v4906, %v4908
    %v4968 = vsel %vm4947, %v4904, %v4906
    %v4969 = vsel %vm4947, %v4902, %v4904
    %v4970 = vsel %vm4947, %v4900, %v4902
    %v4971 = vsel %vm4947, %v4898, %v4900
    %v4972 = vsel %vm4947, %v4896, %v4898
    %v4973 = vsel %vm4947, %v4894, %v4896
    %v4974 = vsel %vm4947, %v4892, %v4894
    %v4975 = vsel %vm4947, %v4890, %v4892
    %v4976 = vsel %vm4947, %v4888, %v4890
    %v4977 = vsel %vm4947, %v4886, %v4888
    %v4978 = vsel %vm4947, %v4884, %v4886
    %v4979 = vsel %vm4947, %v4946, %v4884
    %s4980 = scalar_lea.vmem %s6, 96
    %v4981 = vld [vmem:[%s4980] sm:$0xff]
    %v4982 = vld [vmem:[%s4980 + $0x8] sm:$0xff]
    %v4983 = vld [vmem:[%s4980 + $0x10] sm:$0xff]
    %v4984 = vld [vmem:[%s4980 + $0x18] sm:$0xff]
    %v4989 = vlaneseq
    %v4990 = vshrl.u32 %v4989, 7
    %v4991 = vsub.s32 0, %v4990
    %v4992 = vrot.slane %v4981, %v4991
    %v4993 = vlaneseq
    %v4994 = vshrl.u32 %v4993, 7
    %v4995 = vsub.s32 1, %v4994
    %v4996 = vrot.slane %v4981, %v4995
    %v4997 = vlaneseq
    %v4998 = vshrl.u32 %v4997, 7
    %v4999 = vsub.s32 2, %v4998
    %v5000 = vrot.slane %v4981, %v4999
    %v5001 = vlaneseq
    %v5002 = vshrl.u32 %v5001, 7
    %v5003 = vsub.s32 3, %v5002
    %v5004 = vrot.slane %v4981, %v5003
    %v5005 = vlaneseq
    %v5006 = vshrl.u32 %v5005, 7
    %v5007 = vsub.s32 4, %v5006
    %v5008 = vrot.slane %v4981, %v5007
    %v5009 = vlaneseq
    %v5010 = vshrl.u32 %v5009, 7
    %v5011 = vsub.s32 5, %v5010
    %v5012 = vrot.slane %v4981, %v5011
    %v5013 = vlaneseq
    %v5014 = vshrl.u32 %v5013, 7
    %v5015 = vsub.s32 6, %v5014
    %v5016 = vrot.slane %v4981, %v5015
    %v5017 = vlaneseq
    %v5018 = vshrl.u32 %v5017, 7
    %v5019 = vsub.s32 7, %v5018
    %v5020 = vrot.slane %v4981, %v5019
    %v5021 = vlaneseq
    %v5022 = vshrl.u32 %v5021, 7
    %v5023 = vsub.s32 0, %v5022
    %v5024 = vrot.slane %v4982, %v5023
    %v5025 = vlaneseq
    %v5026 = vshrl.u32 %v5025, 7
    %v5027 = vsub.s32 1, %v5026
    %v5028 = vrot.slane %v4982, %v5027
    %v5029 = vlaneseq
    %v5030 = vshrl.u32 %v5029, 7
    %v5031 = vsub.s32 2, %v5030
    %v5032 = vrot.slane %v4982, %v5031
    %v5033 = vlaneseq
    %v5034 = vshrl.u32 %v5033, 7
    %v5035 = vsub.s32 3, %v5034
    %v5036 = vrot.slane %v4982, %v5035
    %v5037 = vlaneseq
    %v5038 = vshrl.u32 %v5037, 7
    %v5039 = vsub.s32 4, %v5038
    %v5040 = vrot.slane %v4982, %v5039
    %v5041 = vlaneseq
    %v5042 = vshrl.u32 %v5041, 7
    %v5043 = vsub.s32 5, %v5042
    %v5044 = vrot.slane %v4982, %v5043
    %v5045 = vlaneseq
    %v5046 = vshrl.u32 %v5045, 7
    %v5047 = vsub.s32 6, %v5046
    %v5048 = vrot.slane %v4982, %v5047
    %v5049 = vlaneseq
    %v5050 = vshrl.u32 %v5049, 7
    %v5051 = vsub.s32 7, %v5050
    %v5052 = vrot.slane %v4982, %v5051
    %v5053 = vlaneseq
    %v5054 = vshrl.u32 %v5053, 7
    %v5055 = vsub.s32 0, %v5054
    %v5056 = vrot.slane %v4983, %v5055
    %v5057 = vlaneseq
    %v5058 = vshrl.u32 %v5057, 7
    %v5059 = vsub.s32 1, %v5058
    %v5060 = vrot.slane %v4983, %v5059
    %v5061 = vlaneseq
    %v5062 = vshrl.u32 %v5061, 7
    %v5063 = vsub.s32 2, %v5062
    %v5064 = vrot.slane %v4983, %v5063
    %v5065 = vlaneseq
    %v5066 = vshrl.u32 %v5065, 7
    %v5067 = vsub.s32 3, %v5066
    %v5068 = vrot.slane %v4983, %v5067
    %v5069 = vlaneseq
    %v5070 = vshrl.u32 %v5069, 7
    %v5071 = vsub.s32 4, %v5070
    %v5072 = vrot.slane %v4983, %v5071
    %v5073 = vlaneseq
    %v5074 = vshrl.u32 %v5073, 7
    %v5075 = vsub.s32 5, %v5074
    %v5076 = vrot.slane %v4983, %v5075
    %v5077 = vlaneseq
    %v5078 = vshrl.u32 %v5077, 7
    %v5079 = vsub.s32 6, %v5078
    %v5080 = vrot.slane %v4983, %v5079
    %v5081 = vlaneseq
    %v5082 = vshrl.u32 %v5081, 7
    %v5083 = vsub.s32 7, %v5082
    %v5084 = vrot.slane %v4983, %v5083
    %v5085 = vlaneseq
    %v5086 = vshrl.u32 %v5085, 7
    %v5087 = vsub.s32 0, %v5086
    %v5088 = vrot.slane %v4984, %v5087
    %v5089 = vlaneseq
    %v5090 = vshrl.u32 %v5089, 7
    %v5091 = vsub.s32 1, %v5090
    %v5092 = vrot.slane %v4984, %v5091
    %v5093 = vlaneseq
    %v5094 = vshrl.u32 %v5093, 7
    %v5095 = vsub.s32 2, %v5094
    %v5096 = vrot.slane %v4984, %v5095
    %v5097 = vlaneseq
    %v5098 = vshrl.u32 %v5097, 7
    %v5099 = vsub.s32 3, %v5098
    %v5100 = vrot.slane %v4984, %v5099
    %v5101 = vlaneseq
    %v5102 = vshrl.u32 %v5101, 7
    %v5103 = vsub.s32 4, %v5102
    %v5104 = vrot.slane %v4984, %v5103
    %v5105 = vlaneseq
    %v5106 = vshrl.u32 %v5105, 7
    %v5107 = vsub.s32 5, %v5106
    %v5108 = vrot.slane %v4984, %v5107
    %v5109 = vlaneseq
    %v5110 = vshrl.u32 %v5109, 7
    %v5111 = vsub.s32 6, %v5110
    %v5112 = vrot.slane %v4984, %v5111
    %v5113 = vlaneseq
    %v5114 = vshrl.u32 %v5113, 7
    %v5115 = vsub.s32 7, %v5114
    %v5116 = vrot.slane %v4984, %v5115
    %v5149 = vmul.f32 %v4979, %v4992
    %v5150 = vmul.f32 %v4978, %v4996
    %v5151 = vmul.f32 %v4977, %v5000
    %v5152 = vmul.f32 %v4976, %v5004
    %v5153 = vmul.f32 %v4975, %v5008
    %v5154 = vmul.f32 %v4974, %v5012
    %v5155 = vmul.f32 %v4973, %v5016
    %v5156 = vmul.f32 %v4972, %v5020
    %v5157 = vmul.f32 %v4971, %v5024
    %v5158 = vmul.f32 %v4970, %v5028
    %v5159 = vmul.f32 %v4969, %v5032
    %v5160 = vmul.f32 %v4968, %v5036
    %v5161 = vmul.f32 %v4967, %v5040
    %v5162 = vmul.f32 %v4966, %v5044
    %v5163 = vmul.f32 %v4965, %v5048
    %v5164 = vmul.f32 %v4964, %v5052
    %v5165 = vmul.f32 %v4963, %v5056
    %v5166 = vmul.f32 %v4962, %v5060
    %v5167 = vmul.f32 %v4961, %v5064
    %v5168 = vmul.f32 %v4960, %v5068
    %v5169 = vmul.f32 %v4959, %v5072
    %v5170 = vmul.f32 %v4958, %v5076
    %v5171 = vmul.f32 %v4957, %v5080
    %v5172 = vmul.f32 %v4956, %v5084
    %v5173 = vmul.f32 %v4955, %v5088
    %v5174 = vmul.f32 %v4954, %v5092
    %v5175 = vmul.f32 %v4953, %v5096
    %v5176 = vmul.f32 %v4952, %v5100
    %v5177 = vmul.f32 %v4951, %v5104
    %v5178 = vmul.f32 %v4950, %v5108
    %v5179 = vmul.f32 %v4949, %v5112
    %v5180 = vmul.f32 %v4948, %v5116
    %5181 = vrot.lane.b32.xlu0 %v3958, 126
    %v5182 = vpop.permute.xlu0 %5181
    %5183 = vrot.lane.b32.xlu0 %v3959, 126
    %v5184 = vpop.permute.xlu0 %5183
    %5185 = vrot.lane.b32.xlu0 %v3960, 126
    %v5186 = vpop.permute.xlu0 %5185
    %5187 = vrot.lane.b32.xlu0 %v3961, 126
    %v5188 = vpop.permute.xlu0 %5187
    %5189 = vrot.lane.b32.xlu0 %v3962, 126
    %v5190 = vpop.permute.xlu0 %5189
    %5191 = vrot.lane.b32.xlu0 %v3963, 126
    %v5192 = vpop.permute.xlu0 %5191
    %5193 = vrot.lane.b32.xlu0 %v3964, 126
    %v5194 = vpop.permute.xlu0 %5193
    %5195 = vrot.lane.b32.xlu0 %v3965, 126
    %v5196 = vpop.permute.xlu0 %5195
    %5197 = vrot.lane.b32.xlu0 %v3966, 126
    %v5198 = vpop.permute.xlu0 %5197
    %5199 = vrot.lane.b32.xlu0 %v3967, 126
    %v5200 = vpop.permute.xlu0 %5199
    %5201 = vrot.lane.b32.xlu0 %v3968, 126
    %v5202 = vpop.permute.xlu0 %5201
    %5203 = vrot.lane.b32.xlu0 %v3969, 126
    %v5204 = vpop.permute.xlu0 %5203
    %5205 = vrot.lane.b32.xlu0 %v3970, 126
    %v5206 = vpop.permute.xlu0 %5205
    %5207 = vrot.lane.b32.xlu0 %v3971, 126
    %v5208 = vpop.permute.xlu0 %5207
    %5209 = vrot.lane.b32.xlu0 %v3972, 126
    %v5210 = vpop.permute.xlu0 %5209
    %5211 = vrot.lane.b32.xlu0 %v3973, 126
    %v5212 = vpop.permute.xlu0 %5211
    %5213 = vrot.lane.b32.xlu0 %v3974, 126
    %v5214 = vpop.permute.xlu0 %5213
    %5215 = vrot.lane.b32.xlu0 %v3975, 126
    %v5216 = vpop.permute.xlu0 %5215
    %5217 = vrot.lane.b32.xlu0 %v3976, 126
    %v5218 = vpop.permute.xlu0 %5217
    %5219 = vrot.lane.b32.xlu0 %v3977, 126
    %v5220 = vpop.permute.xlu0 %5219
    %5221 = vrot.lane.b32.xlu0 %v3978, 126
    %v5222 = vpop.permute.xlu0 %5221
    %5223 = vrot.lane.b32.xlu0 %v3979, 126
    %v5224 = vpop.permute.xlu0 %5223
    %5225 = vrot.lane.b32.xlu0 %v3980, 126
    %v5226 = vpop.permute.xlu0 %5225
    %5227 = vrot.lane.b32.xlu0 %v3981, 126
    %v5228 = vpop.permute.xlu0 %5227
    %5229 = vrot.lane.b32.xlu0 %v3982, 126
    %v5230 = vpop.permute.xlu0 %5229
    %5231 = vrot.lane.b32.xlu0 %v3983, 126
    %v5232 = vpop.permute.xlu0 %5231
    %5233 = vrot.lane.b32.xlu0 %v3984, 126
    %v5234 = vpop.permute.xlu0 %5233
    %5235 = vrot.lane.b32.xlu0 %v3985, 126
    %v5236 = vpop.permute.xlu0 %5235
    %5237 = vrot.lane.b32.xlu0 %v3986, 126
    %v5238 = vpop.permute.xlu0 %5237
    %5239 = vrot.lane.b32.xlu0 %v3987, 126
    %v5240 = vpop.permute.xlu0 %5239
    %5241 = vrot.lane.b32.xlu0 %v3988, 126
    %v5242 = vpop.permute.xlu0 %5241
    %5243 = vrot.lane.b32.xlu0 %v3989, 126
    %v5244 = vpop.permute.xlu0 %5243
    %vm5245 = vcmp.lt.s32.totalorder %v235, 126
    %v5246 = vsel %vm5245, %v5242, %v5244
    %v5247 = vsel %vm5245, %v5240, %v5242
    %v5248 = vsel %vm5245, %v5238, %v5240
    %v5249 = vsel %vm5245, %v5236, %v5238
    %v5250 = vsel %vm5245, %v5234, %v5236
    %v5251 = vsel %vm5245, %v5232, %v5234
    %v5252 = vsel %vm5245, %v5230, %v5232
    %v5253 = vsel %vm5245, %v5228, %v5230
    %v5254 = vsel %vm5245, %v5226, %v5228
    %v5255 = vsel %vm5245, %v5224, %v5226
    %v5256 = vsel %vm5245, %v5222, %v5224
    %v5257 = vsel %vm5245, %v5220, %v5222
    %v5258 = vsel %vm5245, %v5218, %v5220
    %v5259 = vsel %vm5245, %v5216, %v5218
    %v5260 = vsel %vm5245, %v5214, %v5216
    %v5261 = vsel %vm5245, %v5212, %v5214
    %v5262 = vsel %vm5245, %v5210, %v5212
    %v5263 = vsel %vm5245, %v5208, %v5210
    %v5264 = vsel %vm5245, %v5206, %v5208
    %v5265 = vsel %vm5245, %v5204, %v5206
    %v5266 = vsel %vm5245, %v5202, %v5204
    %v5267 = vsel %vm5245, %v5200, %v5202
    %v5268 = vsel %vm5245, %v5198, %v5200
    %v5269 = vsel %vm5245, %v5196, %v5198
    %v5270 = vsel %vm5245, %v5194, %v5196
    %v5271 = vsel %vm5245, %v5192, %v5194
    %v5272 = vsel %vm5245, %v5190, %v5192
    %v5273 = vsel %vm5245, %v5188, %v5190
    %v5274 = vsel %vm5245, %v5186, %v5188
    %v5275 = vsel %vm5245, %v5184, %v5186
    %v5276 = vsel %vm5245, %v5182, %v5184
    %v5277 = vsel %vm5245, %v5244, %v5182
    %s5278 = scalar_lea.vmem %s6, 160
    %v5279 = vld [vmem:[%s5278] sm:$0xff]
    %v5280 = vld [vmem:[%s5278 + $0x8] sm:$0xff]
    %v5281 = vld [vmem:[%s5278 + $0x10] sm:$0xff]
    %v5282 = vld [vmem:[%s5278 + $0x18] sm:$0xff]
    %v5287 = vlaneseq
    %v5288 = vshrl.u32 %v5287, 7
    %v5289 = vsub.s32 0, %v5288
    %v5290 = vrot.slane %v5279, %v5289
    %v5291 = vlaneseq
    %v5292 = vshrl.u32 %v5291, 7
    %v5293 = vsub.s32 1, %v5292
    %v5294 = vrot.slane %v5279, %v5293
    %v5295 = vlaneseq
    %v5296 = vshrl.u32 %v5295, 7
    %v5297 = vsub.s32 2, %v5296
    %v5298 = vrot.slane %v5279, %v5297
    %v5299 = vlaneseq
    %v5300 = vshrl.u32 %v5299, 7
    %v5301 = vsub.s32 3, %v5300
    %v5302 = vrot.slane %v5279, %v5301
    %v5303 = vlaneseq
    %v5304 = vshrl.u32 %v5303, 7
    %v5305 = vsub.s32 4, %v5304
    %v5306 = vrot.slane %v5279, %v5305
    %v5307 = vlaneseq
    %v5308 = vshrl.u32 %v5307, 7
    %v5309 = vsub.s32 5, %v5308
    %v5310 = vrot.slane %v5279, %v5309
    %v5311 = vlaneseq
    %v5312 = vshrl.u32 %v5311, 7
    %v5313 = vsub.s32 6, %v5312
    %v5314 = vrot.slane %v5279, %v5313
    %v5315 = vlaneseq
    %v5316 = vshrl.u32 %v5315, 7
    %v5317 = vsub.s32 7, %v5316
    %v5318 = vrot.slane %v5279, %v5317
    %v5319 = vlaneseq
    %v5320 = vshrl.u32 %v5319, 7
    %v5321 = vsub.s32 0, %v5320
    %v5322 = vrot.slane %v5280, %v5321
    %v5323 = vlaneseq
    %v5324 = vshrl.u32 %v5323, 7
    %v5325 = vsub.s32 1, %v5324
    %v5326 = vrot.slane %v5280, %v5325
    %v5327 = vlaneseq
    %v5328 = vshrl.u32 %v5327, 7
    %v5329 = vsub.s32 2, %v5328
    %v5330 = vrot.slane %v5280, %v5329
    %v5331 = vlaneseq
    %v5332 = vshrl.u32 %v5331, 7
    %v5333 = vsub.s32 3, %v5332
    %v5334 = vrot.slane %v5280, %v5333
    %v5335 = vlaneseq
    %v5336 = vshrl.u32 %v5335, 7
    %v5337 = vsub.s32 4, %v5336
    %v5338 = vrot.slane %v5280, %v5337
    %v5339 = vlaneseq
    %v5340 = vshrl.u32 %v5339, 7
    %v5341 = vsub.s32 5, %v5340
    %v5342 = vrot.slane %v5280, %v5341
    %v5343 = vlaneseq
    %v5344 = vshrl.u32 %v5343, 7
    %v5345 = vsub.s32 6, %v5344
    %v5346 = vrot.slane %v5280, %v5345
    %v5347 = vlaneseq
    %v5348 = vshrl.u32 %v5347, 7
    %v5349 = vsub.s32 7, %v5348
    %v5350 = vrot.slane %v5280, %v5349
    %v5351 = vlaneseq
    %v5352 = vshrl.u32 %v5351, 7
    %v5353 = vsub.s32 0, %v5352
    %v5354 = vrot.slane %v5281, %v5353
    %v5355 = vlaneseq
    %v5356 = vshrl.u32 %v5355, 7
    %v5357 = vsub.s32 1, %v5356
    %v5358 = vrot.slane %v5281, %v5357
    %v5359 = vlaneseq
    %v5360 = vshrl.u32 %v5359, 7
    %v5361 = vsub.s32 2, %v5360
    %v5362 = vrot.slane %v5281, %v5361
    %v5363 = vlaneseq
    %v5364 = vshrl.u32 %v5363, 7
    %v5365 = vsub.s32 3, %v5364
    %v5366 = vrot.slane %v5281, %v5365
    %v5367 = vlaneseq
    %v5368 = vshrl.u32 %v5367, 7
    %v5369 = vsub.s32 4, %v5368
    %v5370 = vrot.slane %v5281, %v5369
    %v5371 = vlaneseq
    %v5372 = vshrl.u32 %v5371, 7
    %v5373 = vsub.s32 5, %v5372
    %v5374 = vrot.slane %v5281, %v5373
    %v5375 = vlaneseq
    %v5376 = vshrl.u32 %v5375, 7
    %v5377 = vsub.s32 6, %v5376
    %v5378 = vrot.slane %v5281, %v5377
    %v5379 = vlaneseq
    %v5380 = vshrl.u32 %v5379, 7
    %v5381 = vsub.s32 7, %v5380
    %v5382 = vrot.slane %v5281, %v5381
    %v5383 = vlaneseq
    %v5384 = vshrl.u32 %v5383, 7
    %v5385 = vsub.s32 0, %v5384
    %v5386 = vrot.slane %v5282, %v5385
    %v5387 = vlaneseq
    %v5388 = vshrl.u32 %v5387, 7
    %v5389 = vsub.s32 1, %v5388
    %v5390 = vrot.slane %v5282, %v5389
    %v5391 = vlaneseq
    %v5392 = vshrl.u32 %v5391, 7
    %v5393 = vsub.s32 2, %v5392
    %v5394 = vrot.slane %v5282, %v5393
    %v5395 = vlaneseq
    %v5396 = vshrl.u32 %v5395, 7
    %v5397 = vsub.s32 3, %v5396
    %v5398 = vrot.slane %v5282, %v5397
    %v5399 = vlaneseq
    %v5400 = vshrl.u32 %v5399, 7
    %v5401 = vsub.s32 4, %v5400
    %v5402 = vrot.slane %v5282, %v5401
    %v5403 = vlaneseq
    %v5404 = vshrl.u32 %v5403, 7
    %v5405 = vsub.s32 5, %v5404
    %v5406 = vrot.slane %v5282, %v5405
    %v5407 = vlaneseq
    %v5408 = vshrl.u32 %v5407, 7
    %v5409 = vsub.s32 6, %v5408
    %v5410 = vrot.slane %v5282, %v5409
    %v5411 = vlaneseq
    %v5412 = vshrl.u32 %v5411, 7
    %v5413 = vsub.s32 7, %v5412
    %v5414 = vrot.slane %v5282, %v5413
    %v5447 = vmul.f32 %v5276, %v5290
    %v5448 = vmul.f32 %v5275, %v5294
    %v5449 = vmul.f32 %v5274, %v5298
    %v5450 = vmul.f32 %v5273, %v5302
    %v5451 = vmul.f32 %v5272, %v5306
    %v5452 = vmul.f32 %v5271, %v5310
    %v5453 = vmul.f32 %v5270, %v5314
    %v5454 = vmul.f32 %v5269, %v5318
    %v5455 = vmul.f32 %v5268, %v5322
    %v5456 = vmul.f32 %v5267, %v5326
    %v5457 = vmul.f32 %v5266, %v5330
    %v5458 = vmul.f32 %v5265, %v5334
    %v5459 = vmul.f32 %v5264, %v5338
    %v5460 = vmul.f32 %v5263, %v5342
    %v5461 = vmul.f32 %v5262, %v5346
    %v5462 = vmul.f32 %v5261, %v5350
    %v5463 = vmul.f32 %v5260, %v5354
    %v5464 = vmul.f32 %v5259, %v5358
    %v5465 = vmul.f32 %v5258, %v5362
    %v5466 = vmul.f32 %v5257, %v5366
    %v5467 = vmul.f32 %v5256, %v5370
    %v5468 = vmul.f32 %v5255, %v5374
    %v5469 = vmul.f32 %v5254, %v5378
    %v5470 = vmul.f32 %v5253, %v5382
    %v5471 = vmul.f32 %v5252, %v5386
    %v5472 = vmul.f32 %v5251, %v5390
    %v5473 = vmul.f32 %v5250, %v5394
    %v5474 = vmul.f32 %v5249, %v5398
    %v5475 = vmul.f32 %v5248, %v5402
    %v5476 = vmul.f32 %v5247, %v5406
    %v5477 = vmul.f32 %v5246, %v5410
    %v5478 = vmul.f32 %v5277, %v5414
    %5479 = vrot.lane.b32.xlu0 %v3958, 98
    %v5480 = vpop.permute.xlu0 %5479
    %5481 = vrot.lane.b32.xlu0 %v3959, 98
    %v5482 = vpop.permute.xlu0 %5481
    %5483 = vrot.lane.b32.xlu0 %v3960, 98
    %v5484 = vpop.permute.xlu0 %5483
    %5485 = vrot.lane.b32.xlu0 %v3961, 98
    %v5486 = vpop.permute.xlu0 %5485
    %5487 = vrot.lane.b32.xlu0 %v3962, 98
    %v5488 = vpop.permute.xlu0 %5487
    %5489 = vrot.lane.b32.xlu0 %v3963, 98
    %v5490 = vpop.permute.xlu0 %5489
    %5491 = vrot.lane.b32.xlu0 %v3964, 98
    %v5492 = vpop.permute.xlu0 %5491
    %5493 = vrot.lane.b32.xlu0 %v3965, 98
    %v5494 = vpop.permute.xlu0 %5493
    %5495 = vrot.lane.b32.xlu0 %v3966, 98
    %v5496 = vpop.permute.xlu0 %5495
    %5497 = vrot.lane.b32.xlu0 %v3967, 98
    %v5498 = vpop.permute.xlu0 %5497
    %5499 = vrot.lane.b32.xlu0 %v3968, 98
    %v5500 = vpop.permute.xlu0 %5499
    %5501 = vrot.lane.b32.xlu0 %v3969, 98
    %v5502 = vpop.permute.xlu0 %5501
    %5503 = vrot.lane.b32.xlu0 %v3970, 98
    %v5504 = vpop.permute.xlu0 %5503
    %5505 = vrot.lane.b32.xlu0 %v3971, 98
    %v5506 = vpop.permute.xlu0 %5505
    %5507 = vrot.lane.b32.xlu0 %v3972, 98
    %v5508 = vpop.permute.xlu0 %5507
    %5509 = vrot.lane.b32.xlu0 %v3973, 98
    %v5510 = vpop.permute.xlu0 %5509
    %5511 = vrot.lane.b32.xlu0 %v3974, 98
    %v5512 = vpop.permute.xlu0 %5511
    %5513 = vrot.lane.b32.xlu0 %v3975, 98
    %v5514 = vpop.permute.xlu0 %5513
    %5515 = vrot.lane.b32.xlu0 %v3976, 98
    %v5516 = vpop.permute.xlu0 %5515
    %5517 = vrot.lane.b32.xlu0 %v3977, 98
    %v5518 = vpop.permute.xlu0 %5517
    %5519 = vrot.lane.b32.xlu0 %v3978, 98
    %v5520 = vpop.permute.xlu0 %5519
    %5521 = vrot.lane.b32.xlu0 %v3979, 98
    %v5522 = vpop.permute.xlu0 %5521
    %5523 = vrot.lane.b32.xlu0 %v3980, 98
    %v5524 = vpop.permute.xlu0 %5523
    %5525 = vrot.lane.b32.xlu0 %v3981, 98
    %v5526 = vpop.permute.xlu0 %5525
    %5527 = vrot.lane.b32.xlu0 %v3982, 98
    %v5528 = vpop.permute.xlu0 %5527
    %5529 = vrot.lane.b32.xlu0 %v3983, 98
    %v5530 = vpop.permute.xlu0 %5529
    %5531 = vrot.lane.b32.xlu0 %v3984, 98
    %v5532 = vpop.permute.xlu0 %5531
    %5533 = vrot.lane.b32.xlu0 %v3985, 98
    %v5534 = vpop.permute.xlu0 %5533
    %5535 = vrot.lane.b32.xlu0 %v3986, 98
    %v5536 = vpop.permute.xlu0 %5535
    %5537 = vrot.lane.b32.xlu0 %v3987, 98
    %v5538 = vpop.permute.xlu0 %5537
    %5539 = vrot.lane.b32.xlu0 %v3988, 98
    %v5540 = vpop.permute.xlu0 %5539
    %5541 = vrot.lane.b32.xlu0 %v3989, 98
    %v5542 = vpop.permute.xlu0 %5541
    %vm5543 = vcmp.lt.s32.totalorder %v235, 98
    %v5544 = vsel %vm5543, %v5540, %v5542
    %v5545 = vsel %vm5543, %v5538, %v5540
    %v5546 = vsel %vm5543, %v5536, %v5538
    %v5547 = vsel %vm5543, %v5534, %v5536
    %v5548 = vsel %vm5543, %v5532, %v5534
    %v5549 = vsel %vm5543, %v5530, %v5532
    %v5550 = vsel %vm5543, %v5528, %v5530
    %v5551 = vsel %vm5543, %v5526, %v5528
    %v5552 = vsel %vm5543, %v5524, %v5526
    %v5553 = vsel %vm5543, %v5522, %v5524
    %v5554 = vsel %vm5543, %v5520, %v5522
    %v5555 = vsel %vm5543, %v5518, %v5520
    %v5556 = vsel %vm5543, %v5516, %v5518
    %v5557 = vsel %vm5543, %v5514, %v5516
    %v5558 = vsel %vm5543, %v5512, %v5514
    %v5559 = vsel %vm5543, %v5510, %v5512
    %v5560 = vsel %vm5543, %v5508, %v5510
    %v5561 = vsel %vm5543, %v5506, %v5508
    %v5562 = vsel %vm5543, %v5504, %v5506
    %v5563 = vsel %vm5543, %v5502, %v5504
    %v5564 = vsel %vm5543, %v5500, %v5502
    %v5565 = vsel %vm5543, %v5498, %v5500
    %v5566 = vsel %vm5543, %v5496, %v5498
    %v5567 = vsel %vm5543, %v5494, %v5496
    %v5568 = vsel %vm5543, %v5492, %v5494
    %v5569 = vsel %vm5543, %v5490, %v5492
    %v5570 = vsel %vm5543, %v5488, %v5490
    %v5571 = vsel %vm5543, %v5486, %v5488
    %v5572 = vsel %vm5543, %v5484, %v5486
    %v5573 = vsel %vm5543, %v5482, %v5484
    %v5574 = vsel %vm5543, %v5480, %v5482
    %v5575 = vsel %vm5543, %v5542, %v5480
    %s5576 = scalar_lea.vmem %s6, 192
    %v5577 = vld [vmem:[%s5576] sm:$0xff]
    %v5578 = vld [vmem:[%s5576 + $0x8] sm:$0xff]
    %v5579 = vld [vmem:[%s5576 + $0x10] sm:$0xff]
    %v5580 = vld [vmem:[%s5576 + $0x18] sm:$0xff]
    %v5585 = vlaneseq
    %v5586 = vshrl.u32 %v5585, 7
    %v5587 = vsub.s32 0, %v5586
    %v5588 = vrot.slane %v5577, %v5587
    %v5589 = vlaneseq
    %v5590 = vshrl.u32 %v5589, 7
    %v5591 = vsub.s32 1, %v5590
    %v5592 = vrot.slane %v5577, %v5591
    %v5593 = vlaneseq
    %v5594 = vshrl.u32 %v5593, 7
    %v5595 = vsub.s32 2, %v5594
    %v5596 = vrot.slane %v5577, %v5595
    %v5597 = vlaneseq
    %v5598 = vshrl.u32 %v5597, 7
    %v5599 = vsub.s32 3, %v5598
    %v5600 = vrot.slane %v5577, %v5599
    %v5601 = vlaneseq
    %v5602 = vshrl.u32 %v5601, 7
    %v5603 = vsub.s32 4, %v5602
    %v5604 = vrot.slane %v5577, %v5603
    %v5605 = vlaneseq
    %v5606 = vshrl.u32 %v5605, 7
    %v5607 = vsub.s32 5, %v5606
    %v5608 = vrot.slane %v5577, %v5607
    %v5609 = vlaneseq
    %v5610 = vshrl.u32 %v5609, 7
    %v5611 = vsub.s32 6, %v5610
    %v5612 = vrot.slane %v5577, %v5611
    %v5613 = vlaneseq
    %v5614 = vshrl.u32 %v5613, 7
    %v5615 = vsub.s32 7, %v5614
    %v5616 = vrot.slane %v5577, %v5615
    %v5617 = vlaneseq
    %v5618 = vshrl.u32 %v5617, 7
    %v5619 = vsub.s32 0, %v5618
    %v5620 = vrot.slane %v5578, %v5619
    %v5621 = vlaneseq
    %v5622 = vshrl.u32 %v5621, 7
    %v5623 = vsub.s32 1, %v5622
    %v5624 = vrot.slane %v5578, %v5623
    %v5625 = vlaneseq
    %v5626 = vshrl.u32 %v5625, 7
    %v5627 = vsub.s32 2, %v5626
    %v5628 = vrot.slane %v5578, %v5627
    %v5629 = vlaneseq
    %v5630 = vshrl.u32 %v5629, 7
    %v5631 = vsub.s32 3, %v5630
    %v5632 = vrot.slane %v5578, %v5631
    %v5633 = vlaneseq
    %v5634 = vshrl.u32 %v5633, 7
    %v5635 = vsub.s32 4, %v5634
    %v5636 = vrot.slane %v5578, %v5635
    %v5637 = vlaneseq
    %v5638 = vshrl.u32 %v5637, 7
    %v5639 = vsub.s32 5, %v5638
    %v5640 = vrot.slane %v5578, %v5639
    %v5641 = vlaneseq
    %v5642 = vshrl.u32 %v5641, 7
    %v5643 = vsub.s32 6, %v5642
    %v5644 = vrot.slane %v5578, %v5643
    %v5645 = vlaneseq
    %v5646 = vshrl.u32 %v5645, 7
    %v5647 = vsub.s32 7, %v5646
    %v5648 = vrot.slane %v5578, %v5647
    %v5649 = vlaneseq
    %v5650 = vshrl.u32 %v5649, 7
    %v5651 = vsub.s32 0, %v5650
    %v5652 = vrot.slane %v5579, %v5651
    %v5653 = vlaneseq
    %v5654 = vshrl.u32 %v5653, 7
    %v5655 = vsub.s32 1, %v5654
    %v5656 = vrot.slane %v5579, %v5655
    %v5657 = vlaneseq
    %v5658 = vshrl.u32 %v5657, 7
    %v5659 = vsub.s32 2, %v5658
    %v5660 = vrot.slane %v5579, %v5659
    %v5661 = vlaneseq
    %v5662 = vshrl.u32 %v5661, 7
    %v5663 = vsub.s32 3, %v5662
    %v5664 = vrot.slane %v5579, %v5663
    %v5665 = vlaneseq
    %v5666 = vshrl.u32 %v5665, 7
    %v5667 = vsub.s32 4, %v5666
    %v5668 = vrot.slane %v5579, %v5667
    %v5669 = vlaneseq
    %v5670 = vshrl.u32 %v5669, 7
    %v5671 = vsub.s32 5, %v5670
    %v5672 = vrot.slane %v5579, %v5671
    %v5673 = vlaneseq
    %v5674 = vshrl.u32 %v5673, 7
    %v5675 = vsub.s32 6, %v5674
    %v5676 = vrot.slane %v5579, %v5675
    %v5677 = vlaneseq
    %v5678 = vshrl.u32 %v5677, 7
    %v5679 = vsub.s32 7, %v5678
    %v5680 = vrot.slane %v5579, %v5679
    %v5681 = vlaneseq
    %v5682 = vshrl.u32 %v5681, 7
    %v5683 = vsub.s32 0, %v5682
    %v5684 = vrot.slane %v5580, %v5683
    %v5685 = vlaneseq
    %v5686 = vshrl.u32 %v5685, 7
    %v5687 = vsub.s32 1, %v5686
    %v5688 = vrot.slane %v5580, %v5687
    %v5689 = vlaneseq
    %v5690 = vshrl.u32 %v5689, 7
    %v5691 = vsub.s32 2, %v5690
    %v5692 = vrot.slane %v5580, %v5691
    %v5693 = vlaneseq
    %v5694 = vshrl.u32 %v5693, 7
    %v5695 = vsub.s32 3, %v5694
    %v5696 = vrot.slane %v5580, %v5695
    %v5697 = vlaneseq
    %v5698 = vshrl.u32 %v5697, 7
    %v5699 = vsub.s32 4, %v5698
    %v5700 = vrot.slane %v5580, %v5699
    %v5701 = vlaneseq
    %v5702 = vshrl.u32 %v5701, 7
    %v5703 = vsub.s32 5, %v5702
    %v5704 = vrot.slane %v5580, %v5703
    %v5705 = vlaneseq
    %v5706 = vshrl.u32 %v5705, 7
    %v5707 = vsub.s32 6, %v5706
    %v5708 = vrot.slane %v5580, %v5707
    %v5709 = vlaneseq
    %v5710 = vshrl.u32 %v5709, 7
    %v5711 = vsub.s32 7, %v5710
    %v5712 = vrot.slane %v5580, %v5711
    %v5745 = vmul.f32 %v5574, %v5588
    %v5746 = vmul.f32 %v5573, %v5592
    %v5747 = vmul.f32 %v5572, %v5596
    %v5748 = vmul.f32 %v5571, %v5600
    %v5749 = vmul.f32 %v5570, %v5604
    %v5750 = vmul.f32 %v5569, %v5608
    %v5751 = vmul.f32 %v5568, %v5612
    %v5752 = vmul.f32 %v5567, %v5616
    %v5753 = vmul.f32 %v5566, %v5620
    %v5754 = vmul.f32 %v5565, %v5624
    %v5755 = vmul.f32 %v5564, %v5628
    %v5756 = vmul.f32 %v5563, %v5632
    %v5757 = vmul.f32 %v5562, %v5636
    %v5758 = vmul.f32 %v5561, %v5640
    %v5759 = vmul.f32 %v5560, %v5644
    %v5760 = vmul.f32 %v5559, %v5648
    %v5761 = vmul.f32 %v5558, %v5652
    %v5762 = vmul.f32 %v5557, %v5656
    %v5763 = vmul.f32 %v5556, %v5660
    %v5764 = vmul.f32 %v5555, %v5664
    %v5765 = vmul.f32 %v5554, %v5668
    %v5766 = vmul.f32 %v5553, %v5672
    %v5767 = vmul.f32 %v5552, %v5676
    %v5768 = vmul.f32 %v5551, %v5680
    %v5769 = vmul.f32 %v5550, %v5684
    %v5770 = vmul.f32 %v5549, %v5688
    %v5771 = vmul.f32 %v5548, %v5692
    %v5772 = vmul.f32 %v5547, %v5696
    %v5773 = vmul.f32 %v5546, %v5700
    %v5774 = vmul.f32 %v5545, %v5704
    %v5775 = vmul.f32 %v5544, %v5708
    %v5776 = vmul.f32 %v5575, %v5712
    %5777 = vrot.lane.b32.xlu0 %v3958, 96
    %v5778 = vpop.permute.xlu0 %5777
    %5779 = vrot.lane.b32.xlu0 %v3959, 96
    %v5780 = vpop.permute.xlu0 %5779
    %5781 = vrot.lane.b32.xlu0 %v3960, 96
    %v5782 = vpop.permute.xlu0 %5781
    %5783 = vrot.lane.b32.xlu0 %v3961, 96
    %v5784 = vpop.permute.xlu0 %5783
    %5785 = vrot.lane.b32.xlu0 %v3962, 96
    %v5786 = vpop.permute.xlu0 %5785
    %5787 = vrot.lane.b32.xlu0 %v3963, 96
    %v5788 = vpop.permute.xlu0 %5787
    %5789 = vrot.lane.b32.xlu0 %v3964, 96
    %v5790 = vpop.permute.xlu0 %5789
    %5791 = vrot.lane.b32.xlu0 %v3965, 96
    %v5792 = vpop.permute.xlu0 %5791
    %5793 = vrot.lane.b32.xlu0 %v3966, 96
    %v5794 = vpop.permute.xlu0 %5793
    %5795 = vrot.lane.b32.xlu0 %v3967, 96
    %v5796 = vpop.permute.xlu0 %5795
    %5797 = vrot.lane.b32.xlu0 %v3968, 96
    %v5798 = vpop.permute.xlu0 %5797
    %5799 = vrot.lane.b32.xlu0 %v3969, 96
    %v5800 = vpop.permute.xlu0 %5799
    %5801 = vrot.lane.b32.xlu0 %v3970, 96
    %v5802 = vpop.permute.xlu0 %5801
    %5803 = vrot.lane.b32.xlu0 %v3971, 96
    %v5804 = vpop.permute.xlu0 %5803
    %5805 = vrot.lane.b32.xlu0 %v3972, 96
    %v5806 = vpop.permute.xlu0 %5805
    %5807 = vrot.lane.b32.xlu0 %v3973, 96
    %v5808 = vpop.permute.xlu0 %5807
    %5809 = vrot.lane.b32.xlu0 %v3974, 96
    %v5810 = vpop.permute.xlu0 %5809
    %5811 = vrot.lane.b32.xlu0 %v3975, 96
    %v5812 = vpop.permute.xlu0 %5811
    %5813 = vrot.lane.b32.xlu0 %v3976, 96
    %v5814 = vpop.permute.xlu0 %5813
    %5815 = vrot.lane.b32.xlu0 %v3977, 96
    %v5816 = vpop.permute.xlu0 %5815
    %5817 = vrot.lane.b32.xlu0 %v3978, 96
    %v5818 = vpop.permute.xlu0 %5817
    %5819 = vrot.lane.b32.xlu0 %v3979, 96
    %v5820 = vpop.permute.xlu0 %5819
    %5821 = vrot.lane.b32.xlu0 %v3980, 96
    %v5822 = vpop.permute.xlu0 %5821
    %5823 = vrot.lane.b32.xlu0 %v3981, 96
    %v5824 = vpop.permute.xlu0 %5823
    %5825 = vrot.lane.b32.xlu0 %v3982, 96
    %v5826 = vpop.permute.xlu0 %5825
    %5827 = vrot.lane.b32.xlu0 %v3983, 96
    %v5828 = vpop.permute.xlu0 %5827
    %5829 = vrot.lane.b32.xlu0 %v3984, 96
    %v5830 = vpop.permute.xlu0 %5829
    %5831 = vrot.lane.b32.xlu0 %v3985, 96
    %v5832 = vpop.permute.xlu0 %5831
    %5833 = vrot.lane.b32.xlu0 %v3986, 96
    %v5834 = vpop.permute.xlu0 %5833
    %5835 = vrot.lane.b32.xlu0 %v3987, 96
    %v5836 = vpop.permute.xlu0 %5835
    %5837 = vrot.lane.b32.xlu0 %v3988, 96
    %v5838 = vpop.permute.xlu0 %5837
    %5839 = vrot.lane.b32.xlu0 %v3989, 96
    %v5840 = vpop.permute.xlu0 %5839
    %vm5841 = vcmp.lt.s32.totalorder %v235, 96
    %v5842 = vsel %vm5841, %v5838, %v5840
    %v5843 = vsel %vm5841, %v5836, %v5838
    %v5844 = vsel %vm5841, %v5834, %v5836
    %v5845 = vsel %vm5841, %v5832, %v5834
    %v5846 = vsel %vm5841, %v5830, %v5832
    %v5847 = vsel %vm5841, %v5828, %v5830
    %v5848 = vsel %vm5841, %v5826, %v5828
    %v5849 = vsel %vm5841, %v5824, %v5826
    %v5850 = vsel %vm5841, %v5822, %v5824
    %v5851 = vsel %vm5841, %v5820, %v5822
    %v5852 = vsel %vm5841, %v5818, %v5820
    %v5853 = vsel %vm5841, %v5816, %v5818
    %v5854 = vsel %vm5841, %v5814, %v5816
    %v5855 = vsel %vm5841, %v5812, %v5814
    %v5856 = vsel %vm5841, %v5810, %v5812
    %v5857 = vsel %vm5841, %v5808, %v5810
    %v5858 = vsel %vm5841, %v5806, %v5808
    %v5859 = vsel %vm5841, %v5804, %v5806
    %v5860 = vsel %vm5841, %v5802, %v5804
    %v5861 = vsel %vm5841, %v5800, %v5802
    %v5862 = vsel %vm5841, %v5798, %v5800
    %v5863 = vsel %vm5841, %v5796, %v5798
    %v5864 = vsel %vm5841, %v5794, %v5796
    %v5865 = vsel %vm5841, %v5792, %v5794
    %v5866 = vsel %vm5841, %v5790, %v5792
    %v5867 = vsel %vm5841, %v5788, %v5790
    %v5868 = vsel %vm5841, %v5786, %v5788
    %v5869 = vsel %vm5841, %v5784, %v5786
    %v5870 = vsel %vm5841, %v5782, %v5784
    %v5871 = vsel %vm5841, %v5780, %v5782
    %v5872 = vsel %vm5841, %v5778, %v5780
    %v5873 = vsel %vm5841, %v5840, %v5778
    %s5874 = scalar_lea.vmem %s6, 224
    %v5875 = vld [vmem:[%s5874] sm:$0xff]
    %v5876 = vld [vmem:[%s5874 + $0x8] sm:$0xff]
    %v5877 = vld [vmem:[%s5874 + $0x10] sm:$0xff]
    %v5878 = vld [vmem:[%s5874 + $0x18] sm:$0xff]
    %v5883 = vlaneseq
    %v5884 = vshrl.u32 %v5883, 7
    %v5885 = vsub.s32 0, %v5884
    %v5886 = vrot.slane %v5875, %v5885
    %v5887 = vlaneseq
    %v5888 = vshrl.u32 %v5887, 7
    %v5889 = vsub.s32 1, %v5888
    %v5890 = vrot.slane %v5875, %v5889
    %v5891 = vlaneseq
    %v5892 = vshrl.u32 %v5891, 7
    %v5893 = vsub.s32 2, %v5892
    %v5894 = vrot.slane %v5875, %v5893
    %v5895 = vlaneseq
    %v5896 = vshrl.u32 %v5895, 7
    %v5897 = vsub.s32 3, %v5896
    %v5898 = vrot.slane %v5875, %v5897
    %v5899 = vlaneseq
    %v5900 = vshrl.u32 %v5899, 7
    %v5901 = vsub.s32 4, %v5900
    %v5902 = vrot.slane %v5875, %v5901
    %v5903 = vlaneseq
    %v5904 = vshrl.u32 %v5903, 7
    %v5905 = vsub.s32 5, %v5904
    %v5906 = vrot.slane %v5875, %v5905
    %v5907 = vlaneseq
    %v5908 = vshrl.u32 %v5907, 7
    %v5909 = vsub.s32 6, %v5908
    %v5910 = vrot.slane %v5875, %v5909
    %v5911 = vlaneseq
    %v5912 = vshrl.u32 %v5911, 7
    %v5913 = vsub.s32 7, %v5912
    %v5914 = vrot.slane %v5875, %v5913
    %v5915 = vlaneseq
    %v5916 = vshrl.u32 %v5915, 7
    %v5917 = vsub.s32 0, %v5916
    %v5918 = vrot.slane %v5876, %v5917
    %v5919 = vlaneseq
    %v5920 = vshrl.u32 %v5919, 7
    %v5921 = vsub.s32 1, %v5920
    %v5922 = vrot.slane %v5876, %v5921
    %v5923 = vlaneseq
    %v5924 = vshrl.u32 %v5923, 7
    %v5925 = vsub.s32 2, %v5924
    %v5926 = vrot.slane %v5876, %v5925
    %v5927 = vlaneseq
    %v5928 = vshrl.u32 %v5927, 7
    %v5929 = vsub.s32 3, %v5928
    %v5930 = vrot.slane %v5876, %v5929
    %v5931 = vlaneseq
    %v5932 = vshrl.u32 %v5931, 7
    %v5933 = vsub.s32 4, %v5932
    %v5934 = vrot.slane %v5876, %v5933
    %v5935 = vlaneseq
    %v5936 = vshrl.u32 %v5935, 7
    %v5937 = vsub.s32 5, %v5936
    %v5938 = vrot.slane %v5876, %v5937
    %v5939 = vlaneseq
    %v5940 = vshrl.u32 %v5939, 7
    %v5941 = vsub.s32 6, %v5940
    %v5942 = vrot.slane %v5876, %v5941
    %v5943 = vlaneseq
    %v5944 = vshrl.u32 %v5943, 7
    %v5945 = vsub.s32 7, %v5944
    %v5946 = vrot.slane %v5876, %v5945
    %v5947 = vlaneseq
    %v5948 = vshrl.u32 %v5947, 7
    %v5949 = vsub.s32 0, %v5948
    %v5950 = vrot.slane %v5877, %v5949
    %v5951 = vlaneseq
    %v5952 = vshrl.u32 %v5951, 7
    %v5953 = vsub.s32 1, %v5952
    %v5954 = vrot.slane %v5877, %v5953
    %v5955 = vlaneseq
    %v5956 = vshrl.u32 %v5955, 7
    %v5957 = vsub.s32 2, %v5956
    %v5958 = vrot.slane %v5877, %v5957
    %v5959 = vlaneseq
    %v5960 = vshrl.u32 %v5959, 7
    %v5961 = vsub.s32 3, %v5960
    %v5962 = vrot.slane %v5877, %v5961
    %v5963 = vlaneseq
    %v5964 = vshrl.u32 %v5963, 7
    %v5965 = vsub.s32 4, %v5964
    %v5966 = vrot.slane %v5877, %v5965
    %v5967 = vlaneseq
    %v5968 = vshrl.u32 %v5967, 7
    %v5969 = vsub.s32 5, %v5968
    %v5970 = vrot.slane %v5877, %v5969
    %v5971 = vlaneseq
    %v5972 = vshrl.u32 %v5971, 7
    %v5973 = vsub.s32 6, %v5972
    %v5974 = vrot.slane %v5877, %v5973
    %v5975 = vlaneseq
    %v5976 = vshrl.u32 %v5975, 7
    %v5977 = vsub.s32 7, %v5976
    %v5978 = vrot.slane %v5877, %v5977
    %v5979 = vlaneseq
    %v5980 = vshrl.u32 %v5979, 7
    %v5981 = vsub.s32 0, %v5980
    %v5982 = vrot.slane %v5878, %v5981
    %v5983 = vlaneseq
    %v5984 = vshrl.u32 %v5983, 7
    %v5985 = vsub.s32 1, %v5984
    %v5986 = vrot.slane %v5878, %v5985
    %v5987 = vlaneseq
    %v5988 = vshrl.u32 %v5987, 7
    %v5989 = vsub.s32 2, %v5988
    %v5990 = vrot.slane %v5878, %v5989
    %v5991 = vlaneseq
    %v5992 = vshrl.u32 %v5991, 7
    %v5993 = vsub.s32 3, %v5992
    %v5994 = vrot.slane %v5878, %v5993
    %v5995 = vlaneseq
    %v5996 = vshrl.u32 %v5995, 7
    %v5997 = vsub.s32 4, %v5996
    %v5998 = vrot.slane %v5878, %v5997
    %v5999 = vlaneseq
    %v6000 = vshrl.u32 %v5999, 7
    %v6001 = vsub.s32 5, %v6000
    %v6002 = vrot.slane %v5878, %v6001
    %v6003 = vlaneseq
    %v6004 = vshrl.u32 %v6003, 7
    %v6005 = vsub.s32 6, %v6004
    %v6006 = vrot.slane %v5878, %v6005
    %v6007 = vlaneseq
    %v6008 = vshrl.u32 %v6007, 7
    %v6009 = vsub.s32 7, %v6008
    %v6010 = vrot.slane %v5878, %v6009
    %v6043 = vmul.f32 %v5872, %v5886
    %v6044 = vmul.f32 %v5871, %v5890
    %v6045 = vmul.f32 %v5870, %v5894
    %v6046 = vmul.f32 %v5869, %v5898
    %v6047 = vmul.f32 %v5868, %v5902
    %v6048 = vmul.f32 %v5867, %v5906
    %v6049 = vmul.f32 %v5866, %v5910
    %v6050 = vmul.f32 %v5865, %v5914
    %v6051 = vmul.f32 %v5864, %v5918
    %v6052 = vmul.f32 %v5863, %v5922
    %v6053 = vmul.f32 %v5862, %v5926
    %v6054 = vmul.f32 %v5861, %v5930
    %v6055 = vmul.f32 %v5860, %v5934
    %v6056 = vmul.f32 %v5859, %v5938
    %v6057 = vmul.f32 %v5858, %v5942
    %v6058 = vmul.f32 %v5857, %v5946
    %v6059 = vmul.f32 %v5856, %v5950
    %v6060 = vmul.f32 %v5855, %v5954
    %v6061 = vmul.f32 %v5854, %v5958
    %v6062 = vmul.f32 %v5853, %v5962
    %v6063 = vmul.f32 %v5852, %v5966
    %v6064 = vmul.f32 %v5851, %v5970
    %v6065 = vmul.f32 %v5850, %v5974
    %v6066 = vmul.f32 %v5849, %v5978
    %v6067 = vmul.f32 %v5848, %v5982
    %v6068 = vmul.f32 %v5847, %v5986
    %v6069 = vmul.f32 %v5846, %v5990
    %v6070 = vmul.f32 %v5845, %v5994
    %v6071 = vmul.f32 %v5844, %v5998
    %v6072 = vmul.f32 %v5843, %v6002
    %v6073 = vmul.f32 %v5842, %v6006
    %v6074 = vmul.f32 %v5873, %v6010
    %6075 = vrot.lane.b32.xlu0 %v3958, 94
    %v6076 = vpop.permute.xlu0 %6075
    %6077 = vrot.lane.b32.xlu0 %v3959, 94
    %v6078 = vpop.permute.xlu0 %6077
    %6079 = vrot.lane.b32.xlu0 %v3960, 94
    %v6080 = vpop.permute.xlu0 %6079
    %6081 = vrot.lane.b32.xlu0 %v3961, 94
    %v6082 = vpop.permute.xlu0 %6081
    %6083 = vrot.lane.b32.xlu0 %v3962, 94
    %v6084 = vpop.permute.xlu0 %6083
    %6085 = vrot.lane.b32.xlu0 %v3963, 94
    %v6086 = vpop.permute.xlu0 %6085
    %6087 = vrot.lane.b32.xlu0 %v3964, 94
    %v6088 = vpop.permute.xlu0 %6087
    %6089 = vrot.lane.b32.xlu0 %v3965, 94
    %v6090 = vpop.permute.xlu0 %6089
    %6091 = vrot.lane.b32.xlu0 %v3966, 94
    %v6092 = vpop.permute.xlu0 %6091
    %6093 = vrot.lane.b32.xlu0 %v3967, 94
    %v6094 = vpop.permute.xlu0 %6093
    %6095 = vrot.lane.b32.xlu0 %v3968, 94
    %v6096 = vpop.permute.xlu0 %6095
    %6097 = vrot.lane.b32.xlu0 %v3969, 94
    %v6098 = vpop.permute.xlu0 %6097
    %6099 = vrot.lane.b32.xlu0 %v3970, 94
    %v6100 = vpop.permute.xlu0 %6099
    %6101 = vrot.lane.b32.xlu0 %v3971, 94
    %v6102 = vpop.permute.xlu0 %6101
    %6103 = vrot.lane.b32.xlu0 %v3972, 94
    %v6104 = vpop.permute.xlu0 %6103
    %6105 = vrot.lane.b32.xlu0 %v3973, 94
    %v6106 = vpop.permute.xlu0 %6105
    %6107 = vrot.lane.b32.xlu0 %v3974, 94
    %v6108 = vpop.permute.xlu0 %6107
    %6109 = vrot.lane.b32.xlu0 %v3975, 94
    %v6110 = vpop.permute.xlu0 %6109
    %6111 = vrot.lane.b32.xlu0 %v3976, 94
    %v6112 = vpop.permute.xlu0 %6111
    %6113 = vrot.lane.b32.xlu0 %v3977, 94
    %v6114 = vpop.permute.xlu0 %6113
    %6115 = vrot.lane.b32.xlu0 %v3978, 94
    %v6116 = vpop.permute.xlu0 %6115
    %6117 = vrot.lane.b32.xlu0 %v3979, 94
    %v6118 = vpop.permute.xlu0 %6117
    %6119 = vrot.lane.b32.xlu0 %v3980, 94
    %v6120 = vpop.permute.xlu0 %6119
    %6121 = vrot.lane.b32.xlu0 %v3981, 94
    %v6122 = vpop.permute.xlu0 %6121
    %6123 = vrot.lane.b32.xlu0 %v3982, 94
    %v6124 = vpop.permute.xlu0 %6123
    %6125 = vrot.lane.b32.xlu0 %v3983, 94
    %v6126 = vpop.permute.xlu0 %6125
    %6127 = vrot.lane.b32.xlu0 %v3984, 94
    %v6128 = vpop.permute.xlu0 %6127
    %6129 = vrot.lane.b32.xlu0 %v3985, 94
    %v6130 = vpop.permute.xlu0 %6129
    %6131 = vrot.lane.b32.xlu0 %v3986, 94
    %v6132 = vpop.permute.xlu0 %6131
    %6133 = vrot.lane.b32.xlu0 %v3987, 94
    %v6134 = vpop.permute.xlu0 %6133
    %6135 = vrot.lane.b32.xlu0 %v3988, 94
    %v6136 = vpop.permute.xlu0 %6135
    %6137 = vrot.lane.b32.xlu0 %v3989, 94
    %v6138 = vpop.permute.xlu0 %6137
    %vm6139 = vcmp.lt.s32.totalorder %v235, 94
    %v6140 = vsel %vm6139, %v6136, %v6138
    %v6141 = vsel %vm6139, %v6134, %v6136
    %v6142 = vsel %vm6139, %v6132, %v6134
    %v6143 = vsel %vm6139, %v6130, %v6132
    %v6144 = vsel %vm6139, %v6128, %v6130
    %v6145 = vsel %vm6139, %v6126, %v6128
    %v6146 = vsel %vm6139, %v6124, %v6126
    %v6147 = vsel %vm6139, %v6122, %v6124
    %v6148 = vsel %vm6139, %v6120, %v6122
    %v6149 = vsel %vm6139, %v6118, %v6120
    %v6150 = vsel %vm6139, %v6116, %v6118
    %v6151 = vsel %vm6139, %v6114, %v6116
    %v6152 = vsel %vm6139, %v6112, %v6114
    %v6153 = vsel %vm6139, %v6110, %v6112
    %v6154 = vsel %vm6139, %v6108, %v6110
    %v6155 = vsel %vm6139, %v6106, %v6108
    %v6156 = vsel %vm6139, %v6104, %v6106
    %v6157 = vsel %vm6139, %v6102, %v6104
    %v6158 = vsel %vm6139, %v6100, %v6102
    %v6159 = vsel %vm6139, %v6098, %v6100
    %v6160 = vsel %vm6139, %v6096, %v6098
    %v6161 = vsel %vm6139, %v6094, %v6096
    %v6162 = vsel %vm6139, %v6092, %v6094
    %v6163 = vsel %vm6139, %v6090, %v6092
    %v6164 = vsel %vm6139, %v6088, %v6090
    %v6165 = vsel %vm6139, %v6086, %v6088
    %v6166 = vsel %vm6139, %v6084, %v6086
    %v6167 = vsel %vm6139, %v6082, %v6084
    %v6168 = vsel %vm6139, %v6080, %v6082
    %v6169 = vsel %vm6139, %v6078, %v6080
    %v6170 = vsel %vm6139, %v6076, %v6078
    %v6171 = vsel %vm6139, %v6138, %v6076
    %s6172 = scalar_lea.vmem %s6, 256
    %v6173 = vld [vmem:[%s6172] sm:$0xff]
    %v6174 = vld [vmem:[%s6172 + $0x8] sm:$0xff]
    %v6175 = vld [vmem:[%s6172 + $0x10] sm:$0xff]
    %v6176 = vld [vmem:[%s6172 + $0x18] sm:$0xff]
    %v6181 = vlaneseq
    %v6182 = vshrl.u32 %v6181, 7
    %v6183 = vsub.s32 0, %v6182
    %v6184 = vrot.slane %v6173, %v6183
    %v6185 = vlaneseq
    %v6186 = vshrl.u32 %v6185, 7
    %v6187 = vsub.s32 1, %v6186
    %v6188 = vrot.slane %v6173, %v6187
    %v6189 = vlaneseq
    %v6190 = vshrl.u32 %v6189, 7
    %v6191 = vsub.s32 2, %v6190
    %v6192 = vrot.slane %v6173, %v6191
    %v6193 = vlaneseq
    %v6194 = vshrl.u32 %v6193, 7
    %v6195 = vsub.s32 3, %v6194
    %v6196 = vrot.slane %v6173, %v6195
    %v6197 = vlaneseq
    %v6198 = vshrl.u32 %v6197, 7
    %v6199 = vsub.s32 4, %v6198
    %v6200 = vrot.slane %v6173, %v6199
    %v6201 = vlaneseq
    %v6202 = vshrl.u32 %v6201, 7
    %v6203 = vsub.s32 5, %v6202
    %v6204 = vrot.slane %v6173, %v6203
    %v6205 = vlaneseq
    %v6206 = vshrl.u32 %v6205, 7
    %v6207 = vsub.s32 6, %v6206
    %v6208 = vrot.slane %v6173, %v6207
    %v6209 = vlaneseq
    %v6210 = vshrl.u32 %v6209, 7
    %v6211 = vsub.s32 7, %v6210
    %v6212 = vrot.slane %v6173, %v6211
    %v6213 = vlaneseq
    %v6214 = vshrl.u32 %v6213, 7
    %v6215 = vsub.s32 0, %v6214
    %v6216 = vrot.slane %v6174, %v6215
    %v6217 = vlaneseq
    %v6218 = vshrl.u32 %v6217, 7
    %v6219 = vsub.s32 1, %v6218
    %v6220 = vrot.slane %v6174, %v6219
    %v6221 = vlaneseq
    %v6222 = vshrl.u32 %v6221, 7
    %v6223 = vsub.s32 2, %v6222
    %v6224 = vrot.slane %v6174, %v6223
    %v6225 = vlaneseq
    %v6226 = vshrl.u32 %v6225, 7
    %v6227 = vsub.s32 3, %v6226
    %v6228 = vrot.slane %v6174, %v6227
    %v6229 = vlaneseq
    %v6230 = vshrl.u32 %v6229, 7
    %v6231 = vsub.s32 4, %v6230
    %v6232 = vrot.slane %v6174, %v6231
    %v6233 = vlaneseq
    %v6234 = vshrl.u32 %v6233, 7
    %v6235 = vsub.s32 5, %v6234
    %v6236 = vrot.slane %v6174, %v6235
    %v6237 = vlaneseq
    %v6238 = vshrl.u32 %v6237, 7
    %v6239 = vsub.s32 6, %v6238
    %v6240 = vrot.slane %v6174, %v6239
    %v6241 = vlaneseq
    %v6242 = vshrl.u32 %v6241, 7
    %v6243 = vsub.s32 7, %v6242
    %v6244 = vrot.slane %v6174, %v6243
    %v6245 = vlaneseq
    %v6246 = vshrl.u32 %v6245, 7
    %v6247 = vsub.s32 0, %v6246
    %v6248 = vrot.slane %v6175, %v6247
    %v6249 = vlaneseq
    %v6250 = vshrl.u32 %v6249, 7
    %v6251 = vsub.s32 1, %v6250
    %v6252 = vrot.slane %v6175, %v6251
    %v6253 = vlaneseq
    %v6254 = vshrl.u32 %v6253, 7
    %v6255 = vsub.s32 2, %v6254
    %v6256 = vrot.slane %v6175, %v6255
    %v6257 = vlaneseq
    %v6258 = vshrl.u32 %v6257, 7
    %v6259 = vsub.s32 3, %v6258
    %v6260 = vrot.slane %v6175, %v6259
    %v6261 = vlaneseq
    %v6262 = vshrl.u32 %v6261, 7
    %v6263 = vsub.s32 4, %v6262
    %v6264 = vrot.slane %v6175, %v6263
    %v6265 = vlaneseq
    %v6266 = vshrl.u32 %v6265, 7
    %v6267 = vsub.s32 5, %v6266
    %v6268 = vrot.slane %v6175, %v6267
    %v6269 = vlaneseq
    %v6270 = vshrl.u32 %v6269, 7
    %v6271 = vsub.s32 6, %v6270
    %v6272 = vrot.slane %v6175, %v6271
    %v6273 = vlaneseq
    %v6274 = vshrl.u32 %v6273, 7
    %v6275 = vsub.s32 7, %v6274
    %v6276 = vrot.slane %v6175, %v6275
    %v6277 = vlaneseq
    %v6278 = vshrl.u32 %v6277, 7
    %v6279 = vsub.s32 0, %v6278
    %v6280 = vrot.slane %v6176, %v6279
    %v6281 = vlaneseq
    %v6282 = vshrl.u32 %v6281, 7
    %v6283 = vsub.s32 1, %v6282
    %v6284 = vrot.slane %v6176, %v6283
    %v6285 = vlaneseq
    %v6286 = vshrl.u32 %v6285, 7
    %v6287 = vsub.s32 2, %v6286
    %v6288 = vrot.slane %v6176, %v6287
    %v6289 = vlaneseq
    %v6290 = vshrl.u32 %v6289, 7
    %v6291 = vsub.s32 3, %v6290
    %v6292 = vrot.slane %v6176, %v6291
    %v6293 = vlaneseq
    %v6294 = vshrl.u32 %v6293, 7
    %v6295 = vsub.s32 4, %v6294
    %v6296 = vrot.slane %v6176, %v6295
    %v6297 = vlaneseq
    %v6298 = vshrl.u32 %v6297, 7
    %v6299 = vsub.s32 5, %v6298
    %v6300 = vrot.slane %v6176, %v6299
    %v6301 = vlaneseq
    %v6302 = vshrl.u32 %v6301, 7
    %v6303 = vsub.s32 6, %v6302
    %v6304 = vrot.slane %v6176, %v6303
    %v6305 = vlaneseq
    %v6306 = vshrl.u32 %v6305, 7
    %v6307 = vsub.s32 7, %v6306
    %v6308 = vrot.slane %v6176, %v6307
    %v6341 = vmul.f32 %v6170, %v6184
    %v6342 = vmul.f32 %v6169, %v6188
    %v6343 = vmul.f32 %v6168, %v6192
    %v6344 = vmul.f32 %v6167, %v6196
    %v6345 = vmul.f32 %v6166, %v6200
    %v6346 = vmul.f32 %v6165, %v6204
    %v6347 = vmul.f32 %v6164, %v6208
    %v6348 = vmul.f32 %v6163, %v6212
    %v6349 = vmul.f32 %v6162, %v6216
    %v6350 = vmul.f32 %v6161, %v6220
    %v6351 = vmul.f32 %v6160, %v6224
    %v6352 = vmul.f32 %v6159, %v6228
    %v6353 = vmul.f32 %v6158, %v6232
    %v6354 = vmul.f32 %v6157, %v6236
    %v6355 = vmul.f32 %v6156, %v6240
    %v6356 = vmul.f32 %v6155, %v6244
    %v6357 = vmul.f32 %v6154, %v6248
    %v6358 = vmul.f32 %v6153, %v6252
    %v6359 = vmul.f32 %v6152, %v6256
    %v6360 = vmul.f32 %v6151, %v6260
    %v6361 = vmul.f32 %v6150, %v6264
    %v6362 = vmul.f32 %v6149, %v6268
    %v6363 = vmul.f32 %v6148, %v6272
    %v6364 = vmul.f32 %v6147, %v6276
    %v6365 = vmul.f32 %v6146, %v6280
    %v6366 = vmul.f32 %v6145, %v6284
    %v6367 = vmul.f32 %v6144, %v6288
    %v6368 = vmul.f32 %v6143, %v6292
    %v6369 = vmul.f32 %v6142, %v6296
    %v6370 = vmul.f32 %v6141, %v6300
    %v6371 = vmul.f32 %v6140, %v6304
    %v6372 = vmul.f32 %v6171, %v6308
    %v6373 = vld [vmem:[#allocation4] sm:$0xff]
    %v6374 = vld [vmem:[#allocation4 + $0x8] sm:$0xff]
    %v6375 = vld [vmem:[%s5] sm:$0xff]
    %v6376 = vld [vmem:[%s5 + $0x8] sm:$0xff]
    %6378 = vset.pattern.permute.xlu0 0
    %6379 = vperm.xlu0 %6378, %v6375
    %v6380 = vpop.permute.xlu0 %6379
    %6383 = vset.pattern.permute.xlu0 0
    %6384 = vperm.xlu0 %6383, %v6376
    %v6385 = vpop.permute.xlu0 %6384
    %v6388 = vsel %vm2562, %v6373, 0
    %v6391 = vsel %vm2562, %v6374, 0
    %6393 = vmatprep.subr.mxu0 %v4256
    %6394 = vmatpush1.msra.mxu0 %v4255
    %6395 = vmatprep.subr.mxu0 %v4554
    %6396 = vmatpush1.msra.mxu0 %v4553
    %6397 = vmatprep.subr.mxu0 %v4852
    %6398 = vmatpush1.msra.mxu0 %v4851
    %6399 = vmatprep.subr.mxu0 %v5150
    %6400 = vmatpush1.msra.mxu0 %v5149
    %6401 = vmatprep.subr.mxu0 %v3959
    %6402 = vmatpush1.msra.mxu0 %v3958
    %6403 = vmatprep.subr.mxu0 %v5448
    %6404 = vmatpush1.msra.mxu0 %v5447
    %6405 = vmatprep.subr.mxu0 %v5746
    %6406 = vmatpush1.msra.mxu0 %v5745
    %6407 = vmatprep.subr.mxu0 %v6044
    %6408 = vmatpush1.msra.mxu0 %v6043
    %6409 = vmatprep.subr.mxu0 %v6342
    %6410 = vmatpush1.msra.mxu0 %v6341
    %6411 = vmatprep.subr.mxu0 0.0
    %6412 = vmatpush1.msra.mxu0 0.0
    %6413 = vmatprep.subr.mxu0 0.0
    %6414 = vmatpush1.msra.mxu0 0.0
    %6415 = vmatprep.subr.mxu0 0.0
    %6416 = vmatpush1.msra.mxu0 0.0
    %6417 = vmatprep.subr.mxu0 0.0
    %6418 = vmatpush1.msra.mxu0 0.0
    %6419 = vmatprep.subr.mxu0 0.0
    %6420 = vmatpush1.msra.mxu0 0.0
    %6421 = vmatprep.subr.mxu0 0.0
    %6422 = vmatpush1.msra.mxu0 0.0
    %6423 = vmatprep.subr.mxu0 0.0
    %6424 = vmatpush1.msra.mxu0 0.0
    %6425 = vmatprep.subr.mxu0 0.0
    %6426 = vmatpush1.msra.mxu0 0.0
    %6427 = vmatprep.subr.mxu0 0.0
    %6428 = vmatpush1.msra.mxu0 0.0
    %6429 = vmatprep.subr.mxu0 0.0
    %6430 = vmatpush1.msra.mxu0 0.0
    %6431 = vmatprep.subr.mxu0 0.0
    %6432 = vmatpush1.msra.mxu0 0.0
    %6433 = vmatprep.subr.mxu0 0.0
    %6434 = vmatpush1.msra.mxu0 0.0
    %6435 = vmatprep.subr.mxu0 0.0
    %6436 = vmatpush1.msra.mxu0 0.0
    %6437 = vmatprep.subr.mxu0 0.0
    %6438 = vmatpush1.msra.mxu0 0.0
    %6439 = vmatprep.subr.mxu0 0.0
    %6440 = vmatpush1.msra.mxu0 0.0
    %6441 = vmatprep.subr.mxu0 0.0
    %6442 = vmatpush1.msra.mxu0 0.0
    %6443 = vmatprep.subr.mxu0 0.0
    %6444 = vmatpush1.msra.mxu0 0.0
    %6445 = vmatprep.subr.mxu0 0.0
    %6446 = vmatpush1.msra.mxu0 0.0
    %6447 = vmatprep.subr.mxu0 0.0
    %6448 = vmatpush1.msra.mxu0 0.0
    %6449 = vmatprep.subr.mxu0 0.0
    %6450 = vmatpush1.msra.mxu0 0.0
    %6451 = vmatprep.subr.mxu0 0.0
    %6452 = vmatpush1.msra.mxu0 0.0
    %6453 = vmatprep.subr.mxu0 0.0
    %6454 = vmatpush1.msra.mxu0 0.0
    %6455 = vmatprep.subr.mxu0 0.0
    %6456 = vmatpush1.msra.mxu0 0.0
    %6457 = vmatprep.mubr.f32.mxu0 0.0
    %6458 = vmatmul.mubr.f32.gmra.mrb[0].mxu0 %v6388
    %v6459 = vpop.f32.mrb[0].mxu0
    %v6460 = vadd.f32 %v6380, %v6459
    %v6461 = vpop.f32.mrb[0].mxu0
    %v6462 = vadd.f32 %v6380, %v6461
    %6463 = vmatprep.mubr.f32.mxu0 0.0
    %6464 = vmatmul.mubr.f32.gmra.mrb[0].mxu0 %v6391
    %v6465 = vpop.f32.mrb[0].mxu0
    %v6466 = vadd.f32 %v6385, %v6465
    %v6467 = vpop.f32.mrb[0].mxu0
    %v6468 = vadd.f32 %v6385, %v6467
    %6469 = vdwg.mxu0
    %6470 = vmatprep.subr.mxu0 %v4258
    %6471 = vmatpush1.msra.mxu0 %v4257
    %6472 = vmatprep.subr.mxu0 %v4556
    %6473 = vmatpush1.msra.mxu0 %v4555
    %6474 = vmatprep.subr.mxu0 %v4854
    %6475 = vmatpush1.msra.mxu0 %v4853
    %6476 = vmatprep.subr.mxu0 %v5152
    %6477 = vmatpush1.msra.mxu0 %v5151
    %6478 = vmatprep.subr.mxu0 %v3961
    %6479 = vmatpush1.msra.mxu0 %v3960
    %6480 = vmatprep.subr.mxu0 %v5450
    %6481 = vmatpush1.msra.mxu0 %v5449
    %6482 = vmatprep.subr.mxu0 %v5748
    %6483 = vmatpush1.msra.mxu0 %v5747
    %6484 = vmatprep.subr.mxu0 %v6046
    %6485 = vmatpush1.msra.mxu0 %v6045
    %6486 = vmatprep.subr.mxu0 %v6344
    %6487 = vmatpush1.msra.mxu0 %v6343
    %6488 = vmatprep.subr.mxu0 0.0
    %6489 = vmatpush1.msra.mxu0 0.0
    %6490 = vmatprep.subr.mxu0 0.0
    %6491 = vmatpush1.msra.mxu0 0.0
    %6492 = vmatprep.subr.mxu0 0.0
    %6493 = vmatpush1.msra.mxu0 0.0
    %6494 = vmatprep.subr.mxu0 0.0
    %6495 = vmatpush1.msra.mxu0 0.0
    %6496 = vmatprep.subr.mxu0 0.0
    %6497 = vmatpush1.msra.mxu0 0.0
    %6498 = vmatprep.subr.mxu0 0.0
    %6499 = vmatpush1.msra.mxu0 0.0
    %6500 = vmatprep.subr.mxu0 0.0
    %6501 = vmatpush1.msra.mxu0 0.0
    %6502 = vmatprep.subr.mxu0 0.0
    %6503 = vmatpush1.msra.mxu0 0.0
    %6504 = vmatprep.subr.mxu0 0.0
    %6505 = vmatpush1.msra.mxu0 0.0
    %6506 = vmatprep.subr.mxu0 0.0
    %6507 = vmatpush1.msra.mxu0 0.0
    %6508 = vmatprep.subr.mxu0 0.0
    %6509 = vmatpush1.msra.mxu0 0.0
    %6510 = vmatprep.subr.mxu0 0.0
    %6511 = vmatpush1.msra.mxu0 0.0
    %6512 = vmatprep.subr.mxu0 0.0
    %6513 = vmatpush1.msra.mxu0 0.0
    %6514 = vmatprep.subr.mxu0 0.0
    %6515 = vmatpush1.msra.mxu0 0.0
    %6516 = vmatprep.subr.mxu0 0.0
    %6517 = vmatpush1.msra.mxu0 0.0
    %6518 = vmatprep.subr.mxu0 0.0
    %6519 = vmatpush1.msra.mxu0 0.0
    %6520 = vmatprep.subr.mxu0 0.0
    %6521 = vmatpush1.msra.mxu0 0.0
    %6522 = vmatprep.subr.mxu0 0.0
    %6523 = vmatpush1.msra.mxu0 0.0
    %6524 = vmatprep.subr.mxu0 0.0
    %6525 = vmatpush1.msra.mxu0 0.0
    %6526 = vmatprep.subr.mxu0 0.0
    %6527 = vmatpush1.msra.mxu0 0.0
    %6528 = vmatprep.subr.mxu0 0.0
    %6529 = vmatpush1.msra.mxu0 0.0
    %6530 = vmatprep.subr.mxu0 0.0
    %6531 = vmatpush1.msra.mxu0 0.0
    %6532 = vmatprep.subr.mxu0 0.0
    %6533 = vmatpush1.msra.mxu0 0.0
    %6534 = vmatprep.mubr.f32.mxu0 0.0
    %6535 = vmatmul.mubr.f32.gmra.mrb[0].mxu0 %v6388
    %v6536 = vpop.f32.mrb[0].mxu0
    %v6537 = vadd.f32 %v6380, %v6536
    %v6538 = vpop.f32.mrb[0].mxu0
    %v6539 = vadd.f32 %v6380, %v6538
    %6540 = vmatprep.mubr.f32.mxu0 0.0
    %6541 = vmatmul.mubr.f32.gmra.mrb[0].mxu0 %v6391
    %v6542 = vpop.f32.mrb[0].mxu0
    %v6543 = vadd.f32 %v6385, %v6542
    %v6544 = vpop.f32.mrb[0].mxu0
    %v6545 = vadd.f32 %v6385, %v6544
    %6546 = vdwg.mxu0
    %6547 = vmatprep.subr.mxu0 %v4260
    %6548 = vmatpush1.msra.mxu0 %v4259
    %6549 = vmatprep.subr.mxu0 %v4558
    %6550 = vmatpush1.msra.mxu0 %v4557
    %6551 = vmatprep.subr.mxu0 %v4856
    %6552 = vmatpush1.msra.mxu0 %v4855
    %6553 = vmatprep.subr.mxu0 %v5154
    %6554 = vmatpush1.msra.mxu0 %v5153
    %6555 = vmatprep.subr.mxu0 %v3963
    %6556 = vmatpush1.msra.mxu0 %v3962
    %6557 = vmatprep.subr.mxu0 %v5452
    %6558 = vmatpush1.msra.mxu0 %v5451
    %6559 = vmatprep.subr.mxu0 %v5750
    %6560 = vmatpush1.msra.mxu0 %v5749
    %6561 = vmatprep.subr.mxu0 %v6048
    %6562 = vmatpush1.msra.mxu0 %v6047
    %6563 = vmatprep.subr.mxu0 %v6346
    %6564 = vmatpush1.msra.mxu0 %v6345
    %6565 = vmatprep.subr.mxu0 0.0
    %6566 = vmatpush1.msra.mxu0 0.0
    %6567 = vmatprep.subr.mxu0 0.0
    %6568 = vmatpush1.msra.mxu0 0.0
    %6569 = vmatprep.subr.mxu0 0.0
    %6570 = vmatpush1.msra.mxu0 0.0
    %6571 = vmatprep.subr.mxu0 0.0
    %6572 = vmatpush1.msra.mxu0 0.0
    %6573 = vmatprep.subr.mxu0 0.0
    %6574 = vmatpush1.msra.mxu0 0.0
    %6575 = vmatprep.subr.mxu0 0.0
    %6576 = vmatpush1.msra.mxu0 0.0
    %6577 = vmatprep.subr.mxu0 0.0
    %6578 = vmatpush1.msra.mxu0 0.0
    %6579 = vmatprep.subr.mxu0 0.0
    %6580 = vmatpush1.msra.mxu0 0.0
    %6581 = vmatprep.subr.mxu0 0.0
    %6582 = vmatpush1.msra.mxu0 0.0
    %6583 = vmatprep.subr.mxu0 0.0
    %6584 = vmatpush1.msra.mxu0 0.0
    %6585 = vmatprep.subr.mxu0 0.0
    %6586 = vmatpush1.msra.mxu0 0.0
    %6587 = vmatprep.subr.mxu0 0.0
    %6588 = vmatpush1.msra.mxu0 0.0
    %6589 = vmatprep.subr.mxu0 0.0
    %6590 = vmatpush1.msra.mxu0 0.0
    %6591 = vmatprep.subr.mxu0 0.0
    %6592 = vmatpush1.msra.mxu0 0.0
    %6593 = vmatprep.subr.mxu0 0.0
    %6594 = vmatpush1.msra.mxu0 0.0
    %6595 = vmatprep.subr.mxu0 0.0
    %6596 = vmatpush1.msra.mxu0 0.0
    %6597 = vmatprep.subr.mxu0 0.0
    %6598 = vmatpush1.msra.mxu0 0.0
    %6599 = vmatprep.subr.mxu0 0.0
    %6600 = vmatpush1.msra.mxu0 0.0
    %6601 = vmatprep.subr.mxu0 0.0
    %6602 = vmatpush1.msra.mxu0 0.0
    %6603 = vmatprep.subr.mxu0 0.0
    %6604 = vmatpush1.msra.mxu0 0.0
    %6605 = vmatprep.subr.mxu0 0.0
    %6606 = vmatpush1.msra.mxu0 0.0
    %6607 = vmatprep.subr.mxu0 0.0
    %6608 = vmatpush1.msra.mxu0 0.0
    %6609 = vmatprep.subr.mxu0 0.0
    %6610 = vmatpush1.msra.mxu0 0.0
    %6611 = vmatprep.mubr.f32.mxu0 0.0
    %6612 = vmatmul.mubr.f32.gmra.mrb[0].mxu0 %v6388
    %v6613 = vpop.f32.mrb[0].mxu0
    %v6614 = vadd.f32 %v6380, %v6613
    %v6615 = vpop.f32.mrb[0].mxu0
    %v6616 = vadd.f32 %v6380, %v6615
    %6617 = vmatprep.mubr.f32.mxu0 0.0
    %6618 = vmatmul.mubr.f32.gmra.mrb[0].mxu0 %v6391
    %v6619 = vpop.f32.mrb[0].mxu0
    %v6620 = vadd.f32 %v6385, %v6619
    %v6621 = vpop.f32.mrb[0].mxu0
    %v6622 = vadd.f32 %v6385, %v6621
    %6623 = vdwg.mxu0
    %6624 = vmatprep.subr.mxu0 %v4262
    %6625 = vmatpush1.msra.mxu0 %v4261
    %6626 = vmatprep.subr.mxu0 %v4560
    %6627 = vmatpush1.msra.mxu0 %v4559
    %6628 = vmatprep.subr.mxu0 %v4858
    %6629 = vmatpush1.msra.mxu0 %v4857
    %6630 = vmatprep.subr.mxu0 %v5156
    %6631 = vmatpush1.msra.mxu0 %v5155
    %6632 = vmatprep.subr.mxu0 %v3965
    %6633 = vmatpush1.msra.mxu0 %v3964
    %6634 = vmatprep.subr.mxu0 %v5454
    %6635 = vmatpush1.msra.mxu0 %v5453
    %6636 = vmatprep.subr.mxu0 %v5752
    %6637 = vmatpush1.msra.mxu0 %v5751
    %6638 = vmatprep.subr.mxu0 %v6050
    %6639 = vmatpush1.msra.mxu0 %v6049
    %6640 = vmatprep.subr.mxu0 %v6348
    %6641 = vmatpush1.msra.mxu0 %v6347
    %6642 = vmatprep.subr.mxu0 0.0
    %6643 = vmatpush1.msra.mxu0 0.0
    %6644 = vmatprep.subr.mxu0 0.0
    %6645 = vmatpush1.msra.mxu0 0.0
    %6646 = vmatprep.subr.mxu0 0.0
    %6647 = vmatpush1.msra.mxu0 0.0
    %6648 = vmatprep.subr.mxu0 0.0
    %6649 = vmatpush1.msra.mxu0 0.0
    %6650 = vmatprep.subr.mxu0 0.0
    %6651 = vmatpush1.msra.mxu0 0.0
    %6652 = vmatprep.subr.mxu0 0.0
    %6653 = vmatpush1.msra.mxu0 0.0
    %6654 = vmatprep.subr.mxu0 0.0
    %6655 = vmatpush1.msra.mxu0 0.0
    %6656 = vmatprep.subr.mxu0 0.0
    %6657 = vmatpush1.msra.mxu0 0.0
    %6658 = vmatprep.subr.mxu0 0.0
    %6659 = vmatpush1.msra.mxu0 0.0
    %6660 = vmatprep.subr.mxu0 0.0
    %6661 = vmatpush1.msra.mxu0 0.0
    %6662 = vmatprep.subr.mxu0 0.0
    %6663 = vmatpush1.msra.mxu0 0.0
    %6664 = vmatprep.subr.mxu0 0.0
    %6665 = vmatpush1.msra.mxu0 0.0
    %6666 = vmatprep.subr.mxu0 0.0
    %6667 = vmatpush1.msra.mxu0 0.0
    %6668 = vmatprep.subr.mxu0 0.0
    %6669 = vmatpush1.msra.mxu0 0.0
    %6670 = vmatprep.subr.mxu0 0.0
    %6671 = vmatpush1.msra.mxu0 0.0
    %6672 = vmatprep.subr.mxu0 0.0
    %6673 = vmatpush1.msra.mxu0 0.0
    %6674 = vmatprep.subr.mxu0 0.0
    %6675 = vmatpush1.msra.mxu0 0.0
    %6676 = vmatprep.subr.mxu0 0.0
    %6677 = vmatpush1.msra.mxu0 0.0
    %6678 = vmatprep.subr.mxu0 0.0
    %6679 = vmatpush1.msra.mxu0 0.0
    %6680 = vmatprep.subr.mxu0 0.0
    %6681 = vmatpush1.msra.mxu0 0.0
    %6682 = vmatprep.subr.mxu0 0.0
    %6683 = vmatpush1.msra.mxu0 0.0
    %6684 = vmatprep.subr.mxu0 0.0
    %6685 = vmatpush1.msra.mxu0 0.0
    %6686 = vmatprep.subr.mxu0 0.0
    %6687 = vmatpush1.msra.mxu0 0.0
    %6688 = vmatprep.mubr.f32.mxu0 0.0
    %6689 = vmatmul.mubr.f32.gmra.mrb[0].mxu0 %v6388
    %v6690 = vpop.f32.mrb[0].mxu0
    %v6691 = vadd.f32 %v6380, %v6690
    %v6692 = vpop.f32.mrb[0].mxu0
    %v6693 = vadd.f32 %v6380, %v6692
    %6694 = vmatprep.mubr.f32.mxu0 0.0
    %6695 = vmatmul.mubr.f32.gmra.mrb[0].mxu0 %v6391
    %v6696 = vpop.f32.mrb[0].mxu0
    %v6697 = vadd.f32 %v6385, %v6696
    %v6698 = vpop.f32.mrb[0].mxu0
    %v6699 = vadd.f32 %v6385, %v6698
    %6700 = vdwg.mxu0
    %6701 = vmatprep.subr.mxu0 %v4264
    %6702 = vmatpush1.msra.mxu0 %v4263
    %6703 = vmatprep.subr.mxu0 %v4562
    %6704 = vmatpush1.msra.mxu0 %v4561
    %6705 = vmatprep.subr.mxu0 %v4860
    %6706 = vmatpush1.msra.mxu0 %v4859
    %6707 = vmatprep.subr.mxu0 %v5158
    %6708 = vmatpush1.msra.mxu0 %v5157
    %6709 = vmatprep.subr.mxu0 %v3967
    %6710 = vmatpush1.msra.mxu0 %v3966
    %6711 = vmatprep.subr.mxu0 %v5456
    %6712 = vmatpush1.msra.mxu0 %v5455
    %6713 = vmatprep.subr.mxu0 %v5754
    %6714 = vmatpush1.msra.mxu0 %v5753
    %6715 = vmatprep.subr.mxu0 %v6052
    %6716 = vmatpush1.msra.mxu0 %v6051
    %6717 = vmatprep.subr.mxu0 %v6350
    %6718 = vmatpush1.msra.mxu0 %v6349
    %6719 = vmatprep.subr.mxu0 0.0
    %6720 = vmatpush1.msra.mxu0 0.0
    %6721 = vmatprep.subr.mxu0 0.0
    %6722 = vmatpush1.msra.mxu0 0.0
    %6723 = vmatprep.subr.mxu0 0.0
    %6724 = vmatpush1.msra.mxu0 0.0
    %6725 = vmatprep.subr.mxu0 0.0
    %6726 = vmatpush1.msra.mxu0 0.0
    %6727 = vmatprep.subr.mxu0 0.0
    %6728 = vmatpush1.msra.mxu0 0.0
    %6729 = vmatprep.subr.mxu0 0.0
    %6730 = vmatpush1.msra.mxu0 0.0
    %6731 = vmatprep.subr.mxu0 0.0
    %6732 = vmatpush1.msra.mxu0 0.0
    %6733 = vmatprep.subr.mxu0 0.0
    %6734 = vmatpush1.msra.mxu0 0.0
    %6735 = vmatprep.subr.mxu0 0.0
    %6736 = vmatpush1.msra.mxu0 0.0
    %6737 = vmatprep.subr.mxu0 0.0
    %6738 = vmatpush1.msra.mxu0 0.0
    %6739 = vmatprep.subr.mxu0 0.0
    %6740 = vmatpush1.msra.mxu0 0.0
    %6741 = vmatprep.subr.mxu0 0.0
    %6742 = vmatpush1.msra.mxu0 0.0
    %6743 = vmatprep.subr.mxu0 0.0
    %6744 = vmatpush1.msra.mxu0 0.0
    %6745 = vmatprep.subr.mxu0 0.0
    %6746 = vmatpush1.msra.mxu0 0.0
    %6747 = vmatprep.subr.mxu0 0.0
    %6748 = vmatpush1.msra.mxu0 0.0
    %6749 = vmatprep.subr.mxu0 0.0
    %6750 = vmatpush1.msra.mxu0 0.0
    %6751 = vmatprep.subr.mxu0 0.0
    %6752 = vmatpush1.msra.mxu0 0.0
    %6753 = vmatprep.subr.mxu0 0.0
    %6754 = vmatpush1.msra.mxu0 0.0
    %6755 = vmatprep.subr.mxu0 0.0
    %6756 = vmatpush1.msra.mxu0 0.0
    %6757 = vmatprep.subr.mxu0 0.0
    %6758 = vmatpush1.msra.mxu0 0.0
    %6759 = vmatprep.subr.mxu0 0.0
    %6760 = vmatpush1.msra.mxu0 0.0
    %6761 = vmatprep.subr.mxu0 0.0
    %6762 = vmatpush1.msra.mxu0 0.0
    %6763 = vmatprep.subr.mxu0 0.0
    %6764 = vmatpush1.msra.mxu0 0.0
    %6765 = vmatprep.mubr.f32.mxu0 0.0
    %6766 = vmatmul.mubr.f32.gmra.mrb[0].mxu0 %v6388
    %v6767 = vpop.f32.mrb[0].mxu0
    %v6768 = vadd.f32 %v6380, %v6767
    %v6769 = vpop.f32.mrb[0].mxu0
    %v6770 = vadd.f32 %v6380, %v6769
    %6771 = vmatprep.mubr.f32.mxu0 0.0
    %6772 = vmatmul.mubr.f32.gmra.mrb[0].mxu0 %v6391
    %v6773 = vpop.f32.mrb[0].mxu0
    %v6774 = vadd.f32 %v6385, %v6773
    %v6775 = vpop.f32.mrb[0].mxu0
    %v6776 = vadd.f32 %v6385, %v6775
    %6777 = vdwg.mxu0
    %6778 = vmatprep.subr.mxu0 %v4266
    %6779 = vmatpush1.msra.mxu0 %v4265
    %6780 = vmatprep.subr.mxu0 %v4564
    %6781 = vmatpush1.msra.mxu0 %v4563
    %6782 = vmatprep.subr.mxu0 %v4862
    %6783 = vmatpush1.msra.mxu0 %v4861
    %6784 = vmatprep.subr.mxu0 %v5160
    %6785 = vmatpush1.msra.mxu0 %v5159
    %6786 = vmatprep.subr.mxu0 %v3969
    %6787 = vmatpush1.msra.mxu0 %v3968
    %6788 = vmatprep.subr.mxu0 %v5458
    %6789 = vmatpush1.msra.mxu0 %v5457
    %6790 = vmatprep.subr.mxu0 %v5756
    %6791 = vmatpush1.msra.mxu0 %v5755
    %6792 = vmatprep.subr.mxu0 %v6054
    %6793 = vmatpush1.msra.mxu0 %v6053
    %6794 = vmatprep.subr.mxu0 %v6352
    %6795 = vmatpush1.msra.mxu0 %v6351
    %6796 = vmatprep.subr.mxu0 0.0
    %6797 = vmatpush1.msra.mxu0 0.0
    %6798 = vmatprep.subr.mxu0 0.0
    %6799 = vmatpush1.msra.mxu0 0.0
    %6800 = vmatprep.subr.mxu0 0.0
    %6801 = vmatpush1.msra.mxu0 0.0
    %6802 = vmatprep.subr.mxu0 0.0
    %6803 = vmatpush1.msra.mxu0 0.0
    %6804 = vmatprep.subr.mxu0 0.0
    %6805 = vmatpush1.msra.mxu0 0.0
    %6806 = vmatprep.subr.mxu0 0.0
    %6807 = vmatpush1.msra.mxu0 0.0
    %6808 = vmatprep.subr.mxu0 0.0
    %6809 = vmatpush1.msra.mxu0 0.0
    %6810 = vmatprep.subr.mxu0 0.0
    %6811 = vmatpush1.msra.mxu0 0.0
    %6812 = vmatprep.subr.mxu0 0.0
    %6813 = vmatpush1.msra.mxu0 0.0
    %6814 = vmatprep.subr.mxu0 0.0
    %6815 = vmatpush1.msra.mxu0 0.0
    %6816 = vmatprep.subr.mxu0 0.0
    %6817 = vmatpush1.msra.mxu0 0.0
    %6818 = vmatprep.subr.mxu0 0.0
    %6819 = vmatpush1.msra.mxu0 0.0
    %6820 = vmatprep.subr.mxu0 0.0
    %6821 = vmatpush1.msra.mxu0 0.0
    %6822 = vmatprep.subr.mxu0 0.0
    %6823 = vmatpush1.msra.mxu0 0.0
    %6824 = vmatprep.subr.mxu0 0.0
    %6825 = vmatpush1.msra.mxu0 0.0
    %6826 = vmatprep.subr.mxu0 0.0
    %6827 = vmatpush1.msra.mxu0 0.0
    %6828 = vmatprep.subr.mxu0 0.0
    %6829 = vmatpush1.msra.mxu0 0.0
    %6830 = vmatprep.subr.mxu0 0.0
    %6831 = vmatpush1.msra.mxu0 0.0
    %6832 = vmatprep.subr.mxu0 0.0
    %6833 = vmatpush1.msra.mxu0 0.0
    %6834 = vmatprep.subr.mxu0 0.0
    %6835 = vmatpush1.msra.mxu0 0.0
    %6836 = vmatprep.subr.mxu0 0.0
    %6837 = vmatpush1.msra.mxu0 0.0
    %6838 = vmatprep.subr.mxu0 0.0
    %6839 = vmatpush1.msra.mxu0 0.0
    %6840 = vmatprep.subr.mxu0 0.0
    %6841 = vmatpush1.msra.mxu0 0.0
    %6842 = vmatprep.mubr.f32.mxu0 0.0
    %6843 = vmatmul.mubr.f32.gmra.mrb[0].mxu0 %v6388
    %v6844 = vpop.f32.mrb[0].mxu0
    %v6845 = vadd.f32 %v6380, %v6844
    %v6846 = vpop.f32.mrb[0].mxu0
    %v6847 = vadd.f32 %v6380, %v6846
    %6848 = vmatprep.mubr.f32.mxu0 0.0
    %6849 = vmatmul.mubr.f32.gmra.mrb[0].mxu0 %v6391
    %v6850 = vpop.f32.mrb[0].mxu0
    %v6851 = vadd.f32 %v6385, %v6850
    %v6852 = vpop.f32.mrb[0].mxu0
    %v6853 = vadd.f32 %v6385, %v6852
    %6854 = vdwg.mxu0
    %6855 = vmatprep.subr.mxu0 %v4268
    %6856 = vmatpush1.msra.mxu0 %v4267
    %6857 = vmatprep.subr.mxu0 %v4566
    %6858 = vmatpush1.msra.mxu0 %v4565
    %6859 = vmatprep.subr.mxu0 %v4864
    %6860 = vmatpush1.msra.mxu0 %v4863
    %6861 = vmatprep.subr.mxu0 %v5162
    %6862 = vmatpush1.msra.mxu0 %v5161
    %6863 = vmatprep.subr.mxu0 %v3971
    %6864 = vmatpush1.msra.mxu0 %v3970
    %6865 = vmatprep.subr.mxu0 %v5460
    %6866 = vmatpush1.msra.mxu0 %v5459
    %6867 = vmatprep.subr.mxu0 %v5758
    %6868 = vmatpush1.msra.mxu0 %v5757
    %6869 = vmatprep.subr.mxu0 %v6056
    %6870 = vmatpush1.msra.mxu0 %v6055
    %6871 = vmatprep.subr.mxu0 %v6354
    %6872 = vmatpush1.msra.mxu0 %v6353
    %6873 = vmatprep.subr.mxu0 0.0
    %6874 = vmatpush1.msra.mxu0 0.0
    %6875 = vmatprep.subr.mxu0 0.0
    %6876 = vmatpush1.msra.mxu0 0.0
    %6877 = vmatprep.subr.mxu0 0.0
    %6878 = vmatpush1.msra.mxu0 0.0
    %6879 = vmatprep.subr.mxu0 0.0
    %6880 = vmatpush1.msra.mxu0 0.0
    %6881 = vmatprep.subr.mxu0 0.0
    %6882 = vmatpush1.msra.mxu0 0.0
    %6883 = vmatprep.subr.mxu0 0.0
    %6884 = vmatpush1.msra.mxu0 0.0
    %6885 = vmatprep.subr.mxu0 0.0
    %6886 = vmatpush1.msra.mxu0 0.0
    %6887 = vmatprep.subr.mxu0 0.0
    %6888 = vmatpush1.msra.mxu0 0.0
    %6889 = vmatprep.subr.mxu0 0.0
    %6890 = vmatpush1.msra.mxu0 0.0
    %6891 = vmatprep.subr.mxu0 0.0
    %6892 = vmatpush1.msra.mxu0 0.0
    %6893 = vmatprep.subr.mxu0 0.0
    %6894 = vmatpush1.msra.mxu0 0.0
    %6895 = vmatprep.subr.mxu0 0.0
    %6896 = vmatpush1.msra.mxu0 0.0
    %6897 = vmatprep.subr.mxu0 0.0
    %6898 = vmatpush1.msra.mxu0 0.0
    %6899 = vmatprep.subr.mxu0 0.0
    %6900 = vmatpush1.msra.mxu0 0.0
    %6901 = vmatprep.subr.mxu0 0.0
    %6902 = vmatpush1.msra.mxu0 0.0
    %6903 = vmatprep.subr.mxu0 0.0
    %6904 = vmatpush1.msra.mxu0 0.0
    %6905 = vmatprep.subr.mxu0 0.0
    %6906 = vmatpush1.msra.mxu0 0.0
    %6907 = vmatprep.subr.mxu0 0.0
    %6908 = vmatpush1.msra.mxu0 0.0
    %6909 = vmatprep.subr.mxu0 0.0
    %6910 = vmatpush1.msra.mxu0 0.0
    %6911 = vmatprep.subr.mxu0 0.0
    %6912 = vmatpush1.msra.mxu0 0.0
    %6913 = vmatprep.subr.mxu0 0.0
    %6914 = vmatpush1.msra.mxu0 0.0
    %6915 = vmatprep.subr.mxu0 0.0
    %6916 = vmatpush1.msra.mxu0 0.0
    %6917 = vmatprep.subr.mxu0 0.0
    %6918 = vmatpush1.msra.mxu0 0.0
    %6919 = vmatprep.mubr.f32.mxu0 0.0
    %6920 = vmatmul.mubr.f32.gmra.mrb[0].mxu0 %v6388
    %v6921 = vpop.f32.mrb[0].mxu0
    %v6922 = vadd.f32 %v6380, %v6921
    %v6923 = vpop.f32.mrb[0].mxu0
    %v6924 = vadd.f32 %v6380, %v6923
    %6925 = vmatprep.mubr.f32.mxu0 0.0
    %6926 = vmatmul.mubr.f32.gmra.mrb[0].mxu0 %v6391
    %v6927 = vpop.f32.mrb[0].mxu0
    %v6928 = vadd.f32 %v6385, %v6927
    %v6929 = vpop.f32.mrb[0].mxu0
    %v6930 = vadd.f32 %v6385, %v6929
    %6931 = vdwg.mxu0
    %6932 = vmatprep.subr.mxu0 %v4270
    %6933 = vmatpush1.msra.mxu0 %v4269
    %6934 = vmatprep.subr.mxu0 %v4568
    %6935 = vmatpush1.msra.mxu0 %v4567
    %6936 = vmatprep.subr.mxu0 %v4866
    %6937 = vmatpush1.msra.mxu0 %v4865
    %6938 = vmatprep.subr.mxu0 %v5164
    %6939 = vmatpush1.msra.mxu0 %v5163
    %6940 = vmatprep.subr.mxu0 %v3973
    %6941 = vmatpush1.msra.mxu0 %v3972
    %6942 = vmatprep.subr.mxu0 %v5462
    %6943 = vmatpush1.msra.mxu0 %v5461
    %6944 = vmatprep.subr.mxu0 %v5760
    %6945 = vmatpush1.msra.mxu0 %v5759
    %6946 = vmatprep.subr.mxu0 %v6058
    %6947 = vmatpush1.msra.mxu0 %v6057
    %6948 = vmatprep.subr.mxu0 %v6356
    %6949 = vmatpush1.msra.mxu0 %v6355
    %6950 = vmatprep.subr.mxu0 0.0
    %6951 = vmatpush1.msra.mxu0 0.0
    %6952 = vmatprep.subr.mxu0 0.0
    %6953 = vmatpush1.msra.mxu0 0.0
    %6954 = vmatprep.subr.mxu0 0.0
    %6955 = vmatpush1.msra.mxu0 0.0
    %6956 = vmatprep.subr.mxu0 0.0
    %6957 = vmatpush1.msra.mxu0 0.0
    %6958 = vmatprep.subr.mxu0 0.0
    %6959 = vmatpush1.msra.mxu0 0.0
    %6960 = vmatprep.subr.mxu0 0.0
    %6961 = vmatpush1.msra.mxu0 0.0
    %6962 = vmatprep.subr.mxu0 0.0
    %6963 = vmatpush1.msra.mxu0 0.0
    %6964 = vmatprep.subr.mxu0 0.0
    %6965 = vmatpush1.msra.mxu0 0.0
    %6966 = vmatprep.subr.mxu0 0.0
    %6967 = vmatpush1.msra.mxu0 0.0
    %6968 = vmatprep.subr.mxu0 0.0
    %6969 = vmatpush1.msra.mxu0 0.0
    %6970 = vmatprep.subr.mxu0 0.0
    %6971 = vmatpush1.msra.mxu0 0.0
    %6972 = vmatprep.subr.mxu0 0.0
    %6973 = vmatpush1.msra.mxu0 0.0
    %6974 = vmatprep.subr.mxu0 0.0
    %6975 = vmatpush1.msra.mxu0 0.0
    %6976 = vmatprep.subr.mxu0 0.0
    %6977 = vmatpush1.msra.mxu0 0.0
    %6978 = vmatprep.subr.mxu0 0.0
    %6979 = vmatpush1.msra.mxu0 0.0
    %6980 = vmatprep.subr.mxu0 0.0
    %6981 = vmatpush1.msra.mxu0 0.0
    %6982 = vmatprep.subr.mxu0 0.0
    %6983 = vmatpush1.msra.mxu0 0.0
    %6984 = vmatprep.subr.mxu0 0.0
    %6985 = vmatpush1.msra.mxu0 0.0
    %6986 = vmatprep.subr.mxu0 0.0
    %6987 = vmatpush1.msra.mxu0 0.0
    %6988 = vmatprep.subr.mxu0 0.0
    %6989 = vmatpush1.msra.mxu0 0.0
    %6990 = vmatprep.subr.mxu0 0.0
    %6991 = vmatpush1.msra.mxu0 0.0
    %6992 = vmatprep.subr.mxu0 0.0
    %6993 = vmatpush1.msra.mxu0 0.0
    %6994 = vmatprep.subr.mxu0 0.0
    %6995 = vmatpush1.msra.mxu0 0.0
    %6996 = vmatprep.mubr.f32.mxu0 0.0
    %6997 = vmatmul.mubr.f32.gmra.mrb[0].mxu0 %v6388
    %v6998 = vpop.f32.mrb[0].mxu0
    %v6999 = vadd.f32 %v6380, %v6998
    %v7000 = vpop.f32.mrb[0].mxu0
    %v7001 = vadd.f32 %v6380, %v7000
    %7002 = vmatprep.mubr.f32.mxu0 0.0
    %7003 = vmatmul.mubr.f32.gmra.mrb[0].mxu0 %v6391
    %v7004 = vpop.f32.mrb[0].mxu0
    %v7005 = vadd.f32 %v6385, %v7004
    %v7006 = vpop.f32.mrb[0].mxu0
    %v7007 = vadd.f32 %v6385, %v7006
    %7008 = vdwg.mxu0
    %7009 = vmatprep.subr.mxu0 %v4272
    %7010 = vmatpush1.msra.mxu0 %v4271
    %7011 = vmatprep.subr.mxu0 %v4570
    %7012 = vmatpush1.msra.mxu0 %v4569
    %7013 = vmatprep.subr.mxu0 %v4868
    %7014 = vmatpush1.msra.mxu0 %v4867
    %7015 = vmatprep.subr.mxu0 %v5166
    %7016 = vmatpush1.msra.mxu0 %v5165
    %7017 = vmatprep.subr.mxu0 %v3975
    %7018 = vmatpush1.msra.mxu0 %v3974
    %7019 = vmatprep.subr.mxu0 %v5464
    %7020 = vmatpush1.msra.mxu0 %v5463
    %7021 = vmatprep.subr.mxu0 %v5762
    %7022 = vmatpush1.msra.mxu0 %v5761
    %7023 = vmatprep.subr.mxu0 %v6060
    %7024 = vmatpush1.msra.mxu0 %v6059
    %7025 = vmatprep.subr.mxu0 %v6358
    %7026 = vmatpush1.msra.mxu0 %v6357
    %7027 = vmatprep.subr.mxu0 0.0
    %7028 = vmatpush1.msra.mxu0 0.0
    %7029 = vmatprep.subr.mxu0 0.0
    %7030 = vmatpush1.msra.mxu0 0.0
    %7031 = vmatprep.subr.mxu0 0.0
    %7032 = vmatpush1.msra.mxu0 0.0
    %7033 = vmatprep.subr.mxu0 0.0
    %7034 = vmatpush1.msra.mxu0 0.0
    %7035 = vmatprep.subr.mxu0 0.0
    %7036 = vmatpush1.msra.mxu0 0.0
    %7037 = vmatprep.subr.mxu0 0.0
    %7038 = vmatpush1.msra.mxu0 0.0
    %7039 = vmatprep.subr.mxu0 0.0
    %7040 = vmatpush1.msra.mxu0 0.0
    %7041 = vmatprep.subr.mxu0 0.0
    %7042 = vmatpush1.msra.mxu0 0.0
    %7043 = vmatprep.subr.mxu0 0.0
    %7044 = vmatpush1.msra.mxu0 0.0
    %7045 = vmatprep.subr.mxu0 0.0
    %7046 = vmatpush1.msra.mxu0 0.0
    %7047 = vmatprep.subr.mxu0 0.0
    %7048 = vmatpush1.msra.mxu0 0.0
    %7049 = vmatprep.subr.mxu0 0.0
    %7050 = vmatpush1.msra.mxu0 0.0
    %7051 = vmatprep.subr.mxu0 0.0
    %7052 = vmatpush1.msra.mxu0 0.0
    %7053 = vmatprep.subr.mxu0 0.0
    %7054 = vmatpush1.msra.mxu0 0.0
    %7055 = vmatprep.subr.mxu0 0.0
    %7056 = vmatpush1.msra.mxu0 0.0
    %7057 = vmatprep.subr.mxu0 0.0
    %7058 = vmatpush1.msra.mxu0 0.0
    %7059 = vmatprep.subr.mxu0 0.0
    %7060 = vmatpush1.msra.mxu0 0.0
    %7061 = vmatprep.subr.mxu0 0.0
    %7062 = vmatpush1.msra.mxu0 0.0
    %7063 = vmatprep.subr.mxu0 0.0
    %7064 = vmatpush1.msra.mxu0 0.0
    %7065 = vmatprep.subr.mxu0 0.0
    %7066 = vmatpush1.msra.mxu0 0.0
    %7067 = vmatprep.subr.mxu0 0.0
    %7068 = vmatpush1.msra.mxu0 0.0
    %7069 = vmatprep.subr.mxu0 0.0
    %7070 = vmatpush1.msra.mxu0 0.0
    %7071 = vmatprep.subr.mxu0 0.0
    %7072 = vmatpush1.msra.mxu0 0.0
    %7073 = vmatprep.mubr.f32.mxu0 0.0
    %7074 = vmatmul.mubr.f32.gmra.mrb[0].mxu0 %v6388
    %v7075 = vpop.f32.mrb[0].mxu0
    %v7076 = vadd.f32 %v6380, %v7075
    %v7077 = vpop.f32.mrb[0].mxu0
    %v7078 = vadd.f32 %v6380, %v7077
    %7079 = vmatprep.mubr.f32.mxu0 0.0
    %7080 = vmatmul.mubr.f32.gmra.mrb[0].mxu0 %v6391
    %v7081 = vpop.f32.mrb[0].mxu0
    %v7082 = vadd.f32 %v6385, %v7081
    %v7083 = vpop.f32.mrb[0].mxu0
    %v7084 = vadd.f32 %v6385, %v7083
    %7085 = vdwg.mxu0
    %7086 = vmatprep.subr.mxu0 %v4274
    %7087 = vmatpush1.msra.mxu0 %v4273
    %7088 = vmatprep.subr.mxu0 %v4572
    %7089 = vmatpush1.msra.mxu0 %v4571
    %7090 = vmatprep.subr.mxu0 %v4870
    %7091 = vmatpush1.msra.mxu0 %v4869
    %7092 = vmatprep.subr.mxu0 %v5168
    %7093 = vmatpush1.msra.mxu0 %v5167
    %7094 = vmatprep.subr.mxu0 %v3977
    %7095 = vmatpush1.msra.mxu0 %v3976
    %7096 = vmatprep.subr.mxu0 %v5466
    %7097 = vmatpush1.msra.mxu0 %v5465
    %7098 = vmatprep.subr.mxu0 %v5764
    %7099 = vmatpush1.msra.mxu0 %v5763
    %7100 = vmatprep.subr.mxu0 %v6062
    %7101 = vmatpush1.msra.mxu0 %v6061
    %7102 = vmatprep.subr.mxu0 %v6360
    %7103 = vmatpush1.msra.mxu0 %v6359
    %7104 = vmatprep.subr.mxu0 0.0
    %7105 = vmatpush1.msra.mxu0 0.0
    %7106 = vmatprep.subr.mxu0 0.0
    %7107 = vmatpush1.msra.mxu0 0.0
    %7108 = vmatprep.subr.mxu0 0.0
    %7109 = vmatpush1.msra.mxu0 0.0
    %7110 = vmatprep.subr.mxu0 0.0
    %7111 = vmatpush1.msra.mxu0 0.0
    %7112 = vmatprep.subr.mxu0 0.0
    %7113 = vmatpush1.msra.mxu0 0.0
    %7114 = vmatprep.subr.mxu0 0.0
    %7115 = vmatpush1.msra.mxu0 0.0
    %7116 = vmatprep.subr.mxu0 0.0
    %7117 = vmatpush1.msra.mxu0 0.0
    %7118 = vmatprep.subr.mxu0 0.0
    %7119 = vmatpush1.msra.mxu0 0.0
    %7120 = vmatprep.subr.mxu0 0.0
    %7121 = vmatpush1.msra.mxu0 0.0
    %7122 = vmatprep.subr.mxu0 0.0
    %7123 = vmatpush1.msra.mxu0 0.0
    %7124 = vmatprep.subr.mxu0 0.0
    %7125 = vmatpush1.msra.mxu0 0.0
    %7126 = vmatprep.subr.mxu0 0.0
    %7127 = vmatpush1.msra.mxu0 0.0
    %7128 = vmatprep.subr.mxu0 0.0
    %7129 = vmatpush1.msra.mxu0 0.0
    %7130 = vmatprep.subr.mxu0 0.0
    %7131 = vmatpush1.msra.mxu0 0.0
    %7132 = vmatprep.subr.mxu0 0.0
    %7133 = vmatpush1.msra.mxu0 0.0
    %7134 = vmatprep.subr.mxu0 0.0
    %7135 = vmatpush1.msra.mxu0 0.0
    %7136 = vmatprep.subr.mxu0 0.0
    %7137 = vmatpush1.msra.mxu0 0.0
    %7138 = vmatprep.subr.mxu0 0.0
    %7139 = vmatpush1.msra.mxu0 0.0
    %7140 = vmatprep.subr.mxu0 0.0
    %7141 = vmatpush1.msra.mxu0 0.0
    %7142 = vmatprep.subr.mxu0 0.0
    %7143 = vmatpush1.msra.mxu0 0.0
    %7144 = vmatprep.subr.mxu0 0.0
    %7145 = vmatpush1.msra.mxu0 0.0
    %7146 = vmatprep.subr.mxu0 0.0
    %7147 = vmatpush1.msra.mxu0 0.0
    %7148 = vmatprep.subr.mxu0 0.0
    %7149 = vmatpush1.msra.mxu0 0.0
    %7150 = vmatprep.mubr.f32.mxu0 0.0
    %7151 = vmatmul.mubr.f32.gmra.mrb[0].mxu0 %v6388
    %v7152 = vpop.f32.mrb[0].mxu0
    %v7153 = vadd.f32 %v6380, %v7152
    %v7154 = vpop.f32.mrb[0].mxu0
    %v7155 = vadd.f32 %v6380, %v7154
    %7156 = vmatprep.mubr.f32.mxu0 0.0
    %7157 = vmatmul.mubr.f32.gmra.mrb[0].mxu0 %v6391
    %v7158 = vpop.f32.mrb[0].mxu0
    %v7159 = vadd.f32 %v6385, %v7158
    %v7160 = vpop.f32.mrb[0].mxu0
    %v7161 = vadd.f32 %v6385, %v7160
    %7162 = vdwg.mxu0
    %7163 = vmatprep.subr.mxu0 %v4276
    %7164 = vmatpush1.msra.mxu0 %v4275
    %7165 = vmatprep.subr.mxu0 %v4574
    %7166 = vmatpush1.msra.mxu0 %v4573
    %7167 = vmatprep.subr.mxu0 %v4872
    %7168 = vmatpush1.msra.mxu0 %v4871
    %7169 = vmatprep.subr.mxu0 %v5170
    %7170 = vmatpush1.msra.mxu0 %v5169
    %7171 = vmatprep.subr.mxu0 %v3979
    %7172 = vmatpush1.msra.mxu0 %v3978
    %7173 = vmatprep.subr.mxu0 %v5468
    %7174 = vmatpush1.msra.mxu0 %v5467
    %7175 = vmatprep.subr.mxu0 %v5766
    %7176 = vmatpush1.msra.mxu0 %v5765
    %7177 = vmatprep.subr.mxu0 %v6064
    %7178 = vmatpush1.msra.mxu0 %v6063
    %7179 = vmatprep.subr.mxu0 %v6362
    %7180 = vmatpush1.msra.mxu0 %v6361
    %7181 = vmatprep.subr.mxu0 0.0
    %7182 = vmatpush1.msra.mxu0 0.0
    %7183 = vmatprep.subr.mxu0 0.0
    %7184 = vmatpush1.msra.mxu0 0.0
    %7185 = vmatprep.subr.mxu0 0.0
    %7186 = vmatpush1.msra.mxu0 0.0
    %7187 = vmatprep.subr.mxu0 0.0
    %7188 = vmatpush1.msra.mxu0 0.0
    %7189 = vmatprep.subr.mxu0 0.0
    %7190 = vmatpush1.msra.mxu0 0.0
    %7191 = vmatprep.subr.mxu0 0.0
    %7192 = vmatpush1.msra.mxu0 0.0
    %7193 = vmatprep.subr.mxu0 0.0
    %7194 = vmatpush1.msra.mxu0 0.0
    %7195 = vmatprep.subr.mxu0 0.0
    %7196 = vmatpush1.msra.mxu0 0.0
    %7197 = vmatprep.subr.mxu0 0.0
    %7198 = vmatpush1.msra.mxu0 0.0
    %7199 = vmatprep.subr.mxu0 0.0
    %7200 = vmatpush1.msra.mxu0 0.0
    %7201 = vmatprep.subr.mxu0 0.0
    %7202 = vmatpush1.msra.mxu0 0.0
    %7203 = vmatprep.subr.mxu0 0.0
    %7204 = vmatpush1.msra.mxu0 0.0
    %7205 = vmatprep.subr.mxu0 0.0
    %7206 = vmatpush1.msra.mxu0 0.0
    %7207 = vmatprep.subr.mxu0 0.0
    %7208 = vmatpush1.msra.mxu0 0.0
    %7209 = vmatprep.subr.mxu0 0.0
    %7210 = vmatpush1.msra.mxu0 0.0
    %7211 = vmatprep.subr.mxu0 0.0
    %7212 = vmatpush1.msra.mxu0 0.0
    %7213 = vmatprep.subr.mxu0 0.0
    %7214 = vmatpush1.msra.mxu0 0.0
    %7215 = vmatprep.subr.mxu0 0.0
    %7216 = vmatpush1.msra.mxu0 0.0
    %7217 = vmatprep.subr.mxu0 0.0
    %7218 = vmatpush1.msra.mxu0 0.0
    %7219 = vmatprep.subr.mxu0 0.0
    %7220 = vmatpush1.msra.mxu0 0.0
    %7221 = vmatprep.subr.mxu0 0.0
    %7222 = vmatpush1.msra.mxu0 0.0
    %7223 = vmatprep.subr.mxu0 0.0
    %7224 = vmatpush1.msra.mxu0 0.0
    %7225 = vmatprep.subr.mxu0 0.0
    %7226 = vmatpush1.msra.mxu0 0.0
    %7227 = vmatprep.mubr.f32.mxu0 0.0
    %7228 = vmatmul.mubr.f32.gmra.mrb[0].mxu0 %v6388
    %v7229 = vpop.f32.mrb[0].mxu0
    %v7230 = vadd.f32 %v6380, %v7229
    %v7231 = vpop.f32.mrb[0].mxu0
    %v7232 = vadd.f32 %v6380, %v7231
    %7233 = vmatprep.mubr.f32.mxu0 0.0
    %7234 = vmatmul.mubr.f32.gmra.mrb[0].mxu0 %v6391
    %v7235 = vpop.f32.mrb[0].mxu0
    %v7236 = vadd.f32 %v6385, %v7235
    %v7237 = vpop.f32.mrb[0].mxu0
    %v7238 = vadd.f32 %v6385, %v7237
    %7239 = vdwg.mxu0
    %7240 = vmatprep.subr.mxu0 %v4278
    %7241 = vmatpush1.msra.mxu0 %v4277
    %7242 = vmatprep.subr.mxu0 %v4576
    %7243 = vmatpush1.msra.mxu0 %v4575
    %7244 = vmatprep.subr.mxu0 %v4874
    %7245 = vmatpush1.msra.mxu0 %v4873
    %7246 = vmatprep.subr.mxu0 %v5172
    %7247 = vmatpush1.msra.mxu0 %v5171
    %7248 = vmatprep.subr.mxu0 %v3981
    %7249 = vmatpush1.msra.mxu0 %v3980
    %7250 = vmatprep.subr.mxu0 %v5470
    %7251 = vmatpush1.msra.mxu0 %v5469
    %7252 = vmatprep.subr.mxu0 %v5768
    %7253 = vmatpush1.msra.mxu0 %v5767
    %7254 = vmatprep.subr.mxu0 %v6066
    %7255 = vmatpush1.msra.mxu0 %v6065
    %7256 = vmatprep.subr.mxu0 %v6364
    %7257 = vmatpush1.msra.mxu0 %v6363
    %7258 = vmatprep.subr.mxu0 0.0
    %7259 = vmatpush1.msra.mxu0 0.0
    %7260 = vmatprep.subr.mxu0 0.0
    %7261 = vmatpush1.msra.mxu0 0.0
    %7262 = vmatprep.subr.mxu0 0.0
    %7263 = vmatpush1.msra.mxu0 0.0
    %7264 = vmatprep.subr.mxu0 0.0
    %7265 = vmatpush1.msra.mxu0 0.0
    %7266 = vmatprep.subr.mxu0 0.0
    %7267 = vmatpush1.msra.mxu0 0.0
    %7268 = vmatprep.subr.mxu0 0.0
    %7269 = vmatpush1.msra.mxu0 0.0
    %7270 = vmatprep.subr.mxu0 0.0
    %7271 = vmatpush1.msra.mxu0 0.0
    %7272 = vmatprep.subr.mxu0 0.0
    %7273 = vmatpush1.msra.mxu0 0.0
    %7274 = vmatprep.subr.mxu0 0.0
    %7275 = vmatpush1.msra.mxu0 0.0
    %7276 = vmatprep.subr.mxu0 0.0
    %7277 = vmatpush1.msra.mxu0 0.0
    %7278 = vmatprep.subr.mxu0 0.0
    %7279 = vmatpush1.msra.mxu0 0.0
    %7280 = vmatprep.subr.mxu0 0.0
    %7281 = vmatpush1.msra.mxu0 0.0
    %7282 = vmatprep.subr.mxu0 0.0
    %7283 = vmatpush1.msra.mxu0 0.0
    %7284 = vmatprep.subr.mxu0 0.0
    %7285 = vmatpush1.msra.mxu0 0.0
    %7286 = vmatprep.subr.mxu0 0.0
    %7287 = vmatpush1.msra.mxu0 0.0
    %7288 = vmatprep.subr.mxu0 0.0
    %7289 = vmatpush1.msra.mxu0 0.0
    %7290 = vmatprep.subr.mxu0 0.0
    %7291 = vmatpush1.msra.mxu0 0.0
    %7292 = vmatprep.subr.mxu0 0.0
    %7293 = vmatpush1.msra.mxu0 0.0
    %7294 = vmatprep.subr.mxu0 0.0
    %7295 = vmatpush1.msra.mxu0 0.0
    %7296 = vmatprep.subr.mxu0 0.0
    %7297 = vmatpush1.msra.mxu0 0.0
    %7298 = vmatprep.subr.mxu0 0.0
    %7299 = vmatpush1.msra.mxu0 0.0
    %7300 = vmatprep.subr.mxu0 0.0
    %7301 = vmatpush1.msra.mxu0 0.0
    %7302 = vmatprep.subr.mxu0 0.0
    %7303 = vmatpush1.msra.mxu0 0.0
    %7304 = vmatprep.mubr.f32.mxu0 0.0
    %7305 = vmatmul.mubr.f32.gmra.mrb[0].mxu0 %v6388
    %v7306 = vpop.f32.mrb[0].mxu0
    %v7307 = vadd.f32 %v6380, %v7306
    %v7308 = vpop.f32.mrb[0].mxu0
    %v7309 = vadd.f32 %v6380, %v7308
    %7310 = vmatprep.mubr.f32.mxu0 0.0
    %7311 = vmatmul.mubr.f32.gmra.mrb[0].mxu0 %v6391
    %v7312 = vpop.f32.mrb[0].mxu0
    %v7313 = vadd.f32 %v6385, %v7312
    %v7314 = vpop.f32.mrb[0].mxu0
    %v7315 = vadd.f32 %v6385, %v7314
    %7316 = vdwg.mxu0
    %7317 = vmatprep.subr.mxu0 %v4280
    %7318 = vmatpush1.msra.mxu0 %v4279
    %7319 = vmatprep.subr.mxu0 %v4578
    %7320 = vmatpush1.msra.mxu0 %v4577
    %7321 = vmatprep.subr.mxu0 %v4876
    %7322 = vmatpush1.msra.mxu0 %v4875
    %7323 = vmatprep.subr.mxu0 %v5174
    %7324 = vmatpush1.msra.mxu0 %v5173
    %7325 = vmatprep.subr.mxu0 %v3983
    %7326 = vmatpush1.msra.mxu0 %v3982
    %7327 = vmatprep.subr.mxu0 %v5472
    %7328 = vmatpush1.msra.mxu0 %v5471
    %7329 = vmatprep.subr.mxu0 %v5770
    %7330 = vmatpush1.msra.mxu0 %v5769
    %7331 = vmatprep.subr.mxu0 %v6068
    %7332 = vmatpush1.msra.mxu0 %v6067
    %7333 = vmatprep.subr.mxu0 %v6366
    %7334 = vmatpush1.msra.mxu0 %v6365
    %7335 = vmatprep.subr.mxu0 0.0
    %7336 = vmatpush1.msra.mxu0 0.0
    %7337 = vmatprep.subr.mxu0 0.0
    %7338 = vmatpush1.msra.mxu0 0.0
    %7339 = vmatprep.subr.mxu0 0.0
    %7340 = vmatpush1.msra.mxu0 0.0
    %7341 = vmatprep.subr.mxu0 0.0
    %7342 = vmatpush1.msra.mxu0 0.0
    %7343 = vmatprep.subr.mxu0 0.0
    %7344 = vmatpush1.msra.mxu0 0.0
    %7345 = vmatprep.subr.mxu0 0.0
    %7346 = vmatpush1.msra.mxu0 0.0
    %7347 = vmatprep.subr.mxu0 0.0
    %7348 = vmatpush1.msra.mxu0 0.0
    %7349 = vmatprep.subr.mxu0 0.0
    %7350 = vmatpush1.msra.mxu0 0.0
    %7351 = vmatprep.subr.mxu0 0.0
    %7352 = vmatpush1.msra.mxu0 0.0
    %7353 = vmatprep.subr.mxu0 0.0
    %7354 = vmatpush1.msra.mxu0 0.0
    %7355 = vmatprep.subr.mxu0 0.0
    %7356 = vmatpush1.msra.mxu0 0.0
    %7357 = vmatprep.subr.mxu0 0.0
    %7358 = vmatpush1.msra.mxu0 0.0
    %7359 = vmatprep.subr.mxu0 0.0
    %7360 = vmatpush1.msra.mxu0 0.0
    %7361 = vmatprep.subr.mxu0 0.0
    %7362 = vmatpush1.msra.mxu0 0.0
    %7363 = vmatprep.subr.mxu0 0.0
    %7364 = vmatpush1.msra.mxu0 0.0
    %7365 = vmatprep.subr.mxu0 0.0
    %7366 = vmatpush1.msra.mxu0 0.0
    %7367 = vmatprep.subr.mxu0 0.0
    %7368 = vmatpush1.msra.mxu0 0.0
    %7369 = vmatprep.subr.mxu0 0.0
    %7370 = vmatpush1.msra.mxu0 0.0
    %7371 = vmatprep.subr.mxu0 0.0
    %7372 = vmatpush1.msra.mxu0 0.0
    %7373 = vmatprep.subr.mxu0 0.0
    %7374 = vmatpush1.msra.mxu0 0.0
    %7375 = vmatprep.subr.mxu0 0.0
    %7376 = vmatpush1.msra.mxu0 0.0
    %7377 = vmatprep.subr.mxu0 0.0
    %7378 = vmatpush1.msra.mxu0 0.0
    %7379 = vmatprep.subr.mxu0 0.0
    %7380 = vmatpush1.msra.mxu0 0.0
    %7381 = vmatprep.mubr.f32.mxu0 0.0
    %7382 = vmatmul.mubr.f32.gmra.mrb[0].mxu0 %v6388
    %v7383 = vpop.f32.mrb[0].mxu0
    %v7384 = vadd.f32 %v6380, %v7383
    %v7385 = vpop.f32.mrb[0].mxu0
    %v7386 = vadd.f32 %v6380, %v7385
    %7387 = vmatprep.mubr.f32.mxu0 0.0
    %7388 = vmatmul.mubr.f32.gmra.mrb[0].mxu0 %v6391
    %v7389 = vpop.f32.mrb[0].mxu0
    %v7390 = vadd.f32 %v6385, %v7389
    %v7391 = vpop.f32.mrb[0].mxu0
    %v7392 = vadd.f32 %v6385, %v7391
    %7393 = vdwg.mxu0
    %7394 = vmatprep.subr.mxu0 %v4282
    %7395 = vmatpush1.msra.mxu0 %v4281
    %7396 = vmatprep.subr.mxu0 %v4580
    %7397 = vmatpush1.msra.mxu0 %v4579
    %7398 = vmatprep.subr.mxu0 %v4878
    %7399 = vmatpush1.msra.mxu0 %v4877
    %7400 = vmatprep.subr.mxu0 %v5176
    %7401 = vmatpush1.msra.mxu0 %v5175
    %7402 = vmatprep.subr.mxu0 %v3985
    %7403 = vmatpush1.msra.mxu0 %v3984
    %7404 = vmatprep.subr.mxu0 %v5474
    %7405 = vmatpush1.msra.mxu0 %v5473
    %7406 = vmatprep.subr.mxu0 %v5772
    %7407 = vmatpush1.msra.mxu0 %v5771
    %7408 = vmatprep.subr.mxu0 %v6070
    %7409 = vmatpush1.msra.mxu0 %v6069
    %7410 = vmatprep.subr.mxu0 %v6368
    %7411 = vmatpush1.msra.mxu0 %v6367
    %7412 = vmatprep.subr.mxu0 0.0
    %7413 = vmatpush1.msra.mxu0 0.0
    %7414 = vmatprep.subr.mxu0 0.0
    %7415 = vmatpush1.msra.mxu0 0.0
    %7416 = vmatprep.subr.mxu0 0.0
    %7417 = vmatpush1.msra.mxu0 0.0
    %7418 = vmatprep.subr.mxu0 0.0
    %7419 = vmatpush1.msra.mxu0 0.0
    %7420 = vmatprep.subr.mxu0 0.0
    %7421 = vmatpush1.msra.mxu0 0.0
    %7422 = vmatprep.subr.mxu0 0.0
    %7423 = vmatpush1.msra.mxu0 0.0
    %7424 = vmatprep.subr.mxu0 0.0
    %7425 = vmatpush1.msra.mxu0 0.0
    %7426 = vmatprep.subr.mxu0 0.0
    %7427 = vmatpush1.msra.mxu0 0.0
    %7428 = vmatprep.subr.mxu0 0.0
    %7429 = vmatpush1.msra.mxu0 0.0
    %7430 = vmatprep.subr.mxu0 0.0
    %7431 = vmatpush1.msra.mxu0 0.0
    %7432 = vmatprep.subr.mxu0 0.0
    %7433 = vmatpush1.msra.mxu0 0.0
    %7434 = vmatprep.subr.mxu0 0.0
    %7435 = vmatpush1.msra.mxu0 0.0
    %7436 = vmatprep.subr.mxu0 0.0
    %7437 = vmatpush1.msra.mxu0 0.0
    %7438 = vmatprep.subr.mxu0 0.0
    %7439 = vmatpush1.msra.mxu0 0.0
    %7440 = vmatprep.subr.mxu0 0.0
    %7441 = vmatpush1.msra.mxu0 0.0
    %7442 = vmatprep.subr.mxu0 0.0
    %7443 = vmatpush1.msra.mxu0 0.0
    %7444 = vmatprep.subr.mxu0 0.0
    %7445 = vmatpush1.msra.mxu0 0.0
    %7446 = vmatprep.subr.mxu0 0.0
    %7447 = vmatpush1.msra.mxu0 0.0
    %7448 = vmatprep.subr.mxu0 0.0
    %7449 = vmatpush1.msra.mxu0 0.0
    %7450 = vmatprep.subr.mxu0 0.0
    %7451 = vmatpush1.msra.mxu0 0.0
    %7452 = vmatprep.subr.mxu0 0.0
    %7453 = vmatpush1.msra.mxu0 0.0
    %7454 = vmatprep.subr.mxu0 0.0
    %7455 = vmatpush1.msra.mxu0 0.0
    %7456 = vmatprep.subr.mxu0 0.0
    %7457 = vmatpush1.msra.mxu0 0.0
    %7458 = vmatprep.mubr.f32.mxu0 0.0
    %7459 = vmatmul.mubr.f32.gmra.mrb[0].mxu0 %v6388
    %v7460 = vpop.f32.mrb[0].mxu0
    %v7461 = vadd.f32 %v6380, %v7460
    %v7462 = vpop.f32.mrb[0].mxu0
    %v7463 = vadd.f32 %v6380, %v7462
    %7464 = vmatprep.mubr.f32.mxu0 0.0
    %7465 = vmatmul.mubr.f32.gmra.mrb[0].mxu0 %v6391
    %v7466 = vpop.f32.mrb[0].mxu0
    %v7467 = vadd.f32 %v6385, %v7466
    %v7468 = vpop.f32.mrb[0].mxu0
    %v7469 = vadd.f32 %v6385, %v7468
    %7470 = vdwg.mxu0
    %7471 = vmatprep.subr.mxu0 %v4284
    %7472 = vmatpush1.msra.mxu0 %v4283
    %7473 = vmatprep.subr.mxu0 %v4582
    %7474 = vmatpush1.msra.mxu0 %v4581
    %7475 = vmatprep.subr.mxu0 %v4880
    %7476 = vmatpush1.msra.mxu0 %v4879
    %7477 = vmatprep.subr.mxu0 %v5178
    %7478 = vmatpush1.msra.mxu0 %v5177
    %7479 = vmatprep.subr.mxu0 %v3987
    %7480 = vmatpush1.msra.mxu0 %v3986
    %7481 = vmatprep.subr.mxu0 %v5476
    %7482 = vmatpush1.msra.mxu0 %v5475
    %7483 = vmatprep.subr.mxu0 %v5774
    %7484 = vmatpush1.msra.mxu0 %v5773
    %7485 = vmatprep.subr.mxu0 %v6072
    %7486 = vmatpush1.msra.mxu0 %v6071
    %7487 = vmatprep.subr.mxu0 %v6370
    %7488 = vmatpush1.msra.mxu0 %v6369
    %7489 = vmatprep.subr.mxu0 0.0
    %7490 = vmatpush1.msra.mxu0 0.0
    %7491 = vmatprep.subr.mxu0 0.0
    %7492 = vmatpush1.msra.mxu0 0.0
    %7493 = vmatprep.subr.mxu0 0.0
    %7494 = vmatpush1.msra.mxu0 0.0
    %7495 = vmatprep.subr.mxu0 0.0
    %7496 = vmatpush1.msra.mxu0 0.0
    %7497 = vmatprep.subr.mxu0 0.0
    %7498 = vmatpush1.msra.mxu0 0.0
    %7499 = vmatprep.subr.mxu0 0.0
    %7500 = vmatpush1.msra.mxu0 0.0
    %7501 = vmatprep.subr.mxu0 0.0
    %7502 = vmatpush1.msra.mxu0 0.0
    %7503 = vmatprep.subr.mxu0 0.0
    %7504 = vmatpush1.msra.mxu0 0.0
    %7505 = vmatprep.subr.mxu0 0.0
    %7506 = vmatpush1.msra.mxu0 0.0
    %7507 = vmatprep.subr.mxu0 0.0
    %7508 = vmatpush1.msra.mxu0 0.0
    %7509 = vmatprep.subr.mxu0 0.0
    %7510 = vmatpush1.msra.mxu0 0.0
    %7511 = vmatprep.subr.mxu0 0.0
    %7512 = vmatpush1.msra.mxu0 0.0
    %7513 = vmatprep.subr.mxu0 0.0
    %7514 = vmatpush1.msra.mxu0 0.0
    %7515 = vmatprep.subr.mxu0 0.0
    %7516 = vmatpush1.msra.mxu0 0.0
    %7517 = vmatprep.subr.mxu0 0.0
    %7518 = vmatpush1.msra.mxu0 0.0
    %7519 = vmatprep.subr.mxu0 0.0
    %7520 = vmatpush1.msra.mxu0 0.0
    %7521 = vmatprep.subr.mxu0 0.0
    %7522 = vmatpush1.msra.mxu0 0.0
    %7523 = vmatprep.subr.mxu0 0.0
    %7524 = vmatpush1.msra.mxu0 0.0
    %7525 = vmatprep.subr.mxu0 0.0
    %7526 = vmatpush1.msra.mxu0 0.0
    %7527 = vmatprep.subr.mxu0 0.0
    %7528 = vmatpush1.msra.mxu0 0.0
    %7529 = vmatprep.subr.mxu0 0.0
    %7530 = vmatpush1.msra.mxu0 0.0
    %7531 = vmatprep.subr.mxu0 0.0
    %7532 = vmatpush1.msra.mxu0 0.0
    %7533 = vmatprep.subr.mxu0 0.0
    %7534 = vmatpush1.msra.mxu0 0.0
    %7535 = vmatprep.mubr.f32.mxu0 0.0
    %7536 = vmatmul.mubr.f32.gmra.mrb[0].mxu0 %v6388
    %v7537 = vpop.f32.mrb[0].mxu0
    %v7538 = vadd.f32 %v6380, %v7537
    %v7539 = vpop.f32.mrb[0].mxu0
    %v7540 = vadd.f32 %v6380, %v7539
    %7541 = vmatprep.mubr.f32.mxu0 0.0
    %7542 = vmatmul.mubr.f32.gmra.mrb[0].mxu0 %v6391
    %v7543 = vpop.f32.mrb[0].mxu0
    %v7544 = vadd.f32 %v6385, %v7543
    %v7545 = vpop.f32.mrb[0].mxu0
    %v7546 = vadd.f32 %v6385, %v7545
    %7547 = vdwg.mxu0
    %7548 = vmatprep.subr.mxu0 %v4286
    %7549 = vmatpush1.msra.mxu0 %v4285
    %7550 = vmatprep.subr.mxu0 %v4584
    %7551 = vmatpush1.msra.mxu0 %v4583
    %7552 = vmatprep.subr.mxu0 %v4882
    %7553 = vmatpush1.msra.mxu0 %v4881
    %7554 = vmatprep.subr.mxu0 %v5180
    %7555 = vmatpush1.msra.mxu0 %v5179
    %7556 = vmatprep.subr.mxu0 %v3989
    %7557 = vmatpush1.msra.mxu0 %v3988
    %7558 = vmatprep.subr.mxu0 %v5478
    %7559 = vmatpush1.msra.mxu0 %v5477
    %7560 = vmatprep.subr.mxu0 %v5776
    %7561 = vmatpush1.msra.mxu0 %v5775
    %7562 = vmatprep.subr.mxu0 %v6074
    %7563 = vmatpush1.msra.mxu0 %v6073
    %7564 = vmatprep.subr.mxu0 %v6372
    %7565 = vmatpush1.msra.mxu0 %v6371
    %7566 = vmatprep.subr.mxu0 0.0
    %7567 = vmatpush1.msra.mxu0 0.0
    %7568 = vmatprep.subr.mxu0 0.0
    %7569 = vmatpush1.msra.mxu0 0.0
    %7570 = vmatprep.subr.mxu0 0.0
    %7571 = vmatpush1.msra.mxu0 0.0
    %7572 = vmatprep.subr.mxu0 0.0
    %7573 = vmatpush1.msra.mxu0 0.0
    %7574 = vmatprep.subr.mxu0 0.0
    %7575 = vmatpush1.msra.mxu0 0.0
    %7576 = vmatprep.subr.mxu0 0.0
    %7577 = vmatpush1.msra.mxu0 0.0
    %7578 = vmatprep.subr.mxu0 0.0
    %7579 = vmatpush1.msra.mxu0 0.0
    %7580 = vmatprep.subr.mxu0 0.0
    %7581 = vmatpush1.msra.mxu0 0.0
    %7582 = vmatprep.subr.mxu0 0.0
    %7583 = vmatpush1.msra.mxu0 0.0
    %7584 = vmatprep.subr.mxu0 0.0
    %7585 = vmatpush1.msra.mxu0 0.0
    %7586 = vmatprep.subr.mxu0 0.0
    %7587 = vmatpush1.msra.mxu0 0.0
    %7588 = vmatprep.subr.mxu0 0.0
    %7589 = vmatpush1.msra.mxu0 0.0
    %7590 = vmatprep.subr.mxu0 0.0
    %7591 = vmatpush1.msra.mxu0 0.0
    %7592 = vmatprep.subr.mxu0 0.0
    %7593 = vmatpush1.msra.mxu0 0.0
    %7594 = vmatprep.subr.mxu0 0.0
    %7595 = vmatpush1.msra.mxu0 0.0
    %7596 = vmatprep.subr.mxu0 0.0
    %7597 = vmatpush1.msra.mxu0 0.0
    %7598 = vmatprep.subr.mxu0 0.0
    %7599 = vmatpush1.msra.mxu0 0.0
    %7600 = vmatprep.subr.mxu0 0.0
    %7601 = vmatpush1.msra.mxu0 0.0
    %7602 = vmatprep.subr.mxu0 0.0
    %7603 = vmatpush1.msra.mxu0 0.0
    %7604 = vmatprep.subr.mxu0 0.0
    %7605 = vmatpush1.msra.mxu0 0.0
    %7606 = vmatprep.subr.mxu0 0.0
    %7607 = vmatpush1.msra.mxu0 0.0
    %7608 = vmatprep.subr.mxu0 0.0
    %7609 = vmatpush1.msra.mxu0 0.0
    %7610 = vmatprep.subr.mxu0 0.0
    %7611 = vmatpush1.msra.mxu0 0.0
    %7612 = vmatprep.mubr.f32.mxu0 0.0
    %7613 = vmatmul.mubr.f32.gmra.mrb[0].mxu0 %v6388
    %v7614 = vpop.f32.mrb[0].mxu0
    %v7615 = vadd.f32 %v6380, %v7614
    %v7616 = vpop.f32.mrb[0].mxu0
    %v7617 = vadd.f32 %v6380, %v7616
    %7618 = vmatprep.mubr.f32.mxu0 0.0
    %7619 = vmatmul.mubr.f32.gmra.mrb[0].mxu0 %v6391
    %v7620 = vpop.f32.mrb[0].mxu0
    %v7621 = vadd.f32 %v6385, %v7620
    %v7622 = vpop.f32.mrb[0].mxu0
    %v7623 = vadd.f32 %v6385, %v7622
    %7624 = vdwg.mxu0
    %v7625 = vmax.f32 %v6460, 0.0
    %v7626 = vmax.f32 %v6462, 0.0
    %v7627 = vmax.f32 %v6537, 0.0
    %v7628 = vmax.f32 %v6539, 0.0
    %v7629 = vmax.f32 %v6614, 0.0
    %v7630 = vmax.f32 %v6616, 0.0
    %v7631 = vmax.f32 %v6691, 0.0
    %v7632 = vmax.f32 %v6693, 0.0
    %v7633 = vmax.f32 %v6768, 0.0
    %v7634 = vmax.f32 %v6770, 0.0
    %v7635 = vmax.f32 %v6845, 0.0
    %v7636 = vmax.f32 %v6847, 0.0
    %v7637 = vmax.f32 %v6922, 0.0
    %v7638 = vmax.f32 %v6924, 0.0
    %v7639 = vmax.f32 %v6999, 0.0
    %v7640 = vmax.f32 %v7001, 0.0
    %v7641 = vmax.f32 %v7076, 0.0
    %v7642 = vmax.f32 %v7078, 0.0
    %v7643 = vmax.f32 %v7153, 0.0
    %v7644 = vmax.f32 %v7155, 0.0
    %v7645 = vmax.f32 %v7230, 0.0
    %v7646 = vmax.f32 %v7232, 0.0
    %v7647 = vmax.f32 %v7307, 0.0
    %v7648 = vmax.f32 %v7309, 0.0
    %v7649 = vmax.f32 %v7384, 0.0
    %v7650 = vmax.f32 %v7386, 0.0
    %v7651 = vmax.f32 %v7461, 0.0
    %v7652 = vmax.f32 %v7463, 0.0
    %v7653 = vmax.f32 %v7538, 0.0
    %v7654 = vmax.f32 %v7540, 0.0
    %v7655 = vmax.f32 %v7615, 0.0
    %v7656 = vmax.f32 %v7617, 0.0
    %v7657 = vmax.f32 %v6466, 0.0
    %v7658 = vmax.f32 %v6468, 0.0
    %v7659 = vmax.f32 %v6543, 0.0
    %v7660 = vmax.f32 %v6545, 0.0
    %v7661 = vmax.f32 %v6620, 0.0
    %v7662 = vmax.f32 %v6622, 0.0
    %v7663 = vmax.f32 %v6697, 0.0
    %v7664 = vmax.f32 %v6699, 0.0
    %v7665 = vmax.f32 %v6774, 0.0
    %v7666 = vmax.f32 %v6776, 0.0
    %v7667 = vmax.f32 %v6851, 0.0
    %v7668 = vmax.f32 %v6853, 0.0
    %v7669 = vmax.f32 %v6928, 0.0
    %v7670 = vmax.f32 %v6930, 0.0
    %v7671 = vmax.f32 %v7005, 0.0
    %v7672 = vmax.f32 %v7007, 0.0
    %v7673 = vmax.f32 %v7082, 0.0
    %v7674 = vmax.f32 %v7084, 0.0
    %v7675 = vmax.f32 %v7159, 0.0
    %v7676 = vmax.f32 %v7161, 0.0
    %v7677 = vmax.f32 %v7236, 0.0
    %v7678 = vmax.f32 %v7238, 0.0
    %v7679 = vmax.f32 %v7313, 0.0
    %v7680 = vmax.f32 %v7315, 0.0
    %v7681 = vmax.f32 %v7390, 0.0
    %v7682 = vmax.f32 %v7392, 0.0
    %v7683 = vmax.f32 %v7467, 0.0
    %v7684 = vmax.f32 %v7469, 0.0
    %v7685 = vmax.f32 %v7544, 0.0
    %v7686 = vmax.f32 %v7546, 0.0
    %v7687 = vmax.f32 %v7621, 0.0
    %v7688 = vmax.f32 %v7623, 0.0
    %7689 = vrot.lane.b32.xlu0 %v7625, 126
    %v7690 = vpop.permute.xlu0 %7689
    %7691 = vrot.lane.b32.xlu0 %v7657, 126
    %v7692 = vpop.permute.xlu0 %7691
    %7693 = vrot.lane.b32.xlu0 %v7626, 126
    %v7694 = vpop.permute.xlu0 %7693
    %7695 = vrot.lane.b32.xlu0 %v7658, 126
    %v7696 = vpop.permute.xlu0 %7695
    %7697 = vrot.lane.b32.xlu0 %v7627, 126
    %v7698 = vpop.permute.xlu0 %7697
    %7699 = vrot.lane.b32.xlu0 %v7659, 126
    %v7700 = vpop.permute.xlu0 %7699
    %7701 = vrot.lane.b32.xlu0 %v7628, 126
    %v7702 = vpop.permute.xlu0 %7701
    %7703 = vrot.lane.b32.xlu0 %v7660, 126
    %v7704 = vpop.permute.xlu0 %7703
    %7705 = vrot.lane.b32.xlu0 %v7629, 126
    %v7706 = vpop.permute.xlu0 %7705
    %7707 = vrot.lane.b32.xlu0 %v7661, 126
    %v7708 = vpop.permute.xlu0 %7707
    %7709 = vrot.lane.b32.xlu0 %v7630, 126
    %v7710 = vpop.permute.xlu0 %7709
    %7711 = vrot.lane.b32.xlu0 %v7662, 126
    %v7712 = vpop.permute.xlu0 %7711
    %7713 = vrot.lane.b32.xlu0 %v7631, 126
    %v7714 = vpop.permute.xlu0 %7713
    %7715 = vrot.lane.b32.xlu0 %v7663, 126
    %v7716 = vpop.permute.xlu0 %7715
    %7717 = vrot.lane.b32.xlu0 %v7632, 126
    %v7718 = vpop.permute.xlu0 %7717
    %7719 = vrot.lane.b32.xlu0 %v7664, 126
    %v7720 = vpop.permute.xlu0 %7719
    %7721 = vrot.lane.b32.xlu0 %v7633, 126
    %v7722 = vpop.permute.xlu0 %7721
    %7723 = vrot.lane.b32.xlu0 %v7665, 126
    %v7724 = vpop.permute.xlu0 %7723
    %7725 = vrot.lane.b32.xlu0 %v7634, 126
    %v7726 = vpop.permute.xlu0 %7725
    %7727 = vrot.lane.b32.xlu0 %v7666, 126
    %v7728 = vpop.permute.xlu0 %7727
    %7729 = vrot.lane.b32.xlu0 %v7635, 126
    %v7730 = vpop.permute.xlu0 %7729
    %7731 = vrot.lane.b32.xlu0 %v7667, 126
    %v7732 = vpop.permute.xlu0 %7731
    %7733 = vrot.lane.b32.xlu0 %v7636, 126
    %v7734 = vpop.permute.xlu0 %7733
    %7735 = vrot.lane.b32.xlu0 %v7668, 126
    %v7736 = vpop.permute.xlu0 %7735
    %7737 = vrot.lane.b32.xlu0 %v7637, 126
    %v7738 = vpop.permute.xlu0 %7737
    %7739 = vrot.lane.b32.xlu0 %v7669, 126
    %v7740 = vpop.permute.xlu0 %7739
    %7741 = vrot.lane.b32.xlu0 %v7638, 126
    %v7742 = vpop.permute.xlu0 %7741
    %7743 = vrot.lane.b32.xlu0 %v7670, 126
    %v7744 = vpop.permute.xlu0 %7743
    %7745 = vrot.lane.b32.xlu0 %v7639, 126
    %v7746 = vpop.permute.xlu0 %7745
    %7747 = vrot.lane.b32.xlu0 %v7671, 126
    %v7748 = vpop.permute.xlu0 %7747
    %7749 = vrot.lane.b32.xlu0 %v7640, 126
    %v7750 = vpop.permute.xlu0 %7749
    %7751 = vrot.lane.b32.xlu0 %v7672, 126
    %v7752 = vpop.permute.xlu0 %7751
    %7753 = vrot.lane.b32.xlu0 %v7641, 126
    %v7754 = vpop.permute.xlu0 %7753
    %7755 = vrot.lane.b32.xlu0 %v7673, 126
    %v7756 = vpop.permute.xlu0 %7755
    %7757 = vrot.lane.b32.xlu0 %v7642, 126
    %v7758 = vpop.permute.xlu0 %7757
    %7759 = vrot.lane.b32.xlu0 %v7674, 126
    %v7760 = vpop.permute.xlu0 %7759
    %7761 = vrot.lane.b32.xlu0 %v7643, 126
    %v7762 = vpop.permute.xlu0 %7761
    %7763 = vrot.lane.b32.xlu0 %v7675, 126
    %v7764 = vpop.permute.xlu0 %7763
    %7765 = vrot.lane.b32.xlu0 %v7644, 126
    %v7766 = vpop.permute.xlu0 %7765
    %7767 = vrot.lane.b32.xlu0 %v7676, 126
    %v7768 = vpop.permute.xlu0 %7767
    %7769 = vrot.lane.b32.xlu0 %v7645, 126
    %v7770 = vpop.permute.xlu0 %7769
    %7771 = vrot.lane.b32.xlu0 %v7677, 126
    %v7772 = vpop.permute.xlu0 %7771
    %7773 = vrot.lane.b32.xlu0 %v7646, 126
    %v7774 = vpop.permute.xlu0 %7773
    %7775 = vrot.lane.b32.xlu0 %v7678, 126
    %v7776 = vpop.permute.xlu0 %7775
    %7777 = vrot.lane.b32.xlu0 %v7647, 126
    %v7778 = vpop.permute.xlu0 %7777
    %7779 = vrot.lane.b32.xlu0 %v7679, 126
    %v7780 = vpop.permute.xlu0 %7779
    %7781 = vrot.lane.b32.xlu0 %v7648, 126
    %v7782 = vpop.permute.xlu0 %7781
    %7783 = vrot.lane.b32.xlu0 %v7680, 126
    %v7784 = vpop.permute.xlu0 %7783
    %7785 = vrot.lane.b32.xlu0 %v7649, 126
    %v7786 = vpop.permute.xlu0 %7785
    %7787 = vrot.lane.b32.xlu0 %v7681, 126
    %v7788 = vpop.permute.xlu0 %7787
    %7789 = vrot.lane.b32.xlu0 %v7650, 126
    %v7790 = vpop.permute.xlu0 %7789
    %7791 = vrot.lane.b32.xlu0 %v7682, 126
    %v7792 = vpop.permute.xlu0 %7791
    %7793 = vrot.lane.b32.xlu0 %v7651, 126
    %v7794 = vpop.permute.xlu0 %7793
    %7795 = vrot.lane.b32.xlu0 %v7683, 126
    %v7796 = vpop.permute.xlu0 %7795
    %7797 = vrot.lane.b32.xlu0 %v7652, 126
    %v7798 = vpop.permute.xlu0 %7797
    %7799 = vrot.lane.b32.xlu0 %v7684, 126
    %v7800 = vpop.permute.xlu0 %7799
    %7801 = vrot.lane.b32.xlu0 %v7653, 126
    %v7802 = vpop.permute.xlu0 %7801
    %7803 = vrot.lane.b32.xlu0 %v7685, 126
    %v7804 = vpop.permute.xlu0 %7803
    %7805 = vrot.lane.b32.xlu0 %v7654, 126
    %v7806 = vpop.permute.xlu0 %7805
    %7807 = vrot.lane.b32.xlu0 %v7686, 126
    %v7808 = vpop.permute.xlu0 %7807
    %7809 = vrot.lane.b32.xlu0 %v7655, 126
    %v7810 = vpop.permute.xlu0 %7809
    %7811 = vrot.lane.b32.xlu0 %v7687, 126
    %v7812 = vpop.permute.xlu0 %7811
    %7813 = vrot.lane.b32.xlu0 %v7656, 126
    %v7814 = vpop.permute.xlu0 %7813
    %7815 = vrot.lane.b32.xlu0 %v7688, 126
    %v7816 = vpop.permute.xlu0 %7815
    %v7817 = vsel %vm5245, %v7810, %v7814
    %v7818 = vsel %vm5245, %v7812, %v7816
    %v7819 = vsel %vm5245, %v7806, %v7810
    %v7820 = vsel %vm5245, %v7808, %v7812
    %v7821 = vsel %vm5245, %v7802, %v7806
    %v7822 = vsel %vm5245, %v7804, %v7808
    %v7823 = vsel %vm5245, %v7798, %v7802
    %v7824 = vsel %vm5245, %v7800, %v7804
    %v7825 = vsel %vm5245, %v7794, %v7798
    %v7826 = vsel %vm5245, %v7796, %v7800
    %v7827 = vsel %vm5245, %v7790, %v7794
    %v7828 = vsel %vm5245, %v7792, %v7796
    %v7829 = vsel %vm5245, %v7786, %v7790
    %v7830 = vsel %vm5245, %v7788, %v7792
    %v7831 = vsel %vm5245, %v7782, %v7786
    %v7832 = vsel %vm5245, %v7784, %v7788
    %v7833 = vsel %vm5245, %v7778, %v7782
    %v7834 = vsel %vm5245, %v7780, %v7784
    %v7835 = vsel %vm5245, %v7774, %v7778
    %v7836 = vsel %vm5245, %v7776, %v7780
    %v7837 = vsel %vm5245, %v7770, %v7774
    %v7838 = vsel %vm5245, %v7772, %v7776
    %v7839 = vsel %vm5245, %v7766, %v7770
    %v7840 = vsel %vm5245, %v7768, %v7772
    %v7841 = vsel %vm5245, %v7762, %v7766
    %v7842 = vsel %vm5245, %v7764, %v7768
    %v7843 = vsel %vm5245, %v7758, %v7762
    %v7844 = vsel %vm5245, %v7760, %v7764
    %v7845 = vsel %vm5245, %v7754, %v7758
    %v7846 = vsel %vm5245, %v7756, %v7760
    %v7847 = vsel %vm5245, %v7750, %v7754
    %v7848 = vsel %vm5245, %v7752, %v7756
    %v7849 = vsel %vm5245, %v7746, %v7750
    %v7850 = vsel %vm5245, %v7748, %v7752
    %v7851 = vsel %vm5245, %v7742, %v7746
    %v7852 = vsel %vm5245, %v7744, %v7748
    %v7853 = vsel %vm5245, %v7738, %v7742
    %v7854 = vsel %vm5245, %v7740, %v7744
    %v7855 = vsel %vm5245, %v7734, %v7738
    %v7856 = vsel %vm5245, %v7736, %v7740
    %v7857 = vsel %vm5245, %v7730, %v7734
    %v7858 = vsel %vm5245, %v7732, %v7736
    %v7859 = vsel %vm5245, %v7726, %v7730
    %v7860 = vsel %vm5245, %v7728, %v7732
    %v7861 = vsel %vm5245, %v7722, %v7726
    %v7862 = vsel %vm5245, %v7724, %v7728
    %v7863 = vsel %vm5245, %v7718, %v7722
    %v7864 = vsel %vm5245, %v7720, %v7724
    %v7865 = vsel %vm5245, %v7714, %v7718
    %v7866 = vsel %vm5245, %v7716, %v7720
    %v7867 = vsel %vm5245, %v7710, %v7714
    %v7868 = vsel %vm5245, %v7712, %v7716
    %v7869 = vsel %vm5245, %v7706, %v7710
    %v7870 = vsel %vm5245, %v7708, %v7712
    %v7871 = vsel %vm5245, %v7702, %v7706
    %v7872 = vsel %vm5245, %v7704, %v7708
    %v7873 = vsel %vm5245, %v7698, %v7702
    %v7874 = vsel %vm5245, %v7700, %v7704
    %v7875 = vsel %vm5245, %v7694, %v7698
    %v7876 = vsel %vm5245, %v7696, %v7700
    %v7877 = vsel %vm5245, %v7690, %v7694
    %v7878 = vsel %vm5245, %v7692, %v7696
    %v7879 = vsel %vm5245, %v7814, %v7690
    %v7880 = vsel %vm5245, %v7816, %v7692
    %v7881 = vmax.f32 %v7625, %v7877
    %v7882 = vmax.f32 %v7626, %v7875
    %v7883 = vmax.f32 %v7627, %v7873
    %v7884 = vmax.f32 %v7628, %v7871
    %v7885 = vmax.f32 %v7629, %v7869
    %v7886 = vmax.f32 %v7630, %v7867
    %v7887 = vmax.f32 %v7631, %v7865
    %v7888 = vmax.f32 %v7632, %v7863
    %v7889 = vmax.f32 %v7633, %v7861
    %v7890 = vmax.f32 %v7634, %v7859
    %v7891 = vmax.f32 %v7635, %v7857
    %v7892 = vmax.f32 %v7636, %v7855
    %v7893 = vmax.f32 %v7637, %v7853
    %v7894 = vmax.f32 %v7638, %v7851
    %v7895 = vmax.f32 %v7639, %v7849
    %v7896 = vmax.f32 %v7640, %v7847
    %v7897 = vmax.f32 %v7641, %v7845
    %v7898 = vmax.f32 %v7642, %v7843
    %v7899 = vmax.f32 %v7643, %v7841
    %v7900 = vmax.f32 %v7644, %v7839
    %v7901 = vmax.f32 %v7645, %v7837
    %v7902 = vmax.f32 %v7646, %v7835
    %v7903 = vmax.f32 %v7647, %v7833
    %v7904 = vmax.f32 %v7648, %v7831
    %v7905 = vmax.f32 %v7649, %v7829
    %v7906 = vmax.f32 %v7650, %v7827
    %v7907 = vmax.f32 %v7651, %v7825
    %v7908 = vmax.f32 %v7652, %v7823
    %v7909 = vmax.f32 %v7653, %v7821
    %v7910 = vmax.f32 %v7654, %v7819
    %v7911 = vmax.f32 %v7655, %v7817
    %v7912 = vmax.f32 %v7656, %v7879
    %v7913 = vmax.f32 %v7657, %v7878
    %v7914 = vmax.f32 %v7658, %v7876
    %v7915 = vmax.f32 %v7659, %v7874
    %v7916 = vmax.f32 %v7660, %v7872
    %v7917 = vmax.f32 %v7661, %v7870
    %v7918 = vmax.f32 %v7662, %v7868
    %v7919 = vmax.f32 %v7663, %v7866
    %v7920 = vmax.f32 %v7664, %v7864
    %v7921 = vmax.f32 %v7665, %v7862
    %v7922 = vmax.f32 %v7666, %v7860
    %v7923 = vmax.f32 %v7667, %v7858
    %v7924 = vmax.f32 %v7668, %v7856
    %v7925 = vmax.f32 %v7669, %v7854
    %v7926 = vmax.f32 %v7670, %v7852
    %v7927 = vmax.f32 %v7671, %v7850
    %v7928 = vmax.f32 %v7672, %v7848
    %v7929 = vmax.f32 %v7673, %v7846
    %v7930 = vmax.f32 %v7674, %v7844
    %v7931 = vmax.f32 %v7675, %v7842
    %v7932 = vmax.f32 %v7676, %v7840
    %v7933 = vmax.f32 %v7677, %v7838
    %v7934 = vmax.f32 %v7678, %v7836
    %v7935 = vmax.f32 %v7679, %v7834
    %v7936 = vmax.f32 %v7680, %v7832
    %v7937 = vmax.f32 %v7681, %v7830
    %v7938 = vmax.f32 %v7682, %v7828
    %v7939 = vmax.f32 %v7683, %v7826
    %v7940 = vmax.f32 %v7684, %v7824
    %v7941 = vmax.f32 %v7685, %v7822
    %v7942 = vmax.f32 %v7686, %v7820
    %v7943 = vmax.f32 %v7687, %v7818
    %v7944 = vmax.f32 %v7688, %v7880
    %7945 = vrot.lane.b32.xlu0 %v7881, 96
    %v7946 = vpop.permute.xlu0 %7945
    %7947 = vrot.lane.b32.xlu0 %v7913, 96
    %v7948 = vpop.permute.xlu0 %7947
    %7949 = vrot.lane.b32.xlu0 %v7882, 96
    %v7950 = vpop.permute.xlu0 %7949
    %7951 = vrot.lane.b32.xlu0 %v7914, 96
    %v7952 = vpop.permute.xlu0 %7951
    %7953 = vrot.lane.b32.xlu0 %v7883, 96
    %v7954 = vpop.permute.xlu0 %7953
    %7955 = vrot.lane.b32.xlu0 %v7915, 96
    %v7956 = vpop.permute.xlu0 %7955
    %7957 = vrot.lane.b32.xlu0 %v7884, 96
    %v7958 = vpop.permute.xlu0 %7957
    %7959 = vrot.lane.b32.xlu0 %v7916, 96
    %v7960 = vpop.permute.xlu0 %7959
    %7961 = vrot.lane.b32.xlu0 %v7885, 96
    %v7962 = vpop.permute.xlu0 %7961
    %7963 = vrot.lane.b32.xlu0 %v7917, 96
    %v7964 = vpop.permute.xlu0 %7963
    %7965 = vrot.lane.b32.xlu0 %v7886, 96
    %v7966 = vpop.permute.xlu0 %7965
    %7967 = vrot.lane.b32.xlu0 %v7918, 96
    %v7968 = vpop.permute.xlu0 %7967
    %7969 = vrot.lane.b32.xlu0 %v7887, 96
    %v7970 = vpop.permute.xlu0 %7969
    %7971 = vrot.lane.b32.xlu0 %v7919, 96
    %v7972 = vpop.permute.xlu0 %7971
    %7973 = vrot.lane.b32.xlu0 %v7888, 96
    %v7974 = vpop.permute.xlu0 %7973
    %7975 = vrot.lane.b32.xlu0 %v7920, 96
    %v7976 = vpop.permute.xlu0 %7975
    %7977 = vrot.lane.b32.xlu0 %v7889, 96
    %v7978 = vpop.permute.xlu0 %7977
    %7979 = vrot.lane.b32.xlu0 %v7921, 96
    %v7980 = vpop.permute.xlu0 %7979
    %7981 = vrot.lane.b32.xlu0 %v7890, 96
    %v7982 = vpop.permute.xlu0 %7981
    %7983 = vrot.lane.b32.xlu0 %v7922, 96
    %v7984 = vpop.permute.xlu0 %7983
    %7985 = vrot.lane.b32.xlu0 %v7891, 96
    %v7986 = vpop.permute.xlu0 %7985
    %7987 = vrot.lane.b32.xlu0 %v7923, 96
    %v7988 = vpop.permute.xlu0 %7987
    %7989 = vrot.lane.b32.xlu0 %v7892, 96
    %v7990 = vpop.permute.xlu0 %7989
    %7991 = vrot.lane.b32.xlu0 %v7924, 96
    %v7992 = vpop.permute.xlu0 %7991
    %7993 = vrot.lane.b32.xlu0 %v7893, 96
    %v7994 = vpop.permute.xlu0 %7993
    %7995 = vrot.lane.b32.xlu0 %v7925, 96
    %v7996 = vpop.permute.xlu0 %7995
    %7997 = vrot.lane.b32.xlu0 %v7894, 96
    %v7998 = vpop.permute.xlu0 %7997
    %7999 = vrot.lane.b32.xlu0 %v7926, 96
    %v8000 = vpop.permute.xlu0 %7999
    %8001 = vrot.lane.b32.xlu0 %v7895, 96
    %v8002 = vpop.permute.xlu0 %8001
    %8003 = vrot.lane.b32.xlu0 %v7927, 96
    %v8004 = vpop.permute.xlu0 %8003
    %8005 = vrot.lane.b32.xlu0 %v7896, 96
    %v8006 = vpop.permute.xlu0 %8005
    %8007 = vrot.lane.b32.xlu0 %v7928, 96
    %v8008 = vpop.permute.xlu0 %8007
    %8009 = vrot.lane.b32.xlu0 %v7897, 96
    %v8010 = vpop.permute.xlu0 %8009
    %8011 = vrot.lane.b32.xlu0 %v7929, 96
    %v8012 = vpop.permute.xlu0 %8011
    %8013 = vrot.lane.b32.xlu0 %v7898, 96
    %v8014 = vpop.permute.xlu0 %8013
    %8015 = vrot.lane.b32.xlu0 %v7930, 96
    %v8016 = vpop.permute.xlu0 %8015
    %8017 = vrot.lane.b32.xlu0 %v7899, 96
    %v8018 = vpop.permute.xlu0 %8017
    %8019 = vrot.lane.b32.xlu0 %v7931, 96
    %v8020 = vpop.permute.xlu0 %8019
    %8021 = vrot.lane.b32.xlu0 %v7900, 96
    %v8022 = vpop.permute.xlu0 %8021
    %8023 = vrot.lane.b32.xlu0 %v7932, 96
    %v8024 = vpop.permute.xlu0 %8023
    %8025 = vrot.lane.b32.xlu0 %v7901, 96
    %v8026 = vpop.permute.xlu0 %8025
    %8027 = vrot.lane.b32.xlu0 %v7933, 96
    %v8028 = vpop.permute.xlu0 %8027
    %8029 = vrot.lane.b32.xlu0 %v7902, 96
    %v8030 = vpop.permute.xlu0 %8029
    %8031 = vrot.lane.b32.xlu0 %v7934, 96
    %v8032 = vpop.permute.xlu0 %8031
    %8033 = vrot.lane.b32.xlu0 %v7903, 96
    %v8034 = vpop.permute.xlu0 %8033
    %8035 = vrot.lane.b32.xlu0 %v7935, 96
    %v8036 = vpop.permute.xlu0 %8035
    %8037 = vrot.lane.b32.xlu0 %v7904, 96
    %v8038 = vpop.permute.xlu0 %8037
    %8039 = vrot.lane.b32.xlu0 %v7936, 96
    %v8040 = vpop.permute.xlu0 %8039
    %8041 = vrot.lane.b32.xlu0 %v7905, 96
    %v8042 = vpop.permute.xlu0 %8041
    %8043 = vrot.lane.b32.xlu0 %v7937, 96
    %v8044 = vpop.permute.xlu0 %8043
    %8045 = vrot.lane.b32.xlu0 %v7906, 96
    %v8046 = vpop.permute.xlu0 %8045
    %8047 = vrot.lane.b32.xlu0 %v7938, 96
    %v8048 = vpop.permute.xlu0 %8047
    %8049 = vrot.lane.b32.xlu0 %v7907, 96
    %v8050 = vpop.permute.xlu0 %8049
    %8051 = vrot.lane.b32.xlu0 %v7939, 96
    %v8052 = vpop.permute.xlu0 %8051
    %8053 = vrot.lane.b32.xlu0 %v7908, 96
    %v8054 = vpop.permute.xlu0 %8053
    %8055 = vrot.lane.b32.xlu0 %v7940, 96
    %v8056 = vpop.permute.xlu0 %8055
    %8057 = vrot.lane.b32.xlu0 %v7909, 96
    %v8058 = vpop.permute.xlu0 %8057
    %8059 = vrot.lane.b32.xlu0 %v7941, 96
    %v8060 = vpop.permute.xlu0 %8059
    %8061 = vrot.lane.b32.xlu0 %v7910, 96
    %v8062 = vpop.permute.xlu0 %8061
    %8063 = vrot.lane.b32.xlu0 %v7942, 96
    %v8064 = vpop.permute.xlu0 %8063
    %8065 = vrot.lane.b32.xlu0 %v7911, 96
    %v8066 = vpop.permute.xlu0 %8065
    %8067 = vrot.lane.b32.xlu0 %v7943, 96
    %v8068 = vpop.permute.xlu0 %8067
    %8069 = vrot.lane.b32.xlu0 %v7912, 96
    %v8070 = vpop.permute.xlu0 %8069
    %8071 = vrot.lane.b32.xlu0 %v7944, 96
    %v8072 = vpop.permute.xlu0 %8071
    %v8073 = vsel %vm5841, %v8066, %v8070
    %v8074 = vsel %vm5841, %v8068, %v8072
    %v8075 = vsel %vm5841, %v8062, %v8066
    %v8076 = vsel %vm5841, %v8064, %v8068
    %v8077 = vsel %vm5841, %v8058, %v8062
    %v8078 = vsel %vm5841, %v8060, %v8064
    %v8079 = vsel %vm5841, %v8054, %v8058
    %v8080 = vsel %vm5841, %v8056, %v8060
    %v8081 = vsel %vm5841, %v8050, %v8054
    %v8082 = vsel %vm5841, %v8052, %v8056
    %v8083 = vsel %vm5841, %v8046, %v8050
    %v8084 = vsel %vm5841, %v8048, %v8052
    %v8085 = vsel %vm5841, %v8042, %v8046
    %v8086 = vsel %vm5841, %v8044, %v8048
    %v8087 = vsel %vm5841, %v8038, %v8042
    %v8088 = vsel %vm5841, %v8040, %v8044
    %v8089 = vsel %vm5841, %v8034, %v8038
    %v8090 = vsel %vm5841, %v8036, %v8040
    %v8091 = vsel %vm5841, %v8030, %v8034
    %v8092 = vsel %vm5841, %v8032, %v8036
    %v8093 = vsel %vm5841, %v8026, %v8030
    %v8094 = vsel %vm5841, %v8028, %v8032
    %v8095 = vsel %vm5841, %v8022, %v8026
    %v8096 = vsel %vm5841, %v8024, %v8028
    %v8097 = vsel %vm5841, %v8018, %v8022
    %v8098 = vsel %vm5841, %v8020, %v8024
    %v8099 = vsel %vm5841, %v8014, %v8018
    %v8100 = vsel %vm5841, %v8016, %v8020
    %v8101 = vsel %vm5841, %v8010, %v8014
    %v8102 = vsel %vm5841, %v8012, %v8016
    %v8103 = vsel %vm5841, %v8006, %v8010
    %v8104 = vsel %vm5841, %v8008, %v8012
    %v8105 = vsel %vm5841, %v8002, %v8006
    %v8106 = vsel %vm5841, %v8004, %v8008
    %v8107 = vsel %vm5841, %v7998, %v8002
    %v8108 = vsel %vm5841, %v8000, %v8004
    %v8109 = vsel %vm5841, %v7994, %v7998
    %v8110 = vsel %vm5841, %v7996, %v8000
    %v8111 = vsel %vm5841, %v7990, %v7994
    %v8112 = vsel %vm5841, %v7992, %v7996
    %v8113 = vsel %vm5841, %v7986, %v7990
    %v8114 = vsel %vm5841, %v7988, %v7992
    %v8115 = vsel %vm5841, %v7982, %v7986
    %v8116 = vsel %vm5841, %v7984, %v7988
    %v8117 = vsel %vm5841, %v7978, %v7982
    %v8118 = vsel %vm5841, %v7980, %v7984
    %v8119 = vsel %vm5841, %v7974, %v7978
    %v8120 = vsel %vm5841, %v7976, %v7980
    %v8121 = vsel %vm5841, %v7970, %v7974
    %v8122 = vsel %vm5841, %v7972, %v7976
    %v8123 = vsel %vm5841, %v7966, %v7970
    %v8124 = vsel %vm5841, %v7968, %v7972
    %v8125 = vsel %vm5841, %v7962, %v7966
    %v8126 = vsel %vm5841, %v7964, %v7968
    %v8127 = vsel %vm5841, %v7958, %v7962
    %v8128 = vsel %vm5841, %v7960, %v7964
    %v8129 = vsel %vm5841, %v7954, %v7958
    %v8130 = vsel %vm5841, %v7956, %v7960
    %v8131 = vsel %vm5841, %v7950, %v7954
    %v8132 = vsel %vm5841, %v7952, %v7956
    %v8133 = vsel %vm5841, %v7946, %v7950
    %v8134 = vsel %vm5841, %v7948, %v7952
    %v8135 = vsel %vm5841, %v8070, %v7946
    %v8136 = vsel %vm5841, %v8072, %v7948
    %v8137 = vmax.f32 %v7881, %v8133
    %v8138 = vmax.f32 %v7882, %v8131
    %v8139 = vmax.f32 %v7883, %v8129
    %v8140 = vmax.f32 %v7884, %v8127
    %v8141 = vmax.f32 %v7885, %v8125
    %v8142 = vmax.f32 %v7886, %v8123
    %v8143 = vmax.f32 %v7887, %v8121
    %v8144 = vmax.f32 %v7888, %v8119
    %v8145 = vmax.f32 %v7889, %v8117
    %v8146 = vmax.f32 %v7890, %v8115
    %v8147 = vmax.f32 %v7891, %v8113
    %v8148 = vmax.f32 %v7892, %v8111
    %v8149 = vmax.f32 %v7893, %v8109
    %v8150 = vmax.f32 %v7894, %v8107
    %v8151 = vmax.f32 %v7895, %v8105
    %v8152 = vmax.f32 %v7896, %v8103
    %v8153 = vmax.f32 %v7897, %v8101
    %v8154 = vmax.f32 %v7898, %v8099
    %v8155 = vmax.f32 %v7899, %v8097
    %v8156 = vmax.f32 %v7900, %v8095
    %v8157 = vmax.f32 %v7901, %v8093
    %v8158 = vmax.f32 %v7902, %v8091
    %v8159 = vmax.f32 %v7903, %v8089
    %v8160 = vmax.f32 %v7904, %v8087
    %v8161 = vmax.f32 %v7905, %v8085
    %v8162 = vmax.f32 %v7906, %v8083
    %v8163 = vmax.f32 %v7907, %v8081
    %v8164 = vmax.f32 %v7908, %v8079
    %v8165 = vmax.f32 %v7909, %v8077
    %v8166 = vmax.f32 %v7910, %v8075
    %v8167 = vmax.f32 %v7911, %v8073
    %v8168 = vmax.f32 %v7912, %v8135
    %v8169 = vmax.f32 %v7913, %v8134
    %v8170 = vmax.f32 %v7914, %v8132
    %v8171 = vmax.f32 %v7915, %v8130
    %v8172 = vmax.f32 %v7916, %v8128
    %v8173 = vmax.f32 %v7917, %v8126
    %v8174 = vmax.f32 %v7918, %v8124
    %v8175 = vmax.f32 %v7919, %v8122
    %v8176 = vmax.f32 %v7920, %v8120
    %v8177 = vmax.f32 %v7921, %v8118
    %v8178 = vmax.f32 %v7922, %v8116
    %v8179 = vmax.f32 %v7923, %v8114
    %v8180 = vmax.f32 %v7924, %v8112
    %v8181 = vmax.f32 %v7925, %v8110
    %v8182 = vmax.f32 %v7926, %v8108
    %v8183 = vmax.f32 %v7927, %v8106
    %v8184 = vmax.f32 %v7928, %v8104
    %v8185 = vmax.f32 %v7929, %v8102
    %v8186 = vmax.f32 %v7930, %v8100
    %v8187 = vmax.f32 %v7931, %v8098
    %v8188 = vmax.f32 %v7932, %v8096
    %v8189 = vmax.f32 %v7933, %v8094
    %v8190 = vmax.f32 %v7934, %v8092
    %v8191 = vmax.f32 %v7935, %v8090
    %v8192 = vmax.f32 %v7936, %v8088
    %v8193 = vmax.f32 %v7937, %v8086
    %v8194 = vmax.f32 %v7938, %v8084
    %v8195 = vmax.f32 %v7939, %v8082
    %v8196 = vmax.f32 %v7940, %v8080
    %v8197 = vmax.f32 %v7941, %v8078
    %v8198 = vmax.f32 %v7942, %v8076
    %v8199 = vmax.f32 %v7943, %v8074
    %v8200 = vmax.f32 %v7944, %v8136
    %v8201 = vld [vmem:[%s7] sm:$0xff]
    %v8202 = vld [vmem:[%s7 + $0x8] sm:$0xff]
    %v8203 = vld [vmem:[%s7 + $0x10] sm:$0xff]
    %v8204 = vld [vmem:[%s7 + $0x18] sm:$0xff]
    %v8205 = vld [vmem:[%s7 + $0x20] sm:$0xff]
    %v8206 = vld [vmem:[%s7 + $0x28] sm:$0xff]
    %v8207 = vld [vmem:[%s7 + $0x30] sm:$0xff]
    %v8208 = vld [vmem:[%s7 + $0x38] sm:$0xff]
    %v8209 = vld [vmem:[%s7 + $0x40] sm:$0xff]
    %v8210 = vld [vmem:[%s7 + $0x48] sm:$0xff]
    %v8211 = vld [vmem:[%s7 + $0x50] sm:$0xff]
    %v8212 = vld [vmem:[%s7 + $0x58] sm:$0xff]
    %v8213 = vld [vmem:[%s7 + $0x60] sm:$0xff]
    %v8214 = vld [vmem:[%s7 + $0x68] sm:$0xff]
    %v8215 = vld [vmem:[%s7 + $0x70] sm:$0xff]
    %v8216 = vld [vmem:[%s7 + $0x78] sm:$0xff]
    %v8217 = vld [vmem:[%s7 + $0x80] sm:$0xff]
    %v8218 = vld [vmem:[%s7 + $0x88] sm:$0xff]
    %v8219 = vld [vmem:[%s7 + $0x90] sm:$0xff]
    %v8220 = vld [vmem:[%s7 + $0x98] sm:$0xff]
    %v8221 = vld [vmem:[%s7 + $0xa0] sm:$0xff]
    %v8222 = vld [vmem:[%s7 + $0xa8] sm:$0xff]
    %v8223 = vld [vmem:[%s7 + $0xb0] sm:$0xff]
    %v8224 = vld [vmem:[%s7 + $0xb8] sm:$0xff]
    %v8225 = vld [vmem:[%s7 + $0xc0] sm:$0xff]
    %v8226 = vld [vmem:[%s7 + $0xc8] sm:$0xff]
    %v8227 = vld [vmem:[%s7 + $0xd0] sm:$0xff]
    %v8228 = vld [vmem:[%s7 + $0xd8] sm:$0xff]
    %v8229 = vld [vmem:[%s7 + $0xe0] sm:$0xff]
    %v8230 = vld [vmem:[%s7 + $0xe8] sm:$0xff]
    %v8231 = vld [vmem:[%s7 + $0xf0] sm:$0xff]
    %v8232 = vld [vmem:[%s7 + $0xf8] sm:$0xff]
    %v8233 = vld [vmem:[%s7 + $0x100] sm:$0xff]
    %v8234 = vld [vmem:[%s7 + $0x108] sm:$0xff]
    %v8235 = vld [vmem:[%s7 + $0x110] sm:$0xff]
    %v8236 = vld [vmem:[%s7 + $0x118] sm:$0xff]
    %v8237 = vld [vmem:[%s7 + $0x120] sm:$0xff]
    %v8238 = vld [vmem:[%s7 + $0x128] sm:$0xff]
    %v8239 = vld [vmem:[%s7 + $0x130] sm:$0xff]
    %v8240 = vld [vmem:[%s7 + $0x138] sm:$0xff]
    %v8241 = vld [vmem:[%s7 + $0x140] sm:$0xff]
    %v8242 = vld [vmem:[%s7 + $0x148] sm:$0xff]
    %v8243 = vld [vmem:[%s7 + $0x150] sm:$0xff]
    %v8244 = vld [vmem:[%s7 + $0x158] sm:$0xff]
    %v8245 = vld [vmem:[%s7 + $0x160] sm:$0xff]
    %v8246 = vld [vmem:[%s7 + $0x168] sm:$0xff]
    %v8247 = vld [vmem:[%s7 + $0x170] sm:$0xff]
    %v8248 = vld [vmem:[%s7 + $0x178] sm:$0xff]
    %v8249 = vld [vmem:[%s7 + $0x180] sm:$0xff]
    %v8250 = vld [vmem:[%s7 + $0x188] sm:$0xff]
    %v8251 = vld [vmem:[%s7 + $0x190] sm:$0xff]
    %v8252 = vld [vmem:[%s7 + $0x198] sm:$0xff]
    %v8253 = vld [vmem:[%s7 + $0x1a0] sm:$0xff]
    %v8254 = vld [vmem:[%s7 + $0x1a8] sm:$0xff]
    %v8255 = vld [vmem:[%s7 + $0x1b0] sm:$0xff]
    %v8256 = vld [vmem:[%s7 + $0x1b8] sm:$0xff]
    %v8257 = vld [vmem:[%s7 + $0x1c0] sm:$0xff]
    %v8258 = vld [vmem:[%s7 + $0x1c8] sm:$0xff]
    %v8259 = vld [vmem:[%s7 + $0x1d0] sm:$0xff]
    %v8260 = vld [vmem:[%s7 + $0x1d8] sm:$0xff]
    %v8261 = vld [vmem:[%s7 + $0x1e0] sm:$0xff]
    %v8262 = vld [vmem:[%s7 + $0x1e8] sm:$0xff]
    %v8263 = vld [vmem:[%s7 + $0x1f0] sm:$0xff]
    %v8264 = vld [vmem:[%s7 + $0x1f8] sm:$0xff]
    %8265 = vmatprep.subr.mxu0 %v8202
    %8266 = vmatpush1.msra.mxu0 %v8201
    %8267 = vmatprep.subr.mxu0 %v8204
    %8268 = vmatpush1.msra.mxu0 %v8203
    %8269 = vmatprep.subr.mxu0 %v8206
    %8270 = vmatpush1.msra.mxu0 %v8205
    %8271 = vmatprep.subr.mxu0 %v8208
    %8272 = vmatpush1.msra.mxu0 %v8207
    %8273 = vmatprep.subr.mxu0 %v8210
    %8274 = vmatpush1.msra.mxu0 %v8209
    %8275 = vmatprep.subr.mxu0 %v8212
    %8276 = vmatpush1.msra.mxu0 %v8211
    %8277 = vmatprep.subr.mxu0 %v8214
    %8278 = vmatpush1.msra.mxu0 %v8213
    %8279 = vmatprep.subr.mxu0 %v8216
    %8280 = vmatpush1.msra.mxu0 %v8215
    %8281 = vmatprep.subr.mxu0 %v8218
    %8282 = vmatpush1.msra.mxu0 %v8217
    %8283 = vmatprep.subr.mxu0 %v8220
    %8284 = vmatpush1.msra.mxu0 %v8219
    %8285 = vmatprep.subr.mxu0 %v8222
    %8286 = vmatpush1.msra.mxu0 %v8221
    %8287 = vmatprep.subr.mxu0 %v8224
    %8288 = vmatpush1.msra.mxu0 %v8223
    %8289 = vmatprep.subr.mxu0 %v8226
    %8290 = vmatpush1.msra.mxu0 %v8225
    %8291 = vmatprep.subr.mxu0 %v8228
    %8292 = vmatpush1.msra.mxu0 %v8227
    %8293 = vmatprep.subr.mxu0 %v8230
    %8294 = vmatpush1.msra.mxu0 %v8229
    %8295 = vmatprep.subr.mxu0 %v8232
    %8296 = vmatpush1.msra.mxu0 %v8231
    %8297 = vmatprep.subr.mxu0 %v8234
    %8298 = vmatpush1.msra.mxu0 %v8233
    %8299 = vmatprep.subr.mxu0 %v8236
    %8300 = vmatpush1.msra.mxu0 %v8235
    %8301 = vmatprep.subr.mxu0 %v8238
    %8302 = vmatpush1.msra.mxu0 %v8237
    %8303 = vmatprep.subr.mxu0 %v8240
    %8304 = vmatpush1.msra.mxu0 %v8239
    %8305 = vmatprep.subr.mxu0 %v8242
    %8306 = vmatpush1.msra.mxu0 %v8241
    %8307 = vmatprep.subr.mxu0 %v8244
    %8308 = vmatpush1.msra.mxu0 %v8243
    %8309 = vmatprep.subr.mxu0 %v8246
    %8310 = vmatpush1.msra.mxu0 %v8245
    %8311 = vmatprep.subr.mxu0 %v8248
    %8312 = vmatpush1.msra.mxu0 %v8247
    %8313 = vmatprep.subr.mxu0 %v8250
    %8314 = vmatpush1.msra.mxu0 %v8249
    %8315 = vmatprep.subr.mxu0 %v8252
    %8316 = vmatpush1.msra.mxu0 %v8251
    %8317 = vmatprep.subr.mxu0 %v8254
    %8318 = vmatpush1.msra.mxu0 %v8253
    %8319 = vmatprep.subr.mxu0 %v8256
    %8320 = vmatpush1.msra.mxu0 %v8255
    %8321 = vmatprep.subr.mxu0 %v8258
    %8322 = vmatpush1.msra.mxu0 %v8257
    %8323 = vmatprep.subr.mxu0 %v8260
    %8324 = vmatpush1.msra.mxu0 %v8259
    %8325 = vmatprep.subr.mxu0 %v8262
    %8326 = vmatpush1.msra.mxu0 %v8261
    %8327 = vmatprep.subr.mxu0 %v8264
    %8328 = vmatpush1.msra.mxu0 %v8263
    %8329 = vmatprep.mubr.f32.mxu0 %v8138
    %8330 = vmatmul.mubr.f32.gmra.mrb[0].mxu0 %v8137
    %v8331 = vpop.f32.mrb[0].mxu0
    %v8332 = vadd.f32 0.0, %v8331
    %v8333 = vpop.f32.mrb[0].mxu0
    %v8334 = vadd.f32 0.0, %v8333
    %8335 = vmatprep.mubr.f32.mxu0 %v8170
    %8336 = vmatmul.mubr.f32.gmra.mrb[0].mxu0 %v8169
    %v8337 = vpop.f32.mrb[0].mxu0
    %v8338 = vadd.f32 0.0, %v8337
    %v8339 = vpop.f32.mrb[0].mxu0
    %v8340 = vadd.f32 0.0, %v8339
    %8341 = vmatprep.mubr.f32.mxu0 %v8140
    %8342 = vmatmul.mubr.f32.gmra.mrb[0].mxu0 %v8139
    %v8343 = vpop.f32.mrb[0].mxu0
    %v8344 = vadd.f32 0.0, %v8343
    %v8345 = vpop.f32.mrb[0].mxu0
    %v8346 = vadd.f32 0.0, %v8345
    %8347 = vmatprep.mubr.f32.mxu0 %v8172
    %8348 = vmatmul.mubr.f32.gmra.mrb[0].mxu0 %v8171
    %v8349 = vpop.f32.mrb[0].mxu0
    %v8350 = vadd.f32 0.0, %v8349
    %v8351 = vpop.f32.mrb[0].mxu0
    %v8352 = vadd.f32 0.0, %v8351
    %8353 = vmatprep.mubr.f32.mxu0 %v8142
    %8354 = vmatmul.mubr.f32.gmra.mrb[0].mxu0 %v8141
    %v8355 = vpop.f32.mrb[0].mxu0
    %v8356 = vadd.f32 0.0, %v8355
    %v8357 = vpop.f32.mrb[0].mxu0
    %v8358 = vadd.f32 0.0, %v8357
    %8359 = vmatprep.mubr.f32.mxu0 %v8174
    %8360 = vmatmul.mubr.f32.gmra.mrb[0].mxu0 %v8173
    %v8361 = vpop.f32.mrb[0].mxu0
    %v8362 = vadd.f32 0.0, %v8361
    %v8363 = vpop.f32.mrb[0].mxu0
    %v8364 = vadd.f32 0.0, %v8363
    %8365 = vmatprep.mubr.f32.mxu0 %v8144
    %8366 = vmatmul.mubr.f32.gmra.mrb[0].mxu0 %v8143
    %v8367 = vpop.f32.mrb[0].mxu0
    %v8368 = vadd.f32 0.0, %v8367
    %v8369 = vpop.f32.mrb[0].mxu0
    %v8370 = vadd.f32 0.0, %v8369
    %8371 = vmatprep.mubr.f32.mxu0 %v8176
    %8372 = vmatmul.mubr.f32.gmra.mrb[0].mxu0 %v8175
    %v8373 = vpop.f32.mrb[0].mxu0
    %v8374 = vadd.f32 0.0, %v8373
    %v8375 = vpop.f32.mrb[0].mxu0
    %v8376 = vadd.f32 0.0, %v8375
    %8377 = vmatprep.mubr.f32.mxu0 %v8146
    %8378 = vmatmul.mubr.f32.gmra.mrb[0].mxu0 %v8145
    %v8379 = vpop.f32.mrb[0].mxu0
    %v8380 = vadd.f32 0.0, %v8379
    %v8381 = vpop.f32.mrb[0].mxu0
    %v8382 = vadd.f32 0.0, %v8381
    %8383 = vmatprep.mubr.f32.mxu0 %v8178
    %8384 = vmatmul.mubr.f32.gmra.mrb[0].mxu0 %v8177
    %v8385 = vpop.f32.mrb[0].mxu0
    %v8386 = vadd.f32 0.0, %v8385
    %v8387 = vpop.f32.mrb[0].mxu0
    %v8388 = vadd.f32 0.0, %v8387
    %8389 = vmatprep.mubr.f32.mxu0 %v8148
    %8390 = vmatmul.mubr.f32.gmra.mrb[0].mxu0 %v8147
    %v8391 = vpop.f32.mrb[0].mxu0
    %v8392 = vadd.f32 0.0, %v8391
    %v8393 = vpop.f32.mrb[0].mxu0
    %v8394 = vadd.f32 0.0, %v8393
    %8395 = vmatprep.mubr.f32.mxu0 %v8180
    %8396 = vmatmul.mubr.f32.gmra.mrb[0].mxu0 %v8179
    %v8397 = vpop.f32.mrb[0].mxu0
    %v8398 = vadd.f32 0.0, %v8397
    %v8399 = vpop.f32.mrb[0].mxu0
    %v8400 = vadd.f32 0.0, %v8399
    %8401 = vmatprep.mubr.f32.mxu0 %v8150
    %8402 = vmatmul.mubr.f32.gmra.mrb[0].mxu0 %v8149
    %v8403 = vpop.f32.mrb[0].mxu0
    %v8404 = vadd.f32 0.0, %v8403
    %v8405 = vpop.f32.mrb[0].mxu0
    %v8406 = vadd.f32 0.0, %v8405
    %8407 = vmatprep.mubr.f32.mxu0 %v8182
    %8408 = vmatmul.mubr.f32.gmra.mrb[0].mxu0 %v8181
    %v8409 = vpop.f32.mrb[0].mxu0
    %v8410 = vadd.f32 0.0, %v8409
    %v8411 = vpop.f32.mrb[0].mxu0
    %v8412 = vadd.f32 0.0, %v8411
    %8413 = vmatprep.mubr.f32.mxu0 %v8152
    %8414 = vmatmul.mubr.f32.gmra.mrb[0].mxu0 %v8151
    %v8415 = vpop.f32.mrb[0].mxu0
    %v8416 = vadd.f32 0.0, %v8415
    %v8417 = vpop.f32.mrb[0].mxu0
    %v8418 = vadd.f32 0.0, %v8417
    %8419 = vmatprep.mubr.f32.mxu0 %v8184
    %8420 = vmatmul.mubr.f32.gmra.mrb[0].mxu0 %v8183
    %v8421 = vpop.f32.mrb[0].mxu0
    %v8422 = vadd.f32 0.0, %v8421
    %v8423 = vpop.f32.mrb[0].mxu0
    %v8424 = vadd.f32 0.0, %v8423
    %8425 = vmatprep.mubr.f32.mxu0 %v8154
    %8426 = vmatmul.mubr.f32.gmra.mrb[0].mxu0 %v8153
    %v8427 = vpop.f32.mrb[0].mxu0
    %v8428 = vadd.f32 0.0, %v8427
    %v8429 = vpop.f32.mrb[0].mxu0
    %v8430 = vadd.f32 0.0, %v8429
    %8431 = vmatprep.mubr.f32.mxu0 %v8186
    %8432 = vmatmul.mubr.f32.gmra.mrb[0].mxu0 %v8185
    %v8433 = vpop.f32.mrb[0].mxu0
    %v8434 = vadd.f32 0.0, %v8433
    %v8435 = vpop.f32.mrb[0].mxu0
    %v8436 = vadd.f32 0.0, %v8435
    %8437 = vmatprep.mubr.f32.mxu0 %v8156
    %8438 = vmatmul.mubr.f32.gmra.mrb[0].mxu0 %v8155
    %v8439 = vpop.f32.mrb[0].mxu0
    %v8440 = vadd.f32 0.0, %v8439
    %v8441 = vpop.f32.mrb[0].mxu0
    %v8442 = vadd.f32 0.0, %v8441
    %8443 = vmatprep.mubr.f32.mxu0 %v8188
    %8444 = vmatmul.mubr.f32.gmra.mrb[0].mxu0 %v8187
    %v8445 = vpop.f32.mrb[0].mxu0
    %v8446 = vadd.f32 0.0, %v8445
    %v8447 = vpop.f32.mrb[0].mxu0
    %v8448 = vadd.f32 0.0, %v8447
    %8449 = vmatprep.mubr.f32.mxu0 %v8158
    %8450 = vmatmul.mubr.f32.gmra.mrb[0].mxu0 %v8157
    %v8451 = vpop.f32.mrb[0].mxu0
    %v8452 = vadd.f32 0.0, %v8451
    %v8453 = vpop.f32.mrb[0].mxu0
    %v8454 = vadd.f32 0.0, %v8453
    %8455 = vmatprep.mubr.f32.mxu0 %v8190
    %8456 = vmatmul.mubr.f32.gmra.mrb[0].mxu0 %v8189
    %v8457 = vpop.f32.mrb[0].mxu0
    %v8458 = vadd.f32 0.0, %v8457
    %v8459 = vpop.f32.mrb[0].mxu0
    %v8460 = vadd.f32 0.0, %v8459
    %8461 = vmatprep.mubr.f32.mxu0 %v8160
    %8462 = vmatmul.mubr.f32.gmra.mrb[0].mxu0 %v8159
    %v8463 = vpop.f32.mrb[0].mxu0
    %v8464 = vadd.f32 0.0, %v8463
    %v8465 = vpop.f32.mrb[0].mxu0
    %v8466 = vadd.f32 0.0, %v8465
    %8467 = vmatprep.mubr.f32.mxu0 %v8192
    %8468 = vmatmul.mubr.f32.gmra.mrb[0].mxu0 %v8191
    %v8469 = vpop.f32.mrb[0].mxu0
    %v8470 = vadd.f32 0.0, %v8469
    %v8471 = vpop.f32.mrb[0].mxu0
    %v8472 = vadd.f32 0.0, %v8471
    %8473 = vmatprep.mubr.f32.mxu0 %v8162
    %8474 = vmatmul.mubr.f32.gmra.mrb[0].mxu0 %v8161
    %v8475 = vpop.f32.mrb[0].mxu0
    %v8476 = vadd.f32 0.0, %v8475
    %v8477 = vpop.f32.mrb[0].mxu0
    %v8478 = vadd.f32 0.0, %v8477
    %8479 = vmatprep.mubr.f32.mxu0 %v8194
    %8480 = vmatmul.mubr.f32.gmra.mrb[0].mxu0 %v8193
    %v8481 = vpop.f32.mrb[0].mxu0
    %v8482 = vadd.f32 0.0, %v8481
    %v8483 = vpop.f32.mrb[0].mxu0
    %v8484 = vadd.f32 0.0, %v8483
    %8485 = vmatprep.mubr.f32.mxu0 %v8164
    %8486 = vmatmul.mubr.f32.gmra.mrb[0].mxu0 %v8163
    %v8487 = vpop.f32.mrb[0].mxu0
    %v8488 = vadd.f32 0.0, %v8487
    %v8489 = vpop.f32.mrb[0].mxu0
    %v8490 = vadd.f32 0.0, %v8489
    %8491 = vmatprep.mubr.f32.mxu0 %v8196
    %8492 = vmatmul.mubr.f32.gmra.mrb[0].mxu0 %v8195
    %v8493 = vpop.f32.mrb[0].mxu0
    %v8494 = vadd.f32 0.0, %v8493
    %v8495 = vpop.f32.mrb[0].mxu0
    %v8496 = vadd.f32 0.0, %v8495
    %8497 = vmatprep.mubr.f32.mxu0 %v8166
    %8498 = vmatmul.mubr.f32.gmra.mrb[0].mxu0 %v8165
    %v8499 = vpop.f32.mrb[0].mxu0
    %v8500 = vadd.f32 0.0, %v8499
    %v8501 = vpop.f32.mrb[0].mxu0
    %v8502 = vadd.f32 0.0, %v8501
    %8503 = vmatprep.mubr.f32.mxu0 %v8198
    %8504 = vmatmul.mubr.f32.gmra.mrb[0].mxu0 %v8197
    %v8505 = vpop.f32.mrb[0].mxu0
    %v8506 = vadd.f32 0.0, %v8505
    %v8507 = vpop.f32.mrb[0].mxu0
    %v8508 = vadd.f32 0.0, %v8507
    %8509 = vmatprep.mubr.f32.mxu0 %v8168
    %8510 = vmatmul.mubr.f32.gmra.mrb[0].mxu0 %v8167
    %v8511 = vpop.f32.mrb[0].mxu0
    %v8512 = vadd.f32 0.0, %v8511
    %v8513 = vpop.f32.mrb[0].mxu0
    %v8514 = vadd.f32 0.0, %v8513
    %8515 = vmatprep.mubr.f32.mxu0 %v8200
    %8516 = vmatmul.mubr.f32.gmra.mrb[0].mxu0 %v8199
    %v8517 = vpop.f32.mrb[0].mxu0
    %v8518 = vadd.f32 0.0, %v8517
    %v8519 = vpop.f32.mrb[0].mxu0
    %v8520 = vadd.f32 0.0, %v8519
    %8521 = vdwg.mxu0
    %v8522 = vld [vmem:[#allocation7] sm:$0xff]
    %v8523 = vld [vmem:[#allocation7 + $0x8] sm:$0xff]
    %v8524 = vld [vmem:[#allocation7 + $0x10] sm:$0xff]
    %v8525 = vld [vmem:[#allocation7 + $0x18] sm:$0xff]
    %v8526 = vld [vmem:[#allocation6] sm:$0xff]
    %v8527 = vld [vmem:[#allocation6 + $0x8] sm:$0xff]
    %v8528 = vld [vmem:[#allocation6 + $0x10] sm:$0xff]
    %v8529 = vld [vmem:[#allocation6 + $0x18] sm:$0xff]
    %v8530 = vld [vmem:[#allocation6 + $0x20] sm:$0xff]
    %v8531 = vld [vmem:[#allocation6 + $0x28] sm:$0xff]
    %v8532 = vld [vmem:[#allocation6 + $0x30] sm:$0xff]
    %v8533 = vld [vmem:[#allocation6 + $0x38] sm:$0xff]
    %v8534 = vld [vmem:[#allocation6 + $0x40] sm:$0xff]
    %v8535 = vld [vmem:[#allocation6 + $0x48] sm:$0xff]
    %v8536 = vld [vmem:[#allocation6 + $0x50] sm:$0xff]
    %v8537 = vld [vmem:[#allocation6 + $0x58] sm:$0xff]
    %v8538 = vld [vmem:[#allocation6 + $0x60] sm:$0xff]
    %v8539 = vld [vmem:[#allocation6 + $0x68] sm:$0xff]
    %v8540 = vld [vmem:[#allocation6 + $0x70] sm:$0xff]
    %v8541 = vld [vmem:[#allocation6 + $0x78] sm:$0xff]
    %v8542 = vld [vmem:[#allocation6 + $0x80] sm:$0xff]
    %v8543 = vld [vmem:[#allocation6 + $0x88] sm:$0xff]
    %v8544 = vld [vmem:[#allocation6 + $0x90] sm:$0xff]
    %v8545 = vld [vmem:[#allocation6 + $0x98] sm:$0xff]
    %v8546 = vld [vmem:[#allocation6 + $0xa0] sm:$0xff]
    %v8547 = vld [vmem:[#allocation6 + $0xa8] sm:$0xff]
    %v8548 = vld [vmem:[#allocation6 + $0xb0] sm:$0xff]
    %v8549 = vld [vmem:[#allocation6 + $0xb8] sm:$0xff]
    %v8550 = vld [vmem:[#allocation6 + $0xc0] sm:$0xff]
    %v8551 = vld [vmem:[#allocation6 + $0xc8] sm:$0xff]
    %v8552 = vld [vmem:[#allocation6 + $0xd0] sm:$0xff]
    %v8553 = vld [vmem:[#allocation6 + $0xd8] sm:$0xff]
    %v8554 = vld [vmem:[#allocation6 + $0xe0] sm:$0xff]
    %v8555 = vld [vmem:[#allocation6 + $0xe8] sm:$0xff]
    %v8556 = vld [vmem:[#allocation6 + $0xf0] sm:$0xff]
    %v8557 = vld [vmem:[#allocation6 + $0xf8] sm:$0xff]
    %v8558 = vld [vmem:[#allocation6 + $0x100] sm:$0xff]
    %v8559 = vld [vmem:[#allocation6 + $0x108] sm:$0xff]
    %v8560 = vld [vmem:[#allocation6 + $0x110] sm:$0xff]
    %v8561 = vld [vmem:[#allocation6 + $0x118] sm:$0xff]
    %v8562 = vld [vmem:[#allocation6 + $0x120] sm:$0xff]
    %v8563 = vld [vmem:[#allocation6 + $0x128] sm:$0xff]
    %v8564 = vld [vmem:[#allocation6 + $0x130] sm:$0xff]
    %v8565 = vld [vmem:[#allocation6 + $0x138] sm:$0xff]
    %v8566 = vld [vmem:[#allocation6 + $0x140] sm:$0xff]
    %v8567 = vld [vmem:[#allocation6 + $0x148] sm:$0xff]
    %v8568 = vld [vmem:[#allocation6 + $0x150] sm:$0xff]
    %v8569 = vld [vmem:[#allocation6 + $0x158] sm:$0xff]
    %v8570 = vld [vmem:[#allocation6 + $0x160] sm:$0xff]
    %v8571 = vld [vmem:[#allocation6 + $0x168] sm:$0xff]
    %v8572 = vld [vmem:[#allocation6 + $0x170] sm:$0xff]
    %v8573 = vld [vmem:[#allocation6 + $0x178] sm:$0xff]
    %v8574 = vld [vmem:[#allocation6 + $0x180] sm:$0xff]
    %v8575 = vld [vmem:[#allocation6 + $0x188] sm:$0xff]
    %v8576 = vld [vmem:[#allocation6 + $0x190] sm:$0xff]
    %v8577 = vld [vmem:[#allocation6 + $0x198] sm:$0xff]
    %v8578 = vld [vmem:[#allocation6 + $0x1a0] sm:$0xff]
    %v8579 = vld [vmem:[#allocation6 + $0x1a8] sm:$0xff]
    %v8580 = vld [vmem:[#allocation6 + $0x1b0] sm:$0xff]
    %v8581 = vld [vmem:[#allocation6 + $0x1b8] sm:$0xff]
    %v8582 = vld [vmem:[#allocation6 + $0x1c0] sm:$0xff]
    %v8583 = vld [vmem:[#allocation6 + $0x1c8] sm:$0xff]
    %v8584 = vld [vmem:[#allocation6 + $0x1d0] sm:$0xff]
    %v8585 = vld [vmem:[#allocation6 + $0x1d8] sm:$0xff]
    %v8586 = vld [vmem:[#allocation6 + $0x1e0] sm:$0xff]
    %v8587 = vld [vmem:[#allocation6 + $0x1e8] sm:$0xff]
    %v8588 = vld [vmem:[#allocation6 + $0x1f0] sm:$0xff]
    %v8589 = vld [vmem:[#allocation6 + $0x1f8] sm:$0xff]
    %v8590 = vmul.f32 %v8332, %v8526
    %v8591 = vmul.f32 %v8334, %v8527
    %v8592 = vmul.f32 %v8338, %v8528
    %v8593 = vmul.f32 %v8340, %v8529
    %v8594 = vmul.f32 %v8344, %v8530
    %v8595 = vmul.f32 %v8346, %v8531
    %v8596 = vmul.f32 %v8350, %v8532
    %v8597 = vmul.f32 %v8352, %v8533
    %v8598 = vmul.f32 %v8356, %v8534
    %v8599 = vmul.f32 %v8358, %v8535
    %v8600 = vmul.f32 %v8362, %v8536
    %v8601 = vmul.f32 %v8364, %v8537
    %v8602 = vmul.f32 %v8368, %v8538
    %v8603 = vmul.f32 %v8370, %v8539
    %v8604 = vmul.f32 %v8374, %v8540
    %v8605 = vmul.f32 %v8376, %v8541
    %v8606 = vmul.f32 %v8380, %v8542
    %v8607 = vmul.f32 %v8382, %v8543
    %v8608 = vmul.f32 %v8386, %v8544
    %v8609 = vmul.f32 %v8388, %v8545
    %v8610 = vmul.f32 %v8392, %v8546
    %v8611 = vmul.f32 %v8394, %v8547
    %v8612 = vmul.f32 %v8398, %v8548
    %v8613 = vmul.f32 %v8400, %v8549
    %v8614 = vmul.f32 %v8404, %v8550
    %v8615 = vmul.f32 %v8406, %v8551
    %v8616 = vmul.f32 %v8410, %v8552
    %v8617 = vmul.f32 %v8412, %v8553
    %v8618 = vmul.f32 %v8416, %v8554
    %v8619 = vmul.f32 %v8418, %v8555
    %v8620 = vmul.f32 %v8422, %v8556
    %v8621 = vmul.f32 %v8424, %v8557
    %v8622 = vmul.f32 %v8428, %v8558
    %v8623 = vmul.f32 %v8430, %v8559
    %v8624 = vmul.f32 %v8434, %v8560
    %v8625 = vmul.f32 %v8436, %v8561
    %v8626 = vmul.f32 %v8440, %v8562
    %v8627 = vmul.f32 %v8442, %v8563
    %v8628 = vmul.f32 %v8446, %v8564
    %v8629 = vmul.f32 %v8448, %v8565
    %v8630 = vmul.f32 %v8452, %v8566
    %v8631 = vmul.f32 %v8454, %v8567
    %v8632 = vmul.f32 %v8458, %v8568
    %v8633 = vmul.f32 %v8460, %v8569
    %v8634 = vmul.f32 %v8464, %v8570
    %v8635 = vmul.f32 %v8466, %v8571
    %v8636 = vmul.f32 %v8470, %v8572
    %v8637 = vmul.f32 %v8472, %v8573
    %v8638 = vmul.f32 %v8476, %v8574
    %v8639 = vmul.f32 %v8478, %v8575
    %v8640 = vmul.f32 %v8482, %v8576
    %v8641 = vmul.f32 %v8484, %v8577
    %v8642 = vmul.f32 %v8488, %v8578
    %v8643 = vmul.f32 %v8490, %v8579
    %v8644 = vmul.f32 %v8494, %v8580
    %v8645 = vmul.f32 %v8496, %v8581
    %v8646 = vmul.f32 %v8500, %v8582
    %v8647 = vmul.f32 %v8502, %v8583
    %v8648 = vmul.f32 %v8506, %v8584
    %v8649 = vmul.f32 %v8508, %v8585
    %v8650 = vmul.f32 %v8512, %v8586
    %v8651 = vmul.f32 %v8514, %v8587
    %v8652 = vmul.f32 %v8518, %v8588
    %v8653 = vmul.f32 %v8520, %v8589
    %8654 = vmatprep.subr.mxu0 %v8591
    %8655 = vmatpush1.msra.mxu0 %v8590
    %8656 = vmatprep.subr.mxu0 %v8593
    %8657 = vmatpush1.msra.mxu0 %v8592
    %8658 = vmatprep.subr.mxu0 %v8595
    %8659 = vmatpush1.msra.mxu0 %v8594
    %8660 = vmatprep.subr.mxu0 %v8597
    %8661 = vmatpush1.msra.mxu0 %v8596
    %8662 = vmatprep.subr.mxu0 %v8599
    %8663 = vmatpush1.msra.mxu0 %v8598
    %8664 = vmatprep.subr.mxu0 %v8601
    %8665 = vmatpush1.msra.mxu0 %v8600
    %8666 = vmatprep.subr.mxu0 %v8603
    %8667 = vmatpush1.msra.mxu0 %v8602
    %8668 = vmatprep.subr.mxu0 %v8605
    %8669 = vmatpush1.msra.mxu0 %v8604
    %8670 = vmatprep.subr.mxu0 %v8607
    %8671 = vmatpush1.msra.mxu0 %v8606
    %8672 = vmatprep.subr.mxu0 %v8609
    %8673 = vmatpush1.msra.mxu0 %v8608
    %8674 = vmatprep.subr.mxu0 %v8611
    %8675 = vmatpush1.msra.mxu0 %v8610
    %8676 = vmatprep.subr.mxu0 %v8613
    %8677 = vmatpush1.msra.mxu0 %v8612
    %8678 = vmatprep.subr.mxu0 %v8615
    %8679 = vmatpush1.msra.mxu0 %v8614
    %8680 = vmatprep.subr.mxu0 %v8617
    %8681 = vmatpush1.msra.mxu0 %v8616
    %8682 = vmatprep.subr.mxu0 %v8619
    %8683 = vmatpush1.msra.mxu0 %v8618
    %8684 = vmatprep.subr.mxu0 %v8621
    %8685 = vmatpush1.msra.mxu0 %v8620
    %8686 = vmatprep.subr.mxu0 %v8623
    %8687 = vmatpush1.msra.mxu0 %v8622
    %8688 = vmatprep.subr.mxu0 %v8625
    %8689 = vmatpush1.msra.mxu0 %v8624
    %8690 = vmatprep.subr.mxu0 %v8627
    %8691 = vmatpush1.msra.mxu0 %v8626
    %8692 = vmatprep.subr.mxu0 %v8629
    %8693 = vmatpush1.msra.mxu0 %v8628
    %8694 = vmatprep.subr.mxu0 %v8631
    %8695 = vmatpush1.msra.mxu0 %v8630
    %8696 = vmatprep.subr.mxu0 %v8633
    %8697 = vmatpush1.msra.mxu0 %v8632
    %8698 = vmatprep.subr.mxu0 %v8635
    %8699 = vmatpush1.msra.mxu0 %v8634
    %8700 = vmatprep.subr.mxu0 %v8637
    %8701 = vmatpush1.msra.mxu0 %v8636
    %8702 = vmatprep.subr.mxu0 %v8639
    %8703 = vmatpush1.msra.mxu0 %v8638
    %8704 = vmatprep.subr.mxu0 %v8641
    %8705 = vmatpush1.msra.mxu0 %v8640
    %8706 = vmatprep.subr.mxu0 %v8643
    %8707 = vmatpush1.msra.mxu0 %v8642
    %8708 = vmatprep.subr.mxu0 %v8645
    %8709 = vmatpush1.msra.mxu0 %v8644
    %8710 = vmatprep.subr.mxu0 %v8647
    %8711 = vmatpush1.msra.mxu0 %v8646
    %8712 = vmatprep.subr.mxu0 %v8649
    %8713 = vmatpush1.msra.mxu0 %v8648
    %8714 = vmatprep.subr.mxu0 %v8651
    %8715 = vmatpush1.msra.mxu0 %v8650
    %8716 = vmatprep.subr.mxu0 %v8653
    %8717 = vmatpush1.msra.mxu0 %v8652
    %8718 = vmatprep.mubr.f32.mxu0 %v8523
    %8719 = vmatmul.mubr.f32.gmra.mrb[0].mxu0 %v8522
    %v8720 = vpop.f32.mrb[0].mxu0
    %v8721 = vadd.f32 0.0, %v8720
    %v8722 = vpop.f32.mrb[0].mxu0
    %v8723 = vadd.f32 0.0, %v8722
    %8724 = vmatprep.mubr.f32.mxu0 %v8525
    %8725 = vmatmul.mubr.f32.gmra.mrb[0].mxu0 %v8524
    %v8726 = vpop.f32.mrb[0].mxu0
    %v8727 = vadd.f32 0.0, %v8726
    %v8728 = vpop.f32.mrb[0].mxu0
    %v8729 = vadd.f32 0.0, %v8728
    %8730 = vdwg.mxu0
    %v8731 = vld [vmem:[%s10] sm:$0xff]
    %v8732 = vld [vmem:[%s10 + $0x8] sm:$0xff]
    %v8733 = vld [vmem:[%s10 + $0x10] sm:$0xff]
    %v8734 = vld [vmem:[%s10 + $0x18] sm:$0xff]
    %v8735 = vld [vmem:[%s10 + $0x20] sm:$0xff]
    %v8736 = vld [vmem:[%s10 + $0x28] sm:$0xff]
    %v8737 = vld [vmem:[%s10 + $0x30] sm:$0xff]
    %v8738 = vld [vmem:[%s10 + $0x38] sm:$0xff]
    %v8739 = vld [vmem:[%s10 + $0x40] sm:$0xff]
    %v8740 = vld [vmem:[%s10 + $0x48] sm:$0xff]
    %v8741 = vld [vmem:[%s10 + $0x50] sm:$0xff]
    %v8742 = vld [vmem:[%s10 + $0x58] sm:$0xff]
    %v8743 = vld [vmem:[%s10 + $0x60] sm:$0xff]
    %v8744 = vld [vmem:[%s10 + $0x68] sm:$0xff]
    %v8745 = vld [vmem:[%s10 + $0x70] sm:$0xff]
    %v8746 = vld [vmem:[%s10 + $0x78] sm:$0xff]
    %v8747 = vld [vmem:[%s10 + $0x80] sm:$0xff]
    %v8748 = vld [vmem:[%s10 + $0x88] sm:$0xff]
    %v8749 = vld [vmem:[%s10 + $0x90] sm:$0xff]
    %v8750 = vld [vmem:[%s10 + $0x98] sm:$0xff]
    %v8751 = vld [vmem:[%s10 + $0xa0] sm:$0xff]
    %v8752 = vld [vmem:[%s10 + $0xa8] sm:$0xff]
    %v8753 = vld [vmem:[%s10 + $0xb0] sm:$0xff]
    %v8754 = vld [vmem:[%s10 + $0xb8] sm:$0xff]
    %v8755 = vld [vmem:[%s10 + $0xc0] sm:$0xff]
    %v8756 = vld [vmem:[%s10 + $0xc8] sm:$0xff]
    %v8757 = vld [vmem:[%s10 + $0xd0] sm:$0xff]
    %v8758 = vld [vmem:[%s10 + $0xd8] sm:$0xff]
    %v8759 = vld [vmem:[%s10 + $0xe0] sm:$0xff]
    %v8760 = vld [vmem:[%s10 + $0xe8] sm:$0xff]
    %v8761 = vld [vmem:[%s10 + $0xf0] sm:$0xff]
    %v8762 = vld [vmem:[%s10 + $0xf8] sm:$0xff]
    %v8763 = vld [vmem:[#allocation9] sm:$0x1]
    %v8765 = vlaneseq
    %v8766 = vshrl.u32 %v8765, 7
    %v8767 = vsub.s32 0, %v8766
    %v8768 = vrot.slane %v8763, %v8767
    %8770 = vmatprep.subr.mxu0 0.0
    %8771 = vmatpush1.msra.mxu0 %v8731
    %8772 = vmatprep.subr.mxu0 0.0
    %8773 = vmatpush1.msra.mxu0 %v8732
    %8774 = vmatprep.subr.mxu0 0.0
    %8775 = vmatpush1.msra.mxu0 %v8733
    %8776 = vmatprep.subr.mxu0 0.0
    %8777 = vmatpush1.msra.mxu0 %v8734
    %8778 = vmatprep.subr.mxu0 0.0
    %8779 = vmatpush1.msra.mxu0 %v8735
    %8780 = vmatprep.subr.mxu0 0.0
    %8781 = vmatpush1.msra.mxu0 %v8736
    %8782 = vmatprep.subr.mxu0 0.0
    %8783 = vmatpush1.msra.mxu0 %v8737
    %8784 = vmatprep.subr.mxu0 0.0
    %8785 = vmatpush1.msra.mxu0 %v8738
    %8786 = vmatprep.subr.mxu0 0.0
    %8787 = vmatpush1.msra.mxu0 %v8739
    %8788 = vmatprep.subr.mxu0 0.0
    %8789 = vmatpush1.msra.mxu0 %v8740
    %8790 = vmatprep.subr.mxu0 0.0
    %8791 = vmatpush1.msra.mxu0 %v8741
    %8792 = vmatprep.subr.mxu0 0.0
    %8793 = vmatpush1.msra.mxu0 %v8742
    %8794 = vmatprep.subr.mxu0 0.0
    %8795 = vmatpush1.msra.mxu0 %v8743
    %8796 = vmatprep.subr.mxu0 0.0
    %8797 = vmatpush1.msra.mxu0 %v8744
    %8798 = vmatprep.subr.mxu0 0.0
    %8799 = vmatpush1.msra.mxu0 %v8745
    %8800 = vmatprep.subr.mxu0 0.0
    %8801 = vmatpush1.msra.mxu0 %v8746
    %8802 = vmatprep.subr.mxu0 0.0
    %8803 = vmatpush1.msra.mxu0 %v8747
    %8804 = vmatprep.subr.mxu0 0.0
    %8805 = vmatpush1.msra.mxu0 %v8748
    %8806 = vmatprep.subr.mxu0 0.0
    %8807 = vmatpush1.msra.mxu0 %v8749
    %8808 = vmatprep.subr.mxu0 0.0
    %8809 = vmatpush1.msra.mxu0 %v8750
    %8810 = vmatprep.subr.mxu0 0.0
    %8811 = vmatpush1.msra.mxu0 %v8751
    %8812 = vmatprep.subr.mxu0 0.0
    %8813 = vmatpush1.msra.mxu0 %v8752
    %8814 = vmatprep.subr.mxu0 0.0
    %8815 = vmatpush1.msra.mxu0 %v8753
    %8816 = vmatprep.subr.mxu0 0.0
    %8817 = vmatpush1.msra.mxu0 %v8754
    %8818 = vmatprep.subr.mxu0 0.0
    %8819 = vmatpush1.msra.mxu0 %v8755
    %8820 = vmatprep.subr.mxu0 0.0
    %8821 = vmatpush1.msra.mxu0 %v8756
    %8822 = vmatprep.subr.mxu0 0.0
    %8823 = vmatpush1.msra.mxu0 %v8757
    %8824 = vmatprep.subr.mxu0 0.0
    %8825 = vmatpush1.msra.mxu0 %v8758
    %8826 = vmatprep.subr.mxu0 0.0
    %8827 = vmatpush1.msra.mxu0 %v8759
    %8828 = vmatprep.subr.mxu0 0.0
    %8829 = vmatpush1.msra.mxu0 %v8760
    %8830 = vmatprep.subr.mxu0 0.0
    %8831 = vmatpush1.msra.mxu0 %v8761
    %8832 = vmatprep.subr.mxu0 0.0
    %8833 = vmatpush1.msra.mxu0 %v8762
    %8834 = vmatprep.mubr.f32.mxu0 %v8723
    %8835 = vmatmul.mubr.f32.gmra.mrb[0].mxu0 %v8721
    %v8836 = vpop.f32.mrb[0].mxu0
    %v8837 = vadd.f32 %v8768, %v8836
    %v8838 = vpop.f32.mrb[0].mxu0
    %8839 = vmatprep.mubr.f32.mxu0 %v8729
    %8840 = vmatmul.mubr.f32.gmra.mrb[0].mxu0 %v8727
    %v8841 = vpop.f32.mrb[0].mxu0
    %v8842 = vadd.f32 %v8768, %v8841
    %v8843 = vpop.f32.mrb[0].mxu0
    %8844 = vdwg.mxu0
    %v8845 = vmax.f32 %v8837, 0.0
    %v8846 = vmax.f32 %v8842, 0.0
    %v8847 = vld [vmem:[#allocation10] sm:$0xff]
    %v8848 = vld [vmem:[#allocation10 + $0x8] sm:$0xff]
    %v8849 = vld [vmem:[#allocation10 + $0x10] sm:$0xff]
    %v8850 = vld [vmem:[#allocation10 + $0x18] sm:$0xff]
    %v8851 = vld [vmem:[#allocation12] sm:$0x1]
    %v8853 = vlaneseq
    %v8854 = vshrl.u32 %v8853, 7
    %v8855 = vsub.s32 0, %v8854
    %v8856 = vrot.slane %v8851, %v8855
    %vm8858 = vcmask 261120
    %v8860 = vsel %vm8858, %v8845, 0
    %v8863 = vsel %vm8858, %v8846, 0
    %8865 = vmatprep.subr.mxu0 0.0
    %8866 = vmatpush1.msra.mxu0 %v8847
    %8867 = vmatprep.subr.mxu0 0.0
    %8868 = vmatpush1.msra.mxu0 %v8848
    %8869 = vmatprep.subr.mxu0 0.0
    %8870 = vmatpush1.msra.mxu0 %v8849
    %8871 = vmatprep.subr.mxu0 0.0
    %8872 = vmatpush1.msra.mxu0 %v8850
    %8873 = vmatprep.subr.mxu0 0.0
    %8874 = vmatpush1.msra.mxu0 0.0
    %8875 = vmatprep.subr.mxu0 0.0
    %8876 = vmatpush1.msra.mxu0 0.0
    %8877 = vmatprep.subr.mxu0 0.0
    %8878 = vmatpush1.msra.mxu0 0.0
    %8879 = vmatprep.subr.mxu0 0.0
    %8880 = vmatpush1.msra.mxu0 0.0
    %8881 = vmatprep.subr.mxu0 0.0
    %8882 = vmatpush1.msra.mxu0 0.0
    %8883 = vmatprep.subr.mxu0 0.0
    %8884 = vmatpush1.msra.mxu0 0.0
    %8885 = vmatprep.subr.mxu0 0.0
    %8886 = vmatpush1.msra.mxu0 0.0
    %8887 = vmatprep.subr.mxu0 0.0
    %8888 = vmatpush1.msra.mxu0 0.0
    %8889 = vmatprep.subr.mxu0 0.0
    %8890 = vmatpush1.msra.mxu0 0.0
    %8891 = vmatprep.subr.mxu0 0.0
    %8892 = vmatpush1.msra.mxu0 0.0
    %8893 = vmatprep.subr.mxu0 0.0
    %8894 = vmatpush1.msra.mxu0 0.0
    %8895 = vmatprep.subr.mxu0 0.0
    %8896 = vmatpush1.msra.mxu0 0.0
    %8897 = vmatprep.subr.mxu0 0.0
    %8898 = vmatpush1.msra.mxu0 0.0
    %8899 = vmatprep.subr.mxu0 0.0
    %8900 = vmatpush1.msra.mxu0 0.0
    %8901 = vmatprep.subr.mxu0 0.0
    %8902 = vmatpush1.msra.mxu0 0.0
    %8903 = vmatprep.subr.mxu0 0.0
    %8904 = vmatpush1.msra.mxu0 0.0
    %8905 = vmatprep.subr.mxu0 0.0
    %8906 = vmatpush1.msra.mxu0 0.0
    %8907 = vmatprep.subr.mxu0 0.0
    %8908 = vmatpush1.msra.mxu0 0.0
    %8909 = vmatprep.subr.mxu0 0.0
    %8910 = vmatpush1.msra.mxu0 0.0
    %8911 = vmatprep.subr.mxu0 0.0
    %8912 = vmatpush1.msra.mxu0 0.0
    %8913 = vmatprep.subr.mxu0 0.0
    %8914 = vmatpush1.msra.mxu0 0.0
    %8915 = vmatprep.subr.mxu0 0.0
    %8916 = vmatpush1.msra.mxu0 0.0
    %8917 = vmatprep.subr.mxu0 0.0
    %8918 = vmatpush1.msra.mxu0 0.0
    %8919 = vmatprep.subr.mxu0 0.0
    %8920 = vmatpush1.msra.mxu0 0.0
    %8921 = vmatprep.subr.mxu0 0.0
    %8922 = vmatpush1.msra.mxu0 0.0
    %8923 = vmatprep.subr.mxu0 0.0
    %8924 = vmatpush1.msra.mxu0 0.0
    %8925 = vmatprep.subr.mxu0 0.0
    %8926 = vmatpush1.msra.mxu0 0.0
    %8927 = vmatprep.subr.mxu0 0.0
    %8928 = vmatpush1.msra.mxu0 0.0
    %8929 = vmatprep.mubr.f32.mxu0 0.0
    %8930 = vmatmul.mubr.f32.gmra.mrb[0].mxu0 %v8860
    %v8931 = vpop.f32.mrb[0].mxu0
    %v8932 = vadd.f32 %v8856, %v8931
    %v8933 = vpop.f32.mrb[0].mxu0
    %8934 = vmatprep.mubr.f32.mxu0 0.0
    %8935 = vmatmul.mubr.f32.gmra.mrb[0].mxu0 %v8863
    %v8936 = vpop.f32.mrb[0].mxu0
    %v8937 = vadd.f32 %v8856, %v8936
    %v8938 = vpop.f32.mrb[0].mxu0
    %8939 = vdwg.mxu0
    %8940 = vmax.xlane.f32.xlu0 %v8932
    %v8941 = vpop.xlane.xlu0 %8940
    %8942 = vmax.xlane.f32.xlu0 %v8937
    %v8943 = vpop.xlane.xlu0 %8942
    %v8944 = vsub.f32 %v8932, %v8941
    %v8945 = vsub.f32 %v8937, %v8943
    %v8946 = vmul.f32 %v8944, 1.442695
    %v8947 = vpow.pop %v8946
    %v8948 = vmul.f32 %v8945, 1.442695
    %v8949 = vpow.pop %v8948
    %8950 = vadd.xlane.f32.xlu0 %v8947
    %v8951 = vpop.xlane.xlu0 %8950
    %8952 = vadd.xlane.f32.xlu0 %v8949
    %v8953 = vpop.xlane.xlu0 %8952
    %v8954 = vrcp.pop %v8951
    %v8955 = vmul.f32 %v8947, %v8954
    %v8956 = vrcp.pop %v8953
    %v8957 = vmul.f32 %v8949, %v8956
    %8958 = vst [vmem:[%s14] sm:$0xff] %v8955
    %8959 = vst [vmem:[%s14 + $0x8] sm:$0xff] %v8957
    // Predicated region
    $region86: #{convnet_forward.1} parent=1 // pred_check
      _
    $region87: #{convnet_forward.1} parent=1 // pred_check_branch
      %8961 = sbr.rel (0) target = $region89
    $region88: #{convnet_forward.1} parent=1 // pred_region
      _
    $region89: #{convnet_forward.1} parent=1 // pred_fallthru
      _
    // Predicated region
    $region90: #{convnet_forward.1} parent=1 // pred_check
      _
    $region91: #{convnet_forward.1} parent=1 // pred_check_branch
      %8963 = sbr.rel (0) target = $region93
    $region92: #{convnet_forward.1} parent=1 // pred_region
      _
    $region93: #{convnet_forward.1} parent=1 // pred_fallthru
      _
    %8964 = vsyncpa [#allocation3], 1
    %8965 = vsyncpa [#allocation5], 1
    %8966 = vsyncpa [#allocation8], 1
    %8967 = vsyncpa [#allocation11], 1

</llo_original>
